<compile_context>
chip_gen: v5e
topology: v5e:2x2
jax: 0.10.0
libtpu: 0.0.40
codegen_flags: <defaults>
</compile_context>

<pallas_src>
import functools
import math

import jax
import jax.numpy as jnp
from jax.experimental import pallas as pl
from jax.experimental.pallas import tpu as pltpu


# ---------------------------------------------------------------------------
# Hardware / tiling helpers
# ---------------------------------------------------------------------------

def _vmem_limit_bytes():
    """Per-core VMEM budget with headroom for compiler-internal scratch."""
    try:
        cap = int(pltpu.get_tpu_info().vmem_capacity_bytes)
    except Exception:  # not resolvable: conservative value that fits every chip
        cap = 64 * 1024 * 1024
    # ~112 MiB on 128-MiB chips (v5e/v6e), ~48 MiB on 64-MiB v7x.
    return max(32 * 1024 * 1024, min(cap - 16 * 1024 * 1024, int(cap * 0.875)))


def _pick_ff_tile(d_ff, target, align=128):
    """Largest multiple of `align` <= target that divides d_ff; else full d_ff."""
    t = min(target, d_ff)
    t = (t // align) * align
    while t >= align:
        if d_ff % t == 0:
            return t
        t -= align
    return d_ff


def _choose_row_tiling(n_rows, target):
    """Return (padded_rows, row_tile).

    Pads only to a multiple of 8 (sublane) when a clean divisor exists instead
    of padding all the way to the row tile, and prefers >= 2 row tiles so the
    'parallel' row axis can be split across both TensorCores on v7x.
    """
    target = max(8, (int(target) // 8) * 8)
    n8 = n_rows + ((-n_rows) % 8)
    max_tm = min(target, n8)
    if n8 >= 256:                             # enough rows: insist on >= 2 tiles
        max_tm = min(max_tm, (n8 // 2) // 8 * 8)
    if max_tm >= n8:
        return n8, n8                         # single tile, minimal padding
    start = (max_tm // 8) * 8
    for tm in range(start, 63, -8):           # don't accept tiny (<64-row) tiles
        if n8 % tm == 0:
            return n8, tm
    # No clean divisor: fall back to padding up to a multiple of the target.
    n_pad = n_rows + ((-n_rows) % target)
    return n_pad, target


# ---------------------------------------------------------------------------
# Kernels
# ---------------------------------------------------------------------------

def _ffn_resident_kernel(x_ref, w13_ref, b13_ref, w2_ref, b2_ref, o_ref, *, d_ff):
    """Whole-d_ff path: weights VMEM-resident, grid = (row_tiles,)."""
    x = x_ref[...]                                                   # (tm, d_model) bf16
    # Fused up-projection: one wide MXU pass over [W1^T | W3^T].
    h = jnp.dot(x, w13_ref[...], preferred_element_type=jnp.float32) + b13_ref[...]
    h1 = h[:, :d_ff]                                                 # gate branch
    h3 = h[:, d_ff:]                                                 # linear branch
    # SwiGLU elementwise in f32 (v5e has no bf16 VPU/EUP; bf16 here is an
    # optional v6e/v7x micro-opt we skip for accuracy).
    g = (h1 * jax.nn.sigmoid(h1)) * h3                               # (tm, d_ff) f32
    o_ref[...] = (jnp.dot(g.astype(w2_ref.dtype), w2_ref[...],
                          preferred_element_type=jnp.float32)
                  + b2_ref[...]).astype(o_ref.dtype)


def _ffn_streamed_kernel(x_ref, w13_ref, b13_ref, w2_ref, b2_ref, o_ref, acc_ref,
                         *, ff_tile):
    """Streamed-weight path: grid = (row_tiles, d_ff_tiles) with f32 accumulator."""
    k = pl.program_id(1)

    @pl.when(k == 0)
    def _():
        acc_ref[...] = jnp.zeros_like(acc_ref)

    x = x_ref[...]                                                   # (tm, d_model) bf16
    h = jnp.dot(x, w13_ref[...], preferred_element_type=jnp.float32) + b13_ref[...]
    h1 = h[:, :ff_tile]
    h3 = h[:, ff_tile:]
    g = (h1 * jax.nn.sigmoid(h1)) * h3                               # (tm, ff_tile) f32
    acc_ref[...] += jnp.dot(g.astype(w2_ref.dtype), w2_ref[...],
                            preferred_element_type=jnp.float32)

    @pl.when(k == pl.num_programs(1) - 1)
    def _():
        o_ref[...] = (acc_ref[...] + b2_ref[...]).astype(o_ref.dtype)


# ---------------------------------------------------------------------------
# Parameter preparation (run once at load time) and forward pass
# ---------------------------------------------------------------------------

def prepare_feedforward_params(w1, b1, w2, b2, w3, b3, *,
                               compute_dtype=jnp.bfloat16, ff_tile_target=None):
    """Fuse / transpose / cast PyTorch-layout weights once, off the hot path.

    w1/w3: (d_ff, d_model), w2: (d_model, d_ff) (nn.Linear layout).
    """
    d_ff, d_model = w1.shape
    itemsize = jnp.dtype(compute_dtype).itemsize
    vmem_budget = _vmem_limit_bytes()
    weight_bytes = 3 * d_model * d_ff * itemsize

    # Resident path if (double-buffered) fused weights leave room for activations.
    if weight_bytes <= int(0.30 * vmem_budget):
        ff_tile = d_ff
    else:
        if ff_tile_target is None:
            # Bigger d_ff tiles -> fewer k-steps; allowed by the larger VMEM on
            # v5e/v6e, kept smaller on v7x's 64 MiB.
            ff_tile_target = 1024 if vmem_budget >= 96 * 1024 * 1024 else 512
        ff_tile = _pick_ff_tile(d_ff, ff_tile_target)

    n_k = d_ff // ff_tile
    # Fuse [W1^T | W3^T] per ff-tile so every k-block carries both branches.
    w1_t = w1.T.reshape(d_model, n_k, ff_tile)
    w3_t = w3.T.reshape(d_model, n_k, ff_tile)
    w13 = jnp.concatenate([w1_t, w3_t], axis=-1).reshape(d_model, 2 * d_ff)
    b13 = jnp.concatenate(
        [b1.reshape(n_k, ff_tile), b3.reshape(n_k, ff_tile)], axis=-1
    ).reshape(1, 2 * d_ff).astype(jnp.float32)

    return dict(
        w13=w13.astype(compute_dtype),
        b13=b13,
        w2t=w2.T.astype(compute_dtype),                  # (d_ff, d_model)
        b2=b2.reshape(1, d_model).astype(jnp.float32),
        d_model=d_model, d_ff=d_ff, ff_tile=ff_tile,
        compute_dtype=compute_dtype,
    )


def feedforward_pallas(x, params, *, tile_rows=512):
    """x: (..., d_model); params from prepare_feedforward_params."""
    d_model = params["d_model"]
    d_ff = params["d_ff"]
    ff_tile = params["ff_tile"]
    compute_dtype = params["compute_dtype"]
    resident = (ff_tile == d_ff)

    orig_shape = x.shape
    out_dtype = x.dtype
    x2d = x.reshape(-1, d_model)
    n_rows = x2d.shape[0]

    itemsize = jnp.dtype(compute_dtype).itemsize
    out_itemsize = jnp.dtype(out_dtype).itemsize
    vmem_budget = _vmem_limit_bytes()

    # Cap the row tile so double-buffered weights + f32 SwiGLU intermediates fit.
    w_tile_bytes = 2 * 3 * d_model * ff_tile * itemsize
    per_row_bytes = (2 * ff_tile * 4 + ff_tile * 4               # h (f32) + g (f32)
                     + 2 * d_model * itemsize                    # x, double-buffered
                     + 2 * d_model * out_itemsize                # out, double-buffered
                     + (0 if resident else d_model * 4))         # f32 accumulator
    avail = int(0.85 * vmem_budget) - w_tile_bytes - 4 * (2 * d_ff + d_model)
    tm_cap = (avail // per_row_bytes) // 8 * 8 if avail > 0 else 8
    tm_target = max(8, min(int(tile_rows), tm_cap))

    n_rows_p, tm = _choose_row_tiling(n_rows, tm_target)
    if n_rows_p != n_rows:
        x2d = jnp.pad(x2d, ((0, n_rows_p - n_rows), (0, 0)))
    n_row_tiles = n_rows_p // tm
    x_c = x2d.astype(compute_dtype)

    w13, b13, w2t, b2 = params["w13"], params["b13"], params["w2t"], params["b2"]

    weight_bytes = (w13.size + w2t.size) * itemsize
    cost = pl.CostEstimate(
        flops=6 * n_rows_p * d_model * d_ff,
        transcendentals=n_rows_p * d_ff,
        bytes_accessed=(x_c.size * itemsize
                        + weight_bytes * (1 if resident else n_row_tiles)
                        + (b13.size + b2.size) * 4
                        + n_rows_p * d_model * out_itemsize),
    )

    if resident:
        out = pl.pallas_call(
            functools.partial(_ffn_resident_kernel, d_ff=d_ff),
            out_shape=jax.ShapeDtypeStruct((n_rows_p, d_model), out_dtype),
            grid_spec=pltpu.PrefetchScalarGridSpec(
                num_scalar_prefetch=0,
                grid=(n_row_tiles,),
                in_specs=[
                    pl.BlockSpec((tm, d_model),       lambda i: (i, 0)),  # x rows
                    pl.BlockSpec((d_model, 2 * d_ff), lambda i: (0, 0)),  # [W1^T|W3^T]
                    pl.BlockSpec((1, 2 * d_ff),       lambda i: (0, 0)),  # [b1|b3]
                    pl.BlockSpec((d_ff, d_model),     lambda i: (0, 0)),  # W2^T
                    pl.BlockSpec((1, d_model),        lambda i: (0, 0)),  # b2
                ],
                out_specs=pl.BlockSpec((tm, d_model), lambda i: (i, 0)),
            ),
            compiler_params=pltpu.CompilerParams(
                dimension_semantics=("parallel",),
                vmem_limit_bytes=vmem_budget),
            cost_estimate=cost,
        )(x_c, w13, b13, w2t, b2)
    else:
        n_k = d_ff // ff_tile
        out = pl.pallas_call(
            functools.partial(_ffn_streamed_kernel, ff_tile=ff_tile),
            out_shape=jax.ShapeDtypeStruct((n_rows_p, d_model), out_dtype),
            grid_spec=pltpu.PrefetchScalarGridSpec(
                num_scalar_prefetch=0,
                grid=(n_row_tiles, n_k),
                in_specs=[
                    pl.BlockSpec((tm, d_model),          lambda i, k: (i, 0)),
                    pl.BlockSpec((d_model, 2 * ff_tile), lambda i, k: (0, k)),
                    pl.BlockSpec((1, 2 * ff_tile),       lambda i, k: (0, k)),
                    pl.BlockSpec((ff_tile, d_model),     lambda i, k: (k, 0)),
                    pl.BlockSpec((1, d_model),           lambda i, k: (0, 0)),
                ],
                out_specs=pl.BlockSpec((tm, d_model), lambda i, k: (i, 0)),
                scratch_shapes=[pltpu.VMEM((tm, d_model), jnp.float32)],
            ),
            compiler_params=pltpu.CompilerParams(
                dimension_semantics=("parallel", "arbitrary"),
                vmem_limit_bytes=vmem_budget),
            cost_estimate=cost,
        )(x_c, w13, b13, w2t, b2)

    if n_rows_p != n_rows:
        out = out[:n_rows]
    return out.reshape(orig_shape[:-1] + (d_model,))


# ---------------------------------------------------------------------------
# Demo / correctness check
# ---------------------------------------------------------------------------

def _init_linear(key, out_features, in_features, dtype=jnp.float32):
    """Match nn.Linear default init: U(-1/sqrt(in), 1/sqrt(in)) for W and b."""
    kw, kb = jax.random.split(key)
    bound = 1.0 / math.sqrt(in_features)
    w = jax.random.uniform(kw, (out_features, in_features), dtype,
                           minval=-bound, maxval=bound)
    b = jax.random.uniform(kb, (out_features,), dtype,
                           minval=-bound, maxval=bound)
    return w, b


if __name__ == "__main__":
    d_model = 256
    d_ff = 1024
    batch, seq = 2, 200        # n_rows = 400 -> exercises minimal-padding row tiling

    key = jax.random.PRNGKey(0)
    kx, k1, k2, k3 = jax.random.split(key, 4)

    x = jax.random.normal(kx, (batch, seq, d_model), jnp.float32)
    w1, b1 = _init_linear(k1, d_ff, d_model)     # Linear(d_model -> d_ff)
    w2, b2 = _init_linear(k2, d_model, d_ff)     # Linear(d_ff -> d_model)
    w3, b3 = _init_linear(k3, d_ff, d_model)     # Linear(d_model -> d_ff)

    # One-time weight fusion / cast (hoisted out of the per-call hot path).
    params = prepare_feedforward_params(w1, b1, w2, b2, w3, b3)

    out = feedforward_pallas(x, params)
    jax.block_until_ready(out)

    # Reference in plain JAX (f32); bf16 matmuls in the kernel => loose tolerance.
    h1 = x @ w1.T + b1
    h3 = x @ w3.T + b3
    ref = (jax.nn.silu(h1) * h3) @ w2.T + b2
    assert out.shape == (batch, seq, d_model)
    assert jnp.allclose(out, ref, atol=5e-2, rtol=5e-2), (
        float(jnp.max(jnp.abs(out - ref))))

    print("KERNEL_OK")
</pallas_src>

<mosaic_0001>
module attributes {stable_mosaic.version = 11 : i64} {
  func.func @_ffn_resident_kernel(%arg0: i32, %arg1: memref<200x256xbf16, #tpu.memory_space<vmem>>, %arg2: memref<256x2048xbf16, #tpu.memory_space<vmem>>, %arg3: memref<1x2048xf32, #tpu.memory_space<vmem>>, %arg4: memref<1024x256xbf16, #tpu.memory_space<vmem>>, %arg5: memref<1x256xf32, #tpu.memory_space<vmem>>, %arg6: memref<200x256xf32, #tpu.memory_space<vmem>>) attributes {dimension_semantics = [#tpu.dimension_semantics<parallel>], iteration_bounds = array<i64: 2>, scalar_prefetch = 0 : i64, scratch_operands = 0 : i64, tpu.core_type = #tpu.core_type<tc>, window_params = [{transform_indices = @transform_0, window_bounds = array<i64: 200, 256>}, {pipeline_mode = #tpu.pipeline_mode<synchronous>, transform_indices = @transform_1, window_bounds = array<i64: 256, 2048>}, {pipeline_mode = #tpu.pipeline_mode<synchronous>, transform_indices = @transform_2, window_bounds = array<i64: 1, 2048>}, {pipeline_mode = #tpu.pipeline_mode<synchronous>, transform_indices = @transform_3, window_bounds = array<i64: 1024, 256>}, {pipeline_mode = #tpu.pipeline_mode<synchronous>, transform_indices = @transform_4, window_bounds = array<i64: 1, 256>}, {transform_indices = @transform_5, window_bounds = array<i64: 200, 256>}]} {
    %c0 = arith.constant 0 : index
    %c0_0 = arith.constant 0 : index
    %0 = vector.load %arg1[%c0, %c0_0] : memref<200x256xbf16, #tpu.memory_space<vmem>>, vector<200x256xbf16>
    %c0_1 = arith.constant 0 : index
    %c0_2 = arith.constant 0 : index
    %1 = vector.load %arg2[%c0_1, %c0_2] : memref<256x2048xbf16, #tpu.memory_space<vmem>>, vector<256x2048xbf16>
    %cst = arith.constant dense<0.000000e+00> : vector<200x2048xf32>
    %2 = tpu.matmul %0, %1, %cst {dimension_numbers = #tpu.dot_dimension_numbers<[1], [0], [0], [1], [0, 0, 1, 1], [], []>} : vector<200x256xbf16>, vector<256x2048xbf16>, vector<200x2048xf32> -> vector<200x2048xf32>
    %c0_3 = arith.constant 0 : index
    %c0_4 = arith.constant 0 : index
    %3 = vector.load %arg3[%c0_3, %c0_4] : memref<1x2048xf32, #tpu.memory_space<vmem>>, vector<1x2048xf32>
    %4 = vector.broadcast %3 : vector<1x2048xf32> to vector<200x2048xf32>
    %5 = arith.addf %2, %4 : vector<200x2048xf32>
    %6 = vector.extract_strided_slice %5 {offsets = [0, 0], sizes = [200, 1024], strides = [1, 1]} : vector<200x2048xf32> to vector<200x1024xf32>
    %7 = vector.extract_strided_slice %5 {offsets = [0, 1024], sizes = [200, 1024], strides = [1, 1]} : vector<200x2048xf32> to vector<200x1024xf32>
    %8 = arith.negf %6 : vector<200x1024xf32>
    %9 = math.exp %8 : vector<200x1024xf32>
    %cst_5 = arith.constant 1.000000e+00 : f32
    %10 = vector.broadcast %cst_5 : f32 to vector<200x1024xf32>
    %11 = arith.addf %10, %9 : vector<200x1024xf32>
    %12 = arith.divf %10, %11 : vector<200x1024xf32>
    %13 = arith.mulf %6, %12 : vector<200x1024xf32>
    %14 = arith.mulf %13, %7 : vector<200x1024xf32>
    %15 = arith.truncf %14 : vector<200x1024xf32> to vector<200x1024xbf16>
    %c0_6 = arith.constant 0 : index
    %c0_7 = arith.constant 0 : index
    %16 = vector.load %arg4[%c0_6, %c0_7] : memref<1024x256xbf16, #tpu.memory_space<vmem>>, vector<1024x256xbf16>
    %cst_8 = arith.constant dense<0.000000e+00> : vector<200x256xf32>
    %17 = tpu.matmul %15, %16, %cst_8 {dimension_numbers = #tpu.dot_dimension_numbers<[1], [0], [0], [1], [0, 0, 1, 1], [], []>} : vector<200x1024xbf16>, vector<1024x256xbf16>, vector<200x256xf32> -> vector<200x256xf32>
    %c0_9 = arith.constant 0 : index
    %c0_10 = arith.constant 0 : index
    %18 = vector.load %arg5[%c0_9, %c0_10] : memref<1x256xf32, #tpu.memory_space<vmem>>, vector<1x256xf32>
    %19 = vector.broadcast %18 : vector<1x256xf32> to vector<200x256xf32>
    %20 = arith.addf %17, %19 : vector<200x256xf32>
    %c0_11 = arith.constant 0 : index
    %c0_12 = arith.constant 0 : index
    %21 = vector.load %arg6[%c0_11, %c0_12] : memref<200x256xf32, #tpu.memory_space<vmem>>, vector<200x256xf32>
    tpu.vector_store %arg6[%c0_11, %c0_12], %20 {strides = array<i32>} : memref<200x256xf32, #tpu.memory_space<vmem>>, vector<200x256xf32>,
    return
  }
  func.func @transform_0(%arg0: i32) -> (i32, i32) {
    %c0_i32 = arith.constant 0 : i32
    %c0_i32_0 = arith.constant 0 : i32
    return %arg0, %c0_i32 : i32, i32
  }
  func.func @transform_1(%arg0: i32) -> (i32, i32) {
    %c0_i32 = arith.constant 0 : i32
    %c0_i32_0 = arith.constant 0 : i32
    %c0_i32_1 = arith.constant 0 : i32
    return %c0_i32, %c0_i32_0 : i32, i32
  }
  func.func @transform_2(%arg0: i32) -> (i32, i32) {
    %c0_i32 = arith.constant 0 : i32
    %c0_i32_0 = arith.constant 0 : i32
    %c0_i32_1 = arith.constant 0 : i32
    return %c0_i32, %c0_i32_0 : i32, i32
  }
  func.func @transform_3(%arg0: i32) -> (i32, i32) {
    %c0_i32 = arith.constant 0 : i32
    %c0_i32_0 = arith.constant 0 : i32
    %c0_i32_1 = arith.constant 0 : i32
    return %c0_i32, %c0_i32_0 : i32, i32
  }
  func.func @transform_4(%arg0: i32) -> (i32, i32) {
    %c0_i32 = arith.constant 0 : i32
    %c0_i32_0 = arith.constant 0 : i32
    %c0_i32_1 = arith.constant 0 : i32
    return %c0_i32, %c0_i32_0 : i32, i32
  }
  func.func @transform_5(%arg0: i32) -> (i32, i32) {
    %c0_i32 = arith.constant 0 : i32
    %c0_i32_0 = arith.constant 0 : i32
    return %arg0, %c0_i32 : i32, i32
  }
}

</mosaic_0001>

<llo_original>
// kernel: tpu_custom_call.1
$region0: #{tpu_custom_call.1}
  #allocation0 [shape = 'u32[]', space=smem, size = 0x4, offset = 0x4, fixed_abs, tag = 'smem constant byte address 0x4 - core index']
  #allocation1 [shape = 'u32[72,128]{1,0:T(1,128)}', space=vmem, size = 0x9000, scoped, tag = 'internal scratch']
  %s0 = inlined_call_operand.hbm [shape: bf16[400,256], index: 0, kind: input, shape index: {}]
  %s1 = inlined_call_operand.hbm [shape: bf16[256,2048], index: 1, kind: input, shape index: {}]
  %s2 = inlined_call_operand.hbm [shape: f32[1,2048], index: 2, kind: input, shape index: {}]
  %s3 = inlined_call_operand.hbm [shape: bf16[1024,256], index: 3, kind: input, shape index: {}]
  %s4 = inlined_call_operand.vmem [shape: f32[1,256], index: 4, kind: input, shape index: {}]
  %s5 = inlined_call_operand.hbm [shape: f32[400,256], index: 5, kind: output, shape index: {}]
  %s6 = sld [smem:[#allocation0]]
  $region69: #{tpu_custom_call.1} parent=0
    _
  %s8 = ssub.s32 1, %s6
  %s9 = scalar_select 0, %s8, %s6
  $region1: #{tpu_custom_call.1} parent=0
    #allocation2 [shape = 'u8[204800]{0}', space=vmem, size = 0x32000, scoped, tag = 'input window, operand 0']
    #allocation3 [shape = 's32[2]{0}', space=sflag, size = 0x8, scoped, tag = 'scoped memory for tpu_custom_call.1']
    #allocation4 [shape = 's32[2]{0}', space=sflag, size = 0x8, scoped, tag = 'scoped memory for tpu_custom_call.1']
    #allocation5 [shape = 'u8[1048576]{0}', space=vmem, size = 0x100000, scoped, tag = 'input window, operand 1, single buffered']
    #allocation6 [shape = 's32[1]{0}', space=sflag, size = 0x4, scoped, tag = 'scoped memory for tpu_custom_call.1']
    #allocation7 [shape = 'u8[8192]{0}', space=vmem, size = 0x2000, scoped, tag = 'input window, operand 2, single buffered']
    #allocation8 [shape = 'u8[524288]{0}', space=vmem, size = 0x80000, scoped, tag = 'input window, operand 3, single buffered']
    #allocation9 [shape = 's32[1]{0}', space=sflag, size = 0x4, scoped, tag = 'scoped memory for tpu_custom_call.1']
    #allocation10 [shape = 'u8[409600]{0}', space=vmem, size = 0x64000, scoped, tag = 'output window, operand 0']
    %10 = vsyncpa [#allocation3], 0
    %s11 = scalar_lea.sflag [#allocation3], 1
    %12 = vsyncpa %s11, 0
    %13 = vsyncpa [#allocation6], 0
    %14 = vsyncpa [#allocation9], 0
    %15 = vsyncpa [#allocation4], 0
    %s16 = scalar_lea.sflag [#allocation4], 1
    %17 = vsyncpa %s16, 0
    loop: start=0, step=1, limit=4
    $region2: #{tpu_custom_call.1} parent=1 // loop_pre_header
      _
    $region3: #{tpu_custom_call.1} parent=1 // loop_header
      %s19 = sphi 0, %s23
      %p20 = scmp.ge.s32.totalorder %s19, 4
      %s29 = sphi 0, %s31
      %s32 = sphi 0, %s29
      %s33 = sphi 0, %s32
      %s49 = sphi 0, %s33
      %s53 = sphi 0, %s53
      %s55 = sphi 0, %s53
      %s56 = sphi 0, %s55
      %s70 = sphi 0, %s56
      %s74 = sphi 0, %s74
      %s76 = sphi 0, %s74
      %s77 = sphi 0, %s76
      %s91 = sphi 0, %s77
      %s95 = sphi 0, %s95
      %s97 = sphi 0, %s95
      %s98 = sphi 0, %s97
      %s112 = sphi 0, %s98
      %s116 = sphi 0, %s116
      %s118 = sphi 0, %s116
      %s119 = sphi 0, %s118
      %s133 = sphi 0, %s119
      %s139 = sphi 0, %s141
      %s142 = sphi 0, %s139
      %s143 = sphi 0, %s142
      %s159 = sphi 0, %s143
    $region4: #{tpu_custom_call.1} parent=1 // loop_header_branch
      %22 = sbr.rel (%p20) target = $region8
    $region5: #{tpu_custom_call.1} parent=1 // loop_body
      %s24 = ssub.s32 %s19, 1
      %s25 = ssub.s32 %s19, 2
      %s26 = sadd.s32 %s19, 1
      %s27 = ssub.s32 %s19, %s26
      %p28 = scmp.eq.s32.totalorder %s27, 0
      %s30 = sadd.s32 %s29, 1
      %s31 = scalar_select %p28, %s29, %s30
      %p34 = pneg %p28
      %p35 = scmp.eq.s32.totalorder %s19, 1
      %p36 = por %p34, %p35
      %p37 = scmp.ne.s32.totalorder %s29, %s32
      %p38 = scmp.eq.s32.totalorder %s19, 0
      %p39 = por %p37, %p38
      %p40 = scmp.ne.s32.totalorder %s29, %s32
      %p41 = scmp.eq.s32.totalorder %s24, 1
      %p42 = por %p40, %p41
      %p43 = scmp.ne.s32.totalorder %s32, %s33
      %p44 = scmp.eq.s32.totalorder %s24, 0
      %p45 = por %p43, %p44
      %p46 = scmp.ne.s32.totalorder %s32, %s33
      %p47 = scmp.eq.s32.totalorder %s25, 1
      %p48 = por %p46, %p47
      %p50 = scmp.ne.s32.totalorder %s33, %s49
      %p51 = scmp.eq.s32.totalorder %s25, 0
      %p52 = por %p50, %p51
      %s54 = sadd.s32 %s53, 1
      %p57 = scmp.eq.s32.totalorder %s19, 1
      %p58 = scmp.ne.s32.totalorder %s53, %s55
      %p59 = scmp.eq.s32.totalorder %s19, 0
      %p60 = por %p58, %p59
      %p61 = scmp.ne.s32.totalorder %s53, %s55
      %p62 = scmp.eq.s32.totalorder %s24, 1
      %p63 = por %p61, %p62
      %p64 = scmp.ne.s32.totalorder %s55, %s56
      %p65 = scmp.eq.s32.totalorder %s24, 0
      %p66 = por %p64, %p65
      %p67 = scmp.ne.s32.totalorder %s55, %s56
      %p68 = scmp.eq.s32.totalorder %s25, 1
      %p69 = por %p67, %p68
      %p71 = scmp.ne.s32.totalorder %s56, %s70
      %p72 = scmp.eq.s32.totalorder %s25, 0
      %p73 = por %p71, %p72
      %s75 = sadd.s32 %s74, 1
      %p78 = scmp.eq.s32.totalorder %s19, 1
      %p79 = scmp.ne.s32.totalorder %s74, %s76
      %p80 = scmp.eq.s32.totalorder %s19, 0
      %p81 = por %p79, %p80
      %p82 = scmp.ne.s32.totalorder %s74, %s76
      %p83 = scmp.eq.s32.totalorder %s24, 1
      %p84 = por %p82, %p83
      %p85 = scmp.ne.s32.totalorder %s76, %s77
      %p86 = scmp.eq.s32.totalorder %s24, 0
      %p87 = por %p85, %p86
      %p88 = scmp.ne.s32.totalorder %s76, %s77
      %p89 = scmp.eq.s32.totalorder %s25, 1
      %p90 = por %p88, %p89
      %p92 = scmp.ne.s32.totalorder %s77, %s91
      %p93 = scmp.eq.s32.totalorder %s25, 0
      %p94 = por %p92, %p93
      %s96 = sadd.s32 %s95, 1
      %p99 = scmp.eq.s32.totalorder %s19, 1
      %p100 = scmp.ne.s32.totalorder %s95, %s97
      %p101 = scmp.eq.s32.totalorder %s19, 0
      %p102 = por %p100, %p101
      %p103 = scmp.ne.s32.totalorder %s95, %s97
      %p104 = scmp.eq.s32.totalorder %s24, 1
      %p105 = por %p103, %p104
      %p106 = scmp.ne.s32.totalorder %s97, %s98
      %p107 = scmp.eq.s32.totalorder %s24, 0
      %p108 = por %p106, %p107
      %p109 = scmp.ne.s32.totalorder %s97, %s98
      %p110 = scmp.eq.s32.totalorder %s25, 1
      %p111 = por %p109, %p110
      %p113 = scmp.ne.s32.totalorder %s98, %s112
      %p114 = scmp.eq.s32.totalorder %s25, 0
      %p115 = por %p113, %p114
      %s117 = sadd.s32 %s116, 1
      %p120 = scmp.eq.s32.totalorder %s19, 1
      %p121 = scmp.ne.s32.totalorder %s116, %s118
      %p122 = scmp.eq.s32.totalorder %s19, 0
      %p123 = por %p121, %p122
      %p124 = scmp.ne.s32.totalorder %s116, %s118
      %p125 = scmp.eq.s32.totalorder %s24, 1
      %p126 = por %p124, %p125
      %p127 = scmp.ne.s32.totalorder %s118, %s119
      %p128 = scmp.eq.s32.totalorder %s24, 0
      %p129 = por %p127, %p128
      %p130 = scmp.ne.s32.totalorder %s118, %s119
      %p131 = scmp.eq.s32.totalorder %s25, 1
      %p132 = por %p130, %p131
      %p134 = scmp.ne.s32.totalorder %s119, %s133
      %p135 = scmp.eq.s32.totalorder %s25, 0
      %p136 = por %p134, %p135
      %s137 = ssub.s32 %s19, %s26
      %p138 = scmp.eq.s32.totalorder %s137, 0
      %s140 = sadd.s32 %s139, 1
      %s141 = scalar_select %p138, %s139, %s140
      %p144 = pneg %p138
      %p145 = scmp.eq.s32.totalorder %s19, 1
      %p146 = por %p144, %p145
      %p147 = scmp.ne.s32.totalorder %s139, %s142
      %p148 = scmp.eq.s32.totalorder %s19, 0
      %p149 = por %p147, %p148
      %p150 = scmp.ne.s32.totalorder %s139, %s142
      %p151 = scmp.eq.s32.totalorder %s24, 1
      %p152 = por %p150, %p151
      %p153 = scmp.ne.s32.totalorder %s142, %s143
      %p154 = scmp.eq.s32.totalorder %s24, 0
      %p155 = por %p153, %p154
      %p156 = scmp.ne.s32.totalorder %s142, %s143
      %p157 = scmp.eq.s32.totalorder %s25, 1
      %p158 = por %p156, %p157
      %p160 = scmp.ne.s32.totalorder %s143, %s159
      %p161 = scmp.eq.s32.totalorder %s25, 0
      %p162 = por %p160, %p161
      %p163 = scmp.le.s32.totalorder 1, %s19
      %p164 = scmp.lt.s32.totalorder %s19, 3
      %p165 = pnand %p163, %p164
      %p166 = pneg %p165
      // Predicated region
      $region9: #{tpu_custom_call.1} parent=5 // pred_check
        _
      $region10: #{tpu_custom_call.1} parent=5 // pred_check_branch
        %168 = sbr.rel (%p165) target = $region12
      $region11: #{tpu_custom_call.1} parent=5 // pred_region
        %s169 = ssub.s32 %s19, 1
        // Predicated region
        $region13: #{tpu_custom_call.1} parent=11 // pred_check
          %p170 = pneg %p66
        $region14: #{tpu_custom_call.1} parent=11 // pred_check_branch
          %172 = sbr.rel (%p170) target = $region16
        $region15: #{tpu_custom_call.1} parent=11 // pred_region
          %174 = vsyncadd [#allocation6], 0
          %s175 = sshll.u32 %s1, 4
          %s176 = int_to_ptr.hbm [resolvable:$true] %s175
          %s177 = sshll.u32 [#allocation5], 4
          %s178 = int_to_ptr.vmem [resolvable:$true] %s177
          %183 = dma.hbm_to_vmem [thread:$0]  %s176, 32768, %s178, [#allocation6], 1024, 1024, 64
        $region16: #{tpu_custom_call.1} parent=11 // pred_fallthru
          _
        // Predicated region
        $region17: #{tpu_custom_call.1} parent=11 // pred_check
          %p184 = pneg %p87
        $region18: #{tpu_custom_call.1} parent=11 // pred_check_branch
          %186 = sbr.rel (%p184) target = $region20
        $region19: #{tpu_custom_call.1} parent=11 // pred_region
          %188 = vsyncadd [#allocation6], 0
          %s190 = sshll.u32 %s2, 4
          %s191 = int_to_ptr.hbm [resolvable:$true] %s190
          %s192 = sshll.u32 [#allocation7], 4
          %s193 = int_to_ptr.vmem [resolvable:$true] %s192
          %195 = dma.hbm_to_vmem [thread:$0]  %s191, 256, %s193, [#allocation6]
        $region20: #{tpu_custom_call.1} parent=11 // pred_fallthru
          _
        // Predicated region
        $region21: #{tpu_custom_call.1} parent=11 // pred_check
          %p196 = pneg %p108
        $region22: #{tpu_custom_call.1} parent=11 // pred_check_branch
          %198 = sbr.rel (%p196) target = $region24
        $region23: #{tpu_custom_call.1} parent=11 // pred_region
          %200 = vsyncadd [#allocation9], 0
          %s201 = sshll.u32 %s3, 4
          %s202 = int_to_ptr.hbm [resolvable:$true] %s201
          %s203 = sshll.u32 [#allocation8], 4
          %s204 = int_to_ptr.vmem [resolvable:$true] %s203
          %209 = dma.hbm_to_vmem [thread:$0]  %s202, 16384, %s204, [#allocation9], 128, 128, 8
        $region24: #{tpu_custom_call.1} parent=11 // pred_fallthru
          _
        // Predicated region
        $region25: #{tpu_custom_call.1} parent=11 // pred_check
          %p210 = pneg %p129
        $region26: #{tpu_custom_call.1} parent=11 // pred_check_branch
          %212 = sbr.rel (%p210) target = $region28
        $region27: #{tpu_custom_call.1} parent=11 // pred_region
          _
        $region28: #{tpu_custom_call.1} parent=11 // pred_fallthru
          _
      $region12: #{tpu_custom_call.1} parent=5 // pred_fallthru
        _
      %p213 = scmp.lt.s32.totalorder %s19, 2
      // Predicated region
      $region29: #{tpu_custom_call.1} parent=5 // pred_check
        %p214 = pneg %p213
      $region30: #{tpu_custom_call.1} parent=5 // pred_check_branch
        %216 = sbr.rel (%p214) target = $region32
      $region31: #{tpu_custom_call.1} parent=5 // pred_region
        // Predicated region
        $region33: #{tpu_custom_call.1} parent=31 // pred_check
          %p217 = pneg %p39
        $region34: #{tpu_custom_call.1} parent=31 // pred_check_branch
          %219 = sbr.rel (%p217) target = $region36
        $region35: #{tpu_custom_call.1} parent=31 // pred_region
          %s220 = sand.u32 %s29, 1
          %s221 = scalar_lea.sflag [#allocation3], %s220
          %s222 = sand.u32 %s29, 1
          %s223 = smul.addr %s222, 200
          %s224 = scalar_lea.vmem [#allocation2], %s223
          %s225 = smul.u32 25, %s19
          %227 = vsyncadd %s221, 0
          %s228 = smul.addr %s225, 2
          %s229 = smul.addr %s228, 4
          %s230 = scalar_lea.hbm %s0, %s229
          %s231 = sshll.u32 %s230, 4
          %s232 = int_to_ptr.hbm [resolvable:$true] %s231
          %s233 = sshll.u32 %s224, 4
          %s234 = int_to_ptr.vmem [resolvable:$true] %s233
          %239 = dma.hbm_to_vmem [thread:$0]  %s232, 3200, %s234, %s221, 128, 128, 8
        $region36: #{tpu_custom_call.1} parent=31 // pred_fallthru
          _
      $region32: #{tpu_custom_call.1} parent=5 // pred_fallthru
        _
      %p240 = scmp.le.s32.totalorder 1, %s19
      %p241 = scmp.lt.s32.totalorder %s19, 3
      %p242 = pnand %p240, %p241
      %p243 = pneg %p242
      // Predicated region
      $region37: #{tpu_custom_call.1} parent=5 // pred_check
        _
      $region38: #{tpu_custom_call.1} parent=5 // pred_check_branch
        %245 = sbr.rel (%p242) target = $region40
      $region39: #{tpu_custom_call.1} parent=5 // pred_region
        %s246 = ssub.s32 %s19, 1
        %s247 = sand.u32 %s32, 1
        %s248 = scalar_lea.sflag [#allocation3], %s247
        %s249 = sand.u32 %s32, 1
        %s250 = smul.addr %s249, 200
        %s251 = scalar_lea.vmem [#allocation2], %s250
        // Predicated region
        $region41: #{tpu_custom_call.1} parent=39 // pred_check
          %p252 = pneg %p45
        $region42: #{tpu_custom_call.1} parent=39 // pred_check_branch
          %254 = sbr.rel (%p252) target = $region44
        $region43: #{tpu_custom_call.1} parent=39 // pred_region
          %256 = dma.done %s248, 3200
        $region44: #{tpu_custom_call.1} parent=39 // pred_fallthru
          _
        // Predicated region
        $region45: #{tpu_custom_call.1} parent=39 // pred_check
          %p257 = pneg %p66
        $region46: #{tpu_custom_call.1} parent=39 // pred_check_branch
          %259 = sbr.rel (%p257) target = $region48
        $region47: #{tpu_custom_call.1} parent=39 // pred_region
          %261 = dma.done [#allocation6], 32768
        $region48: #{tpu_custom_call.1} parent=39 // pred_fallthru
          _
        // Predicated region
        $region49: #{tpu_custom_call.1} parent=39 // pred_check
          %p262 = pneg %p87
        $region50: #{tpu_custom_call.1} parent=39 // pred_check_branch
          %264 = sbr.rel (%p262) target = $region52
        $region51: #{tpu_custom_call.1} parent=39 // pred_region
          %266 = dma.done [#allocation6], 256
        $region52: #{tpu_custom_call.1} parent=39 // pred_fallthru
          _
        // Predicated region
        $region53: #{tpu_custom_call.1} parent=39 // pred_check
          %p267 = pneg %p108
        $region54: #{tpu_custom_call.1} parent=39 // pred_check_branch
          %269 = sbr.rel (%p267) target = $region56
        $region55: #{tpu_custom_call.1} parent=39 // pred_region
          %271 = dma.done [#allocation9], 16384
        $region56: #{tpu_custom_call.1} parent=39 // pred_fallthru
          _
        %s272 = sand.u32 %s32, 1
        %s273 = scalar_lea.sflag [#allocation3], %s272
        %s274 = sand.u32 %s32, 1
        %s275 = smul.addr %s274, 200
        %s276 = scalar_lea.vmem [#allocation2], %s275
        %p277 = pneg %p45
        %p278 = pneg %p42
        %p279 = pneg %p66
        %p280 = pneg %p63
        %p281 = pneg %p87
        %p282 = pneg %p84
        %p283 = pneg %p108
        %p284 = pneg %p105
        %p285 = pneg %p129
        %p286 = pneg %p126
        %p287 = pneg %p155
        %p288 = pneg %p152
        %s289 = sand.u32 %s142, 1
        %s290 = scalar_lea.sflag [#allocation4], %s289
        %s291 = sand.u32 %s142, 1
        %s292 = smul.addr %s291, 400
        %s293 = scalar_lea.vmem [#allocation10], %s292
        %s294 = smul.u32 25, %s24
        %s295 = smul.u32 25, %s24
        %v296 = vld [vmem:[%s251] sm:$0xff]
        %v297 = vld [vmem:[%s251 + $0x8] sm:$0xff]
        %v298 = vld [vmem:[%s251 + $0x10] sm:$0xff]
        %v299 = vld [vmem:[%s251 + $0x18] sm:$0xff]
        %v300 = vld [vmem:[%s251 + $0x20] sm:$0xff]
        %v301 = vld [vmem:[%s251 + $0x28] sm:$0xff]
        %v302 = vld [vmem:[%s251 + $0x30] sm:$0xff]
        %v303 = vld [vmem:[%s251 + $0x38] sm:$0xff]
        %v304 = vld [vmem:[%s251 + $0x40] sm:$0xff]
        %v305 = vld [vmem:[%s251 + $0x48] sm:$0xff]
        %v306 = vld [vmem:[%s251 + $0x50] sm:$0xff]
        %v307 = vld [vmem:[%s251 + $0x58] sm:$0xff]
        %v308 = vld [vmem:[%s251 + $0x60] sm:$0xff]
        %v309 = vld [vmem:[%s251 + $0x68] sm:$0xff]
        %v310 = vld [vmem:[%s251 + $0x70] sm:$0xff]
        %v311 = vld [vmem:[%s251 + $0x78] sm:$0xff]
        %v312 = vld [vmem:[%s251 + $0x80] sm:$0xff]
        %v313 = vld [vmem:[%s251 + $0x88] sm:$0xff]
        %v314 = vld [vmem:[%s251 + $0x90] sm:$0xff]
        %v315 = vld [vmem:[%s251 + $0x98] sm:$0xff]
        %v316 = vld [vmem:[%s251 + $0xa0] sm:$0xff]
        %v317 = vld [vmem:[%s251 + $0xa8] sm:$0xff]
        %v318 = vld [vmem:[%s251 + $0xb0] sm:$0xff]
        %v319 = vld [vmem:[%s251 + $0xb8] sm:$0xff]
        %v320 = vld [vmem:[%s251 + $0xc0] sm:$0xff]
        %v321 = vld [vmem:[#allocation5] sm:$0xff]
        %v322 = vld [vmem:[#allocation5 + $0x8] sm:$0xff]
        %v323 = vld [vmem:[#allocation5 + $0x10] sm:$0xff]
        %v324 = vld [vmem:[#allocation5 + $0x18] sm:$0xff]
        %v325 = vld [vmem:[#allocation5 + $0x20] sm:$0xff]
        %v326 = vld [vmem:[#allocation5 + $0x28] sm:$0xff]
        %v327 = vld [vmem:[#allocation5 + $0x30] sm:$0xff]
        %v328 = vld [vmem:[#allocation5 + $0x38] sm:$0xff]
        %v329 = vld [vmem:[#allocation5 + $0x40] sm:$0xff]
        %v330 = vld [vmem:[#allocation5 + $0x48] sm:$0xff]
        %v331 = vld [vmem:[#allocation5 + $0x50] sm:$0xff]
        %v332 = vld [vmem:[#allocation5 + $0x58] sm:$0xff]
        %v333 = vld [vmem:[#allocation5 + $0x60] sm:$0xff]
        %v334 = vld [vmem:[#allocation5 + $0x68] sm:$0xff]
        %v335 = vld [vmem:[#allocation5 + $0x70] sm:$0xff]
        %v336 = vld [vmem:[#allocation5 + $0x78] sm:$0xff]
        %v337 = vld [vmem:[#allocation5 + $0x80] sm:$0xff]
        %v338 = vld [vmem:[#allocation5 + $0x88] sm:$0xff]
        %v339 = vld [vmem:[#allocation5 + $0x90] sm:$0xff]
        %v340 = vld [vmem:[#allocation5 + $0x98] sm:$0xff]
        %v341 = vld [vmem:[#allocation5 + $0xa0] sm:$0xff]
        %v342 = vld [vmem:[#allocation5 + $0xa8] sm:$0xff]
        %v343 = vld [vmem:[#allocation5 + $0xb0] sm:$0xff]
        %v344 = vld [vmem:[#allocation5 + $0xb8] sm:$0xff]
        %v345 = vld [vmem:[#allocation5 + $0xc0] sm:$0xff]
        %v346 = vld [vmem:[#allocation5 + $0xc8] sm:$0xff]
        %v347 = vld [vmem:[#allocation5 + $0xd0] sm:$0xff]
        %v348 = vld [vmem:[#allocation5 + $0xd8] sm:$0xff]
        %v349 = vld [vmem:[#allocation5 + $0xe0] sm:$0xff]
        %v350 = vld [vmem:[#allocation5 + $0xe8] sm:$0xff]
        %v351 = vld [vmem:[#allocation5 + $0xf0] sm:$0xff]
        %v352 = vld [vmem:[#allocation5 + $0xf8] sm:$0xff]
        %v353 = vld [vmem:[#allocation5 + $0x100] sm:$0xff]
        %v354 = vld [vmem:[#allocation5 + $0x108] sm:$0xff]
        %v355 = vld [vmem:[#allocation5 + $0x110] sm:$0xff]
        %v356 = vld [vmem:[#allocation5 + $0x118] sm:$0xff]
        %v357 = vld [vmem:[#allocation5 + $0x120] sm:$0xff]
        %v358 = vld [vmem:[#allocation5 + $0x128] sm:$0xff]
        %v359 = vld [vmem:[#allocation5 + $0x130] sm:$0xff]
        %v360 = vld [vmem:[#allocation5 + $0x138] sm:$0xff]
        %v361 = vld [vmem:[#allocation5 + $0x140] sm:$0xff]
        %v362 = vld [vmem:[#allocation5 + $0x148] sm:$0xff]
        %v363 = vld [vmem:[#allocation5 + $0x150] sm:$0xff]
        %v364 = vld [vmem:[#allocation5 + $0x158] sm:$0xff]
        %v365 = vld [vmem:[#allocation5 + $0x160] sm:$0xff]
        %v366 = vld [vmem:[#allocation5 + $0x168] sm:$0xff]
        %v367 = vld [vmem:[#allocation5 + $0x170] sm:$0xff]
        %v368 = vld [vmem:[#allocation5 + $0x178] sm:$0xff]
        %v369 = vld [vmem:[#allocation5 + $0x180] sm:$0xff]
        %v370 = vld [vmem:[#allocation5 + $0x188] sm:$0xff]
        %v371 = vld [vmem:[#allocation5 + $0x190] sm:$0xff]
        %v372 = vld [vmem:[#allocation5 + $0x198] sm:$0xff]
        %v373 = vld [vmem:[#allocation5 + $0x1a0] sm:$0xff]
        %v374 = vld [vmem:[#allocation5 + $0x1a8] sm:$0xff]
        %v375 = vld [vmem:[#allocation5 + $0x1b0] sm:$0xff]
        %v376 = vld [vmem:[#allocation5 + $0x1b8] sm:$0xff]
        %v377 = vld [vmem:[#allocation5 + $0x1c0] sm:$0xff]
        %v378 = vld [vmem:[#allocation5 + $0x1c8] sm:$0xff]
        %v379 = vld [vmem:[#allocation5 + $0x1d0] sm:$0xff]
        %v380 = vld [vmem:[#allocation5 + $0x1d8] sm:$0xff]
        %v381 = vld [vmem:[#allocation5 + $0x1e0] sm:$0xff]
        %v382 = vld [vmem:[#allocation5 + $0x1e8] sm:$0xff]
        %v383 = vld [vmem:[#allocation5 + $0x1f0] sm:$0xff]
        %v384 = vld [vmem:[#allocation5 + $0x1f8] sm:$0xff]
        %v385 = vld [vmem:[#allocation5 + $0x200] sm:$0xff]
        %v386 = vld [vmem:[#allocation5 + $0x208] sm:$0xff]
        %v387 = vld [vmem:[#allocation5 + $0x210] sm:$0xff]
        %v388 = vld [vmem:[#allocation5 + $0x218] sm:$0xff]
        %v389 = vld [vmem:[#allocation5 + $0x220] sm:$0xff]
        %v390 = vld [vmem:[#allocation5 + $0x228] sm:$0xff]
        %v391 = vld [vmem:[#allocation5 + $0x230] sm:$0xff]
        %v392 = vld [vmem:[#allocation5 + $0x238] sm:$0xff]
        %v393 = vld [vmem:[#allocation5 + $0x240] sm:$0xff]
        %v394 = vld [vmem:[#allocation5 + $0x248] sm:$0xff]
        %v395 = vld [vmem:[#allocation5 + $0x250] sm:$0xff]
        %v396 = vld [vmem:[#allocation5 + $0x258] sm:$0xff]
        %v397 = vld [vmem:[#allocation5 + $0x260] sm:$0xff]
        %v398 = vld [vmem:[#allocation5 + $0x268] sm:$0xff]
        %v399 = vld [vmem:[#allocation5 + $0x270] sm:$0xff]
        %v400 = vld [vmem:[#allocation5 + $0x278] sm:$0xff]
        %v401 = vld [vmem:[#allocation5 + $0x280] sm:$0xff]
        %v402 = vld [vmem:[#allocation5 + $0x288] sm:$0xff]
        %v403 = vld [vmem:[#allocation5 + $0x290] sm:$0xff]
        %v404 = vld [vmem:[#allocation5 + $0x298] sm:$0xff]
        %v405 = vld [vmem:[#allocation5 + $0x2a0] sm:$0xff]
        %v406 = vld [vmem:[#allocation5 + $0x2a8] sm:$0xff]
        %v407 = vld [vmem:[#allocation5 + $0x2b0] sm:$0xff]
        %v408 = vld [vmem:[#allocation5 + $0x2b8] sm:$0xff]
        %v409 = vld [vmem:[#allocation5 + $0x2c0] sm:$0xff]
        %v410 = vld [vmem:[#allocation5 + $0x2c8] sm:$0xff]
        %v411 = vld [vmem:[#allocation5 + $0x2d0] sm:$0xff]
        %v412 = vld [vmem:[#allocation5 + $0x2d8] sm:$0xff]
        %v413 = vld [vmem:[#allocation5 + $0x2e0] sm:$0xff]
        %v414 = vld [vmem:[#allocation5 + $0x2e8] sm:$0xff]
        %v415 = vld [vmem:[#allocation5 + $0x2f0] sm:$0xff]
        %v416 = vld [vmem:[#allocation5 + $0x2f8] sm:$0xff]
        %v417 = vld [vmem:[#allocation5 + $0x300] sm:$0xff]
        %v418 = vld [vmem:[#allocation5 + $0x308] sm:$0xff]
        %v419 = vld [vmem:[#allocation5 + $0x310] sm:$0xff]
        %v420 = vld [vmem:[#allocation5 + $0x318] sm:$0xff]
        %v421 = vld [vmem:[#allocation5 + $0x320] sm:$0xff]
        %v422 = vld [vmem:[#allocation5 + $0x328] sm:$0xff]
        %v423 = vld [vmem:[#allocation5 + $0x330] sm:$0xff]
        %v424 = vld [vmem:[#allocation5 + $0x338] sm:$0xff]
        %v425 = vld [vmem:[#allocation5 + $0x340] sm:$0xff]
        %v426 = vld [vmem:[#allocation5 + $0x348] sm:$0xff]
        %v427 = vld [vmem:[#allocation5 + $0x350] sm:$0xff]
        %v428 = vld [vmem:[#allocation5 + $0x358] sm:$0xff]
        %v429 = vld [vmem:[#allocation5 + $0x360] sm:$0xff]
        %v430 = vld [vmem:[#allocation5 + $0x368] sm:$0xff]
        %v431 = vld [vmem:[#allocation5 + $0x370] sm:$0xff]
        %v432 = vld [vmem:[#allocation5 + $0x378] sm:$0xff]
        %v433 = vld [vmem:[#allocation5 + $0x380] sm:$0xff]
        %v434 = vld [vmem:[#allocation5 + $0x388] sm:$0xff]
        %v435 = vld [vmem:[#allocation5 + $0x390] sm:$0xff]
        %v436 = vld [vmem:[#allocation5 + $0x398] sm:$0xff]
        %v437 = vld [vmem:[#allocation5 + $0x3a0] sm:$0xff]
        %v438 = vld [vmem:[#allocation5 + $0x3a8] sm:$0xff]
        %v439 = vld [vmem:[#allocation5 + $0x3b0] sm:$0xff]
        %v440 = vld [vmem:[#allocation5 + $0x3b8] sm:$0xff]
        %v441 = vld [vmem:[#allocation5 + $0x3c0] sm:$0xff]
        %v442 = vld [vmem:[#allocation5 + $0x3c8] sm:$0xff]
        %v443 = vld [vmem:[#allocation5 + $0x3d0] sm:$0xff]
        %v444 = vld [vmem:[#allocation5 + $0x3d8] sm:$0xff]
        %v445 = vld [vmem:[#allocation5 + $0x3e0] sm:$0xff]
        %v446 = vld [vmem:[#allocation5 + $0x3e8] sm:$0xff]
        %v447 = vld [vmem:[#allocation5 + $0x3f0] sm:$0xff]
        %v448 = vld [vmem:[#allocation5 + $0x3f8] sm:$0xff]
        %v449 = vld [vmem:[#allocation5 + $0x400] sm:$0xff]
        %v450 = vld [vmem:[#allocation5 + $0x408] sm:$0xff]
        %v451 = vld [vmem:[#allocation5 + $0x410] sm:$0xff]
        %v452 = vld [vmem:[#allocation5 + $0x418] sm:$0xff]
        %v453 = vld [vmem:[#allocation5 + $0x420] sm:$0xff]
        %v454 = vld [vmem:[#allocation5 + $0x428] sm:$0xff]
        %v455 = vld [vmem:[#allocation5 + $0x430] sm:$0xff]
        %v456 = vld [vmem:[#allocation5 + $0x438] sm:$0xff]
        %v457 = vld [vmem:[#allocation5 + $0x440] sm:$0xff]
        %v458 = vld [vmem:[#allocation5 + $0x448] sm:$0xff]
        %v459 = vld [vmem:[#allocation5 + $0x450] sm:$0xff]
        %v460 = vld [vmem:[#allocation5 + $0x458] sm:$0xff]
        %v461 = vld [vmem:[#allocation5 + $0x460] sm:$0xff]
        %v462 = vld [vmem:[#allocation5 + $0x468] sm:$0xff]
        %v463 = vld [vmem:[#allocation5 + $0x470] sm:$0xff]
        %v464 = vld [vmem:[#allocation5 + $0x478] sm:$0xff]
        %v465 = vld [vmem:[#allocation5 + $0x480] sm:$0xff]
        %v466 = vld [vmem:[#allocation5 + $0x488] sm:$0xff]
        %v467 = vld [vmem:[#allocation5 + $0x490] sm:$0xff]
        %v468 = vld [vmem:[#allocation5 + $0x498] sm:$0xff]
        %v469 = vld [vmem:[#allocation5 + $0x4a0] sm:$0xff]
        %v470 = vld [vmem:[#allocation5 + $0x4a8] sm:$0xff]
        %v471 = vld [vmem:[#allocation5 + $0x4b0] sm:$0xff]
        %v472 = vld [vmem:[#allocation5 + $0x4b8] sm:$0xff]
        %v473 = vld [vmem:[#allocation5 + $0x4c0] sm:$0xff]
        %v474 = vld [vmem:[#allocation5 + $0x4c8] sm:$0xff]
        %v475 = vld [vmem:[#allocation5 + $0x4d0] sm:$0xff]
        %v476 = vld [vmem:[#allocation5 + $0x4d8] sm:$0xff]
        %v477 = vld [vmem:[#allocation5 + $0x4e0] sm:$0xff]
        %v478 = vld [vmem:[#allocation5 + $0x4e8] sm:$0xff]
        %v479 = vld [vmem:[#allocation5 + $0x4f0] sm:$0xff]
        %v480 = vld [vmem:[#allocation5 + $0x4f8] sm:$0xff]
        %v481 = vld [vmem:[#allocation5 + $0x500] sm:$0xff]
        %v482 = vld [vmem:[#allocation5 + $0x508] sm:$0xff]
        %v483 = vld [vmem:[#allocation5 + $0x510] sm:$0xff]
        %v484 = vld [vmem:[#allocation5 + $0x518] sm:$0xff]
        %v485 = vld [vmem:[#allocation5 + $0x520] sm:$0xff]
        %v486 = vld [vmem:[#allocation5 + $0x528] sm:$0xff]
        %v487 = vld [vmem:[#allocation5 + $0x530] sm:$0xff]
        %v488 = vld [vmem:[#allocation5 + $0x538] sm:$0xff]
        %v489 = vld [vmem:[#allocation5 + $0x540] sm:$0xff]
        %v490 = vld [vmem:[#allocation5 + $0x548] sm:$0xff]
        %v491 = vld [vmem:[#allocation5 + $0x550] sm:$0xff]
        %v492 = vld [vmem:[#allocation5 + $0x558] sm:$0xff]
        %v493 = vld [vmem:[#allocation5 + $0x560] sm:$0xff]
        %v494 = vld [vmem:[#allocation5 + $0x568] sm:$0xff]
        %v495 = vld [vmem:[#allocation5 + $0x570] sm:$0xff]
        %v496 = vld [vmem:[#allocation5 + $0x578] sm:$0xff]
        %v497 = vld [vmem:[#allocation5 + $0x580] sm:$0xff]
        %v498 = vld [vmem:[#allocation5 + $0x588] sm:$0xff]
        %v499 = vld [vmem:[#allocation5 + $0x590] sm:$0xff]
        %v500 = vld [vmem:[#allocation5 + $0x598] sm:$0xff]
        %v501 = vld [vmem:[#allocation5 + $0x5a0] sm:$0xff]
        %v502 = vld [vmem:[#allocation5 + $0x5a8] sm:$0xff]
        %v503 = vld [vmem:[#allocation5 + $0x5b0] sm:$0xff]
        %v504 = vld [vmem:[#allocation5 + $0x5b8] sm:$0xff]
        %v505 = vld [vmem:[#allocation5 + $0x5c0] sm:$0xff]
        %v506 = vld [vmem:[#allocation5 + $0x5c8] sm:$0xff]
        %v507 = vld [vmem:[#allocation5 + $0x5d0] sm:$0xff]
        %v508 = vld [vmem:[#allocation5 + $0x5d8] sm:$0xff]
        %v509 = vld [vmem:[#allocation5 + $0x5e0] sm:$0xff]
        %v510 = vld [vmem:[#allocation5 + $0x5e8] sm:$0xff]
        %v511 = vld [vmem:[#allocation5 + $0x5f0] sm:$0xff]
        %v512 = vld [vmem:[#allocation5 + $0x5f8] sm:$0xff]
        %v513 = vld [vmem:[#allocation5 + $0x600] sm:$0xff]
        %v514 = vld [vmem:[#allocation5 + $0x608] sm:$0xff]
        %v515 = vld [vmem:[#allocation5 + $0x610] sm:$0xff]
        %v516 = vld [vmem:[#allocation5 + $0x618] sm:$0xff]
        %v517 = vld [vmem:[#allocation5 + $0x620] sm:$0xff]
        %v518 = vld [vmem:[#allocation5 + $0x628] sm:$0xff]
        %v519 = vld [vmem:[#allocation5 + $0x630] sm:$0xff]
        %v520 = vld [vmem:[#allocation5 + $0x638] sm:$0xff]
        %v521 = vld [vmem:[#allocation5 + $0x640] sm:$0xff]
        %v522 = vld [vmem:[#allocation5 + $0x648] sm:$0xff]
        %v523 = vld [vmem:[#allocation5 + $0x650] sm:$0xff]
        %v524 = vld [vmem:[#allocation5 + $0x658] sm:$0xff]
        %v525 = vld [vmem:[#allocation5 + $0x660] sm:$0xff]
        %v526 = vld [vmem:[#allocation5 + $0x668] sm:$0xff]
        %v527 = vld [vmem:[#allocation5 + $0x670] sm:$0xff]
        %v528 = vld [vmem:[#allocation5 + $0x678] sm:$0xff]
        %v529 = vld [vmem:[#allocation5 + $0x680] sm:$0xff]
        %v530 = vld [vmem:[#allocation5 + $0x688] sm:$0xff]
        %v531 = vld [vmem:[#allocation5 + $0x690] sm:$0xff]
        %v532 = vld [vmem:[#allocation5 + $0x698] sm:$0xff]
        %v533 = vld [vmem:[#allocation5 + $0x6a0] sm:$0xff]
        %v534 = vld [vmem:[#allocation5 + $0x6a8] sm:$0xff]
        %v535 = vld [vmem:[#allocation5 + $0x6b0] sm:$0xff]
        %v536 = vld [vmem:[#allocation5 + $0x6b8] sm:$0xff]
        %v537 = vld [vmem:[#allocation5 + $0x6c0] sm:$0xff]
        %v538 = vld [vmem:[#allocation5 + $0x6c8] sm:$0xff]
        %v539 = vld [vmem:[#allocation5 + $0x6d0] sm:$0xff]
        %v540 = vld [vmem:[#allocation5 + $0x6d8] sm:$0xff]
        %v541 = vld [vmem:[#allocation5 + $0x6e0] sm:$0xff]
        %v542 = vld [vmem:[#allocation5 + $0x6e8] sm:$0xff]
        %v543 = vld [vmem:[#allocation5 + $0x6f0] sm:$0xff]
        %v544 = vld [vmem:[#allocation5 + $0x6f8] sm:$0xff]
        %v545 = vld [vmem:[#allocation5 + $0x700] sm:$0xff]
        %v546 = vld [vmem:[#allocation5 + $0x708] sm:$0xff]
        %v547 = vld [vmem:[#allocation5 + $0x710] sm:$0xff]
        %v548 = vld [vmem:[#allocation5 + $0x718] sm:$0xff]
        %v549 = vld [vmem:[#allocation5 + $0x720] sm:$0xff]
        %v550 = vld [vmem:[#allocation5 + $0x728] sm:$0xff]
        %v551 = vld [vmem:[#allocation5 + $0x730] sm:$0xff]
        %v552 = vld [vmem:[#allocation5 + $0x738] sm:$0xff]
        %v553 = vld [vmem:[#allocation5 + $0x740] sm:$0xff]
        %v554 = vld [vmem:[#allocation5 + $0x748] sm:$0xff]
        %v555 = vld [vmem:[#allocation5 + $0x750] sm:$0xff]
        %v556 = vld [vmem:[#allocation5 + $0x758] sm:$0xff]
        %v557 = vld [vmem:[#allocation5 + $0x760] sm:$0xff]
        %v558 = vld [vmem:[#allocation5 + $0x768] sm:$0xff]
        %v559 = vld [vmem:[#allocation5 + $0x770] sm:$0xff]
        %v560 = vld [vmem:[#allocation5 + $0x778] sm:$0xff]
        %v561 = vld [vmem:[#allocation5 + $0x780] sm:$0xff]
        %v562 = vld [vmem:[#allocation5 + $0x788] sm:$0xff]
        %v563 = vld [vmem:[#allocation5 + $0x790] sm:$0xff]
        %v564 = vld [vmem:[#allocation5 + $0x798] sm:$0xff]
        %v565 = vld [vmem:[#allocation5 + $0x7a0] sm:$0xff]
        %v566 = vld [vmem:[#allocation5 + $0x7a8] sm:$0xff]
        %v567 = vld [vmem:[#allocation5 + $0x7b0] sm:$0xff]
        %v568 = vld [vmem:[#allocation5 + $0x7b8] sm:$0xff]
        %v569 = vld [vmem:[#allocation5 + $0x7c0] sm:$0xff]
        %v570 = vld [vmem:[#allocation5 + $0x7c8] sm:$0xff]
        %v571 = vld [vmem:[#allocation5 + $0x7d0] sm:$0xff]
        %v572 = vld [vmem:[#allocation5 + $0x7d8] sm:$0xff]
        %v573 = vld [vmem:[#allocation5 + $0x7e0] sm:$0xff]
        %v574 = vld [vmem:[#allocation5 + $0x7e8] sm:$0xff]
        %v575 = vld [vmem:[#allocation5 + $0x7f0] sm:$0xff]
        %v576 = vld [vmem:[#allocation5 + $0x7f8] sm:$0xff]
        %v577 = vld [vmem:[#allocation7] sm:$0xff]
        %v578 = vld [vmem:[#allocation7 + $0x8] sm:$0xff]
        %v581 = vperm.slane %v577, 0
        %v582 = vperm.slane %v577, 1
        %v583 = vperm.slane %v577, 2
        %v584 = vperm.slane %v577, 3
        %v585 = vperm.slane %v577, 4
        %v586 = vperm.slane %v577, 5
        %v587 = vperm.slane %v577, 6
        %v588 = vperm.slane %v577, 7
        %v589 = vperm.slane %v578, 0
        %v590 = vperm.slane %v578, 1
        %v591 = vperm.slane %v578, 2
        %v592 = vperm.slane %v578, 3
        %v593 = vperm.slane %v578, 4
        %v594 = vperm.slane %v578, 5
        %v595 = vperm.slane %v578, 6
        %v596 = vperm.slane %v578, 7
        %v638 = vunpack.c.l.b16 %v296
        %v639 = vunpack.c.h.b16 %v296
        %v640 = vunpack.c.l.b16 %v297
        %v641 = vunpack.c.h.b16 %v297
        %v642 = vunpack.c.l.b16 %v298
        %v643 = vunpack.c.h.b16 %v298
        %v644 = vunpack.c.l.b16 %v299
        %v645 = vunpack.c.h.b16 %v299
        %v646 = vunpack.c.l.b16 %v300
        %v647 = vunpack.c.h.b16 %v300
        %v648 = vunpack.c.l.b16 %v301
        %v649 = vunpack.c.h.b16 %v301
        %v650 = vunpack.c.l.b16 %v302
        %v651 = vunpack.c.h.b16 %v302
        %v652 = vunpack.c.l.b16 %v303
        %v653 = vunpack.c.h.b16 %v303
        %v654 = vunpack.c.l.b16 %v304
        %v655 = vunpack.c.h.b16 %v304
        %v656 = vunpack.c.l.b16 %v305
        %v657 = vunpack.c.h.b16 %v305
        %v658 = vunpack.c.l.b16 %v306
        %v659 = vunpack.c.h.b16 %v306
        %v660 = vunpack.c.l.b16 %v307
        %v661 = vunpack.c.h.b16 %v307
        %v662 = vunpack.c.l.b16 %v308
        %v663 = vunpack.c.h.b16 %v308
        %v664 = vunpack.c.l.b16 %v309
        %v665 = vunpack.c.h.b16 %v309
        %v666 = vunpack.c.l.b16 %v310
        %v667 = vunpack.c.h.b16 %v310
        %v668 = vunpack.c.l.b16 %v311
        %v669 = vunpack.c.h.b16 %v311
        %v670 = vunpack.c.l.b16 %v312
        %v671 = vunpack.c.h.b16 %v312
        %v672 = vunpack.c.l.b16 %v313
        %v673 = vunpack.c.h.b16 %v313
        %v674 = vunpack.c.l.b16 %v314
        %v675 = vunpack.c.h.b16 %v314
        %v676 = vunpack.c.l.b16 %v315
        %v677 = vunpack.c.h.b16 %v315
        %v678 = vunpack.c.l.b16 %v316
        %v679 = vunpack.c.h.b16 %v316
        %v680 = vunpack.c.l.b16 %v317
        %v681 = vunpack.c.h.b16 %v317
        %v682 = vunpack.c.l.b16 %v318
        %v683 = vunpack.c.h.b16 %v318
        %v684 = vunpack.c.l.b16 %v319
        %v685 = vunpack.c.h.b16 %v319
        %v686 = vunpack.c.l.b16 %v320
        %v687 = vunpack.c.h.b16 %v320
        %v688 = vpack.c.b16 %v640, %v638
        %v689 = vpack.c.b16 %v641, %v639
        %v690 = vpack.c.b16 %v644, %v642
        %v691 = vpack.c.b16 %v645, %v643
        %v692 = vpack.c.b16 %v648, %v646
        %v693 = vpack.c.b16 %v649, %v647
        %v694 = vpack.c.b16 %v652, %v650
        %v695 = vpack.c.b16 %v653, %v651
        %v696 = vpack.c.b16 %v656, %v654
        %v697 = vpack.c.b16 %v657, %v655
        %v698 = vpack.c.b16 %v660, %v658
        %v699 = vpack.c.b16 %v661, %v659
        %v700 = vpack.c.b16 %v664, %v662
        %v701 = vpack.c.b16 %v665, %v663
        %v702 = vpack.c.b16 %v668, %v666
        %v703 = vpack.c.b16 %v669, %v667
        %v704 = vpack.c.b16 %v672, %v670
        %v705 = vpack.c.b16 %v673, %v671
        %v706 = vpack.c.b16 %v676, %v674
        %v707 = vpack.c.b16 %v677, %v675
        %v708 = vpack.c.b16 %v680, %v678
        %v709 = vpack.c.b16 %v681, %v679
        %v710 = vpack.c.b16 %v684, %v682
        %v711 = vpack.c.b16 %v685, %v683
        %v712 = vpack.c.b16 %v686, %v686
        %v713 = vpack.c.b16 %v687, %v687
        %v996 = vunpack.c.l.b16 %v321
        %v997 = vunpack.c.h.b16 %v321
        %v998 = vunpack.c.l.b16 %v322
        %v999 = vunpack.c.h.b16 %v322
        %v1000 = vunpack.c.l.b16 %v323
        %v1001 = vunpack.c.h.b16 %v323
        %v1002 = vunpack.c.l.b16 %v324
        %v1003 = vunpack.c.h.b16 %v324
        %v1004 = vunpack.c.l.b16 %v325
        %v1005 = vunpack.c.h.b16 %v325
        %v1006 = vunpack.c.l.b16 %v326
        %v1007 = vunpack.c.h.b16 %v326
        %v1008 = vunpack.c.l.b16 %v327
        %v1009 = vunpack.c.h.b16 %v327
        %v1010 = vunpack.c.l.b16 %v328
        %v1011 = vunpack.c.h.b16 %v328
        %v1012 = vunpack.c.l.b16 %v329
        %v1013 = vunpack.c.h.b16 %v329
        %v1014 = vunpack.c.l.b16 %v330
        %v1015 = vunpack.c.h.b16 %v330
        %v1016 = vunpack.c.l.b16 %v331
        %v1017 = vunpack.c.h.b16 %v331
        %v1018 = vunpack.c.l.b16 %v332
        %v1019 = vunpack.c.h.b16 %v332
        %v1020 = vunpack.c.l.b16 %v333
        %v1021 = vunpack.c.h.b16 %v333
        %v1022 = vunpack.c.l.b16 %v334
        %v1023 = vunpack.c.h.b16 %v334
        %v1024 = vunpack.c.l.b16 %v335
        %v1025 = vunpack.c.h.b16 %v335
        %v1026 = vunpack.c.l.b16 %v336
        %v1027 = vunpack.c.h.b16 %v336
        %v1028 = vunpack.c.l.b16 %v337
        %v1029 = vunpack.c.h.b16 %v337
        %v1030 = vunpack.c.l.b16 %v338
        %v1031 = vunpack.c.h.b16 %v338
        %v1032 = vunpack.c.l.b16 %v339
        %v1033 = vunpack.c.h.b16 %v339
        %v1034 = vunpack.c.l.b16 %v340
        %v1035 = vunpack.c.h.b16 %v340
        %v1036 = vunpack.c.l.b16 %v341
        %v1037 = vunpack.c.h.b16 %v341
        %v1038 = vunpack.c.l.b16 %v342
        %v1039 = vunpack.c.h.b16 %v342
        %v1040 = vunpack.c.l.b16 %v343
        %v1041 = vunpack.c.h.b16 %v343
        %v1042 = vunpack.c.l.b16 %v344
        %v1043 = vunpack.c.h.b16 %v344
        %v1044 = vunpack.c.l.b16 %v345
        %v1045 = vunpack.c.h.b16 %v345
        %v1046 = vunpack.c.l.b16 %v346
        %v1047 = vunpack.c.h.b16 %v346
        %v1048 = vunpack.c.l.b16 %v347
        %v1049 = vunpack.c.h.b16 %v347
        %v1050 = vunpack.c.l.b16 %v348
        %v1051 = vunpack.c.h.b16 %v348
        %v1052 = vunpack.c.l.b16 %v349
        %v1053 = vunpack.c.h.b16 %v349
        %v1054 = vunpack.c.l.b16 %v350
        %v1055 = vunpack.c.h.b16 %v350
        %v1056 = vunpack.c.l.b16 %v351
        %v1057 = vunpack.c.h.b16 %v351
        %v1058 = vunpack.c.l.b16 %v352
        %v1059 = vunpack.c.h.b16 %v352
        %v1060 = vunpack.c.l.b16 %v353
        %v1061 = vunpack.c.h.b16 %v353
        %v1062 = vunpack.c.l.b16 %v354
        %v1063 = vunpack.c.h.b16 %v354
        %v1064 = vunpack.c.l.b16 %v355
        %v1065 = vunpack.c.h.b16 %v355
        %v1066 = vunpack.c.l.b16 %v356
        %v1067 = vunpack.c.h.b16 %v356
        %v1068 = vunpack.c.l.b16 %v357
        %v1069 = vunpack.c.h.b16 %v357
        %v1070 = vunpack.c.l.b16 %v358
        %v1071 = vunpack.c.h.b16 %v358
        %v1072 = vunpack.c.l.b16 %v359
        %v1073 = vunpack.c.h.b16 %v359
        %v1074 = vunpack.c.l.b16 %v360
        %v1075 = vunpack.c.h.b16 %v360
        %v1076 = vunpack.c.l.b16 %v361
        %v1077 = vunpack.c.h.b16 %v361
        %v1078 = vunpack.c.l.b16 %v362
        %v1079 = vunpack.c.h.b16 %v362
        %v1080 = vunpack.c.l.b16 %v363
        %v1081 = vunpack.c.h.b16 %v363
        %v1082 = vunpack.c.l.b16 %v364
        %v1083 = vunpack.c.h.b16 %v364
        %v1084 = vunpack.c.l.b16 %v365
        %v1085 = vunpack.c.h.b16 %v365
        %v1086 = vunpack.c.l.b16 %v366
        %v1087 = vunpack.c.h.b16 %v366
        %v1088 = vunpack.c.l.b16 %v367
        %v1089 = vunpack.c.h.b16 %v367
        %v1090 = vunpack.c.l.b16 %v368
        %v1091 = vunpack.c.h.b16 %v368
        %v1092 = vunpack.c.l.b16 %v369
        %v1093 = vunpack.c.h.b16 %v369
        %v1094 = vunpack.c.l.b16 %v370
        %v1095 = vunpack.c.h.b16 %v370
        %v1096 = vunpack.c.l.b16 %v371
        %v1097 = vunpack.c.h.b16 %v371
        %v1098 = vunpack.c.l.b16 %v372
        %v1099 = vunpack.c.h.b16 %v372
        %v1100 = vunpack.c.l.b16 %v373
        %v1101 = vunpack.c.h.b16 %v373
        %v1102 = vunpack.c.l.b16 %v374
        %v1103 = vunpack.c.h.b16 %v374
        %v1104 = vunpack.c.l.b16 %v375
        %v1105 = vunpack.c.h.b16 %v375
        %v1106 = vunpack.c.l.b16 %v376
        %v1107 = vunpack.c.h.b16 %v376
        %v1108 = vunpack.c.l.b16 %v377
        %v1109 = vunpack.c.h.b16 %v377
        %v1110 = vunpack.c.l.b16 %v378
        %v1111 = vunpack.c.h.b16 %v378
        %v1112 = vunpack.c.l.b16 %v379
        %v1113 = vunpack.c.h.b16 %v379
        %v1114 = vunpack.c.l.b16 %v380
        %v1115 = vunpack.c.h.b16 %v380
        %v1116 = vunpack.c.l.b16 %v381
        %v1117 = vunpack.c.h.b16 %v381
        %v1118 = vunpack.c.l.b16 %v382
        %v1119 = vunpack.c.h.b16 %v382
        %v1120 = vunpack.c.l.b16 %v383
        %v1121 = vunpack.c.h.b16 %v383
        %v1122 = vunpack.c.l.b16 %v384
        %v1123 = vunpack.c.h.b16 %v384
        %v1124 = vunpack.c.l.b16 %v385
        %v1125 = vunpack.c.h.b16 %v385
        %v1126 = vunpack.c.l.b16 %v386
        %v1127 = vunpack.c.h.b16 %v386
        %v1128 = vunpack.c.l.b16 %v387
        %v1129 = vunpack.c.h.b16 %v387
        %v1130 = vunpack.c.l.b16 %v388
        %v1131 = vunpack.c.h.b16 %v388
        %v1132 = vunpack.c.l.b16 %v389
        %v1133 = vunpack.c.h.b16 %v389
        %v1134 = vunpack.c.l.b16 %v390
        %v1135 = vunpack.c.h.b16 %v390
        %v1136 = vunpack.c.l.b16 %v391
        %v1137 = vunpack.c.h.b16 %v391
        %v1138 = vunpack.c.l.b16 %v392
        %v1139 = vunpack.c.h.b16 %v392
        %v1140 = vunpack.c.l.b16 %v393
        %v1141 = vunpack.c.h.b16 %v393
        %v1142 = vunpack.c.l.b16 %v394
        %v1143 = vunpack.c.h.b16 %v394
        %v1144 = vunpack.c.l.b16 %v395
        %v1145 = vunpack.c.h.b16 %v395
        %v1146 = vunpack.c.l.b16 %v396
        %v1147 = vunpack.c.h.b16 %v396
        %v1148 = vunpack.c.l.b16 %v397
        %v1149 = vunpack.c.h.b16 %v397
        %v1150 = vunpack.c.l.b16 %v398
        %v1151 = vunpack.c.h.b16 %v398
        %v1152 = vunpack.c.l.b16 %v399
        %v1153 = vunpack.c.h.b16 %v399
        %v1154 = vunpack.c.l.b16 %v400
        %v1155 = vunpack.c.h.b16 %v400
        %v1156 = vunpack.c.l.b16 %v401
        %v1157 = vunpack.c.h.b16 %v401
        %v1158 = vunpack.c.l.b16 %v402
        %v1159 = vunpack.c.h.b16 %v402
        %v1160 = vunpack.c.l.b16 %v403
        %v1161 = vunpack.c.h.b16 %v403
        %v1162 = vunpack.c.l.b16 %v404
        %v1163 = vunpack.c.h.b16 %v404
        %v1164 = vunpack.c.l.b16 %v405
        %v1165 = vunpack.c.h.b16 %v405
        %v1166 = vunpack.c.l.b16 %v406
        %v1167 = vunpack.c.h.b16 %v406
        %v1168 = vunpack.c.l.b16 %v407
        %v1169 = vunpack.c.h.b16 %v407
        %v1170 = vunpack.c.l.b16 %v408
        %v1171 = vunpack.c.h.b16 %v408
        %v1172 = vunpack.c.l.b16 %v409
        %v1173 = vunpack.c.h.b16 %v409
        %v1174 = vunpack.c.l.b16 %v410
        %v1175 = vunpack.c.h.b16 %v410
        %v1176 = vunpack.c.l.b16 %v411
        %v1177 = vunpack.c.h.b16 %v411
        %v1178 = vunpack.c.l.b16 %v412
        %v1179 = vunpack.c.h.b16 %v412
        %v1180 = vunpack.c.l.b16 %v413
        %v1181 = vunpack.c.h.b16 %v413
        %v1182 = vunpack.c.l.b16 %v414
        %v1183 = vunpack.c.h.b16 %v414
        %v1184 = vunpack.c.l.b16 %v415
        %v1185 = vunpack.c.h.b16 %v415
        %v1186 = vunpack.c.l.b16 %v416
        %v1187 = vunpack.c.h.b16 %v416
        %v1188 = vunpack.c.l.b16 %v417
        %v1189 = vunpack.c.h.b16 %v417
        %v1190 = vunpack.c.l.b16 %v418
        %v1191 = vunpack.c.h.b16 %v418
        %v1192 = vunpack.c.l.b16 %v419
        %v1193 = vunpack.c.h.b16 %v419
        %v1194 = vunpack.c.l.b16 %v420
        %v1195 = vunpack.c.h.b16 %v420
        %v1196 = vunpack.c.l.b16 %v421
        %v1197 = vunpack.c.h.b16 %v421
        %v1198 = vunpack.c.l.b16 %v422
        %v1199 = vunpack.c.h.b16 %v422
        %v1200 = vunpack.c.l.b16 %v423
        %v1201 = vunpack.c.h.b16 %v423
        %v1202 = vunpack.c.l.b16 %v424
        %v1203 = vunpack.c.h.b16 %v424
        %v1204 = vunpack.c.l.b16 %v425
        %v1205 = vunpack.c.h.b16 %v425
        %v1206 = vunpack.c.l.b16 %v426
        %v1207 = vunpack.c.h.b16 %v426
        %v1208 = vunpack.c.l.b16 %v427
        %v1209 = vunpack.c.h.b16 %v427
        %v1210 = vunpack.c.l.b16 %v428
        %v1211 = vunpack.c.h.b16 %v428
        %v1212 = vunpack.c.l.b16 %v429
        %v1213 = vunpack.c.h.b16 %v429
        %v1214 = vunpack.c.l.b16 %v430
        %v1215 = vunpack.c.h.b16 %v430
        %v1216 = vunpack.c.l.b16 %v431
        %v1217 = vunpack.c.h.b16 %v431
        %v1218 = vunpack.c.l.b16 %v432
        %v1219 = vunpack.c.h.b16 %v432
        %v1220 = vunpack.c.l.b16 %v433
        %v1221 = vunpack.c.h.b16 %v433
        %v1222 = vunpack.c.l.b16 %v434
        %v1223 = vunpack.c.h.b16 %v434
        %v1224 = vunpack.c.l.b16 %v435
        %v1225 = vunpack.c.h.b16 %v435
        %v1226 = vunpack.c.l.b16 %v436
        %v1227 = vunpack.c.h.b16 %v436
        %v1228 = vunpack.c.l.b16 %v437
        %v1229 = vunpack.c.h.b16 %v437
        %v1230 = vunpack.c.l.b16 %v438
        %v1231 = vunpack.c.h.b16 %v438
        %v1232 = vunpack.c.l.b16 %v439
        %v1233 = vunpack.c.h.b16 %v439
        %v1234 = vunpack.c.l.b16 %v440
        %v1235 = vunpack.c.h.b16 %v440
        %v1236 = vunpack.c.l.b16 %v441
        %v1237 = vunpack.c.h.b16 %v441
        %v1238 = vunpack.c.l.b16 %v442
        %v1239 = vunpack.c.h.b16 %v442
        %v1240 = vunpack.c.l.b16 %v443
        %v1241 = vunpack.c.h.b16 %v443
        %v1242 = vunpack.c.l.b16 %v444
        %v1243 = vunpack.c.h.b16 %v444
        %v1244 = vunpack.c.l.b16 %v445
        %v1245 = vunpack.c.h.b16 %v445
        %v1246 = vunpack.c.l.b16 %v446
        %v1247 = vunpack.c.h.b16 %v446
        %v1248 = vunpack.c.l.b16 %v447
        %v1249 = vunpack.c.h.b16 %v447
        %v1250 = vunpack.c.l.b16 %v448
        %v1251 = vunpack.c.h.b16 %v448
        %v1252 = vunpack.c.l.b16 %v449
        %v1253 = vunpack.c.h.b16 %v449
        %v1254 = vunpack.c.l.b16 %v450
        %v1255 = vunpack.c.h.b16 %v450
        %v1256 = vunpack.c.l.b16 %v451
        %v1257 = vunpack.c.h.b16 %v451
        %v1258 = vunpack.c.l.b16 %v452
        %v1259 = vunpack.c.h.b16 %v452
        %v1260 = vunpack.c.l.b16 %v453
        %v1261 = vunpack.c.h.b16 %v453
        %v1262 = vunpack.c.l.b16 %v454
        %v1263 = vunpack.c.h.b16 %v454
        %v1264 = vunpack.c.l.b16 %v455
        %v1265 = vunpack.c.h.b16 %v455
        %v1266 = vunpack.c.l.b16 %v456
        %v1267 = vunpack.c.h.b16 %v456
        %v1268 = vunpack.c.l.b16 %v457
        %v1269 = vunpack.c.h.b16 %v457
        %v1270 = vunpack.c.l.b16 %v458
        %v1271 = vunpack.c.h.b16 %v458
        %v1272 = vunpack.c.l.b16 %v459
        %v1273 = vunpack.c.h.b16 %v459
        %v1274 = vunpack.c.l.b16 %v460
        %v1275 = vunpack.c.h.b16 %v460
        %v1276 = vunpack.c.l.b16 %v461
        %v1277 = vunpack.c.h.b16 %v461
        %v1278 = vunpack.c.l.b16 %v462
        %v1279 = vunpack.c.h.b16 %v462
        %v1280 = vunpack.c.l.b16 %v463
        %v1281 = vunpack.c.h.b16 %v463
        %v1282 = vunpack.c.l.b16 %v464
        %v1283 = vunpack.c.h.b16 %v464
        %v1284 = vunpack.c.l.b16 %v465
        %v1285 = vunpack.c.h.b16 %v465
        %v1286 = vunpack.c.l.b16 %v466
        %v1287 = vunpack.c.h.b16 %v466
        %v1288 = vunpack.c.l.b16 %v467
        %v1289 = vunpack.c.h.b16 %v467
        %v1290 = vunpack.c.l.b16 %v468
        %v1291 = vunpack.c.h.b16 %v468
        %v1292 = vunpack.c.l.b16 %v469
        %v1293 = vunpack.c.h.b16 %v469
        %v1294 = vunpack.c.l.b16 %v470
        %v1295 = vunpack.c.h.b16 %v470
        %v1296 = vunpack.c.l.b16 %v471
        %v1297 = vunpack.c.h.b16 %v471
        %v1298 = vunpack.c.l.b16 %v472
        %v1299 = vunpack.c.h.b16 %v472
        %v1300 = vunpack.c.l.b16 %v473
        %v1301 = vunpack.c.h.b16 %v473
        %v1302 = vunpack.c.l.b16 %v474
        %v1303 = vunpack.c.h.b16 %v474
        %v1304 = vunpack.c.l.b16 %v475
        %v1305 = vunpack.c.h.b16 %v475
        %v1306 = vunpack.c.l.b16 %v476
        %v1307 = vunpack.c.h.b16 %v476
        %v1308 = vunpack.c.l.b16 %v477
        %v1309 = vunpack.c.h.b16 %v477
        %v1310 = vunpack.c.l.b16 %v478
        %v1311 = vunpack.c.h.b16 %v478
        %v1312 = vunpack.c.l.b16 %v479
        %v1313 = vunpack.c.h.b16 %v479
        %v1314 = vunpack.c.l.b16 %v480
        %v1315 = vunpack.c.h.b16 %v480
        %v1316 = vunpack.c.l.b16 %v481
        %v1317 = vunpack.c.h.b16 %v481
        %v1318 = vunpack.c.l.b16 %v482
        %v1319 = vunpack.c.h.b16 %v482
        %v1320 = vunpack.c.l.b16 %v483
        %v1321 = vunpack.c.h.b16 %v483
        %v1322 = vunpack.c.l.b16 %v484
        %v1323 = vunpack.c.h.b16 %v484
        %v1324 = vunpack.c.l.b16 %v485
        %v1325 = vunpack.c.h.b16 %v485
        %v1326 = vunpack.c.l.b16 %v486
        %v1327 = vunpack.c.h.b16 %v486
        %v1328 = vunpack.c.l.b16 %v487
        %v1329 = vunpack.c.h.b16 %v487
        %v1330 = vunpack.c.l.b16 %v488
        %v1331 = vunpack.c.h.b16 %v488
        %v1332 = vunpack.c.l.b16 %v489
        %v1333 = vunpack.c.h.b16 %v489
        %v1334 = vunpack.c.l.b16 %v490
        %v1335 = vunpack.c.h.b16 %v490
        %v1336 = vunpack.c.l.b16 %v491
        %v1337 = vunpack.c.h.b16 %v491
        %v1338 = vunpack.c.l.b16 %v492
        %v1339 = vunpack.c.h.b16 %v492
        %v1340 = vunpack.c.l.b16 %v493
        %v1341 = vunpack.c.h.b16 %v493
        %v1342 = vunpack.c.l.b16 %v494
        %v1343 = vunpack.c.h.b16 %v494
        %v1344 = vunpack.c.l.b16 %v495
        %v1345 = vunpack.c.h.b16 %v495
        %v1346 = vunpack.c.l.b16 %v496
        %v1347 = vunpack.c.h.b16 %v496
        %v1348 = vunpack.c.l.b16 %v497
        %v1349 = vunpack.c.h.b16 %v497
        %v1350 = vunpack.c.l.b16 %v498
        %v1351 = vunpack.c.h.b16 %v498
        %v1352 = vunpack.c.l.b16 %v499
        %v1353 = vunpack.c.h.b16 %v499
        %v1354 = vunpack.c.l.b16 %v500
        %v1355 = vunpack.c.h.b16 %v500
        %v1356 = vunpack.c.l.b16 %v501
        %v1357 = vunpack.c.h.b16 %v501
        %v1358 = vunpack.c.l.b16 %v502
        %v1359 = vunpack.c.h.b16 %v502
        %v1360 = vunpack.c.l.b16 %v503
        %v1361 = vunpack.c.h.b16 %v503
        %v1362 = vunpack.c.l.b16 %v504
        %v1363 = vunpack.c.h.b16 %v504
        %v1364 = vunpack.c.l.b16 %v505
        %v1365 = vunpack.c.h.b16 %v505
        %v1366 = vunpack.c.l.b16 %v506
        %v1367 = vunpack.c.h.b16 %v506
        %v1368 = vunpack.c.l.b16 %v507
        %v1369 = vunpack.c.h.b16 %v507
        %v1370 = vunpack.c.l.b16 %v508
        %v1371 = vunpack.c.h.b16 %v508
        %v1372 = vunpack.c.l.b16 %v509
        %v1373 = vunpack.c.h.b16 %v509
        %v1374 = vunpack.c.l.b16 %v510
        %v1375 = vunpack.c.h.b16 %v510
        %v1376 = vunpack.c.l.b16 %v511
        %v1377 = vunpack.c.h.b16 %v511
        %v1378 = vunpack.c.l.b16 %v512
        %v1379 = vunpack.c.h.b16 %v512
        %v1380 = vunpack.c.l.b16 %v513
        %v1381 = vunpack.c.h.b16 %v513
        %v1382 = vunpack.c.l.b16 %v514
        %v1383 = vunpack.c.h.b16 %v514
        %v1384 = vunpack.c.l.b16 %v515
        %v1385 = vunpack.c.h.b16 %v515
        %v1386 = vunpack.c.l.b16 %v516
        %v1387 = vunpack.c.h.b16 %v516
        %v1388 = vunpack.c.l.b16 %v517
        %v1389 = vunpack.c.h.b16 %v517
        %v1390 = vunpack.c.l.b16 %v518
        %v1391 = vunpack.c.h.b16 %v518
        %v1392 = vunpack.c.l.b16 %v519
        %v1393 = vunpack.c.h.b16 %v519
        %v1394 = vunpack.c.l.b16 %v520
        %v1395 = vunpack.c.h.b16 %v520
        %v1396 = vunpack.c.l.b16 %v521
        %v1397 = vunpack.c.h.b16 %v521
        %v1398 = vunpack.c.l.b16 %v522
        %v1399 = vunpack.c.h.b16 %v522
        %v1400 = vunpack.c.l.b16 %v523
        %v1401 = vunpack.c.h.b16 %v523
        %v1402 = vunpack.c.l.b16 %v524
        %v1403 = vunpack.c.h.b16 %v524
        %v1404 = vunpack.c.l.b16 %v525
        %v1405 = vunpack.c.h.b16 %v525
        %v1406 = vunpack.c.l.b16 %v526
        %v1407 = vunpack.c.h.b16 %v526
        %v1408 = vunpack.c.l.b16 %v527
        %v1409 = vunpack.c.h.b16 %v527
        %v1410 = vunpack.c.l.b16 %v528
        %v1411 = vunpack.c.h.b16 %v528
        %v1412 = vunpack.c.l.b16 %v529
        %v1413 = vunpack.c.h.b16 %v529
        %v1414 = vunpack.c.l.b16 %v530
        %v1415 = vunpack.c.h.b16 %v530
        %v1416 = vunpack.c.l.b16 %v531
        %v1417 = vunpack.c.h.b16 %v531
        %v1418 = vunpack.c.l.b16 %v532
        %v1419 = vunpack.c.h.b16 %v532
        %v1420 = vunpack.c.l.b16 %v533
        %v1421 = vunpack.c.h.b16 %v533
        %v1422 = vunpack.c.l.b16 %v534
        %v1423 = vunpack.c.h.b16 %v534
        %v1424 = vunpack.c.l.b16 %v535
        %v1425 = vunpack.c.h.b16 %v535
        %v1426 = vunpack.c.l.b16 %v536
        %v1427 = vunpack.c.h.b16 %v536
        %v1428 = vunpack.c.l.b16 %v537
        %v1429 = vunpack.c.h.b16 %v537
        %v1430 = vunpack.c.l.b16 %v538
        %v1431 = vunpack.c.h.b16 %v538
        %v1432 = vunpack.c.l.b16 %v539
        %v1433 = vunpack.c.h.b16 %v539
        %v1434 = vunpack.c.l.b16 %v540
        %v1435 = vunpack.c.h.b16 %v540
        %v1436 = vunpack.c.l.b16 %v541
        %v1437 = vunpack.c.h.b16 %v541
        %v1438 = vunpack.c.l.b16 %v542
        %v1439 = vunpack.c.h.b16 %v542
        %v1440 = vunpack.c.l.b16 %v543
        %v1441 = vunpack.c.h.b16 %v543
        %v1442 = vunpack.c.l.b16 %v544
        %v1443 = vunpack.c.h.b16 %v544
        %v1444 = vunpack.c.l.b16 %v545
        %v1445 = vunpack.c.h.b16 %v545
        %v1446 = vunpack.c.l.b16 %v546
        %v1447 = vunpack.c.h.b16 %v546
        %v1448 = vunpack.c.l.b16 %v547
        %v1449 = vunpack.c.h.b16 %v547
        %v1450 = vunpack.c.l.b16 %v548
        %v1451 = vunpack.c.h.b16 %v548
        %v1452 = vunpack.c.l.b16 %v549
        %v1453 = vunpack.c.h.b16 %v549
        %v1454 = vunpack.c.l.b16 %v550
        %v1455 = vunpack.c.h.b16 %v550
        %v1456 = vunpack.c.l.b16 %v551
        %v1457 = vunpack.c.h.b16 %v551
        %v1458 = vunpack.c.l.b16 %v552
        %v1459 = vunpack.c.h.b16 %v552
        %v1460 = vunpack.c.l.b16 %v553
        %v1461 = vunpack.c.h.b16 %v553
        %v1462 = vunpack.c.l.b16 %v554
        %v1463 = vunpack.c.h.b16 %v554
        %v1464 = vunpack.c.l.b16 %v555
        %v1465 = vunpack.c.h.b16 %v555
        %v1466 = vunpack.c.l.b16 %v556
        %v1467 = vunpack.c.h.b16 %v556
        %v1468 = vunpack.c.l.b16 %v557
        %v1469 = vunpack.c.h.b16 %v557
        %v1470 = vunpack.c.l.b16 %v558
        %v1471 = vunpack.c.h.b16 %v558
        %v1472 = vunpack.c.l.b16 %v559
        %v1473 = vunpack.c.h.b16 %v559
        %v1474 = vunpack.c.l.b16 %v560
        %v1475 = vunpack.c.h.b16 %v560
        %v1476 = vunpack.c.l.b16 %v561
        %v1477 = vunpack.c.h.b16 %v561
        %v1478 = vunpack.c.l.b16 %v562
        %v1479 = vunpack.c.h.b16 %v562
        %v1480 = vunpack.c.l.b16 %v563
        %v1481 = vunpack.c.h.b16 %v563
        %v1482 = vunpack.c.l.b16 %v564
        %v1483 = vunpack.c.h.b16 %v564
        %v1484 = vunpack.c.l.b16 %v565
        %v1485 = vunpack.c.h.b16 %v565
        %v1486 = vunpack.c.l.b16 %v566
        %v1487 = vunpack.c.h.b16 %v566
        %v1488 = vunpack.c.l.b16 %v567
        %v1489 = vunpack.c.h.b16 %v567
        %v1490 = vunpack.c.l.b16 %v568
        %v1491 = vunpack.c.h.b16 %v568
        %v1492 = vunpack.c.l.b16 %v569
        %v1493 = vunpack.c.h.b16 %v569
        %v1494 = vunpack.c.l.b16 %v570
        %v1495 = vunpack.c.h.b16 %v570
        %v1496 = vunpack.c.l.b16 %v571
        %v1497 = vunpack.c.h.b16 %v571
        %v1498 = vunpack.c.l.b16 %v572
        %v1499 = vunpack.c.h.b16 %v572
        %v1500 = vunpack.c.l.b16 %v573
        %v1501 = vunpack.c.h.b16 %v573
        %v1502 = vunpack.c.l.b16 %v574
        %v1503 = vunpack.c.h.b16 %v574
        %v1504 = vunpack.c.l.b16 %v575
        %v1505 = vunpack.c.h.b16 %v575
        %v1506 = vunpack.c.l.b16 %v576
        %v1507 = vunpack.c.h.b16 %v576
        %v1508 = vpack.c.b16 %v1012, %v996
        %v1509 = vpack.c.b16 %v1013, %v997
        %v1510 = vpack.c.b16 %v1014, %v998
        %v1511 = vpack.c.b16 %v1015, %v999
        %v1512 = vpack.c.b16 %v1016, %v1000
        %v1513 = vpack.c.b16 %v1017, %v1001
        %v1514 = vpack.c.b16 %v1018, %v1002
        %v1515 = vpack.c.b16 %v1019, %v1003
        %v1516 = vpack.c.b16 %v1020, %v1004
        %v1517 = vpack.c.b16 %v1021, %v1005
        %v1518 = vpack.c.b16 %v1022, %v1006
        %v1519 = vpack.c.b16 %v1023, %v1007
        %v1520 = vpack.c.b16 %v1024, %v1008
        %v1521 = vpack.c.b16 %v1025, %v1009
        %v1522 = vpack.c.b16 %v1026, %v1010
        %v1523 = vpack.c.b16 %v1027, %v1011
        %v1524 = vpack.c.b16 %v1044, %v1028
        %v1525 = vpack.c.b16 %v1045, %v1029
        %v1526 = vpack.c.b16 %v1046, %v1030
        %v1527 = vpack.c.b16 %v1047, %v1031
        %v1528 = vpack.c.b16 %v1048, %v1032
        %v1529 = vpack.c.b16 %v1049, %v1033
        %v1530 = vpack.c.b16 %v1050, %v1034
        %v1531 = vpack.c.b16 %v1051, %v1035
        %v1532 = vpack.c.b16 %v1052, %v1036
        %v1533 = vpack.c.b16 %v1053, %v1037
        %v1534 = vpack.c.b16 %v1054, %v1038
        %v1535 = vpack.c.b16 %v1055, %v1039
        %v1536 = vpack.c.b16 %v1056, %v1040
        %v1537 = vpack.c.b16 %v1057, %v1041
        %v1538 = vpack.c.b16 %v1058, %v1042
        %v1539 = vpack.c.b16 %v1059, %v1043
        %v1540 = vpack.c.b16 %v1076, %v1060
        %v1541 = vpack.c.b16 %v1077, %v1061
        %v1542 = vpack.c.b16 %v1078, %v1062
        %v1543 = vpack.c.b16 %v1079, %v1063
        %v1544 = vpack.c.b16 %v1080, %v1064
        %v1545 = vpack.c.b16 %v1081, %v1065
        %v1546 = vpack.c.b16 %v1082, %v1066
        %v1547 = vpack.c.b16 %v1083, %v1067
        %v1548 = vpack.c.b16 %v1084, %v1068
        %v1549 = vpack.c.b16 %v1085, %v1069
        %v1550 = vpack.c.b16 %v1086, %v1070
        %v1551 = vpack.c.b16 %v1087, %v1071
        %v1552 = vpack.c.b16 %v1088, %v1072
        %v1553 = vpack.c.b16 %v1089, %v1073
        %v1554 = vpack.c.b16 %v1090, %v1074
        %v1555 = vpack.c.b16 %v1091, %v1075
        %v1556 = vpack.c.b16 %v1108, %v1092
        %v1557 = vpack.c.b16 %v1109, %v1093
        %v1558 = vpack.c.b16 %v1110, %v1094
        %v1559 = vpack.c.b16 %v1111, %v1095
        %v1560 = vpack.c.b16 %v1112, %v1096
        %v1561 = vpack.c.b16 %v1113, %v1097
        %v1562 = vpack.c.b16 %v1114, %v1098
        %v1563 = vpack.c.b16 %v1115, %v1099
        %v1564 = vpack.c.b16 %v1116, %v1100
        %v1565 = vpack.c.b16 %v1117, %v1101
        %v1566 = vpack.c.b16 %v1118, %v1102
        %v1567 = vpack.c.b16 %v1119, %v1103
        %v1568 = vpack.c.b16 %v1120, %v1104
        %v1569 = vpack.c.b16 %v1121, %v1105
        %v1570 = vpack.c.b16 %v1122, %v1106
        %v1571 = vpack.c.b16 %v1123, %v1107
        %v1572 = vpack.c.b16 %v1140, %v1124
        %v1573 = vpack.c.b16 %v1141, %v1125
        %v1574 = vpack.c.b16 %v1142, %v1126
        %v1575 = vpack.c.b16 %v1143, %v1127
        %v1576 = vpack.c.b16 %v1144, %v1128
        %v1577 = vpack.c.b16 %v1145, %v1129
        %v1578 = vpack.c.b16 %v1146, %v1130
        %v1579 = vpack.c.b16 %v1147, %v1131
        %v1580 = vpack.c.b16 %v1148, %v1132
        %v1581 = vpack.c.b16 %v1149, %v1133
        %v1582 = vpack.c.b16 %v1150, %v1134
        %v1583 = vpack.c.b16 %v1151, %v1135
        %v1584 = vpack.c.b16 %v1152, %v1136
        %v1585 = vpack.c.b16 %v1153, %v1137
        %v1586 = vpack.c.b16 %v1154, %v1138
        %v1587 = vpack.c.b16 %v1155, %v1139
        %v1588 = vpack.c.b16 %v1172, %v1156
        %v1589 = vpack.c.b16 %v1173, %v1157
        %v1590 = vpack.c.b16 %v1174, %v1158
        %v1591 = vpack.c.b16 %v1175, %v1159
        %v1592 = vpack.c.b16 %v1176, %v1160
        %v1593 = vpack.c.b16 %v1177, %v1161
        %v1594 = vpack.c.b16 %v1178, %v1162
        %v1595 = vpack.c.b16 %v1179, %v1163
        %v1596 = vpack.c.b16 %v1180, %v1164
        %v1597 = vpack.c.b16 %v1181, %v1165
        %v1598 = vpack.c.b16 %v1182, %v1166
        %v1599 = vpack.c.b16 %v1183, %v1167
        %v1600 = vpack.c.b16 %v1184, %v1168
        %v1601 = vpack.c.b16 %v1185, %v1169
        %v1602 = vpack.c.b16 %v1186, %v1170
        %v1603 = vpack.c.b16 %v1187, %v1171
        %v1604 = vpack.c.b16 %v1204, %v1188
        %v1605 = vpack.c.b16 %v1205, %v1189
        %v1606 = vpack.c.b16 %v1206, %v1190
        %v1607 = vpack.c.b16 %v1207, %v1191
        %v1608 = vpack.c.b16 %v1208, %v1192
        %v1609 = vpack.c.b16 %v1209, %v1193
        %v1610 = vpack.c.b16 %v1210, %v1194
        %v1611 = vpack.c.b16 %v1211, %v1195
        %v1612 = vpack.c.b16 %v1212, %v1196
        %v1613 = vpack.c.b16 %v1213, %v1197
        %v1614 = vpack.c.b16 %v1214, %v1198
        %v1615 = vpack.c.b16 %v1215, %v1199
        %v1616 = vpack.c.b16 %v1216, %v1200
        %v1617 = vpack.c.b16 %v1217, %v1201
        %v1618 = vpack.c.b16 %v1218, %v1202
        %v1619 = vpack.c.b16 %v1219, %v1203
        %v1620 = vpack.c.b16 %v1236, %v1220
        %v1621 = vpack.c.b16 %v1237, %v1221
        %v1622 = vpack.c.b16 %v1238, %v1222
        %v1623 = vpack.c.b16 %v1239, %v1223
        %v1624 = vpack.c.b16 %v1240, %v1224
        %v1625 = vpack.c.b16 %v1241, %v1225
        %v1626 = vpack.c.b16 %v1242, %v1226
        %v1627 = vpack.c.b16 %v1243, %v1227
        %v1628 = vpack.c.b16 %v1244, %v1228
        %v1629 = vpack.c.b16 %v1245, %v1229
        %v1630 = vpack.c.b16 %v1246, %v1230
        %v1631 = vpack.c.b16 %v1247, %v1231
        %v1632 = vpack.c.b16 %v1248, %v1232
        %v1633 = vpack.c.b16 %v1249, %v1233
        %v1634 = vpack.c.b16 %v1250, %v1234
        %v1635 = vpack.c.b16 %v1251, %v1235
        %v1636 = vpack.c.b16 %v1268, %v1252
        %v1637 = vpack.c.b16 %v1269, %v1253
        %v1638 = vpack.c.b16 %v1270, %v1254
        %v1639 = vpack.c.b16 %v1271, %v1255
        %v1640 = vpack.c.b16 %v1272, %v1256
        %v1641 = vpack.c.b16 %v1273, %v1257
        %v1642 = vpack.c.b16 %v1274, %v1258
        %v1643 = vpack.c.b16 %v1275, %v1259
        %v1644 = vpack.c.b16 %v1276, %v1260
        %v1645 = vpack.c.b16 %v1277, %v1261
        %v1646 = vpack.c.b16 %v1278, %v1262
        %v1647 = vpack.c.b16 %v1279, %v1263
        %v1648 = vpack.c.b16 %v1280, %v1264
        %v1649 = vpack.c.b16 %v1281, %v1265
        %v1650 = vpack.c.b16 %v1282, %v1266
        %v1651 = vpack.c.b16 %v1283, %v1267
        %v1652 = vpack.c.b16 %v1300, %v1284
        %v1653 = vpack.c.b16 %v1301, %v1285
        %v1654 = vpack.c.b16 %v1302, %v1286
        %v1655 = vpack.c.b16 %v1303, %v1287
        %v1656 = vpack.c.b16 %v1304, %v1288
        %v1657 = vpack.c.b16 %v1305, %v1289
        %v1658 = vpack.c.b16 %v1306, %v1290
        %v1659 = vpack.c.b16 %v1307, %v1291
        %v1660 = vpack.c.b16 %v1308, %v1292
        %v1661 = vpack.c.b16 %v1309, %v1293
        %v1662 = vpack.c.b16 %v1310, %v1294
        %v1663 = vpack.c.b16 %v1311, %v1295
        %v1664 = vpack.c.b16 %v1312, %v1296
        %v1665 = vpack.c.b16 %v1313, %v1297
        %v1666 = vpack.c.b16 %v1314, %v1298
        %v1667 = vpack.c.b16 %v1315, %v1299
        %v1668 = vpack.c.b16 %v1332, %v1316
        %v1669 = vpack.c.b16 %v1333, %v1317
        %v1670 = vpack.c.b16 %v1334, %v1318
        %v1671 = vpack.c.b16 %v1335, %v1319
        %v1672 = vpack.c.b16 %v1336, %v1320
        %v1673 = vpack.c.b16 %v1337, %v1321
        %v1674 = vpack.c.b16 %v1338, %v1322
        %v1675 = vpack.c.b16 %v1339, %v1323
        %v1676 = vpack.c.b16 %v1340, %v1324
        %v1677 = vpack.c.b16 %v1341, %v1325
        %v1678 = vpack.c.b16 %v1342, %v1326
        %v1679 = vpack.c.b16 %v1343, %v1327
        %v1680 = vpack.c.b16 %v1344, %v1328
        %v1681 = vpack.c.b16 %v1345, %v1329
        %v1682 = vpack.c.b16 %v1346, %v1330
        %v1683 = vpack.c.b16 %v1347, %v1331
        %v1684 = vpack.c.b16 %v1364, %v1348
        %v1685 = vpack.c.b16 %v1365, %v1349
        %v1686 = vpack.c.b16 %v1366, %v1350
        %v1687 = vpack.c.b16 %v1367, %v1351
        %v1688 = vpack.c.b16 %v1368, %v1352
        %v1689 = vpack.c.b16 %v1369, %v1353
        %v1690 = vpack.c.b16 %v1370, %v1354
        %v1691 = vpack.c.b16 %v1371, %v1355
        %v1692 = vpack.c.b16 %v1372, %v1356
        %v1693 = vpack.c.b16 %v1373, %v1357
        %v1694 = vpack.c.b16 %v1374, %v1358
        %v1695 = vpack.c.b16 %v1375, %v1359
        %v1696 = vpack.c.b16 %v1376, %v1360
        %v1697 = vpack.c.b16 %v1377, %v1361
        %v1698 = vpack.c.b16 %v1378, %v1362
        %v1699 = vpack.c.b16 %v1379, %v1363
        %v1700 = vpack.c.b16 %v1396, %v1380
        %v1701 = vpack.c.b16 %v1397, %v1381
        %v1702 = vpack.c.b16 %v1398, %v1382
        %v1703 = vpack.c.b16 %v1399, %v1383
        %v1704 = vpack.c.b16 %v1400, %v1384
        %v1705 = vpack.c.b16 %v1401, %v1385
        %v1706 = vpack.c.b16 %v1402, %v1386
        %v1707 = vpack.c.b16 %v1403, %v1387
        %v1708 = vpack.c.b16 %v1404, %v1388
        %v1709 = vpack.c.b16 %v1405, %v1389
        %v1710 = vpack.c.b16 %v1406, %v1390
        %v1711 = vpack.c.b16 %v1407, %v1391
        %v1712 = vpack.c.b16 %v1408, %v1392
        %v1713 = vpack.c.b16 %v1409, %v1393
        %v1714 = vpack.c.b16 %v1410, %v1394
        %v1715 = vpack.c.b16 %v1411, %v1395
        %v1716 = vpack.c.b16 %v1428, %v1412
        %v1717 = vpack.c.b16 %v1429, %v1413
        %v1718 = vpack.c.b16 %v1430, %v1414
        %v1719 = vpack.c.b16 %v1431, %v1415
        %v1720 = vpack.c.b16 %v1432, %v1416
        %v1721 = vpack.c.b16 %v1433, %v1417
        %v1722 = vpack.c.b16 %v1434, %v1418
        %v1723 = vpack.c.b16 %v1435, %v1419
        %v1724 = vpack.c.b16 %v1436, %v1420
        %v1725 = vpack.c.b16 %v1437, %v1421
        %v1726 = vpack.c.b16 %v1438, %v1422
        %v1727 = vpack.c.b16 %v1439, %v1423
        %v1728 = vpack.c.b16 %v1440, %v1424
        %v1729 = vpack.c.b16 %v1441, %v1425
        %v1730 = vpack.c.b16 %v1442, %v1426
        %v1731 = vpack.c.b16 %v1443, %v1427
        %v1732 = vpack.c.b16 %v1460, %v1444
        %v1733 = vpack.c.b16 %v1461, %v1445
        %v1734 = vpack.c.b16 %v1462, %v1446
        %v1735 = vpack.c.b16 %v1463, %v1447
        %v1736 = vpack.c.b16 %v1464, %v1448
        %v1737 = vpack.c.b16 %v1465, %v1449
        %v1738 = vpack.c.b16 %v1466, %v1450
        %v1739 = vpack.c.b16 %v1467, %v1451
        %v1740 = vpack.c.b16 %v1468, %v1452
        %v1741 = vpack.c.b16 %v1469, %v1453
        %v1742 = vpack.c.b16 %v1470, %v1454
        %v1743 = vpack.c.b16 %v1471, %v1455
        %v1744 = vpack.c.b16 %v1472, %v1456
        %v1745 = vpack.c.b16 %v1473, %v1457
        %v1746 = vpack.c.b16 %v1474, %v1458
        %v1747 = vpack.c.b16 %v1475, %v1459
        %v1748 = vpack.c.b16 %v1492, %v1476
        %v1749 = vpack.c.b16 %v1493, %v1477
        %v1750 = vpack.c.b16 %v1494, %v1478
        %v1751 = vpack.c.b16 %v1495, %v1479
        %v1752 = vpack.c.b16 %v1496, %v1480
        %v1753 = vpack.c.b16 %v1497, %v1481
        %v1754 = vpack.c.b16 %v1498, %v1482
        %v1755 = vpack.c.b16 %v1499, %v1483
        %v1756 = vpack.c.b16 %v1500, %v1484
        %v1757 = vpack.c.b16 %v1501, %v1485
        %v1758 = vpack.c.b16 %v1502, %v1486
        %v1759 = vpack.c.b16 %v1503, %v1487
        %v1760 = vpack.c.b16 %v1504, %v1488
        %v1761 = vpack.c.b16 %v1505, %v1489
        %v1762 = vpack.c.b16 %v1506, %v1490
        %v1763 = vpack.c.b16 %v1507, %v1491
        %2020 = vmatpush.bf16.msra.mxu0 %v1620
        %2021 = vmatpush.bf16.msra.mxu0 %v1604
        %2022 = vmatpush.bf16.msra.mxu0 %v1588
        %2023 = vmatpush.bf16.msra.mxu0 %v1572
        %2024 = vmatpush.bf16.msra.mxu0 %v1556
        %2025 = vmatpush.bf16.msra.mxu0 %v1540
        %2026 = vmatpush.bf16.msra.mxu0 %v1524
        %2027 = vmatpush.bf16.msra.mxu0 %v1508
        %2028 = vmatmul.bf16.gmra.mxu0 %v688
        %v2029 = vpop.f32.mrf.mxu0
        %v2030 = vadd.f32 %v581, %v2029
        %v2031 = vpop.f32.mrf.mxu0
        %v2032 = vadd.f32 %v581, %v2031
        %2033 = vmatmul.bf16.gmra.mxu0 %v690
        %v2034 = vpop.f32.mrf.mxu0
        %v2035 = vadd.f32 %v581, %v2034
        %v2036 = vpop.f32.mrf.mxu0
        %v2037 = vadd.f32 %v581, %v2036
        %2038 = vmatmul.bf16.gmra.mxu0 %v692
        %v2039 = vpop.f32.mrf.mxu0
        %v2040 = vadd.f32 %v581, %v2039
        %v2041 = vpop.f32.mrf.mxu0
        %v2042 = vadd.f32 %v581, %v2041
        %2043 = vmatmul.bf16.gmra.mxu0 %v694
        %v2044 = vpop.f32.mrf.mxu0
        %v2045 = vadd.f32 %v581, %v2044
        %v2046 = vpop.f32.mrf.mxu0
        %v2047 = vadd.f32 %v581, %v2046
        %2048 = vmatmul.bf16.gmra.mxu0 %v696
        %v2049 = vpop.f32.mrf.mxu0
        %v2050 = vadd.f32 %v581, %v2049
        %v2051 = vpop.f32.mrf.mxu0
        %v2052 = vadd.f32 %v581, %v2051
        %2053 = vmatmul.bf16.gmra.mxu0 %v698
        %v2054 = vpop.f32.mrf.mxu0
        %v2055 = vadd.f32 %v581, %v2054
        %v2056 = vpop.f32.mrf.mxu0
        %v2057 = vadd.f32 %v581, %v2056
        %2058 = vmatmul.bf16.gmra.mxu0 %v700
        %v2059 = vpop.f32.mrf.mxu0
        %v2060 = vadd.f32 %v581, %v2059
        %v2061 = vpop.f32.mrf.mxu0
        %v2062 = vadd.f32 %v581, %v2061
        %2063 = vmatmul.bf16.gmra.mxu0 %v702
        %v2064 = vpop.f32.mrf.mxu0
        %v2065 = vadd.f32 %v581, %v2064
        %v2066 = vpop.f32.mrf.mxu0
        %v2067 = vadd.f32 %v581, %v2066
        %2068 = vmatmul.bf16.gmra.mxu0 %v704
        %v2069 = vpop.f32.mrf.mxu0
        %v2070 = vadd.f32 %v581, %v2069
        %v2071 = vpop.f32.mrf.mxu0
        %v2072 = vadd.f32 %v581, %v2071
        %2073 = vmatmul.bf16.gmra.mxu0 %v706
        %v2074 = vpop.f32.mrf.mxu0
        %v2075 = vadd.f32 %v581, %v2074
        %v2076 = vpop.f32.mrf.mxu0
        %v2077 = vadd.f32 %v581, %v2076
        %2078 = vmatmul.bf16.gmra.mxu0 %v708
        %v2079 = vpop.f32.mrf.mxu0
        %v2080 = vadd.f32 %v581, %v2079
        %v2081 = vpop.f32.mrf.mxu0
        %v2082 = vadd.f32 %v581, %v2081
        %2083 = vmatmul.bf16.gmra.mxu0 %v710
        %v2084 = vpop.f32.mrf.mxu0
        %v2085 = vadd.f32 %v581, %v2084
        %v2086 = vpop.f32.mrf.mxu0
        %v2087 = vadd.f32 %v581, %v2086
        %2088 = vmatmul.bf16.gmra.mxu0 %v712
        %v2089 = vpop.f32.mrf.mxu0
        %v2090 = vadd.f32 %v581, %v2089
        %v2091 = vpop.f32.mrf.mxu0
        %2092 = vdwg.mxu0
        %2093 = vmatpush.bf16.msra.mxu0 %v1748
        %2094 = vmatpush.bf16.msra.mxu0 %v1732
        %2095 = vmatpush.bf16.msra.mxu0 %v1716
        %2096 = vmatpush.bf16.msra.mxu0 %v1700
        %2097 = vmatpush.bf16.msra.mxu0 %v1684
        %2098 = vmatpush.bf16.msra.mxu0 %v1668
        %2099 = vmatpush.bf16.msra.mxu0 %v1652
        %2100 = vmatpush.bf16.msra.mxu0 %v1636
        %2101 = vmatmul.bf16.gmra.mxu0 %v689
        %v2102 = vpop.f32.mrf.mxu0
        %v2103 = vadd.f32 %v2030, %v2102
        %v2104 = vpop.f32.mrf.mxu0
        %v2105 = vadd.f32 %v2032, %v2104
        %2106 = vmatmul.bf16.gmra.mxu0 %v691
        %v2107 = vpop.f32.mrf.mxu0
        %v2108 = vadd.f32 %v2035, %v2107
        %v2109 = vpop.f32.mrf.mxu0
        %v2110 = vadd.f32 %v2037, %v2109
        %2111 = vmatmul.bf16.gmra.mxu0 %v693
        %v2112 = vpop.f32.mrf.mxu0
        %v2113 = vadd.f32 %v2040, %v2112
        %v2114 = vpop.f32.mrf.mxu0
        %v2115 = vadd.f32 %v2042, %v2114
        %2116 = vmatmul.bf16.gmra.mxu0 %v695
        %v2117 = vpop.f32.mrf.mxu0
        %v2118 = vadd.f32 %v2045, %v2117
        %v2119 = vpop.f32.mrf.mxu0
        %v2120 = vadd.f32 %v2047, %v2119
        %2121 = vmatmul.bf16.gmra.mxu0 %v697
        %v2122 = vpop.f32.mrf.mxu0
        %v2123 = vadd.f32 %v2050, %v2122
        %v2124 = vpop.f32.mrf.mxu0
        %v2125 = vadd.f32 %v2052, %v2124
        %2126 = vmatmul.bf16.gmra.mxu0 %v699
        %v2127 = vpop.f32.mrf.mxu0
        %v2128 = vadd.f32 %v2055, %v2127
        %v2129 = vpop.f32.mrf.mxu0
        %v2130 = vadd.f32 %v2057, %v2129
        %2131 = vmatmul.bf16.gmra.mxu0 %v701
        %v2132 = vpop.f32.mrf.mxu0
        %v2133 = vadd.f32 %v2060, %v2132
        %v2134 = vpop.f32.mrf.mxu0
        %v2135 = vadd.f32 %v2062, %v2134
        %2136 = vmatmul.bf16.gmra.mxu0 %v703
        %v2137 = vpop.f32.mrf.mxu0
        %v2138 = vadd.f32 %v2065, %v2137
        %v2139 = vpop.f32.mrf.mxu0
        %v2140 = vadd.f32 %v2067, %v2139
        %2141 = vmatmul.bf16.gmra.mxu0 %v705
        %v2142 = vpop.f32.mrf.mxu0
        %v2143 = vadd.f32 %v2070, %v2142
        %v2144 = vpop.f32.mrf.mxu0
        %v2145 = vadd.f32 %v2072, %v2144
        %2146 = vmatmul.bf16.gmra.mxu0 %v707
        %v2147 = vpop.f32.mrf.mxu0
        %v2148 = vadd.f32 %v2075, %v2147
        %v2149 = vpop.f32.mrf.mxu0
        %v2150 = vadd.f32 %v2077, %v2149
        %2151 = vmatmul.bf16.gmra.mxu0 %v709
        %v2152 = vpop.f32.mrf.mxu0
        %v2153 = vadd.f32 %v2080, %v2152
        %v2154 = vpop.f32.mrf.mxu0
        %v2155 = vadd.f32 %v2082, %v2154
        %2156 = vmatmul.bf16.gmra.mxu0 %v711
        %v2157 = vpop.f32.mrf.mxu0
        %v2158 = vadd.f32 %v2085, %v2157
        %v2159 = vpop.f32.mrf.mxu0
        %v2160 = vadd.f32 %v2087, %v2159
        %2161 = vmatmul.bf16.gmra.mxu0 %v713
        %v2162 = vpop.f32.mrf.mxu0
        %v2163 = vadd.f32 %v2090, %v2162
        %v2164 = vpop.f32.mrf.mxu0
        %2165 = vdwg.mxu0
        %2166 = vmatpush.bf16.msra.mxu0 %v1621
        %2167 = vmatpush.bf16.msra.mxu0 %v1605
        %2168 = vmatpush.bf16.msra.mxu0 %v1589
        %2169 = vmatpush.bf16.msra.mxu0 %v1573
        %2170 = vmatpush.bf16.msra.mxu0 %v1557
        %2171 = vmatpush.bf16.msra.mxu0 %v1541
        %2172 = vmatpush.bf16.msra.mxu0 %v1525
        %2173 = vmatpush.bf16.msra.mxu0 %v1509
        %2174 = vmatmul.bf16.gmra.mxu0 %v688
        %v2175 = vpop.f32.mrf.mxu0
        %v2176 = vadd.f32 %v582, %v2175
        %v2177 = vpop.f32.mrf.mxu0
        %v2178 = vadd.f32 %v582, %v2177
        %2179 = vmatmul.bf16.gmra.mxu0 %v690
        %v2180 = vpop.f32.mrf.mxu0
        %v2181 = vadd.f32 %v582, %v2180
        %v2182 = vpop.f32.mrf.mxu0
        %v2183 = vadd.f32 %v582, %v2182
        %2184 = vmatmul.bf16.gmra.mxu0 %v692
        %v2185 = vpop.f32.mrf.mxu0
        %v2186 = vadd.f32 %v582, %v2185
        %v2187 = vpop.f32.mrf.mxu0
        %v2188 = vadd.f32 %v582, %v2187
        %2189 = vmatmul.bf16.gmra.mxu0 %v694
        %v2190 = vpop.f32.mrf.mxu0
        %v2191 = vadd.f32 %v582, %v2190
        %v2192 = vpop.f32.mrf.mxu0
        %v2193 = vadd.f32 %v582, %v2192
        %2194 = vmatmul.bf16.gmra.mxu0 %v696
        %v2195 = vpop.f32.mrf.mxu0
        %v2196 = vadd.f32 %v582, %v2195
        %v2197 = vpop.f32.mrf.mxu0
        %v2198 = vadd.f32 %v582, %v2197
        %2199 = vmatmul.bf16.gmra.mxu0 %v698
        %v2200 = vpop.f32.mrf.mxu0
        %v2201 = vadd.f32 %v582, %v2200
        %v2202 = vpop.f32.mrf.mxu0
        %v2203 = vadd.f32 %v582, %v2202
        %2204 = vmatmul.bf16.gmra.mxu0 %v700
        %v2205 = vpop.f32.mrf.mxu0
        %v2206 = vadd.f32 %v582, %v2205
        %v2207 = vpop.f32.mrf.mxu0
        %v2208 = vadd.f32 %v582, %v2207
        %2209 = vmatmul.bf16.gmra.mxu0 %v702
        %v2210 = vpop.f32.mrf.mxu0
        %v2211 = vadd.f32 %v582, %v2210
        %v2212 = vpop.f32.mrf.mxu0
        %v2213 = vadd.f32 %v582, %v2212
        %2214 = vmatmul.bf16.gmra.mxu0 %v704
        %v2215 = vpop.f32.mrf.mxu0
        %v2216 = vadd.f32 %v582, %v2215
        %v2217 = vpop.f32.mrf.mxu0
        %v2218 = vadd.f32 %v582, %v2217
        %2219 = vmatmul.bf16.gmra.mxu0 %v706
        %v2220 = vpop.f32.mrf.mxu0
        %v2221 = vadd.f32 %v582, %v2220
        %v2222 = vpop.f32.mrf.mxu0
        %v2223 = vadd.f32 %v582, %v2222
        %2224 = vmatmul.bf16.gmra.mxu0 %v708
        %v2225 = vpop.f32.mrf.mxu0
        %v2226 = vadd.f32 %v582, %v2225
        %v2227 = vpop.f32.mrf.mxu0
        %v2228 = vadd.f32 %v582, %v2227
        %2229 = vmatmul.bf16.gmra.mxu0 %v710
        %v2230 = vpop.f32.mrf.mxu0
        %v2231 = vadd.f32 %v582, %v2230
        %v2232 = vpop.f32.mrf.mxu0
        %v2233 = vadd.f32 %v582, %v2232
        %2234 = vmatmul.bf16.gmra.mxu0 %v712
        %v2235 = vpop.f32.mrf.mxu0
        %v2236 = vadd.f32 %v582, %v2235
        %v2237 = vpop.f32.mrf.mxu0
        %2238 = vdwg.mxu0
        %2239 = vmatpush.bf16.msra.mxu0 %v1749
        %2240 = vmatpush.bf16.msra.mxu0 %v1733
        %2241 = vmatpush.bf16.msra.mxu0 %v1717
        %2242 = vmatpush.bf16.msra.mxu0 %v1701
        %2243 = vmatpush.bf16.msra.mxu0 %v1685
        %2244 = vmatpush.bf16.msra.mxu0 %v1669
        %2245 = vmatpush.bf16.msra.mxu0 %v1653
        %2246 = vmatpush.bf16.msra.mxu0 %v1637
        %2247 = vmatmul.bf16.gmra.mxu0 %v689
        %v2248 = vpop.f32.mrf.mxu0
        %v2249 = vadd.f32 %v2176, %v2248
        %v2250 = vpop.f32.mrf.mxu0
        %v2251 = vadd.f32 %v2178, %v2250
        %2252 = vmatmul.bf16.gmra.mxu0 %v691
        %v2253 = vpop.f32.mrf.mxu0
        %v2254 = vadd.f32 %v2181, %v2253
        %v2255 = vpop.f32.mrf.mxu0
        %v2256 = vadd.f32 %v2183, %v2255
        %2257 = vmatmul.bf16.gmra.mxu0 %v693
        %v2258 = vpop.f32.mrf.mxu0
        %v2259 = vadd.f32 %v2186, %v2258
        %v2260 = vpop.f32.mrf.mxu0
        %v2261 = vadd.f32 %v2188, %v2260
        %2262 = vmatmul.bf16.gmra.mxu0 %v695
        %v2263 = vpop.f32.mrf.mxu0
        %v2264 = vadd.f32 %v2191, %v2263
        %v2265 = vpop.f32.mrf.mxu0
        %v2266 = vadd.f32 %v2193, %v2265
        %2267 = vmatmul.bf16.gmra.mxu0 %v697
        %v2268 = vpop.f32.mrf.mxu0
        %v2269 = vadd.f32 %v2196, %v2268
        %v2270 = vpop.f32.mrf.mxu0
        %v2271 = vadd.f32 %v2198, %v2270
        %2272 = vmatmul.bf16.gmra.mxu0 %v699
        %v2273 = vpop.f32.mrf.mxu0
        %v2274 = vadd.f32 %v2201, %v2273
        %v2275 = vpop.f32.mrf.mxu0
        %v2276 = vadd.f32 %v2203, %v2275
        %2277 = vmatmul.bf16.gmra.mxu0 %v701
        %v2278 = vpop.f32.mrf.mxu0
        %v2279 = vadd.f32 %v2206, %v2278
        %v2280 = vpop.f32.mrf.mxu0
        %v2281 = vadd.f32 %v2208, %v2280
        %2282 = vmatmul.bf16.gmra.mxu0 %v703
        %v2283 = vpop.f32.mrf.mxu0
        %v2284 = vadd.f32 %v2211, %v2283
        %v2285 = vpop.f32.mrf.mxu0
        %v2286 = vadd.f32 %v2213, %v2285
        %2287 = vmatmul.bf16.gmra.mxu0 %v705
        %v2288 = vpop.f32.mrf.mxu0
        %v2289 = vadd.f32 %v2216, %v2288
        %v2290 = vpop.f32.mrf.mxu0
        %v2291 = vadd.f32 %v2218, %v2290
        %2292 = vmatmul.bf16.gmra.mxu0 %v707
        %v2293 = vpop.f32.mrf.mxu0
        %v2294 = vadd.f32 %v2221, %v2293
        %v2295 = vpop.f32.mrf.mxu0
        %v2296 = vadd.f32 %v2223, %v2295
        %2297 = vmatmul.bf16.gmra.mxu0 %v709
        %v2298 = vpop.f32.mrf.mxu0
        %v2299 = vadd.f32 %v2226, %v2298
        %v2300 = vpop.f32.mrf.mxu0
        %v2301 = vadd.f32 %v2228, %v2300
        %2302 = vmatmul.bf16.gmra.mxu0 %v711
        %v2303 = vpop.f32.mrf.mxu0
        %v2304 = vadd.f32 %v2231, %v2303
        %v2305 = vpop.f32.mrf.mxu0
        %v2306 = vadd.f32 %v2233, %v2305
        %2307 = vmatmul.bf16.gmra.mxu0 %v713
        %v2308 = vpop.f32.mrf.mxu0
        %v2309 = vadd.f32 %v2236, %v2308
        %v2310 = vpop.f32.mrf.mxu0
        %2311 = vdwg.mxu0
        %2312 = vmatpush.bf16.msra.mxu0 %v1622
        %2313 = vmatpush.bf16.msra.mxu0 %v1606
        %2314 = vmatpush.bf16.msra.mxu0 %v1590
        %2315 = vmatpush.bf16.msra.mxu0 %v1574
        %2316 = vmatpush.bf16.msra.mxu0 %v1558
        %2317 = vmatpush.bf16.msra.mxu0 %v1542
        %2318 = vmatpush.bf16.msra.mxu0 %v1526
        %2319 = vmatpush.bf16.msra.mxu0 %v1510
        %2320 = vmatmul.bf16.gmra.mxu0 %v688
        %v2321 = vpop.f32.mrf.mxu0
        %v2322 = vadd.f32 %v583, %v2321
        %v2323 = vpop.f32.mrf.mxu0
        %v2324 = vadd.f32 %v583, %v2323
        %2325 = vmatmul.bf16.gmra.mxu0 %v690
        %v2326 = vpop.f32.mrf.mxu0
        %v2327 = vadd.f32 %v583, %v2326
        %v2328 = vpop.f32.mrf.mxu0
        %v2329 = vadd.f32 %v583, %v2328
        %2330 = vmatmul.bf16.gmra.mxu0 %v692
        %v2331 = vpop.f32.mrf.mxu0
        %v2332 = vadd.f32 %v583, %v2331
        %v2333 = vpop.f32.mrf.mxu0
        %v2334 = vadd.f32 %v583, %v2333
        %2335 = vmatmul.bf16.gmra.mxu0 %v694
        %v2336 = vpop.f32.mrf.mxu0
        %v2337 = vadd.f32 %v583, %v2336
        %v2338 = vpop.f32.mrf.mxu0
        %v2339 = vadd.f32 %v583, %v2338
        %2340 = vmatmul.bf16.gmra.mxu0 %v696
        %v2341 = vpop.f32.mrf.mxu0
        %v2342 = vadd.f32 %v583, %v2341
        %v2343 = vpop.f32.mrf.mxu0
        %v2344 = vadd.f32 %v583, %v2343
        %2345 = vmatmul.bf16.gmra.mxu0 %v698
        %v2346 = vpop.f32.mrf.mxu0
        %v2347 = vadd.f32 %v583, %v2346
        %v2348 = vpop.f32.mrf.mxu0
        %v2349 = vadd.f32 %v583, %v2348
        %2350 = vmatmul.bf16.gmra.mxu0 %v700
        %v2351 = vpop.f32.mrf.mxu0
        %v2352 = vadd.f32 %v583, %v2351
        %v2353 = vpop.f32.mrf.mxu0
        %v2354 = vadd.f32 %v583, %v2353
        %2355 = vmatmul.bf16.gmra.mxu0 %v702
        %v2356 = vpop.f32.mrf.mxu0
        %v2357 = vadd.f32 %v583, %v2356
        %v2358 = vpop.f32.mrf.mxu0
        %v2359 = vadd.f32 %v583, %v2358
        %2360 = vmatmul.bf16.gmra.mxu0 %v704
        %v2361 = vpop.f32.mrf.mxu0
        %v2362 = vadd.f32 %v583, %v2361
        %v2363 = vpop.f32.mrf.mxu0
        %v2364 = vadd.f32 %v583, %v2363
        %2365 = vmatmul.bf16.gmra.mxu0 %v706
        %v2366 = vpop.f32.mrf.mxu0
        %v2367 = vadd.f32 %v583, %v2366
        %v2368 = vpop.f32.mrf.mxu0
        %v2369 = vadd.f32 %v583, %v2368
        %2370 = vmatmul.bf16.gmra.mxu0 %v708
        %v2371 = vpop.f32.mrf.mxu0
        %v2372 = vadd.f32 %v583, %v2371
        %v2373 = vpop.f32.mrf.mxu0
        %v2374 = vadd.f32 %v583, %v2373
        %2375 = vmatmul.bf16.gmra.mxu0 %v710
        %v2376 = vpop.f32.mrf.mxu0
        %v2377 = vadd.f32 %v583, %v2376
        %v2378 = vpop.f32.mrf.mxu0
        %v2379 = vadd.f32 %v583, %v2378
        %2380 = vmatmul.bf16.gmra.mxu0 %v712
        %v2381 = vpop.f32.mrf.mxu0
        %v2382 = vadd.f32 %v583, %v2381
        %v2383 = vpop.f32.mrf.mxu0
        %2384 = vdwg.mxu0
        %2385 = vmatpush.bf16.msra.mxu0 %v1750
        %2386 = vmatpush.bf16.msra.mxu0 %v1734
        %2387 = vmatpush.bf16.msra.mxu0 %v1718
        %2388 = vmatpush.bf16.msra.mxu0 %v1702
        %2389 = vmatpush.bf16.msra.mxu0 %v1686
        %2390 = vmatpush.bf16.msra.mxu0 %v1670
        %2391 = vmatpush.bf16.msra.mxu0 %v1654
        %2392 = vmatpush.bf16.msra.mxu0 %v1638
        %2393 = vmatmul.bf16.gmra.mxu0 %v689
        %v2394 = vpop.f32.mrf.mxu0
        %v2395 = vadd.f32 %v2322, %v2394
        %v2396 = vpop.f32.mrf.mxu0
        %v2397 = vadd.f32 %v2324, %v2396
        %2398 = vmatmul.bf16.gmra.mxu0 %v691
        %v2399 = vpop.f32.mrf.mxu0
        %v2400 = vadd.f32 %v2327, %v2399
        %v2401 = vpop.f32.mrf.mxu0
        %v2402 = vadd.f32 %v2329, %v2401
        %2403 = vmatmul.bf16.gmra.mxu0 %v693
        %v2404 = vpop.f32.mrf.mxu0
        %v2405 = vadd.f32 %v2332, %v2404
        %v2406 = vpop.f32.mrf.mxu0
        %v2407 = vadd.f32 %v2334, %v2406
        %2408 = vmatmul.bf16.gmra.mxu0 %v695
        %v2409 = vpop.f32.mrf.mxu0
        %v2410 = vadd.f32 %v2337, %v2409
        %v2411 = vpop.f32.mrf.mxu0
        %v2412 = vadd.f32 %v2339, %v2411
        %2413 = vmatmul.bf16.gmra.mxu0 %v697
        %v2414 = vpop.f32.mrf.mxu0
        %v2415 = vadd.f32 %v2342, %v2414
        %v2416 = vpop.f32.mrf.mxu0
        %v2417 = vadd.f32 %v2344, %v2416
        %2418 = vmatmul.bf16.gmra.mxu0 %v699
        %v2419 = vpop.f32.mrf.mxu0
        %v2420 = vadd.f32 %v2347, %v2419
        %v2421 = vpop.f32.mrf.mxu0
        %v2422 = vadd.f32 %v2349, %v2421
        %2423 = vmatmul.bf16.gmra.mxu0 %v701
        %v2424 = vpop.f32.mrf.mxu0
        %v2425 = vadd.f32 %v2352, %v2424
        %v2426 = vpop.f32.mrf.mxu0
        %v2427 = vadd.f32 %v2354, %v2426
        %2428 = vmatmul.bf16.gmra.mxu0 %v703
        %v2429 = vpop.f32.mrf.mxu0
        %v2430 = vadd.f32 %v2357, %v2429
        %v2431 = vpop.f32.mrf.mxu0
        %v2432 = vadd.f32 %v2359, %v2431
        %2433 = vmatmul.bf16.gmra.mxu0 %v705
        %v2434 = vpop.f32.mrf.mxu0
        %v2435 = vadd.f32 %v2362, %v2434
        %v2436 = vpop.f32.mrf.mxu0
        %v2437 = vadd.f32 %v2364, %v2436
        %2438 = vmatmul.bf16.gmra.mxu0 %v707
        %v2439 = vpop.f32.mrf.mxu0
        %v2440 = vadd.f32 %v2367, %v2439
        %v2441 = vpop.f32.mrf.mxu0
        %v2442 = vadd.f32 %v2369, %v2441
        %2443 = vmatmul.bf16.gmra.mxu0 %v709
        %v2444 = vpop.f32.mrf.mxu0
        %v2445 = vadd.f32 %v2372, %v2444
        %v2446 = vpop.f32.mrf.mxu0
        %v2447 = vadd.f32 %v2374, %v2446
        %2448 = vmatmul.bf16.gmra.mxu0 %v711
        %v2449 = vpop.f32.mrf.mxu0
        %v2450 = vadd.f32 %v2377, %v2449
        %v2451 = vpop.f32.mrf.mxu0
        %v2452 = vadd.f32 %v2379, %v2451
        %2453 = vmatmul.bf16.gmra.mxu0 %v713
        %v2454 = vpop.f32.mrf.mxu0
        %v2455 = vadd.f32 %v2382, %v2454
        %v2456 = vpop.f32.mrf.mxu0
        %2457 = vdwg.mxu0
        %2458 = vmatpush.bf16.msra.mxu0 %v1623
        %2459 = vmatpush.bf16.msra.mxu0 %v1607
        %2460 = vmatpush.bf16.msra.mxu0 %v1591
        %2461 = vmatpush.bf16.msra.mxu0 %v1575
        %2462 = vmatpush.bf16.msra.mxu0 %v1559
        %2463 = vmatpush.bf16.msra.mxu0 %v1543
        %2464 = vmatpush.bf16.msra.mxu0 %v1527
        %2465 = vmatpush.bf16.msra.mxu0 %v1511
        %2466 = vmatmul.bf16.gmra.mxu0 %v688
        %v2467 = vpop.f32.mrf.mxu0
        %v2468 = vadd.f32 %v584, %v2467
        %v2469 = vpop.f32.mrf.mxu0
        %v2470 = vadd.f32 %v584, %v2469
        %2471 = vmatmul.bf16.gmra.mxu0 %v690
        %v2472 = vpop.f32.mrf.mxu0
        %v2473 = vadd.f32 %v584, %v2472
        %v2474 = vpop.f32.mrf.mxu0
        %v2475 = vadd.f32 %v584, %v2474
        %2476 = vmatmul.bf16.gmra.mxu0 %v692
        %v2477 = vpop.f32.mrf.mxu0
        %v2478 = vadd.f32 %v584, %v2477
        %v2479 = vpop.f32.mrf.mxu0
        %v2480 = vadd.f32 %v584, %v2479
        %2481 = vmatmul.bf16.gmra.mxu0 %v694
        %v2482 = vpop.f32.mrf.mxu0
        %v2483 = vadd.f32 %v584, %v2482
        %v2484 = vpop.f32.mrf.mxu0
        %v2485 = vadd.f32 %v584, %v2484
        %2486 = vmatmul.bf16.gmra.mxu0 %v696
        %v2487 = vpop.f32.mrf.mxu0
        %v2488 = vadd.f32 %v584, %v2487
        %v2489 = vpop.f32.mrf.mxu0
        %v2490 = vadd.f32 %v584, %v2489
        %2491 = vmatmul.bf16.gmra.mxu0 %v698
        %v2492 = vpop.f32.mrf.mxu0
        %v2493 = vadd.f32 %v584, %v2492
        %v2494 = vpop.f32.mrf.mxu0
        %v2495 = vadd.f32 %v584, %v2494
        %2496 = vmatmul.bf16.gmra.mxu0 %v700
        %v2497 = vpop.f32.mrf.mxu0
        %v2498 = vadd.f32 %v584, %v2497
        %v2499 = vpop.f32.mrf.mxu0
        %v2500 = vadd.f32 %v584, %v2499
        %2501 = vmatmul.bf16.gmra.mxu0 %v702
        %v2502 = vpop.f32.mrf.mxu0
        %v2503 = vadd.f32 %v584, %v2502
        %v2504 = vpop.f32.mrf.mxu0
        %v2505 = vadd.f32 %v584, %v2504
        %2506 = vmatmul.bf16.gmra.mxu0 %v704
        %v2507 = vpop.f32.mrf.mxu0
        %v2508 = vadd.f32 %v584, %v2507
        %v2509 = vpop.f32.mrf.mxu0
        %v2510 = vadd.f32 %v584, %v2509
        %2511 = vmatmul.bf16.gmra.mxu0 %v706
        %v2512 = vpop.f32.mrf.mxu0
        %v2513 = vadd.f32 %v584, %v2512
        %v2514 = vpop.f32.mrf.mxu0
        %v2515 = vadd.f32 %v584, %v2514
        %2516 = vmatmul.bf16.gmra.mxu0 %v708
        %v2517 = vpop.f32.mrf.mxu0
        %v2518 = vadd.f32 %v584, %v2517
        %v2519 = vpop.f32.mrf.mxu0
        %v2520 = vadd.f32 %v584, %v2519
        %2521 = vmatmul.bf16.gmra.mxu0 %v710
        %v2522 = vpop.f32.mrf.mxu0
        %v2523 = vadd.f32 %v584, %v2522
        %v2524 = vpop.f32.mrf.mxu0
        %v2525 = vadd.f32 %v584, %v2524
        %2526 = vmatmul.bf16.gmra.mxu0 %v712
        %v2527 = vpop.f32.mrf.mxu0
        %v2528 = vadd.f32 %v584, %v2527
        %v2529 = vpop.f32.mrf.mxu0
        %2530 = vdwg.mxu0
        %2531 = vmatpush.bf16.msra.mxu0 %v1751
        %2532 = vmatpush.bf16.msra.mxu0 %v1735
        %2533 = vmatpush.bf16.msra.mxu0 %v1719
        %2534 = vmatpush.bf16.msra.mxu0 %v1703
        %2535 = vmatpush.bf16.msra.mxu0 %v1687
        %2536 = vmatpush.bf16.msra.mxu0 %v1671
        %2537 = vmatpush.bf16.msra.mxu0 %v1655
        %2538 = vmatpush.bf16.msra.mxu0 %v1639
        %2539 = vmatmul.bf16.gmra.mxu0 %v689
        %v2540 = vpop.f32.mrf.mxu0
        %v2541 = vadd.f32 %v2468, %v2540
        %v2542 = vpop.f32.mrf.mxu0
        %v2543 = vadd.f32 %v2470, %v2542
        %2544 = vmatmul.bf16.gmra.mxu0 %v691
        %v2545 = vpop.f32.mrf.mxu0
        %v2546 = vadd.f32 %v2473, %v2545
        %v2547 = vpop.f32.mrf.mxu0
        %v2548 = vadd.f32 %v2475, %v2547
        %2549 = vmatmul.bf16.gmra.mxu0 %v693
        %v2550 = vpop.f32.mrf.mxu0
        %v2551 = vadd.f32 %v2478, %v2550
        %v2552 = vpop.f32.mrf.mxu0
        %v2553 = vadd.f32 %v2480, %v2552
        %2554 = vmatmul.bf16.gmra.mxu0 %v695
        %v2555 = vpop.f32.mrf.mxu0
        %v2556 = vadd.f32 %v2483, %v2555
        %v2557 = vpop.f32.mrf.mxu0
        %v2558 = vadd.f32 %v2485, %v2557
        %2559 = vmatmul.bf16.gmra.mxu0 %v697
        %v2560 = vpop.f32.mrf.mxu0
        %v2561 = vadd.f32 %v2488, %v2560
        %v2562 = vpop.f32.mrf.mxu0
        %v2563 = vadd.f32 %v2490, %v2562
        %2564 = vmatmul.bf16.gmra.mxu0 %v699
        %v2565 = vpop.f32.mrf.mxu0
        %v2566 = vadd.f32 %v2493, %v2565
        %v2567 = vpop.f32.mrf.mxu0
        %v2568 = vadd.f32 %v2495, %v2567
        %2569 = vmatmul.bf16.gmra.mxu0 %v701
        %v2570 = vpop.f32.mrf.mxu0
        %v2571 = vadd.f32 %v2498, %v2570
        %v2572 = vpop.f32.mrf.mxu0
        %v2573 = vadd.f32 %v2500, %v2572
        %2574 = vmatmul.bf16.gmra.mxu0 %v703
        %v2575 = vpop.f32.mrf.mxu0
        %v2576 = vadd.f32 %v2503, %v2575
        %v2577 = vpop.f32.mrf.mxu0
        %v2578 = vadd.f32 %v2505, %v2577
        %2579 = vmatmul.bf16.gmra.mxu0 %v705
        %v2580 = vpop.f32.mrf.mxu0
        %v2581 = vadd.f32 %v2508, %v2580
        %v2582 = vpop.f32.mrf.mxu0
        %v2583 = vadd.f32 %v2510, %v2582
        %2584 = vmatmul.bf16.gmra.mxu0 %v707
        %v2585 = vpop.f32.mrf.mxu0
        %v2586 = vadd.f32 %v2513, %v2585
        %v2587 = vpop.f32.mrf.mxu0
        %v2588 = vadd.f32 %v2515, %v2587
        %2589 = vmatmul.bf16.gmra.mxu0 %v709
        %v2590 = vpop.f32.mrf.mxu0
        %v2591 = vadd.f32 %v2518, %v2590
        %v2592 = vpop.f32.mrf.mxu0
        %v2593 = vadd.f32 %v2520, %v2592
        %2594 = vmatmul.bf16.gmra.mxu0 %v711
        %v2595 = vpop.f32.mrf.mxu0
        %v2596 = vadd.f32 %v2523, %v2595
        %v2597 = vpop.f32.mrf.mxu0
        %v2598 = vadd.f32 %v2525, %v2597
        %2599 = vmatmul.bf16.gmra.mxu0 %v713
        %v2600 = vpop.f32.mrf.mxu0
        %v2601 = vadd.f32 %v2528, %v2600
        %v2602 = vpop.f32.mrf.mxu0
        %2603 = vdwg.mxu0
        %2604 = vmatpush.bf16.msra.mxu0 %v1624
        %2605 = vmatpush.bf16.msra.mxu0 %v1608
        %2606 = vmatpush.bf16.msra.mxu0 %v1592
        %2607 = vmatpush.bf16.msra.mxu0 %v1576
        %2608 = vmatpush.bf16.msra.mxu0 %v1560
        %2609 = vmatpush.bf16.msra.mxu0 %v1544
        %2610 = vmatpush.bf16.msra.mxu0 %v1528
        %2611 = vmatpush.bf16.msra.mxu0 %v1512
        %2612 = vmatmul.bf16.gmra.mxu0 %v688
        %v2613 = vpop.f32.mrf.mxu0
        %v2614 = vadd.f32 %v585, %v2613
        %v2615 = vpop.f32.mrf.mxu0
        %v2616 = vadd.f32 %v585, %v2615
        %2617 = vmatmul.bf16.gmra.mxu0 %v690
        %v2618 = vpop.f32.mrf.mxu0
        %v2619 = vadd.f32 %v585, %v2618
        %v2620 = vpop.f32.mrf.mxu0
        %v2621 = vadd.f32 %v585, %v2620
        %2622 = vmatmul.bf16.gmra.mxu0 %v692
        %v2623 = vpop.f32.mrf.mxu0
        %v2624 = vadd.f32 %v585, %v2623
        %v2625 = vpop.f32.mrf.mxu0
        %v2626 = vadd.f32 %v585, %v2625
        %2627 = vmatmul.bf16.gmra.mxu0 %v694
        %v2628 = vpop.f32.mrf.mxu0
        %v2629 = vadd.f32 %v585, %v2628
        %v2630 = vpop.f32.mrf.mxu0
        %v2631 = vadd.f32 %v585, %v2630
        %2632 = vmatmul.bf16.gmra.mxu0 %v696
        %v2633 = vpop.f32.mrf.mxu0
        %v2634 = vadd.f32 %v585, %v2633
        %v2635 = vpop.f32.mrf.mxu0
        %v2636 = vadd.f32 %v585, %v2635
        %2637 = vmatmul.bf16.gmra.mxu0 %v698
        %v2638 = vpop.f32.mrf.mxu0
        %v2639 = vadd.f32 %v585, %v2638
        %v2640 = vpop.f32.mrf.mxu0
        %v2641 = vadd.f32 %v585, %v2640
        %2642 = vmatmul.bf16.gmra.mxu0 %v700
        %v2643 = vpop.f32.mrf.mxu0
        %v2644 = vadd.f32 %v585, %v2643
        %v2645 = vpop.f32.mrf.mxu0
        %v2646 = vadd.f32 %v585, %v2645
        %2647 = vmatmul.bf16.gmra.mxu0 %v702
        %v2648 = vpop.f32.mrf.mxu0
        %v2649 = vadd.f32 %v585, %v2648
        %v2650 = vpop.f32.mrf.mxu0
        %v2651 = vadd.f32 %v585, %v2650
        %2652 = vmatmul.bf16.gmra.mxu0 %v704
        %v2653 = vpop.f32.mrf.mxu0
        %v2654 = vadd.f32 %v585, %v2653
        %v2655 = vpop.f32.mrf.mxu0
        %v2656 = vadd.f32 %v585, %v2655
        %2657 = vmatmul.bf16.gmra.mxu0 %v706
        %v2658 = vpop.f32.mrf.mxu0
        %v2659 = vadd.f32 %v585, %v2658
        %v2660 = vpop.f32.mrf.mxu0
        %v2661 = vadd.f32 %v585, %v2660
        %2662 = vmatmul.bf16.gmra.mxu0 %v708
        %v2663 = vpop.f32.mrf.mxu0
        %v2664 = vadd.f32 %v585, %v2663
        %v2665 = vpop.f32.mrf.mxu0
        %v2666 = vadd.f32 %v585, %v2665
        %2667 = vmatmul.bf16.gmra.mxu0 %v710
        %v2668 = vpop.f32.mrf.mxu0
        %v2669 = vadd.f32 %v585, %v2668
        %v2670 = vpop.f32.mrf.mxu0
        %v2671 = vadd.f32 %v585, %v2670
        %2672 = vmatmul.bf16.gmra.mxu0 %v712
        %v2673 = vpop.f32.mrf.mxu0
        %v2674 = vadd.f32 %v585, %v2673
        %v2675 = vpop.f32.mrf.mxu0
        %2676 = vdwg.mxu0
        %2677 = vmatpush.bf16.msra.mxu0 %v1752
        %2678 = vmatpush.bf16.msra.mxu0 %v1736
        %2679 = vmatpush.bf16.msra.mxu0 %v1720
        %2680 = vmatpush.bf16.msra.mxu0 %v1704
        %2681 = vmatpush.bf16.msra.mxu0 %v1688
        %2682 = vmatpush.bf16.msra.mxu0 %v1672
        %2683 = vmatpush.bf16.msra.mxu0 %v1656
        %2684 = vmatpush.bf16.msra.mxu0 %v1640
        %2685 = vmatmul.bf16.gmra.mxu0 %v689
        %v2686 = vpop.f32.mrf.mxu0
        %v2687 = vadd.f32 %v2614, %v2686
        %v2688 = vpop.f32.mrf.mxu0
        %v2689 = vadd.f32 %v2616, %v2688
        %2690 = vmatmul.bf16.gmra.mxu0 %v691
        %v2691 = vpop.f32.mrf.mxu0
        %v2692 = vadd.f32 %v2619, %v2691
        %v2693 = vpop.f32.mrf.mxu0
        %v2694 = vadd.f32 %v2621, %v2693
        %2695 = vmatmul.bf16.gmra.mxu0 %v693
        %v2696 = vpop.f32.mrf.mxu0
        %v2697 = vadd.f32 %v2624, %v2696
        %v2698 = vpop.f32.mrf.mxu0
        %v2699 = vadd.f32 %v2626, %v2698
        %2700 = vmatmul.bf16.gmra.mxu0 %v695
        %v2701 = vpop.f32.mrf.mxu0
        %v2702 = vadd.f32 %v2629, %v2701
        %v2703 = vpop.f32.mrf.mxu0
        %v2704 = vadd.f32 %v2631, %v2703
        %2705 = vmatmul.bf16.gmra.mxu0 %v697
        %v2706 = vpop.f32.mrf.mxu0
        %v2707 = vadd.f32 %v2634, %v2706
        %v2708 = vpop.f32.mrf.mxu0
        %v2709 = vadd.f32 %v2636, %v2708
        %2710 = vmatmul.bf16.gmra.mxu0 %v699
        %v2711 = vpop.f32.mrf.mxu0
        %v2712 = vadd.f32 %v2639, %v2711
        %v2713 = vpop.f32.mrf.mxu0
        %v2714 = vadd.f32 %v2641, %v2713
        %2715 = vmatmul.bf16.gmra.mxu0 %v701
        %v2716 = vpop.f32.mrf.mxu0
        %v2717 = vadd.f32 %v2644, %v2716
        %v2718 = vpop.f32.mrf.mxu0
        %v2719 = vadd.f32 %v2646, %v2718
        %2720 = vmatmul.bf16.gmra.mxu0 %v703
        %v2721 = vpop.f32.mrf.mxu0
        %v2722 = vadd.f32 %v2649, %v2721
        %v2723 = vpop.f32.mrf.mxu0
        %v2724 = vadd.f32 %v2651, %v2723
        %2725 = vmatmul.bf16.gmra.mxu0 %v705
        %v2726 = vpop.f32.mrf.mxu0
        %v2727 = vadd.f32 %v2654, %v2726
        %v2728 = vpop.f32.mrf.mxu0
        %v2729 = vadd.f32 %v2656, %v2728
        %2730 = vmatmul.bf16.gmra.mxu0 %v707
        %v2731 = vpop.f32.mrf.mxu0
        %v2732 = vadd.f32 %v2659, %v2731
        %v2733 = vpop.f32.mrf.mxu0
        %v2734 = vadd.f32 %v2661, %v2733
        %2735 = vmatmul.bf16.gmra.mxu0 %v709
        %v2736 = vpop.f32.mrf.mxu0
        %v2737 = vadd.f32 %v2664, %v2736
        %v2738 = vpop.f32.mrf.mxu0
        %v2739 = vadd.f32 %v2666, %v2738
        %2740 = vmatmul.bf16.gmra.mxu0 %v711
        %v2741 = vpop.f32.mrf.mxu0
        %v2742 = vadd.f32 %v2669, %v2741
        %v2743 = vpop.f32.mrf.mxu0
        %v2744 = vadd.f32 %v2671, %v2743
        %2745 = vmatmul.bf16.gmra.mxu0 %v713
        %v2746 = vpop.f32.mrf.mxu0
        %v2747 = vadd.f32 %v2674, %v2746
        %v2748 = vpop.f32.mrf.mxu0
        %2749 = vdwg.mxu0
        %2750 = vmatpush.bf16.msra.mxu0 %v1625
        %2751 = vmatpush.bf16.msra.mxu0 %v1609
        %2752 = vmatpush.bf16.msra.mxu0 %v1593
        %2753 = vmatpush.bf16.msra.mxu0 %v1577
        %2754 = vmatpush.bf16.msra.mxu0 %v1561
        %2755 = vmatpush.bf16.msra.mxu0 %v1545
        %2756 = vmatpush.bf16.msra.mxu0 %v1529
        %2757 = vmatpush.bf16.msra.mxu0 %v1513
        %2758 = vmatmul.bf16.gmra.mxu0 %v688
        %v2759 = vpop.f32.mrf.mxu0
        %v2760 = vadd.f32 %v586, %v2759
        %v2761 = vpop.f32.mrf.mxu0
        %v2762 = vadd.f32 %v586, %v2761
        %2763 = vmatmul.bf16.gmra.mxu0 %v690
        %v2764 = vpop.f32.mrf.mxu0
        %v2765 = vadd.f32 %v586, %v2764
        %v2766 = vpop.f32.mrf.mxu0
        %v2767 = vadd.f32 %v586, %v2766
        %2768 = vmatmul.bf16.gmra.mxu0 %v692
        %v2769 = vpop.f32.mrf.mxu0
        %v2770 = vadd.f32 %v586, %v2769
        %v2771 = vpop.f32.mrf.mxu0
        %v2772 = vadd.f32 %v586, %v2771
        %2773 = vmatmul.bf16.gmra.mxu0 %v694
        %v2774 = vpop.f32.mrf.mxu0
        %v2775 = vadd.f32 %v586, %v2774
        %v2776 = vpop.f32.mrf.mxu0
        %v2777 = vadd.f32 %v586, %v2776
        %2778 = vmatmul.bf16.gmra.mxu0 %v696
        %v2779 = vpop.f32.mrf.mxu0
        %v2780 = vadd.f32 %v586, %v2779
        %v2781 = vpop.f32.mrf.mxu0
        %v2782 = vadd.f32 %v586, %v2781
        %2783 = vmatmul.bf16.gmra.mxu0 %v698
        %v2784 = vpop.f32.mrf.mxu0
        %v2785 = vadd.f32 %v586, %v2784
        %v2786 = vpop.f32.mrf.mxu0
        %v2787 = vadd.f32 %v586, %v2786
        %2788 = vmatmul.bf16.gmra.mxu0 %v700
        %v2789 = vpop.f32.mrf.mxu0
        %v2790 = vadd.f32 %v586, %v2789
        %v2791 = vpop.f32.mrf.mxu0
        %v2792 = vadd.f32 %v586, %v2791
        %2793 = vmatmul.bf16.gmra.mxu0 %v702
        %v2794 = vpop.f32.mrf.mxu0
        %v2795 = vadd.f32 %v586, %v2794
        %v2796 = vpop.f32.mrf.mxu0
        %v2797 = vadd.f32 %v586, %v2796
        %2798 = vmatmul.bf16.gmra.mxu0 %v704
        %v2799 = vpop.f32.mrf.mxu0
        %v2800 = vadd.f32 %v586, %v2799
        %v2801 = vpop.f32.mrf.mxu0
        %v2802 = vadd.f32 %v586, %v2801
        %2803 = vmatmul.bf16.gmra.mxu0 %v706
        %v2804 = vpop.f32.mrf.mxu0
        %v2805 = vadd.f32 %v586, %v2804
        %v2806 = vpop.f32.mrf.mxu0
        %v2807 = vadd.f32 %v586, %v2806
        %2808 = vmatmul.bf16.gmra.mxu0 %v708
        %v2809 = vpop.f32.mrf.mxu0
        %v2810 = vadd.f32 %v586, %v2809
        %v2811 = vpop.f32.mrf.mxu0
        %v2812 = vadd.f32 %v586, %v2811
        %2813 = vmatmul.bf16.gmra.mxu0 %v710
        %v2814 = vpop.f32.mrf.mxu0
        %v2815 = vadd.f32 %v586, %v2814
        %v2816 = vpop.f32.mrf.mxu0
        %v2817 = vadd.f32 %v586, %v2816
        %2818 = vmatmul.bf16.gmra.mxu0 %v712
        %v2819 = vpop.f32.mrf.mxu0
        %v2820 = vadd.f32 %v586, %v2819
        %v2821 = vpop.f32.mrf.mxu0
        %2822 = vdwg.mxu0
        %2823 = vmatpush.bf16.msra.mxu0 %v1753
        %2824 = vmatpush.bf16.msra.mxu0 %v1737
        %2825 = vmatpush.bf16.msra.mxu0 %v1721
        %2826 = vmatpush.bf16.msra.mxu0 %v1705
        %2827 = vmatpush.bf16.msra.mxu0 %v1689
        %2828 = vmatpush.bf16.msra.mxu0 %v1673
        %2829 = vmatpush.bf16.msra.mxu0 %v1657
        %2830 = vmatpush.bf16.msra.mxu0 %v1641
        %2831 = vmatmul.bf16.gmra.mxu0 %v689
        %v2832 = vpop.f32.mrf.mxu0
        %v2833 = vadd.f32 %v2760, %v2832
        %v2834 = vpop.f32.mrf.mxu0
        %v2835 = vadd.f32 %v2762, %v2834
        %2836 = vmatmul.bf16.gmra.mxu0 %v691
        %v2837 = vpop.f32.mrf.mxu0
        %v2838 = vadd.f32 %v2765, %v2837
        %v2839 = vpop.f32.mrf.mxu0
        %v2840 = vadd.f32 %v2767, %v2839
        %2841 = vmatmul.bf16.gmra.mxu0 %v693
        %v2842 = vpop.f32.mrf.mxu0
        %v2843 = vadd.f32 %v2770, %v2842
        %v2844 = vpop.f32.mrf.mxu0
        %v2845 = vadd.f32 %v2772, %v2844
        %2846 = vmatmul.bf16.gmra.mxu0 %v695
        %v2847 = vpop.f32.mrf.mxu0
        %v2848 = vadd.f32 %v2775, %v2847
        %v2849 = vpop.f32.mrf.mxu0
        %v2850 = vadd.f32 %v2777, %v2849
        %2851 = vmatmul.bf16.gmra.mxu0 %v697
        %v2852 = vpop.f32.mrf.mxu0
        %v2853 = vadd.f32 %v2780, %v2852
        %v2854 = vpop.f32.mrf.mxu0
        %v2855 = vadd.f32 %v2782, %v2854
        %2856 = vmatmul.bf16.gmra.mxu0 %v699
        %v2857 = vpop.f32.mrf.mxu0
        %v2858 = vadd.f32 %v2785, %v2857
        %v2859 = vpop.f32.mrf.mxu0
        %v2860 = vadd.f32 %v2787, %v2859
        %2861 = vmatmul.bf16.gmra.mxu0 %v701
        %v2862 = vpop.f32.mrf.mxu0
        %v2863 = vadd.f32 %v2790, %v2862
        %v2864 = vpop.f32.mrf.mxu0
        %v2865 = vadd.f32 %v2792, %v2864
        %2866 = vmatmul.bf16.gmra.mxu0 %v703
        %v2867 = vpop.f32.mrf.mxu0
        %v2868 = vadd.f32 %v2795, %v2867
        %v2869 = vpop.f32.mrf.mxu0
        %v2870 = vadd.f32 %v2797, %v2869
        %2871 = vmatmul.bf16.gmra.mxu0 %v705
        %v2872 = vpop.f32.mrf.mxu0
        %v2873 = vadd.f32 %v2800, %v2872
        %v2874 = vpop.f32.mrf.mxu0
        %v2875 = vadd.f32 %v2802, %v2874
        %2876 = vmatmul.bf16.gmra.mxu0 %v707
        %v2877 = vpop.f32.mrf.mxu0
        %v2878 = vadd.f32 %v2805, %v2877
        %v2879 = vpop.f32.mrf.mxu0
        %v2880 = vadd.f32 %v2807, %v2879
        %2881 = vmatmul.bf16.gmra.mxu0 %v709
        %v2882 = vpop.f32.mrf.mxu0
        %v2883 = vadd.f32 %v2810, %v2882
        %v2884 = vpop.f32.mrf.mxu0
        %v2885 = vadd.f32 %v2812, %v2884
        %2886 = vmatmul.bf16.gmra.mxu0 %v711
        %v2887 = vpop.f32.mrf.mxu0
        %v2888 = vadd.f32 %v2815, %v2887
        %v2889 = vpop.f32.mrf.mxu0
        %v2890 = vadd.f32 %v2817, %v2889
        %2891 = vmatmul.bf16.gmra.mxu0 %v713
        %v2892 = vpop.f32.mrf.mxu0
        %v2893 = vadd.f32 %v2820, %v2892
        %v2894 = vpop.f32.mrf.mxu0
        %2895 = vdwg.mxu0
        %2896 = vmatpush.bf16.msra.mxu0 %v1626
        %2897 = vmatpush.bf16.msra.mxu0 %v1610
        %2898 = vmatpush.bf16.msra.mxu0 %v1594
        %2899 = vmatpush.bf16.msra.mxu0 %v1578
        %2900 = vmatpush.bf16.msra.mxu0 %v1562
        %2901 = vmatpush.bf16.msra.mxu0 %v1546
        %2902 = vmatpush.bf16.msra.mxu0 %v1530
        %2903 = vmatpush.bf16.msra.mxu0 %v1514
        %2904 = vmatmul.bf16.gmra.mxu0 %v688
        %v2905 = vpop.f32.mrf.mxu0
        %v2906 = vadd.f32 %v587, %v2905
        %v2907 = vpop.f32.mrf.mxu0
        %v2908 = vadd.f32 %v587, %v2907
        %2909 = vmatmul.bf16.gmra.mxu0 %v690
        %v2910 = vpop.f32.mrf.mxu0
        %v2911 = vadd.f32 %v587, %v2910
        %v2912 = vpop.f32.mrf.mxu0
        %v2913 = vadd.f32 %v587, %v2912
        %2914 = vmatmul.bf16.gmra.mxu0 %v692
        %v2915 = vpop.f32.mrf.mxu0
        %v2916 = vadd.f32 %v587, %v2915
        %v2917 = vpop.f32.mrf.mxu0
        %v2918 = vadd.f32 %v587, %v2917
        %2919 = vmatmul.bf16.gmra.mxu0 %v694
        %v2920 = vpop.f32.mrf.mxu0
        %v2921 = vadd.f32 %v587, %v2920
        %v2922 = vpop.f32.mrf.mxu0
        %v2923 = vadd.f32 %v587, %v2922
        %2924 = vmatmul.bf16.gmra.mxu0 %v696
        %v2925 = vpop.f32.mrf.mxu0
        %v2926 = vadd.f32 %v587, %v2925
        %v2927 = vpop.f32.mrf.mxu0
        %v2928 = vadd.f32 %v587, %v2927
        %2929 = vmatmul.bf16.gmra.mxu0 %v698
        %v2930 = vpop.f32.mrf.mxu0
        %v2931 = vadd.f32 %v587, %v2930
        %v2932 = vpop.f32.mrf.mxu0
        %v2933 = vadd.f32 %v587, %v2932
        %2934 = vmatmul.bf16.gmra.mxu0 %v700
        %v2935 = vpop.f32.mrf.mxu0
        %v2936 = vadd.f32 %v587, %v2935
        %v2937 = vpop.f32.mrf.mxu0
        %v2938 = vadd.f32 %v587, %v2937
        %2939 = vmatmul.bf16.gmra.mxu0 %v702
        %v2940 = vpop.f32.mrf.mxu0
        %v2941 = vadd.f32 %v587, %v2940
        %v2942 = vpop.f32.mrf.mxu0
        %v2943 = vadd.f32 %v587, %v2942
        %2944 = vmatmul.bf16.gmra.mxu0 %v704
        %v2945 = vpop.f32.mrf.mxu0
        %v2946 = vadd.f32 %v587, %v2945
        %v2947 = vpop.f32.mrf.mxu0
        %v2948 = vadd.f32 %v587, %v2947
        %2949 = vmatmul.bf16.gmra.mxu0 %v706
        %v2950 = vpop.f32.mrf.mxu0
        %v2951 = vadd.f32 %v587, %v2950
        %v2952 = vpop.f32.mrf.mxu0
        %v2953 = vadd.f32 %v587, %v2952
        %2954 = vmatmul.bf16.gmra.mxu0 %v708
        %v2955 = vpop.f32.mrf.mxu0
        %v2956 = vadd.f32 %v587, %v2955
        %v2957 = vpop.f32.mrf.mxu0
        %v2958 = vadd.f32 %v587, %v2957
        %2959 = vmatmul.bf16.gmra.mxu0 %v710
        %v2960 = vpop.f32.mrf.mxu0
        %v2961 = vadd.f32 %v587, %v2960
        %v2962 = vpop.f32.mrf.mxu0
        %v2963 = vadd.f32 %v587, %v2962
        %2964 = vmatmul.bf16.gmra.mxu0 %v712
        %v2965 = vpop.f32.mrf.mxu0
        %v2966 = vadd.f32 %v587, %v2965
        %v2967 = vpop.f32.mrf.mxu0
        %2968 = vdwg.mxu0
        %2969 = vmatpush.bf16.msra.mxu0 %v1754
        %2970 = vmatpush.bf16.msra.mxu0 %v1738
        %2971 = vmatpush.bf16.msra.mxu0 %v1722
        %2972 = vmatpush.bf16.msra.mxu0 %v1706
        %2973 = vmatpush.bf16.msra.mxu0 %v1690
        %2974 = vmatpush.bf16.msra.mxu0 %v1674
        %2975 = vmatpush.bf16.msra.mxu0 %v1658
        %2976 = vmatpush.bf16.msra.mxu0 %v1642
        %2977 = vmatmul.bf16.gmra.mxu0 %v689
        %v2978 = vpop.f32.mrf.mxu0
        %v2979 = vadd.f32 %v2906, %v2978
        %v2980 = vpop.f32.mrf.mxu0
        %v2981 = vadd.f32 %v2908, %v2980
        %2982 = vmatmul.bf16.gmra.mxu0 %v691
        %v2983 = vpop.f32.mrf.mxu0
        %v2984 = vadd.f32 %v2911, %v2983
        %v2985 = vpop.f32.mrf.mxu0
        %v2986 = vadd.f32 %v2913, %v2985
        %2987 = vmatmul.bf16.gmra.mxu0 %v693
        %v2988 = vpop.f32.mrf.mxu0
        %v2989 = vadd.f32 %v2916, %v2988
        %v2990 = vpop.f32.mrf.mxu0
        %v2991 = vadd.f32 %v2918, %v2990
        %2992 = vmatmul.bf16.gmra.mxu0 %v695
        %v2993 = vpop.f32.mrf.mxu0
        %v2994 = vadd.f32 %v2921, %v2993
        %v2995 = vpop.f32.mrf.mxu0
        %v2996 = vadd.f32 %v2923, %v2995
        %2997 = vmatmul.bf16.gmra.mxu0 %v697
        %v2998 = vpop.f32.mrf.mxu0
        %v2999 = vadd.f32 %v2926, %v2998
        %v3000 = vpop.f32.mrf.mxu0
        %v3001 = vadd.f32 %v2928, %v3000
        %3002 = vmatmul.bf16.gmra.mxu0 %v699
        %v3003 = vpop.f32.mrf.mxu0
        %v3004 = vadd.f32 %v2931, %v3003
        %v3005 = vpop.f32.mrf.mxu0
        %v3006 = vadd.f32 %v2933, %v3005
        %3007 = vmatmul.bf16.gmra.mxu0 %v701
        %v3008 = vpop.f32.mrf.mxu0
        %v3009 = vadd.f32 %v2936, %v3008
        %v3010 = vpop.f32.mrf.mxu0
        %v3011 = vadd.f32 %v2938, %v3010
        %3012 = vmatmul.bf16.gmra.mxu0 %v703
        %v3013 = vpop.f32.mrf.mxu0
        %v3014 = vadd.f32 %v2941, %v3013
        %v3015 = vpop.f32.mrf.mxu0
        %v3016 = vadd.f32 %v2943, %v3015
        %3017 = vmatmul.bf16.gmra.mxu0 %v705
        %v3018 = vpop.f32.mrf.mxu0
        %v3019 = vadd.f32 %v2946, %v3018
        %v3020 = vpop.f32.mrf.mxu0
        %v3021 = vadd.f32 %v2948, %v3020
        %3022 = vmatmul.bf16.gmra.mxu0 %v707
        %v3023 = vpop.f32.mrf.mxu0
        %v3024 = vadd.f32 %v2951, %v3023
        %v3025 = vpop.f32.mrf.mxu0
        %v3026 = vadd.f32 %v2953, %v3025
        %3027 = vmatmul.bf16.gmra.mxu0 %v709
        %v3028 = vpop.f32.mrf.mxu0
        %v3029 = vadd.f32 %v2956, %v3028
        %v3030 = vpop.f32.mrf.mxu0
        %v3031 = vadd.f32 %v2958, %v3030
        %3032 = vmatmul.bf16.gmra.mxu0 %v711
        %v3033 = vpop.f32.mrf.mxu0
        %v3034 = vadd.f32 %v2961, %v3033
        %v3035 = vpop.f32.mrf.mxu0
        %v3036 = vadd.f32 %v2963, %v3035
        %3037 = vmatmul.bf16.gmra.mxu0 %v713
        %v3038 = vpop.f32.mrf.mxu0
        %v3039 = vadd.f32 %v2966, %v3038
        %v3040 = vpop.f32.mrf.mxu0
        %3041 = vdwg.mxu0
        %3042 = vmatpush.bf16.msra.mxu0 %v1627
        %3043 = vmatpush.bf16.msra.mxu0 %v1611
        %3044 = vmatpush.bf16.msra.mxu0 %v1595
        %3045 = vmatpush.bf16.msra.mxu0 %v1579
        %3046 = vmatpush.bf16.msra.mxu0 %v1563
        %3047 = vmatpush.bf16.msra.mxu0 %v1547
        %3048 = vmatpush.bf16.msra.mxu0 %v1531
        %3049 = vmatpush.bf16.msra.mxu0 %v1515
        %3050 = vmatmul.bf16.gmra.mxu0 %v688
        %v3051 = vpop.f32.mrf.mxu0
        %v3052 = vadd.f32 %v588, %v3051
        %v3053 = vpop.f32.mrf.mxu0
        %v3054 = vadd.f32 %v588, %v3053
        %3055 = vmatmul.bf16.gmra.mxu0 %v690
        %v3056 = vpop.f32.mrf.mxu0
        %v3057 = vadd.f32 %v588, %v3056
        %v3058 = vpop.f32.mrf.mxu0
        %v3059 = vadd.f32 %v588, %v3058
        %3060 = vmatmul.bf16.gmra.mxu0 %v692
        %v3061 = vpop.f32.mrf.mxu0
        %v3062 = vadd.f32 %v588, %v3061
        %v3063 = vpop.f32.mrf.mxu0
        %v3064 = vadd.f32 %v588, %v3063
        %3065 = vmatmul.bf16.gmra.mxu0 %v694
        %v3066 = vpop.f32.mrf.mxu0
        %v3067 = vadd.f32 %v588, %v3066
        %v3068 = vpop.f32.mrf.mxu0
        %v3069 = vadd.f32 %v588, %v3068
        %3070 = vmatmul.bf16.gmra.mxu0 %v696
        %v3071 = vpop.f32.mrf.mxu0
        %v3072 = vadd.f32 %v588, %v3071
        %v3073 = vpop.f32.mrf.mxu0
        %v3074 = vadd.f32 %v588, %v3073
        %3075 = vmatmul.bf16.gmra.mxu0 %v698
        %v3076 = vpop.f32.mrf.mxu0
        %v3077 = vadd.f32 %v588, %v3076
        %v3078 = vpop.f32.mrf.mxu0
        %v3079 = vadd.f32 %v588, %v3078
        %3080 = vmatmul.bf16.gmra.mxu0 %v700
        %v3081 = vpop.f32.mrf.mxu0
        %v3082 = vadd.f32 %v588, %v3081
        %v3083 = vpop.f32.mrf.mxu0
        %v3084 = vadd.f32 %v588, %v3083
        %3085 = vmatmul.bf16.gmra.mxu0 %v702
        %v3086 = vpop.f32.mrf.mxu0
        %v3087 = vadd.f32 %v588, %v3086
        %v3088 = vpop.f32.mrf.mxu0
        %v3089 = vadd.f32 %v588, %v3088
        %3090 = vmatmul.bf16.gmra.mxu0 %v704
        %v3091 = vpop.f32.mrf.mxu0
        %v3092 = vadd.f32 %v588, %v3091
        %v3093 = vpop.f32.mrf.mxu0
        %v3094 = vadd.f32 %v588, %v3093
        %3095 = vmatmul.bf16.gmra.mxu0 %v706
        %v3096 = vpop.f32.mrf.mxu0
        %v3097 = vadd.f32 %v588, %v3096
        %v3098 = vpop.f32.mrf.mxu0
        %v3099 = vadd.f32 %v588, %v3098
        %3100 = vmatmul.bf16.gmra.mxu0 %v708
        %v3101 = vpop.f32.mrf.mxu0
        %v3102 = vadd.f32 %v588, %v3101
        %v3103 = vpop.f32.mrf.mxu0
        %v3104 = vadd.f32 %v588, %v3103
        %3105 = vmatmul.bf16.gmra.mxu0 %v710
        %v3106 = vpop.f32.mrf.mxu0
        %v3107 = vadd.f32 %v588, %v3106
        %v3108 = vpop.f32.mrf.mxu0
        %v3109 = vadd.f32 %v588, %v3108
        %3110 = vmatmul.bf16.gmra.mxu0 %v712
        %v3111 = vpop.f32.mrf.mxu0
        %v3112 = vadd.f32 %v588, %v3111
        %v3113 = vpop.f32.mrf.mxu0
        %3114 = vdwg.mxu0
        %3115 = vmatpush.bf16.msra.mxu0 %v1755
        %3116 = vmatpush.bf16.msra.mxu0 %v1739
        %3117 = vmatpush.bf16.msra.mxu0 %v1723
        %3118 = vmatpush.bf16.msra.mxu0 %v1707
        %3119 = vmatpush.bf16.msra.mxu0 %v1691
        %3120 = vmatpush.bf16.msra.mxu0 %v1675
        %3121 = vmatpush.bf16.msra.mxu0 %v1659
        %3122 = vmatpush.bf16.msra.mxu0 %v1643
        %3123 = vmatmul.bf16.gmra.mxu0 %v689
        %v3124 = vpop.f32.mrf.mxu0
        %v3125 = vadd.f32 %v3052, %v3124
        %v3126 = vpop.f32.mrf.mxu0
        %v3127 = vadd.f32 %v3054, %v3126
        %3128 = vmatmul.bf16.gmra.mxu0 %v691
        %v3129 = vpop.f32.mrf.mxu0
        %v3130 = vadd.f32 %v3057, %v3129
        %v3131 = vpop.f32.mrf.mxu0
        %v3132 = vadd.f32 %v3059, %v3131
        %3133 = vmatmul.bf16.gmra.mxu0 %v693
        %v3134 = vpop.f32.mrf.mxu0
        %v3135 = vadd.f32 %v3062, %v3134
        %v3136 = vpop.f32.mrf.mxu0
        %v3137 = vadd.f32 %v3064, %v3136
        %3138 = vmatmul.bf16.gmra.mxu0 %v695
        %v3139 = vpop.f32.mrf.mxu0
        %v3140 = vadd.f32 %v3067, %v3139
        %v3141 = vpop.f32.mrf.mxu0
        %v3142 = vadd.f32 %v3069, %v3141
        %3143 = vmatmul.bf16.gmra.mxu0 %v697
        %v3144 = vpop.f32.mrf.mxu0
        %v3145 = vadd.f32 %v3072, %v3144
        %v3146 = vpop.f32.mrf.mxu0
        %v3147 = vadd.f32 %v3074, %v3146
        %3148 = vmatmul.bf16.gmra.mxu0 %v699
        %v3149 = vpop.f32.mrf.mxu0
        %v3150 = vadd.f32 %v3077, %v3149
        %v3151 = vpop.f32.mrf.mxu0
        %v3152 = vadd.f32 %v3079, %v3151
        %3153 = vmatmul.bf16.gmra.mxu0 %v701
        %v3154 = vpop.f32.mrf.mxu0
        %v3155 = vadd.f32 %v3082, %v3154
        %v3156 = vpop.f32.mrf.mxu0
        %v3157 = vadd.f32 %v3084, %v3156
        %3158 = vmatmul.bf16.gmra.mxu0 %v703
        %v3159 = vpop.f32.mrf.mxu0
        %v3160 = vadd.f32 %v3087, %v3159
        %v3161 = vpop.f32.mrf.mxu0
        %v3162 = vadd.f32 %v3089, %v3161
        %3163 = vmatmul.bf16.gmra.mxu0 %v705
        %v3164 = vpop.f32.mrf.mxu0
        %v3165 = vadd.f32 %v3092, %v3164
        %v3166 = vpop.f32.mrf.mxu0
        %v3167 = vadd.f32 %v3094, %v3166
        %3168 = vmatmul.bf16.gmra.mxu0 %v707
        %v3169 = vpop.f32.mrf.mxu0
        %v3170 = vadd.f32 %v3097, %v3169
        %v3171 = vpop.f32.mrf.mxu0
        %v3172 = vadd.f32 %v3099, %v3171
        %3173 = vmatmul.bf16.gmra.mxu0 %v709
        %v3174 = vpop.f32.mrf.mxu0
        %v3175 = vadd.f32 %v3102, %v3174
        %v3176 = vpop.f32.mrf.mxu0
        %v3177 = vadd.f32 %v3104, %v3176
        %3178 = vmatmul.bf16.gmra.mxu0 %v711
        %v3179 = vpop.f32.mrf.mxu0
        %v3180 = vadd.f32 %v3107, %v3179
        %v3181 = vpop.f32.mrf.mxu0
        %v3182 = vadd.f32 %v3109, %v3181
        %3183 = vmatmul.bf16.gmra.mxu0 %v713
        %v3184 = vpop.f32.mrf.mxu0
        %v3185 = vadd.f32 %v3112, %v3184
        %v3186 = vpop.f32.mrf.mxu0
        %3187 = vdwg.mxu0
        %3188 = vmatpush.bf16.msra.mxu0 %v1628
        %3189 = vmatpush.bf16.msra.mxu0 %v1612
        %3190 = vmatpush.bf16.msra.mxu0 %v1596
        %3191 = vmatpush.bf16.msra.mxu0 %v1580
        %3192 = vmatpush.bf16.msra.mxu0 %v1564
        %3193 = vmatpush.bf16.msra.mxu0 %v1548
        %3194 = vmatpush.bf16.msra.mxu0 %v1532
        %3195 = vmatpush.bf16.msra.mxu0 %v1516
        %3196 = vmatmul.bf16.gmra.mxu0 %v688
        %v3197 = vpop.f32.mrf.mxu0
        %v3198 = vadd.f32 %v589, %v3197
        %v3199 = vpop.f32.mrf.mxu0
        %v3200 = vadd.f32 %v589, %v3199
        %3201 = vmatmul.bf16.gmra.mxu0 %v690
        %v3202 = vpop.f32.mrf.mxu0
        %v3203 = vadd.f32 %v589, %v3202
        %v3204 = vpop.f32.mrf.mxu0
        %v3205 = vadd.f32 %v589, %v3204
        %3206 = vmatmul.bf16.gmra.mxu0 %v692
        %v3207 = vpop.f32.mrf.mxu0
        %v3208 = vadd.f32 %v589, %v3207
        %v3209 = vpop.f32.mrf.mxu0
        %v3210 = vadd.f32 %v589, %v3209
        %3211 = vmatmul.bf16.gmra.mxu0 %v694
        %v3212 = vpop.f32.mrf.mxu0
        %v3213 = vadd.f32 %v589, %v3212
        %v3214 = vpop.f32.mrf.mxu0
        %v3215 = vadd.f32 %v589, %v3214
        %3216 = vmatmul.bf16.gmra.mxu0 %v696
        %v3217 = vpop.f32.mrf.mxu0
        %v3218 = vadd.f32 %v589, %v3217
        %v3219 = vpop.f32.mrf.mxu0
        %v3220 = vadd.f32 %v589, %v3219
        %3221 = vmatmul.bf16.gmra.mxu0 %v698
        %v3222 = vpop.f32.mrf.mxu0
        %v3223 = vadd.f32 %v589, %v3222
        %v3224 = vpop.f32.mrf.mxu0
        %v3225 = vadd.f32 %v589, %v3224
        %3226 = vmatmul.bf16.gmra.mxu0 %v700
        %v3227 = vpop.f32.mrf.mxu0
        %v3228 = vadd.f32 %v589, %v3227
        %v3229 = vpop.f32.mrf.mxu0
        %v3230 = vadd.f32 %v589, %v3229
        %3231 = vmatmul.bf16.gmra.mxu0 %v702
        %v3232 = vpop.f32.mrf.mxu0
        %v3233 = vadd.f32 %v589, %v3232
        %v3234 = vpop.f32.mrf.mxu0
        %v3235 = vadd.f32 %v589, %v3234
        %3236 = vmatmul.bf16.gmra.mxu0 %v704
        %v3237 = vpop.f32.mrf.mxu0
        %v3238 = vadd.f32 %v589, %v3237
        %v3239 = vpop.f32.mrf.mxu0
        %v3240 = vadd.f32 %v589, %v3239
        %3241 = vmatmul.bf16.gmra.mxu0 %v706
        %v3242 = vpop.f32.mrf.mxu0
        %v3243 = vadd.f32 %v589, %v3242
        %v3244 = vpop.f32.mrf.mxu0
        %v3245 = vadd.f32 %v589, %v3244
        %3246 = vmatmul.bf16.gmra.mxu0 %v708
        %v3247 = vpop.f32.mrf.mxu0
        %v3248 = vadd.f32 %v589, %v3247
        %v3249 = vpop.f32.mrf.mxu0
        %v3250 = vadd.f32 %v589, %v3249
        %3251 = vmatmul.bf16.gmra.mxu0 %v710
        %v3252 = vpop.f32.mrf.mxu0
        %v3253 = vadd.f32 %v589, %v3252
        %v3254 = vpop.f32.mrf.mxu0
        %v3255 = vadd.f32 %v589, %v3254
        %3256 = vmatmul.bf16.gmra.mxu0 %v712
        %v3257 = vpop.f32.mrf.mxu0
        %v3258 = vadd.f32 %v589, %v3257
        %v3259 = vpop.f32.mrf.mxu0
        %3260 = vdwg.mxu0
        %3261 = vmatpush.bf16.msra.mxu0 %v1756
        %3262 = vmatpush.bf16.msra.mxu0 %v1740
        %3263 = vmatpush.bf16.msra.mxu0 %v1724
        %3264 = vmatpush.bf16.msra.mxu0 %v1708
        %3265 = vmatpush.bf16.msra.mxu0 %v1692
        %3266 = vmatpush.bf16.msra.mxu0 %v1676
        %3267 = vmatpush.bf16.msra.mxu0 %v1660
        %3268 = vmatpush.bf16.msra.mxu0 %v1644
        %3269 = vmatmul.bf16.gmra.mxu0 %v689
        %v3270 = vpop.f32.mrf.mxu0
        %v3271 = vadd.f32 %v3198, %v3270
        %v3272 = vpop.f32.mrf.mxu0
        %v3273 = vadd.f32 %v3200, %v3272
        %3274 = vmatmul.bf16.gmra.mxu0 %v691
        %v3275 = vpop.f32.mrf.mxu0
        %v3276 = vadd.f32 %v3203, %v3275
        %v3277 = vpop.f32.mrf.mxu0
        %v3278 = vadd.f32 %v3205, %v3277
        %3279 = vmatmul.bf16.gmra.mxu0 %v693
        %v3280 = vpop.f32.mrf.mxu0
        %v3281 = vadd.f32 %v3208, %v3280
        %v3282 = vpop.f32.mrf.mxu0
        %v3283 = vadd.f32 %v3210, %v3282
        %3284 = vmatmul.bf16.gmra.mxu0 %v695
        %v3285 = vpop.f32.mrf.mxu0
        %v3286 = vadd.f32 %v3213, %v3285
        %v3287 = vpop.f32.mrf.mxu0
        %v3288 = vadd.f32 %v3215, %v3287
        %3289 = vmatmul.bf16.gmra.mxu0 %v697
        %v3290 = vpop.f32.mrf.mxu0
        %v3291 = vadd.f32 %v3218, %v3290
        %v3292 = vpop.f32.mrf.mxu0
        %v3293 = vadd.f32 %v3220, %v3292
        %3294 = vmatmul.bf16.gmra.mxu0 %v699
        %v3295 = vpop.f32.mrf.mxu0
        %v3296 = vadd.f32 %v3223, %v3295
        %v3297 = vpop.f32.mrf.mxu0
        %v3298 = vadd.f32 %v3225, %v3297
        %3299 = vmatmul.bf16.gmra.mxu0 %v701
        %v3300 = vpop.f32.mrf.mxu0
        %v3301 = vadd.f32 %v3228, %v3300
        %v3302 = vpop.f32.mrf.mxu0
        %v3303 = vadd.f32 %v3230, %v3302
        %3304 = vmatmul.bf16.gmra.mxu0 %v703
        %v3305 = vpop.f32.mrf.mxu0
        %v3306 = vadd.f32 %v3233, %v3305
        %v3307 = vpop.f32.mrf.mxu0
        %v3308 = vadd.f32 %v3235, %v3307
        %3309 = vmatmul.bf16.gmra.mxu0 %v705
        %v3310 = vpop.f32.mrf.mxu0
        %v3311 = vadd.f32 %v3238, %v3310
        %v3312 = vpop.f32.mrf.mxu0
        %v3313 = vadd.f32 %v3240, %v3312
        %3314 = vmatmul.bf16.gmra.mxu0 %v707
        %v3315 = vpop.f32.mrf.mxu0
        %v3316 = vadd.f32 %v3243, %v3315
        %v3317 = vpop.f32.mrf.mxu0
        %v3318 = vadd.f32 %v3245, %v3317
        %3319 = vmatmul.bf16.gmra.mxu0 %v709
        %v3320 = vpop.f32.mrf.mxu0
        %v3321 = vadd.f32 %v3248, %v3320
        %v3322 = vpop.f32.mrf.mxu0
        %v3323 = vadd.f32 %v3250, %v3322
        %3324 = vmatmul.bf16.gmra.mxu0 %v711
        %v3325 = vpop.f32.mrf.mxu0
        %v3326 = vadd.f32 %v3253, %v3325
        %v3327 = vpop.f32.mrf.mxu0
        %v3328 = vadd.f32 %v3255, %v3327
        %3329 = vmatmul.bf16.gmra.mxu0 %v713
        %v3330 = vpop.f32.mrf.mxu0
        %v3331 = vadd.f32 %v3258, %v3330
        %v3332 = vpop.f32.mrf.mxu0
        %3333 = vdwg.mxu0
        %3334 = vmatpush.bf16.msra.mxu0 %v1629
        %3335 = vmatpush.bf16.msra.mxu0 %v1613
        %3336 = vmatpush.bf16.msra.mxu0 %v1597
        %3337 = vmatpush.bf16.msra.mxu0 %v1581
        %3338 = vmatpush.bf16.msra.mxu0 %v1565
        %3339 = vmatpush.bf16.msra.mxu0 %v1549
        %3340 = vmatpush.bf16.msra.mxu0 %v1533
        %3341 = vmatpush.bf16.msra.mxu0 %v1517
        %3342 = vmatmul.bf16.gmra.mxu0 %v688
        %v3343 = vpop.f32.mrf.mxu0
        %v3344 = vadd.f32 %v590, %v3343
        %v3345 = vpop.f32.mrf.mxu0
        %v3346 = vadd.f32 %v590, %v3345
        %3347 = vmatmul.bf16.gmra.mxu0 %v690
        %v3348 = vpop.f32.mrf.mxu0
        %v3349 = vadd.f32 %v590, %v3348
        %v3350 = vpop.f32.mrf.mxu0
        %v3351 = vadd.f32 %v590, %v3350
        %3352 = vmatmul.bf16.gmra.mxu0 %v692
        %v3353 = vpop.f32.mrf.mxu0
        %v3354 = vadd.f32 %v590, %v3353
        %v3355 = vpop.f32.mrf.mxu0
        %v3356 = vadd.f32 %v590, %v3355
        %3357 = vmatmul.bf16.gmra.mxu0 %v694
        %v3358 = vpop.f32.mrf.mxu0
        %v3359 = vadd.f32 %v590, %v3358
        %v3360 = vpop.f32.mrf.mxu0
        %v3361 = vadd.f32 %v590, %v3360
        %3362 = vmatmul.bf16.gmra.mxu0 %v696
        %v3363 = vpop.f32.mrf.mxu0
        %v3364 = vadd.f32 %v590, %v3363
        %v3365 = vpop.f32.mrf.mxu0
        %v3366 = vadd.f32 %v590, %v3365
        %3367 = vmatmul.bf16.gmra.mxu0 %v698
        %v3368 = vpop.f32.mrf.mxu0
        %v3369 = vadd.f32 %v590, %v3368
        %v3370 = vpop.f32.mrf.mxu0
        %v3371 = vadd.f32 %v590, %v3370
        %3372 = vmatmul.bf16.gmra.mxu0 %v700
        %v3373 = vpop.f32.mrf.mxu0
        %v3374 = vadd.f32 %v590, %v3373
        %v3375 = vpop.f32.mrf.mxu0
        %v3376 = vadd.f32 %v590, %v3375
        %3377 = vmatmul.bf16.gmra.mxu0 %v702
        %v3378 = vpop.f32.mrf.mxu0
        %v3379 = vadd.f32 %v590, %v3378
        %v3380 = vpop.f32.mrf.mxu0
        %v3381 = vadd.f32 %v590, %v3380
        %3382 = vmatmul.bf16.gmra.mxu0 %v704
        %v3383 = vpop.f32.mrf.mxu0
        %v3384 = vadd.f32 %v590, %v3383
        %v3385 = vpop.f32.mrf.mxu0
        %v3386 = vadd.f32 %v590, %v3385
        %3387 = vmatmul.bf16.gmra.mxu0 %v706
        %v3388 = vpop.f32.mrf.mxu0
        %v3389 = vadd.f32 %v590, %v3388
        %v3390 = vpop.f32.mrf.mxu0
        %v3391 = vadd.f32 %v590, %v3390
        %3392 = vmatmul.bf16.gmra.mxu0 %v708
        %v3393 = vpop.f32.mrf.mxu0
        %v3394 = vadd.f32 %v590, %v3393
        %v3395 = vpop.f32.mrf.mxu0
        %v3396 = vadd.f32 %v590, %v3395
        %3397 = vmatmul.bf16.gmra.mxu0 %v710
        %v3398 = vpop.f32.mrf.mxu0
        %v3399 = vadd.f32 %v590, %v3398
        %v3400 = vpop.f32.mrf.mxu0
        %v3401 = vadd.f32 %v590, %v3400
        %3402 = vmatmul.bf16.gmra.mxu0 %v712
        %v3403 = vpop.f32.mrf.mxu0
        %v3404 = vadd.f32 %v590, %v3403
        %v3405 = vpop.f32.mrf.mxu0
        %3406 = vdwg.mxu0
        %3407 = vmatpush.bf16.msra.mxu0 %v1757
        %3408 = vmatpush.bf16.msra.mxu0 %v1741
        %3409 = vmatpush.bf16.msra.mxu0 %v1725
        %3410 = vmatpush.bf16.msra.mxu0 %v1709
        %3411 = vmatpush.bf16.msra.mxu0 %v1693
        %3412 = vmatpush.bf16.msra.mxu0 %v1677
        %3413 = vmatpush.bf16.msra.mxu0 %v1661
        %3414 = vmatpush.bf16.msra.mxu0 %v1645
        %3415 = vmatmul.bf16.gmra.mxu0 %v689
        %v3416 = vpop.f32.mrf.mxu0
        %v3417 = vadd.f32 %v3344, %v3416
        %v3418 = vpop.f32.mrf.mxu0
        %v3419 = vadd.f32 %v3346, %v3418
        %3420 = vmatmul.bf16.gmra.mxu0 %v691
        %v3421 = vpop.f32.mrf.mxu0
        %v3422 = vadd.f32 %v3349, %v3421
        %v3423 = vpop.f32.mrf.mxu0
        %v3424 = vadd.f32 %v3351, %v3423
        %3425 = vmatmul.bf16.gmra.mxu0 %v693
        %v3426 = vpop.f32.mrf.mxu0
        %v3427 = vadd.f32 %v3354, %v3426
        %v3428 = vpop.f32.mrf.mxu0
        %v3429 = vadd.f32 %v3356, %v3428
        %3430 = vmatmul.bf16.gmra.mxu0 %v695
        %v3431 = vpop.f32.mrf.mxu0
        %v3432 = vadd.f32 %v3359, %v3431
        %v3433 = vpop.f32.mrf.mxu0
        %v3434 = vadd.f32 %v3361, %v3433
        %3435 = vmatmul.bf16.gmra.mxu0 %v697
        %v3436 = vpop.f32.mrf.mxu0
        %v3437 = vadd.f32 %v3364, %v3436
        %v3438 = vpop.f32.mrf.mxu0
        %v3439 = vadd.f32 %v3366, %v3438
        %3440 = vmatmul.bf16.gmra.mxu0 %v699
        %v3441 = vpop.f32.mrf.mxu0
        %v3442 = vadd.f32 %v3369, %v3441
        %v3443 = vpop.f32.mrf.mxu0
        %v3444 = vadd.f32 %v3371, %v3443
        %3445 = vmatmul.bf16.gmra.mxu0 %v701
        %v3446 = vpop.f32.mrf.mxu0
        %v3447 = vadd.f32 %v3374, %v3446
        %v3448 = vpop.f32.mrf.mxu0
        %v3449 = vadd.f32 %v3376, %v3448
        %3450 = vmatmul.bf16.gmra.mxu0 %v703
        %v3451 = vpop.f32.mrf.mxu0
        %v3452 = vadd.f32 %v3379, %v3451
        %v3453 = vpop.f32.mrf.mxu0
        %v3454 = vadd.f32 %v3381, %v3453
        %3455 = vmatmul.bf16.gmra.mxu0 %v705
        %v3456 = vpop.f32.mrf.mxu0
        %v3457 = vadd.f32 %v3384, %v3456
        %v3458 = vpop.f32.mrf.mxu0
        %v3459 = vadd.f32 %v3386, %v3458
        %3460 = vmatmul.bf16.gmra.mxu0 %v707
        %v3461 = vpop.f32.mrf.mxu0
        %v3462 = vadd.f32 %v3389, %v3461
        %v3463 = vpop.f32.mrf.mxu0
        %v3464 = vadd.f32 %v3391, %v3463
        %3465 = vmatmul.bf16.gmra.mxu0 %v709
        %v3466 = vpop.f32.mrf.mxu0
        %v3467 = vadd.f32 %v3394, %v3466
        %v3468 = vpop.f32.mrf.mxu0
        %v3469 = vadd.f32 %v3396, %v3468
        %3470 = vmatmul.bf16.gmra.mxu0 %v711
        %v3471 = vpop.f32.mrf.mxu0
        %v3472 = vadd.f32 %v3399, %v3471
        %v3473 = vpop.f32.mrf.mxu0
        %v3474 = vadd.f32 %v3401, %v3473
        %3475 = vmatmul.bf16.gmra.mxu0 %v713
        %v3476 = vpop.f32.mrf.mxu0
        %v3477 = vadd.f32 %v3404, %v3476
        %v3478 = vpop.f32.mrf.mxu0
        %3479 = vdwg.mxu0
        %3480 = vmatpush.bf16.msra.mxu0 %v1630
        %3481 = vmatpush.bf16.msra.mxu0 %v1614
        %3482 = vmatpush.bf16.msra.mxu0 %v1598
        %3483 = vmatpush.bf16.msra.mxu0 %v1582
        %3484 = vmatpush.bf16.msra.mxu0 %v1566
        %3485 = vmatpush.bf16.msra.mxu0 %v1550
        %3486 = vmatpush.bf16.msra.mxu0 %v1534
        %3487 = vmatpush.bf16.msra.mxu0 %v1518
        %3488 = vmatmul.bf16.gmra.mxu0 %v688
        %v3489 = vpop.f32.mrf.mxu0
        %v3490 = vadd.f32 %v591, %v3489
        %v3491 = vpop.f32.mrf.mxu0
        %v3492 = vadd.f32 %v591, %v3491
        %3493 = vmatmul.bf16.gmra.mxu0 %v690
        %v3494 = vpop.f32.mrf.mxu0
        %v3495 = vadd.f32 %v591, %v3494
        %v3496 = vpop.f32.mrf.mxu0
        %v3497 = vadd.f32 %v591, %v3496
        %3498 = vmatmul.bf16.gmra.mxu0 %v692
        %v3499 = vpop.f32.mrf.mxu0
        %v3500 = vadd.f32 %v591, %v3499
        %v3501 = vpop.f32.mrf.mxu0
        %v3502 = vadd.f32 %v591, %v3501
        %3503 = vmatmul.bf16.gmra.mxu0 %v694
        %v3504 = vpop.f32.mrf.mxu0
        %v3505 = vadd.f32 %v591, %v3504
        %v3506 = vpop.f32.mrf.mxu0
        %v3507 = vadd.f32 %v591, %v3506
        %3508 = vmatmul.bf16.gmra.mxu0 %v696
        %v3509 = vpop.f32.mrf.mxu0
        %v3510 = vadd.f32 %v591, %v3509
        %v3511 = vpop.f32.mrf.mxu0
        %v3512 = vadd.f32 %v591, %v3511
        %3513 = vmatmul.bf16.gmra.mxu0 %v698
        %v3514 = vpop.f32.mrf.mxu0
        %v3515 = vadd.f32 %v591, %v3514
        %v3516 = vpop.f32.mrf.mxu0
        %v3517 = vadd.f32 %v591, %v3516
        %3518 = vmatmul.bf16.gmra.mxu0 %v700
        %v3519 = vpop.f32.mrf.mxu0
        %v3520 = vadd.f32 %v591, %v3519
        %v3521 = vpop.f32.mrf.mxu0
        %v3522 = vadd.f32 %v591, %v3521
        %3523 = vmatmul.bf16.gmra.mxu0 %v702
        %v3524 = vpop.f32.mrf.mxu0
        %v3525 = vadd.f32 %v591, %v3524
        %v3526 = vpop.f32.mrf.mxu0
        %v3527 = vadd.f32 %v591, %v3526
        %3528 = vmatmul.bf16.gmra.mxu0 %v704
        %v3529 = vpop.f32.mrf.mxu0
        %v3530 = vadd.f32 %v591, %v3529
        %v3531 = vpop.f32.mrf.mxu0
        %v3532 = vadd.f32 %v591, %v3531
        %3533 = vmatmul.bf16.gmra.mxu0 %v706
        %v3534 = vpop.f32.mrf.mxu0
        %v3535 = vadd.f32 %v591, %v3534
        %v3536 = vpop.f32.mrf.mxu0
        %v3537 = vadd.f32 %v591, %v3536
        %3538 = vmatmul.bf16.gmra.mxu0 %v708
        %v3539 = vpop.f32.mrf.mxu0
        %v3540 = vadd.f32 %v591, %v3539
        %v3541 = vpop.f32.mrf.mxu0
        %v3542 = vadd.f32 %v591, %v3541
        %3543 = vmatmul.bf16.gmra.mxu0 %v710
        %v3544 = vpop.f32.mrf.mxu0
        %v3545 = vadd.f32 %v591, %v3544
        %v3546 = vpop.f32.mrf.mxu0
        %v3547 = vadd.f32 %v591, %v3546
        %3548 = vmatmul.bf16.gmra.mxu0 %v712
        %v3549 = vpop.f32.mrf.mxu0
        %v3550 = vadd.f32 %v591, %v3549
        %v3551 = vpop.f32.mrf.mxu0
        %3552 = vdwg.mxu0
        %3553 = vmatpush.bf16.msra.mxu0 %v1758
        %3554 = vmatpush.bf16.msra.mxu0 %v1742
        %3555 = vmatpush.bf16.msra.mxu0 %v1726
        %3556 = vmatpush.bf16.msra.mxu0 %v1710
        %3557 = vmatpush.bf16.msra.mxu0 %v1694
        %3558 = vmatpush.bf16.msra.mxu0 %v1678
        %3559 = vmatpush.bf16.msra.mxu0 %v1662
        %3560 = vmatpush.bf16.msra.mxu0 %v1646
        %3561 = vmatmul.bf16.gmra.mxu0 %v689
        %v3562 = vpop.f32.mrf.mxu0
        %v3563 = vadd.f32 %v3490, %v3562
        %v3564 = vpop.f32.mrf.mxu0
        %v3565 = vadd.f32 %v3492, %v3564
        %3566 = vmatmul.bf16.gmra.mxu0 %v691
        %v3567 = vpop.f32.mrf.mxu0
        %v3568 = vadd.f32 %v3495, %v3567
        %v3569 = vpop.f32.mrf.mxu0
        %v3570 = vadd.f32 %v3497, %v3569
        %3571 = vmatmul.bf16.gmra.mxu0 %v693
        %v3572 = vpop.f32.mrf.mxu0
        %v3573 = vadd.f32 %v3500, %v3572
        %v3574 = vpop.f32.mrf.mxu0
        %v3575 = vadd.f32 %v3502, %v3574
        %3576 = vmatmul.bf16.gmra.mxu0 %v695
        %v3577 = vpop.f32.mrf.mxu0
        %v3578 = vadd.f32 %v3505, %v3577
        %v3579 = vpop.f32.mrf.mxu0
        %v3580 = vadd.f32 %v3507, %v3579
        %3581 = vmatmul.bf16.gmra.mxu0 %v697
        %v3582 = vpop.f32.mrf.mxu0
        %v3583 = vadd.f32 %v3510, %v3582
        %v3584 = vpop.f32.mrf.mxu0
        %v3585 = vadd.f32 %v3512, %v3584
        %3586 = vmatmul.bf16.gmra.mxu0 %v699
        %v3587 = vpop.f32.mrf.mxu0
        %v3588 = vadd.f32 %v3515, %v3587
        %v3589 = vpop.f32.mrf.mxu0
        %v3590 = vadd.f32 %v3517, %v3589
        %3591 = vmatmul.bf16.gmra.mxu0 %v701
        %v3592 = vpop.f32.mrf.mxu0
        %v3593 = vadd.f32 %v3520, %v3592
        %v3594 = vpop.f32.mrf.mxu0
        %v3595 = vadd.f32 %v3522, %v3594
        %3596 = vmatmul.bf16.gmra.mxu0 %v703
        %v3597 = vpop.f32.mrf.mxu0
        %v3598 = vadd.f32 %v3525, %v3597
        %v3599 = vpop.f32.mrf.mxu0
        %v3600 = vadd.f32 %v3527, %v3599
        %3601 = vmatmul.bf16.gmra.mxu0 %v705
        %v3602 = vpop.f32.mrf.mxu0
        %v3603 = vadd.f32 %v3530, %v3602
        %v3604 = vpop.f32.mrf.mxu0
        %v3605 = vadd.f32 %v3532, %v3604
        %3606 = vmatmul.bf16.gmra.mxu0 %v707
        %v3607 = vpop.f32.mrf.mxu0
        %v3608 = vadd.f32 %v3535, %v3607
        %v3609 = vpop.f32.mrf.mxu0
        %v3610 = vadd.f32 %v3537, %v3609
        %3611 = vmatmul.bf16.gmra.mxu0 %v709
        %v3612 = vpop.f32.mrf.mxu0
        %v3613 = vadd.f32 %v3540, %v3612
        %v3614 = vpop.f32.mrf.mxu0
        %v3615 = vadd.f32 %v3542, %v3614
        %3616 = vmatmul.bf16.gmra.mxu0 %v711
        %v3617 = vpop.f32.mrf.mxu0
        %v3618 = vadd.f32 %v3545, %v3617
        %v3619 = vpop.f32.mrf.mxu0
        %v3620 = vadd.f32 %v3547, %v3619
        %3621 = vmatmul.bf16.gmra.mxu0 %v713
        %v3622 = vpop.f32.mrf.mxu0
        %v3623 = vadd.f32 %v3550, %v3622
        %v3624 = vpop.f32.mrf.mxu0
        %3625 = vdwg.mxu0
        %3626 = vmatpush.bf16.msra.mxu0 %v1631
        %3627 = vmatpush.bf16.msra.mxu0 %v1615
        %3628 = vmatpush.bf16.msra.mxu0 %v1599
        %3629 = vmatpush.bf16.msra.mxu0 %v1583
        %3630 = vmatpush.bf16.msra.mxu0 %v1567
        %3631 = vmatpush.bf16.msra.mxu0 %v1551
        %3632 = vmatpush.bf16.msra.mxu0 %v1535
        %3633 = vmatpush.bf16.msra.mxu0 %v1519
        %3634 = vmatmul.bf16.gmra.mxu0 %v688
        %v3635 = vpop.f32.mrf.mxu0
        %v3636 = vadd.f32 %v592, %v3635
        %v3637 = vpop.f32.mrf.mxu0
        %v3638 = vadd.f32 %v592, %v3637
        %3639 = vmatmul.bf16.gmra.mxu0 %v690
        %v3640 = vpop.f32.mrf.mxu0
        %v3641 = vadd.f32 %v592, %v3640
        %v3642 = vpop.f32.mrf.mxu0
        %v3643 = vadd.f32 %v592, %v3642
        %3644 = vmatmul.bf16.gmra.mxu0 %v692
        %v3645 = vpop.f32.mrf.mxu0
        %v3646 = vadd.f32 %v592, %v3645
        %v3647 = vpop.f32.mrf.mxu0
        %v3648 = vadd.f32 %v592, %v3647
        %3649 = vmatmul.bf16.gmra.mxu0 %v694
        %v3650 = vpop.f32.mrf.mxu0
        %v3651 = vadd.f32 %v592, %v3650
        %v3652 = vpop.f32.mrf.mxu0
        %v3653 = vadd.f32 %v592, %v3652
        %3654 = vmatmul.bf16.gmra.mxu0 %v696
        %v3655 = vpop.f32.mrf.mxu0
        %v3656 = vadd.f32 %v592, %v3655
        %v3657 = vpop.f32.mrf.mxu0
        %v3658 = vadd.f32 %v592, %v3657
        %3659 = vmatmul.bf16.gmra.mxu0 %v698
        %v3660 = vpop.f32.mrf.mxu0
        %v3661 = vadd.f32 %v592, %v3660
        %v3662 = vpop.f32.mrf.mxu0
        %v3663 = vadd.f32 %v592, %v3662
        %3664 = vmatmul.bf16.gmra.mxu0 %v700
        %v3665 = vpop.f32.mrf.mxu0
        %v3666 = vadd.f32 %v592, %v3665
        %v3667 = vpop.f32.mrf.mxu0
        %v3668 = vadd.f32 %v592, %v3667
        %3669 = vmatmul.bf16.gmra.mxu0 %v702
        %v3670 = vpop.f32.mrf.mxu0
        %v3671 = vadd.f32 %v592, %v3670
        %v3672 = vpop.f32.mrf.mxu0
        %v3673 = vadd.f32 %v592, %v3672
        %3674 = vmatmul.bf16.gmra.mxu0 %v704
        %v3675 = vpop.f32.mrf.mxu0
        %v3676 = vadd.f32 %v592, %v3675
        %v3677 = vpop.f32.mrf.mxu0
        %v3678 = vadd.f32 %v592, %v3677
        %3679 = vmatmul.bf16.gmra.mxu0 %v706
        %v3680 = vpop.f32.mrf.mxu0
        %v3681 = vadd.f32 %v592, %v3680
        %v3682 = vpop.f32.mrf.mxu0
        %v3683 = vadd.f32 %v592, %v3682
        %3684 = vmatmul.bf16.gmra.mxu0 %v708
        %v3685 = vpop.f32.mrf.mxu0
        %v3686 = vadd.f32 %v592, %v3685
        %v3687 = vpop.f32.mrf.mxu0
        %v3688 = vadd.f32 %v592, %v3687
        %3689 = vmatmul.bf16.gmra.mxu0 %v710
        %v3690 = vpop.f32.mrf.mxu0
        %v3691 = vadd.f32 %v592, %v3690
        %v3692 = vpop.f32.mrf.mxu0
        %v3693 = vadd.f32 %v592, %v3692
        %3694 = vmatmul.bf16.gmra.mxu0 %v712
        %v3695 = vpop.f32.mrf.mxu0
        %v3696 = vadd.f32 %v592, %v3695
        %v3697 = vpop.f32.mrf.mxu0
        %3698 = vdwg.mxu0
        %3699 = vmatpush.bf16.msra.mxu0 %v1759
        %3700 = vmatpush.bf16.msra.mxu0 %v1743
        %3701 = vmatpush.bf16.msra.mxu0 %v1727
        %3702 = vmatpush.bf16.msra.mxu0 %v1711
        %3703 = vmatpush.bf16.msra.mxu0 %v1695
        %3704 = vmatpush.bf16.msra.mxu0 %v1679
        %3705 = vmatpush.bf16.msra.mxu0 %v1663
        %3706 = vmatpush.bf16.msra.mxu0 %v1647
        %3707 = vmatmul.bf16.gmra.mxu0 %v689
        %v3708 = vpop.f32.mrf.mxu0
        %v3709 = vadd.f32 %v3636, %v3708
        %v3710 = vpop.f32.mrf.mxu0
        %v3711 = vadd.f32 %v3638, %v3710
        %3712 = vmatmul.bf16.gmra.mxu0 %v691
        %v3713 = vpop.f32.mrf.mxu0
        %v3714 = vadd.f32 %v3641, %v3713
        %v3715 = vpop.f32.mrf.mxu0
        %v3716 = vadd.f32 %v3643, %v3715
        %3717 = vmatmul.bf16.gmra.mxu0 %v693
        %v3718 = vpop.f32.mrf.mxu0
        %v3719 = vadd.f32 %v3646, %v3718
        %v3720 = vpop.f32.mrf.mxu0
        %v3721 = vadd.f32 %v3648, %v3720
        %3722 = vmatmul.bf16.gmra.mxu0 %v695
        %v3723 = vpop.f32.mrf.mxu0
        %v3724 = vadd.f32 %v3651, %v3723
        %v3725 = vpop.f32.mrf.mxu0
        %v3726 = vadd.f32 %v3653, %v3725
        %3727 = vmatmul.bf16.gmra.mxu0 %v697
        %v3728 = vpop.f32.mrf.mxu0
        %v3729 = vadd.f32 %v3656, %v3728
        %v3730 = vpop.f32.mrf.mxu0
        %v3731 = vadd.f32 %v3658, %v3730
        %3732 = vmatmul.bf16.gmra.mxu0 %v699
        %v3733 = vpop.f32.mrf.mxu0
        %v3734 = vadd.f32 %v3661, %v3733
        %v3735 = vpop.f32.mrf.mxu0
        %v3736 = vadd.f32 %v3663, %v3735
        %3737 = vmatmul.bf16.gmra.mxu0 %v701
        %v3738 = vpop.f32.mrf.mxu0
        %v3739 = vadd.f32 %v3666, %v3738
        %v3740 = vpop.f32.mrf.mxu0
        %v3741 = vadd.f32 %v3668, %v3740
        %3742 = vmatmul.bf16.gmra.mxu0 %v703
        %v3743 = vpop.f32.mrf.mxu0
        %v3744 = vadd.f32 %v3671, %v3743
        %v3745 = vpop.f32.mrf.mxu0
        %v3746 = vadd.f32 %v3673, %v3745
        %3747 = vmatmul.bf16.gmra.mxu0 %v705
        %v3748 = vpop.f32.mrf.mxu0
        %v3749 = vadd.f32 %v3676, %v3748
        %v3750 = vpop.f32.mrf.mxu0
        %v3751 = vadd.f32 %v3678, %v3750
        %3752 = vmatmul.bf16.gmra.mxu0 %v707
        %v3753 = vpop.f32.mrf.mxu0
        %v3754 = vadd.f32 %v3681, %v3753
        %v3755 = vpop.f32.mrf.mxu0
        %v3756 = vadd.f32 %v3683, %v3755
        %3757 = vmatmul.bf16.gmra.mxu0 %v709
        %v3758 = vpop.f32.mrf.mxu0
        %v3759 = vadd.f32 %v3686, %v3758
        %v3760 = vpop.f32.mrf.mxu0
        %v3761 = vadd.f32 %v3688, %v3760
        %3762 = vmatmul.bf16.gmra.mxu0 %v711
        %v3763 = vpop.f32.mrf.mxu0
        %v3764 = vadd.f32 %v3691, %v3763
        %v3765 = vpop.f32.mrf.mxu0
        %v3766 = vadd.f32 %v3693, %v3765
        %3767 = vmatmul.bf16.gmra.mxu0 %v713
        %v3768 = vpop.f32.mrf.mxu0
        %v3769 = vadd.f32 %v3696, %v3768
        %v3770 = vpop.f32.mrf.mxu0
        %3771 = vdwg.mxu0
        %3772 = vmatpush.bf16.msra.mxu0 %v1632
        %3773 = vmatpush.bf16.msra.mxu0 %v1616
        %3774 = vmatpush.bf16.msra.mxu0 %v1600
        %3775 = vmatpush.bf16.msra.mxu0 %v1584
        %3776 = vmatpush.bf16.msra.mxu0 %v1568
        %3777 = vmatpush.bf16.msra.mxu0 %v1552
        %3778 = vmatpush.bf16.msra.mxu0 %v1536
        %3779 = vmatpush.bf16.msra.mxu0 %v1520
        %3780 = vmatmul.bf16.gmra.mxu0 %v688
        %v3781 = vpop.f32.mrf.mxu0
        %v3782 = vadd.f32 %v593, %v3781
        %v3783 = vpop.f32.mrf.mxu0
        %v3784 = vadd.f32 %v593, %v3783
        %3785 = vmatmul.bf16.gmra.mxu0 %v690
        %v3786 = vpop.f32.mrf.mxu0
        %v3787 = vadd.f32 %v593, %v3786
        %v3788 = vpop.f32.mrf.mxu0
        %v3789 = vadd.f32 %v593, %v3788
        %3790 = vmatmul.bf16.gmra.mxu0 %v692
        %v3791 = vpop.f32.mrf.mxu0
        %v3792 = vadd.f32 %v593, %v3791
        %v3793 = vpop.f32.mrf.mxu0
        %v3794 = vadd.f32 %v593, %v3793
        %3795 = vmatmul.bf16.gmra.mxu0 %v694
        %v3796 = vpop.f32.mrf.mxu0
        %v3797 = vadd.f32 %v593, %v3796
        %v3798 = vpop.f32.mrf.mxu0
        %v3799 = vadd.f32 %v593, %v3798
        %3800 = vmatmul.bf16.gmra.mxu0 %v696
        %v3801 = vpop.f32.mrf.mxu0
        %v3802 = vadd.f32 %v593, %v3801
        %v3803 = vpop.f32.mrf.mxu0
        %v3804 = vadd.f32 %v593, %v3803
        %3805 = vmatmul.bf16.gmra.mxu0 %v698
        %v3806 = vpop.f32.mrf.mxu0
        %v3807 = vadd.f32 %v593, %v3806
        %v3808 = vpop.f32.mrf.mxu0
        %v3809 = vadd.f32 %v593, %v3808
        %3810 = vmatmul.bf16.gmra.mxu0 %v700
        %v3811 = vpop.f32.mrf.mxu0
        %v3812 = vadd.f32 %v593, %v3811
        %v3813 = vpop.f32.mrf.mxu0
        %v3814 = vadd.f32 %v593, %v3813
        %3815 = vmatmul.bf16.gmra.mxu0 %v702
        %v3816 = vpop.f32.mrf.mxu0
        %v3817 = vadd.f32 %v593, %v3816
        %v3818 = vpop.f32.mrf.mxu0
        %v3819 = vadd.f32 %v593, %v3818
        %3820 = vmatmul.bf16.gmra.mxu0 %v704
        %v3821 = vpop.f32.mrf.mxu0
        %v3822 = vadd.f32 %v593, %v3821
        %v3823 = vpop.f32.mrf.mxu0
        %v3824 = vadd.f32 %v593, %v3823
        %3825 = vmatmul.bf16.gmra.mxu0 %v706
        %v3826 = vpop.f32.mrf.mxu0
        %v3827 = vadd.f32 %v593, %v3826
        %v3828 = vpop.f32.mrf.mxu0
        %v3829 = vadd.f32 %v593, %v3828
        %3830 = vmatmul.bf16.gmra.mxu0 %v708
        %v3831 = vpop.f32.mrf.mxu0
        %v3832 = vadd.f32 %v593, %v3831
        %v3833 = vpop.f32.mrf.mxu0
        %v3834 = vadd.f32 %v593, %v3833
        %3835 = vmatmul.bf16.gmra.mxu0 %v710
        %v3836 = vpop.f32.mrf.mxu0
        %v3837 = vadd.f32 %v593, %v3836
        %v3838 = vpop.f32.mrf.mxu0
        %v3839 = vadd.f32 %v593, %v3838
        %3840 = vmatmul.bf16.gmra.mxu0 %v712
        %v3841 = vpop.f32.mrf.mxu0
        %v3842 = vadd.f32 %v593, %v3841
        %v3843 = vpop.f32.mrf.mxu0
        %3844 = vdwg.mxu0
        %3845 = vmatpush.bf16.msra.mxu0 %v1760
        %3846 = vmatpush.bf16.msra.mxu0 %v1744
        %3847 = vmatpush.bf16.msra.mxu0 %v1728
        %3848 = vmatpush.bf16.msra.mxu0 %v1712
        %3849 = vmatpush.bf16.msra.mxu0 %v1696
        %3850 = vmatpush.bf16.msra.mxu0 %v1680
        %3851 = vmatpush.bf16.msra.mxu0 %v1664
        %3852 = vmatpush.bf16.msra.mxu0 %v1648
        %3853 = vmatmul.bf16.gmra.mxu0 %v689
        %v3854 = vpop.f32.mrf.mxu0
        %v3855 = vadd.f32 %v3782, %v3854
        %v3856 = vpop.f32.mrf.mxu0
        %v3857 = vadd.f32 %v3784, %v3856
        %3858 = vmatmul.bf16.gmra.mxu0 %v691
        %v3859 = vpop.f32.mrf.mxu0
        %v3860 = vadd.f32 %v3787, %v3859
        %v3861 = vpop.f32.mrf.mxu0
        %v3862 = vadd.f32 %v3789, %v3861
        %3863 = vmatmul.bf16.gmra.mxu0 %v693
        %v3864 = vpop.f32.mrf.mxu0
        %v3865 = vadd.f32 %v3792, %v3864
        %v3866 = vpop.f32.mrf.mxu0
        %v3867 = vadd.f32 %v3794, %v3866
        %3868 = vmatmul.bf16.gmra.mxu0 %v695
        %v3869 = vpop.f32.mrf.mxu0
        %v3870 = vadd.f32 %v3797, %v3869
        %v3871 = vpop.f32.mrf.mxu0
        %v3872 = vadd.f32 %v3799, %v3871
        %3873 = vmatmul.bf16.gmra.mxu0 %v697
        %v3874 = vpop.f32.mrf.mxu0
        %v3875 = vadd.f32 %v3802, %v3874
        %v3876 = vpop.f32.mrf.mxu0
        %v3877 = vadd.f32 %v3804, %v3876
        %3878 = vmatmul.bf16.gmra.mxu0 %v699
        %v3879 = vpop.f32.mrf.mxu0
        %v3880 = vadd.f32 %v3807, %v3879
        %v3881 = vpop.f32.mrf.mxu0
        %v3882 = vadd.f32 %v3809, %v3881
        %3883 = vmatmul.bf16.gmra.mxu0 %v701
        %v3884 = vpop.f32.mrf.mxu0
        %v3885 = vadd.f32 %v3812, %v3884
        %v3886 = vpop.f32.mrf.mxu0
        %v3887 = vadd.f32 %v3814, %v3886
        %3888 = vmatmul.bf16.gmra.mxu0 %v703
        %v3889 = vpop.f32.mrf.mxu0
        %v3890 = vadd.f32 %v3817, %v3889
        %v3891 = vpop.f32.mrf.mxu0
        %v3892 = vadd.f32 %v3819, %v3891
        %3893 = vmatmul.bf16.gmra.mxu0 %v705
        %v3894 = vpop.f32.mrf.mxu0
        %v3895 = vadd.f32 %v3822, %v3894
        %v3896 = vpop.f32.mrf.mxu0
        %v3897 = vadd.f32 %v3824, %v3896
        %3898 = vmatmul.bf16.gmra.mxu0 %v707
        %v3899 = vpop.f32.mrf.mxu0
        %v3900 = vadd.f32 %v3827, %v3899
        %v3901 = vpop.f32.mrf.mxu0
        %v3902 = vadd.f32 %v3829, %v3901
        %3903 = vmatmul.bf16.gmra.mxu0 %v709
        %v3904 = vpop.f32.mrf.mxu0
        %v3905 = vadd.f32 %v3832, %v3904
        %v3906 = vpop.f32.mrf.mxu0
        %v3907 = vadd.f32 %v3834, %v3906
        %3908 = vmatmul.bf16.gmra.mxu0 %v711
        %v3909 = vpop.f32.mrf.mxu0
        %v3910 = vadd.f32 %v3837, %v3909
        %v3911 = vpop.f32.mrf.mxu0
        %v3912 = vadd.f32 %v3839, %v3911
        %3913 = vmatmul.bf16.gmra.mxu0 %v713
        %v3914 = vpop.f32.mrf.mxu0
        %v3915 = vadd.f32 %v3842, %v3914
        %v3916 = vpop.f32.mrf.mxu0
        %3917 = vdwg.mxu0
        %3918 = vmatpush.bf16.msra.mxu0 %v1633
        %3919 = vmatpush.bf16.msra.mxu0 %v1617
        %3920 = vmatpush.bf16.msra.mxu0 %v1601
        %3921 = vmatpush.bf16.msra.mxu0 %v1585
        %3922 = vmatpush.bf16.msra.mxu0 %v1569
        %3923 = vmatpush.bf16.msra.mxu0 %v1553
        %3924 = vmatpush.bf16.msra.mxu0 %v1537
        %3925 = vmatpush.bf16.msra.mxu0 %v1521
        %3926 = vmatmul.bf16.gmra.mxu0 %v688
        %v3927 = vpop.f32.mrf.mxu0
        %v3928 = vadd.f32 %v594, %v3927
        %v3929 = vpop.f32.mrf.mxu0
        %v3930 = vadd.f32 %v594, %v3929
        %3931 = vmatmul.bf16.gmra.mxu0 %v690
        %v3932 = vpop.f32.mrf.mxu0
        %v3933 = vadd.f32 %v594, %v3932
        %v3934 = vpop.f32.mrf.mxu0
        %v3935 = vadd.f32 %v594, %v3934
        %3936 = vmatmul.bf16.gmra.mxu0 %v692
        %v3937 = vpop.f32.mrf.mxu0
        %v3938 = vadd.f32 %v594, %v3937
        %v3939 = vpop.f32.mrf.mxu0
        %v3940 = vadd.f32 %v594, %v3939
        %3941 = vmatmul.bf16.gmra.mxu0 %v694
        %v3942 = vpop.f32.mrf.mxu0
        %v3943 = vadd.f32 %v594, %v3942
        %v3944 = vpop.f32.mrf.mxu0
        %v3945 = vadd.f32 %v594, %v3944
        %3946 = vmatmul.bf16.gmra.mxu0 %v696
        %v3947 = vpop.f32.mrf.mxu0
        %v3948 = vadd.f32 %v594, %v3947
        %v3949 = vpop.f32.mrf.mxu0
        %v3950 = vadd.f32 %v594, %v3949
        %3951 = vmatmul.bf16.gmra.mxu0 %v698
        %v3952 = vpop.f32.mrf.mxu0
        %v3953 = vadd.f32 %v594, %v3952
        %v3954 = vpop.f32.mrf.mxu0
        %v3955 = vadd.f32 %v594, %v3954
        %3956 = vmatmul.bf16.gmra.mxu0 %v700
        %v3957 = vpop.f32.mrf.mxu0
        %v3958 = vadd.f32 %v594, %v3957
        %v3959 = vpop.f32.mrf.mxu0
        %v3960 = vadd.f32 %v594, %v3959
        %3961 = vmatmul.bf16.gmra.mxu0 %v702
        %v3962 = vpop.f32.mrf.mxu0
        %v3963 = vadd.f32 %v594, %v3962
        %v3964 = vpop.f32.mrf.mxu0
        %v3965 = vadd.f32 %v594, %v3964
        %3966 = vmatmul.bf16.gmra.mxu0 %v704
        %v3967 = vpop.f32.mrf.mxu0
        %v3968 = vadd.f32 %v594, %v3967
        %v3969 = vpop.f32.mrf.mxu0
        %v3970 = vadd.f32 %v594, %v3969
        %3971 = vmatmul.bf16.gmra.mxu0 %v706
        %v3972 = vpop.f32.mrf.mxu0
        %v3973 = vadd.f32 %v594, %v3972
        %v3974 = vpop.f32.mrf.mxu0
        %v3975 = vadd.f32 %v594, %v3974
        %3976 = vmatmul.bf16.gmra.mxu0 %v708
        %v3977 = vpop.f32.mrf.mxu0
        %v3978 = vadd.f32 %v594, %v3977
        %v3979 = vpop.f32.mrf.mxu0
        %v3980 = vadd.f32 %v594, %v3979
        %3981 = vmatmul.bf16.gmra.mxu0 %v710
        %v3982 = vpop.f32.mrf.mxu0
        %v3983 = vadd.f32 %v594, %v3982
        %v3984 = vpop.f32.mrf.mxu0
        %v3985 = vadd.f32 %v594, %v3984
        %3986 = vmatmul.bf16.gmra.mxu0 %v712
        %v3987 = vpop.f32.mrf.mxu0
        %v3988 = vadd.f32 %v594, %v3987
        %v3989 = vpop.f32.mrf.mxu0
        %3990 = vdwg.mxu0
        %3991 = vmatpush.bf16.msra.mxu0 %v1761
        %3992 = vmatpush.bf16.msra.mxu0 %v1745
        %3993 = vmatpush.bf16.msra.mxu0 %v1729
        %3994 = vmatpush.bf16.msra.mxu0 %v1713
        %3995 = vmatpush.bf16.msra.mxu0 %v1697
        %3996 = vmatpush.bf16.msra.mxu0 %v1681
        %3997 = vmatpush.bf16.msra.mxu0 %v1665
        %3998 = vmatpush.bf16.msra.mxu0 %v1649
        %3999 = vmatmul.bf16.gmra.mxu0 %v689
        %v4000 = vpop.f32.mrf.mxu0
        %v4001 = vadd.f32 %v3928, %v4000
        %v4002 = vpop.f32.mrf.mxu0
        %v4003 = vadd.f32 %v3930, %v4002
        %4004 = vmatmul.bf16.gmra.mxu0 %v691
        %v4005 = vpop.f32.mrf.mxu0
        %v4006 = vadd.f32 %v3933, %v4005
        %v4007 = vpop.f32.mrf.mxu0
        %v4008 = vadd.f32 %v3935, %v4007
        %4009 = vmatmul.bf16.gmra.mxu0 %v693
        %v4010 = vpop.f32.mrf.mxu0
        %v4011 = vadd.f32 %v3938, %v4010
        %v4012 = vpop.f32.mrf.mxu0
        %v4013 = vadd.f32 %v3940, %v4012
        %4014 = vmatmul.bf16.gmra.mxu0 %v695
        %v4015 = vpop.f32.mrf.mxu0
        %v4016 = vadd.f32 %v3943, %v4015
        %v4017 = vpop.f32.mrf.mxu0
        %v4018 = vadd.f32 %v3945, %v4017
        %4019 = vmatmul.bf16.gmra.mxu0 %v697
        %v4020 = vpop.f32.mrf.mxu0
        %v4021 = vadd.f32 %v3948, %v4020
        %v4022 = vpop.f32.mrf.mxu0
        %v4023 = vadd.f32 %v3950, %v4022
        %4024 = vmatmul.bf16.gmra.mxu0 %v699
        %v4025 = vpop.f32.mrf.mxu0
        %v4026 = vadd.f32 %v3953, %v4025
        %v4027 = vpop.f32.mrf.mxu0
        %v4028 = vadd.f32 %v3955, %v4027
        %4029 = vmatmul.bf16.gmra.mxu0 %v701
        %v4030 = vpop.f32.mrf.mxu0
        %v4031 = vadd.f32 %v3958, %v4030
        %v4032 = vpop.f32.mrf.mxu0
        %v4033 = vadd.f32 %v3960, %v4032
        %4034 = vmatmul.bf16.gmra.mxu0 %v703
        %v4035 = vpop.f32.mrf.mxu0
        %v4036 = vadd.f32 %v3963, %v4035
        %v4037 = vpop.f32.mrf.mxu0
        %v4038 = vadd.f32 %v3965, %v4037
        %4039 = vmatmul.bf16.gmra.mxu0 %v705
        %v4040 = vpop.f32.mrf.mxu0
        %v4041 = vadd.f32 %v3968, %v4040
        %v4042 = vpop.f32.mrf.mxu0
        %v4043 = vadd.f32 %v3970, %v4042
        %4044 = vmatmul.bf16.gmra.mxu0 %v707
        %v4045 = vpop.f32.mrf.mxu0
        %v4046 = vadd.f32 %v3973, %v4045
        %v4047 = vpop.f32.mrf.mxu0
        %v4048 = vadd.f32 %v3975, %v4047
        %4049 = vmatmul.bf16.gmra.mxu0 %v709
        %v4050 = vpop.f32.mrf.mxu0
        %v4051 = vadd.f32 %v3978, %v4050
        %v4052 = vpop.f32.mrf.mxu0
        %v4053 = vadd.f32 %v3980, %v4052
        %4054 = vmatmul.bf16.gmra.mxu0 %v711
        %v4055 = vpop.f32.mrf.mxu0
        %v4056 = vadd.f32 %v3983, %v4055
        %v4057 = vpop.f32.mrf.mxu0
        %v4058 = vadd.f32 %v3985, %v4057
        %4059 = vmatmul.bf16.gmra.mxu0 %v713
        %v4060 = vpop.f32.mrf.mxu0
        %v4061 = vadd.f32 %v3988, %v4060
        %v4062 = vpop.f32.mrf.mxu0
        %4063 = vdwg.mxu0
        %4064 = vmatpush.bf16.msra.mxu0 %v1634
        %4065 = vmatpush.bf16.msra.mxu0 %v1618
        %4066 = vmatpush.bf16.msra.mxu0 %v1602
        %4067 = vmatpush.bf16.msra.mxu0 %v1586
        %4068 = vmatpush.bf16.msra.mxu0 %v1570
        %4069 = vmatpush.bf16.msra.mxu0 %v1554
        %4070 = vmatpush.bf16.msra.mxu0 %v1538
        %4071 = vmatpush.bf16.msra.mxu0 %v1522
        %4072 = vmatmul.bf16.gmra.mxu0 %v688
        %v4073 = vpop.f32.mrf.mxu0
        %v4074 = vadd.f32 %v595, %v4073
        %v4075 = vpop.f32.mrf.mxu0
        %v4076 = vadd.f32 %v595, %v4075
        %4077 = vmatmul.bf16.gmra.mxu0 %v690
        %v4078 = vpop.f32.mrf.mxu0
        %v4079 = vadd.f32 %v595, %v4078
        %v4080 = vpop.f32.mrf.mxu0
        %v4081 = vadd.f32 %v595, %v4080
        %4082 = vmatmul.bf16.gmra.mxu0 %v692
        %v4083 = vpop.f32.mrf.mxu0
        %v4084 = vadd.f32 %v595, %v4083
        %v4085 = vpop.f32.mrf.mxu0
        %v4086 = vadd.f32 %v595, %v4085
        %4087 = vmatmul.bf16.gmra.mxu0 %v694
        %v4088 = vpop.f32.mrf.mxu0
        %v4089 = vadd.f32 %v595, %v4088
        %v4090 = vpop.f32.mrf.mxu0
        %v4091 = vadd.f32 %v595, %v4090
        %4092 = vmatmul.bf16.gmra.mxu0 %v696
        %v4093 = vpop.f32.mrf.mxu0
        %v4094 = vadd.f32 %v595, %v4093
        %v4095 = vpop.f32.mrf.mxu0
        %v4096 = vadd.f32 %v595, %v4095
        %4097 = vmatmul.bf16.gmra.mxu0 %v698
        %v4098 = vpop.f32.mrf.mxu0
        %v4099 = vadd.f32 %v595, %v4098
        %v4100 = vpop.f32.mrf.mxu0
        %v4101 = vadd.f32 %v595, %v4100
        %4102 = vmatmul.bf16.gmra.mxu0 %v700
        %v4103 = vpop.f32.mrf.mxu0
        %v4104 = vadd.f32 %v595, %v4103
        %v4105 = vpop.f32.mrf.mxu0
        %v4106 = vadd.f32 %v595, %v4105
        %4107 = vmatmul.bf16.gmra.mxu0 %v702
        %v4108 = vpop.f32.mrf.mxu0
        %v4109 = vadd.f32 %v595, %v4108
        %v4110 = vpop.f32.mrf.mxu0
        %v4111 = vadd.f32 %v595, %v4110
        %4112 = vmatmul.bf16.gmra.mxu0 %v704
        %v4113 = vpop.f32.mrf.mxu0
        %v4114 = vadd.f32 %v595, %v4113
        %v4115 = vpop.f32.mrf.mxu0
        %v4116 = vadd.f32 %v595, %v4115
        %4117 = vmatmul.bf16.gmra.mxu0 %v706
        %v4118 = vpop.f32.mrf.mxu0
        %v4119 = vadd.f32 %v595, %v4118
        %v4120 = vpop.f32.mrf.mxu0
        %v4121 = vadd.f32 %v595, %v4120
        %4122 = vmatmul.bf16.gmra.mxu0 %v708
        %v4123 = vpop.f32.mrf.mxu0
        %v4124 = vadd.f32 %v595, %v4123
        %v4125 = vpop.f32.mrf.mxu0
        %v4126 = vadd.f32 %v595, %v4125
        %4127 = vmatmul.bf16.gmra.mxu0 %v710
        %v4128 = vpop.f32.mrf.mxu0
        %v4129 = vadd.f32 %v595, %v4128
        %v4130 = vpop.f32.mrf.mxu0
        %v4131 = vadd.f32 %v595, %v4130
        %4132 = vmatmul.bf16.gmra.mxu0 %v712
        %v4133 = vpop.f32.mrf.mxu0
        %v4134 = vadd.f32 %v595, %v4133
        %v4135 = vpop.f32.mrf.mxu0
        %4136 = vdwg.mxu0
        %4137 = vmatpush.bf16.msra.mxu0 %v1762
        %4138 = vmatpush.bf16.msra.mxu0 %v1746
        %4139 = vmatpush.bf16.msra.mxu0 %v1730
        %4140 = vmatpush.bf16.msra.mxu0 %v1714
        %4141 = vmatpush.bf16.msra.mxu0 %v1698
        %4142 = vmatpush.bf16.msra.mxu0 %v1682
        %4143 = vmatpush.bf16.msra.mxu0 %v1666
        %4144 = vmatpush.bf16.msra.mxu0 %v1650
        %4145 = vmatmul.bf16.gmra.mxu0 %v689
        %v4146 = vpop.f32.mrf.mxu0
        %v4147 = vadd.f32 %v4074, %v4146
        %v4148 = vpop.f32.mrf.mxu0
        %v4149 = vadd.f32 %v4076, %v4148
        %4150 = vmatmul.bf16.gmra.mxu0 %v691
        %v4151 = vpop.f32.mrf.mxu0
        %v4152 = vadd.f32 %v4079, %v4151
        %v4153 = vpop.f32.mrf.mxu0
        %v4154 = vadd.f32 %v4081, %v4153
        %4155 = vmatmul.bf16.gmra.mxu0 %v693
        %v4156 = vpop.f32.mrf.mxu0
        %v4157 = vadd.f32 %v4084, %v4156
        %v4158 = vpop.f32.mrf.mxu0
        %v4159 = vadd.f32 %v4086, %v4158
        %4160 = vmatmul.bf16.gmra.mxu0 %v695
        %v4161 = vpop.f32.mrf.mxu0
        %v4162 = vadd.f32 %v4089, %v4161
        %v4163 = vpop.f32.mrf.mxu0
        %v4164 = vadd.f32 %v4091, %v4163
        %4165 = vmatmul.bf16.gmra.mxu0 %v697
        %v4166 = vpop.f32.mrf.mxu0
        %v4167 = vadd.f32 %v4094, %v4166
        %v4168 = vpop.f32.mrf.mxu0
        %v4169 = vadd.f32 %v4096, %v4168
        %4170 = vmatmul.bf16.gmra.mxu0 %v699
        %v4171 = vpop.f32.mrf.mxu0
        %v4172 = vadd.f32 %v4099, %v4171
        %v4173 = vpop.f32.mrf.mxu0
        %v4174 = vadd.f32 %v4101, %v4173
        %4175 = vmatmul.bf16.gmra.mxu0 %v701
        %v4176 = vpop.f32.mrf.mxu0
        %v4177 = vadd.f32 %v4104, %v4176
        %v4178 = vpop.f32.mrf.mxu0
        %v4179 = vadd.f32 %v4106, %v4178
        %4180 = vmatmul.bf16.gmra.mxu0 %v703
        %v4181 = vpop.f32.mrf.mxu0
        %v4182 = vadd.f32 %v4109, %v4181
        %v4183 = vpop.f32.mrf.mxu0
        %v4184 = vadd.f32 %v4111, %v4183
        %4185 = vmatmul.bf16.gmra.mxu0 %v705
        %v4186 = vpop.f32.mrf.mxu0
        %v4187 = vadd.f32 %v4114, %v4186
        %v4188 = vpop.f32.mrf.mxu0
        %v4189 = vadd.f32 %v4116, %v4188
        %4190 = vmatmul.bf16.gmra.mxu0 %v707
        %v4191 = vpop.f32.mrf.mxu0
        %v4192 = vadd.f32 %v4119, %v4191
        %v4193 = vpop.f32.mrf.mxu0
        %v4194 = vadd.f32 %v4121, %v4193
        %4195 = vmatmul.bf16.gmra.mxu0 %v709
        %v4196 = vpop.f32.mrf.mxu0
        %v4197 = vadd.f32 %v4124, %v4196
        %v4198 = vpop.f32.mrf.mxu0
        %v4199 = vadd.f32 %v4126, %v4198
        %4200 = vmatmul.bf16.gmra.mxu0 %v711
        %v4201 = vpop.f32.mrf.mxu0
        %v4202 = vadd.f32 %v4129, %v4201
        %v4203 = vpop.f32.mrf.mxu0
        %v4204 = vadd.f32 %v4131, %v4203
        %4205 = vmatmul.bf16.gmra.mxu0 %v713
        %v4206 = vpop.f32.mrf.mxu0
        %v4207 = vadd.f32 %v4134, %v4206
        %v4208 = vpop.f32.mrf.mxu0
        %4209 = vdwg.mxu0
        %4210 = vmatpush.bf16.msra.mxu0 %v1635
        %4211 = vmatpush.bf16.msra.mxu0 %v1619
        %4212 = vmatpush.bf16.msra.mxu0 %v1603
        %4213 = vmatpush.bf16.msra.mxu0 %v1587
        %4214 = vmatpush.bf16.msra.mxu0 %v1571
        %4215 = vmatpush.bf16.msra.mxu0 %v1555
        %4216 = vmatpush.bf16.msra.mxu0 %v1539
        %4217 = vmatpush.bf16.msra.mxu0 %v1523
        %4218 = vmatmul.bf16.gmra.mxu0 %v688
        %v4219 = vpop.f32.mrf.mxu0
        %v4220 = vadd.f32 %v596, %v4219
        %v4221 = vpop.f32.mrf.mxu0
        %v4222 = vadd.f32 %v596, %v4221
        %4223 = vmatmul.bf16.gmra.mxu0 %v690
        %v4224 = vpop.f32.mrf.mxu0
        %v4225 = vadd.f32 %v596, %v4224
        %v4226 = vpop.f32.mrf.mxu0
        %v4227 = vadd.f32 %v596, %v4226
        %4228 = vmatmul.bf16.gmra.mxu0 %v692
        %v4229 = vpop.f32.mrf.mxu0
        %v4230 = vadd.f32 %v596, %v4229
        %v4231 = vpop.f32.mrf.mxu0
        %v4232 = vadd.f32 %v596, %v4231
        %4233 = vmatmul.bf16.gmra.mxu0 %v694
        %v4234 = vpop.f32.mrf.mxu0
        %v4235 = vadd.f32 %v596, %v4234
        %v4236 = vpop.f32.mrf.mxu0
        %v4237 = vadd.f32 %v596, %v4236
        %4238 = vmatmul.bf16.gmra.mxu0 %v696
        %v4239 = vpop.f32.mrf.mxu0
        %v4240 = vadd.f32 %v596, %v4239
        %v4241 = vpop.f32.mrf.mxu0
        %v4242 = vadd.f32 %v596, %v4241
        %4243 = vmatmul.bf16.gmra.mxu0 %v698
        %v4244 = vpop.f32.mrf.mxu0
        %v4245 = vadd.f32 %v596, %v4244
        %v4246 = vpop.f32.mrf.mxu0
        %v4247 = vadd.f32 %v596, %v4246
        %4248 = vmatmul.bf16.gmra.mxu0 %v700
        %v4249 = vpop.f32.mrf.mxu0
        %v4250 = vadd.f32 %v596, %v4249
        %v4251 = vpop.f32.mrf.mxu0
        %v4252 = vadd.f32 %v596, %v4251
        %4253 = vmatmul.bf16.gmra.mxu0 %v702
        %v4254 = vpop.f32.mrf.mxu0
        %v4255 = vadd.f32 %v596, %v4254
        %v4256 = vpop.f32.mrf.mxu0
        %v4257 = vadd.f32 %v596, %v4256
        %4258 = vmatmul.bf16.gmra.mxu0 %v704
        %v4259 = vpop.f32.mrf.mxu0
        %v4260 = vadd.f32 %v596, %v4259
        %v4261 = vpop.f32.mrf.mxu0
        %v4262 = vadd.f32 %v596, %v4261
        %4263 = vmatmul.bf16.gmra.mxu0 %v706
        %v4264 = vpop.f32.mrf.mxu0
        %v4265 = vadd.f32 %v596, %v4264
        %v4266 = vpop.f32.mrf.mxu0
        %v4267 = vadd.f32 %v596, %v4266
        %4268 = vmatmul.bf16.gmra.mxu0 %v708
        %v4269 = vpop.f32.mrf.mxu0
        %v4270 = vadd.f32 %v596, %v4269
        %v4271 = vpop.f32.mrf.mxu0
        %v4272 = vadd.f32 %v596, %v4271
        %4273 = vmatmul.bf16.gmra.mxu0 %v710
        %v4274 = vpop.f32.mrf.mxu0
        %v4275 = vadd.f32 %v596, %v4274
        %v4276 = vpop.f32.mrf.mxu0
        %v4277 = vadd.f32 %v596, %v4276
        %4278 = vmatmul.bf16.gmra.mxu0 %v712
        %v4279 = vpop.f32.mrf.mxu0
        %v4280 = vadd.f32 %v596, %v4279
        %v4281 = vpop.f32.mrf.mxu0
        %4282 = vdwg.mxu0
        %4283 = vmatpush.bf16.msra.mxu0 %v1763
        %4284 = vmatpush.bf16.msra.mxu0 %v1747
        %4285 = vmatpush.bf16.msra.mxu0 %v1731
        %4286 = vmatpush.bf16.msra.mxu0 %v1715
        %4287 = vmatpush.bf16.msra.mxu0 %v1699
        %4288 = vmatpush.bf16.msra.mxu0 %v1683
        %4289 = vmatpush.bf16.msra.mxu0 %v1667
        %4290 = vmatpush.bf16.msra.mxu0 %v1651
        %4291 = vmatmul.bf16.gmra.mxu0 %v689
        %v4292 = vpop.f32.mrf.mxu0
        %v4293 = vadd.f32 %v4220, %v4292
        %v4294 = vpop.f32.mrf.mxu0
        %v4295 = vadd.f32 %v4222, %v4294
        %4296 = vmatmul.bf16.gmra.mxu0 %v691
        %v4297 = vpop.f32.mrf.mxu0
        %v4298 = vadd.f32 %v4225, %v4297
        %v4299 = vpop.f32.mrf.mxu0
        %v4300 = vadd.f32 %v4227, %v4299
        %4301 = vmatmul.bf16.gmra.mxu0 %v693
        %v4302 = vpop.f32.mrf.mxu0
        %v4303 = vadd.f32 %v4230, %v4302
        %v4304 = vpop.f32.mrf.mxu0
        %v4305 = vadd.f32 %v4232, %v4304
        %4306 = vmatmul.bf16.gmra.mxu0 %v695
        %v4307 = vpop.f32.mrf.mxu0
        %v4308 = vadd.f32 %v4235, %v4307
        %v4309 = vpop.f32.mrf.mxu0
        %v4310 = vadd.f32 %v4237, %v4309
        %4311 = vmatmul.bf16.gmra.mxu0 %v697
        %v4312 = vpop.f32.mrf.mxu0
        %v4313 = vadd.f32 %v4240, %v4312
        %v4314 = vpop.f32.mrf.mxu0
        %v4315 = vadd.f32 %v4242, %v4314
        %4316 = vmatmul.bf16.gmra.mxu0 %v699
        %v4317 = vpop.f32.mrf.mxu0
        %v4318 = vadd.f32 %v4245, %v4317
        %v4319 = vpop.f32.mrf.mxu0
        %v4320 = vadd.f32 %v4247, %v4319
        %4321 = vmatmul.bf16.gmra.mxu0 %v701
        %v4322 = vpop.f32.mrf.mxu0
        %v4323 = vadd.f32 %v4250, %v4322
        %v4324 = vpop.f32.mrf.mxu0
        %v4325 = vadd.f32 %v4252, %v4324
        %4326 = vmatmul.bf16.gmra.mxu0 %v703
        %v4327 = vpop.f32.mrf.mxu0
        %v4328 = vadd.f32 %v4255, %v4327
        %v4329 = vpop.f32.mrf.mxu0
        %v4330 = vadd.f32 %v4257, %v4329
        %4331 = vmatmul.bf16.gmra.mxu0 %v705
        %v4332 = vpop.f32.mrf.mxu0
        %v4333 = vadd.f32 %v4260, %v4332
        %v4334 = vpop.f32.mrf.mxu0
        %v4335 = vadd.f32 %v4262, %v4334
        %4336 = vmatmul.bf16.gmra.mxu0 %v707
        %v4337 = vpop.f32.mrf.mxu0
        %v4338 = vadd.f32 %v4265, %v4337
        %v4339 = vpop.f32.mrf.mxu0
        %v4340 = vadd.f32 %v4267, %v4339
        %4341 = vmatmul.bf16.gmra.mxu0 %v709
        %v4342 = vpop.f32.mrf.mxu0
        %v4343 = vadd.f32 %v4270, %v4342
        %v4344 = vpop.f32.mrf.mxu0
        %v4345 = vadd.f32 %v4272, %v4344
        %4346 = vmatmul.bf16.gmra.mxu0 %v711
        %v4347 = vpop.f32.mrf.mxu0
        %v4348 = vadd.f32 %v4275, %v4347
        %v4349 = vpop.f32.mrf.mxu0
        %v4350 = vadd.f32 %v4277, %v4349
        %4351 = vmatmul.bf16.gmra.mxu0 %v713
        %v4352 = vpop.f32.mrf.mxu0
        %v4353 = vadd.f32 %v4280, %v4352
        %v4354 = vpop.f32.mrf.mxu0
        %4355 = vdwg.mxu0
        %v4356 = vxor.u32 %v2103, 2147483648
        %v4357 = vxor.u32 %v2249, 2147483648
        %v4358 = vxor.u32 %v2395, 2147483648
        %v4359 = vxor.u32 %v2541, 2147483648
        %v4360 = vxor.u32 %v2687, 2147483648
        %v4361 = vxor.u32 %v2833, 2147483648
        %v4362 = vxor.u32 %v2979, 2147483648
        %v4363 = vxor.u32 %v3125, 2147483648
        %v4364 = vxor.u32 %v2105, 2147483648
        %v4365 = vxor.u32 %v2251, 2147483648
        %v4366 = vxor.u32 %v2397, 2147483648
        %v4367 = vxor.u32 %v2543, 2147483648
        %v4368 = vxor.u32 %v2689, 2147483648
        %v4369 = vxor.u32 %v2835, 2147483648
        %v4370 = vxor.u32 %v2981, 2147483648
        %v4371 = vxor.u32 %v3127, 2147483648
        %v4372 = vxor.u32 %v2108, 2147483648
        %v4373 = vxor.u32 %v2254, 2147483648
        %v4374 = vxor.u32 %v2400, 2147483648
        %v4375 = vxor.u32 %v2546, 2147483648
        %v4376 = vxor.u32 %v2692, 2147483648
        %v4377 = vxor.u32 %v2838, 2147483648
        %v4378 = vxor.u32 %v2984, 2147483648
        %v4379 = vxor.u32 %v3130, 2147483648
        %v4380 = vxor.u32 %v2110, 2147483648
        %v4381 = vxor.u32 %v2256, 2147483648
        %v4382 = vxor.u32 %v2402, 2147483648
        %v4383 = vxor.u32 %v2548, 2147483648
        %v4384 = vxor.u32 %v2694, 2147483648
        %v4385 = vxor.u32 %v2840, 2147483648
        %v4386 = vxor.u32 %v2986, 2147483648
        %v4387 = vxor.u32 %v3132, 2147483648
        %v4388 = vxor.u32 %v2113, 2147483648
        %v4389 = vxor.u32 %v2259, 2147483648
        %v4390 = vxor.u32 %v2405, 2147483648
        %v4391 = vxor.u32 %v2551, 2147483648
        %v4392 = vxor.u32 %v2697, 2147483648
        %v4393 = vxor.u32 %v2843, 2147483648
        %v4394 = vxor.u32 %v2989, 2147483648
        %v4395 = vxor.u32 %v3135, 2147483648
        %v4396 = vxor.u32 %v2115, 2147483648
        %v4397 = vxor.u32 %v2261, 2147483648
        %v4398 = vxor.u32 %v2407, 2147483648
        %v4399 = vxor.u32 %v2553, 2147483648
        %v4400 = vxor.u32 %v2699, 2147483648
        %v4401 = vxor.u32 %v2845, 2147483648
        %v4402 = vxor.u32 %v2991, 2147483648
        %v4403 = vxor.u32 %v3137, 2147483648
        %v4404 = vxor.u32 %v2118, 2147483648
        %v4405 = vxor.u32 %v2264, 2147483648
        %v4406 = vxor.u32 %v2410, 2147483648
        %v4407 = vxor.u32 %v2556, 2147483648
        %v4408 = vxor.u32 %v2702, 2147483648
        %v4409 = vxor.u32 %v2848, 2147483648
        %v4410 = vxor.u32 %v2994, 2147483648
        %v4411 = vxor.u32 %v3140, 2147483648
        %v4412 = vxor.u32 %v2120, 2147483648
        %v4413 = vxor.u32 %v2266, 2147483648
        %v4414 = vxor.u32 %v2412, 2147483648
        %v4415 = vxor.u32 %v2558, 2147483648
        %v4416 = vxor.u32 %v2704, 2147483648
        %v4417 = vxor.u32 %v2850, 2147483648
        %v4418 = vxor.u32 %v2996, 2147483648
        %v4419 = vxor.u32 %v3142, 2147483648
        %v4420 = vxor.u32 %v2123, 2147483648
        %v4421 = vxor.u32 %v2269, 2147483648
        %v4422 = vxor.u32 %v2415, 2147483648
        %v4423 = vxor.u32 %v2561, 2147483648
        %v4424 = vxor.u32 %v2707, 2147483648
        %v4425 = vxor.u32 %v2853, 2147483648
        %v4426 = vxor.u32 %v2999, 2147483648
        %v4427 = vxor.u32 %v3145, 2147483648
        %v4428 = vxor.u32 %v2125, 2147483648
        %v4429 = vxor.u32 %v2271, 2147483648
        %v4430 = vxor.u32 %v2417, 2147483648
        %v4431 = vxor.u32 %v2563, 2147483648
        %v4432 = vxor.u32 %v2709, 2147483648
        %v4433 = vxor.u32 %v2855, 2147483648
        %v4434 = vxor.u32 %v3001, 2147483648
        %v4435 = vxor.u32 %v3147, 2147483648
        %v4436 = vxor.u32 %v2128, 2147483648
        %v4437 = vxor.u32 %v2274, 2147483648
        %v4438 = vxor.u32 %v2420, 2147483648
        %v4439 = vxor.u32 %v2566, 2147483648
        %v4440 = vxor.u32 %v2712, 2147483648
        %v4441 = vxor.u32 %v2858, 2147483648
        %v4442 = vxor.u32 %v3004, 2147483648
        %v4443 = vxor.u32 %v3150, 2147483648
        %v4444 = vxor.u32 %v2130, 2147483648
        %v4445 = vxor.u32 %v2276, 2147483648
        %v4446 = vxor.u32 %v2422, 2147483648
        %v4447 = vxor.u32 %v2568, 2147483648
        %v4448 = vxor.u32 %v2714, 2147483648
        %v4449 = vxor.u32 %v2860, 2147483648
        %v4450 = vxor.u32 %v3006, 2147483648
        %v4451 = vxor.u32 %v3152, 2147483648
        %v4452 = vxor.u32 %v2133, 2147483648
        %v4453 = vxor.u32 %v2279, 2147483648
        %v4454 = vxor.u32 %v2425, 2147483648
        %v4455 = vxor.u32 %v2571, 2147483648
        %v4456 = vxor.u32 %v2717, 2147483648
        %v4457 = vxor.u32 %v2863, 2147483648
        %v4458 = vxor.u32 %v3009, 2147483648
        %v4459 = vxor.u32 %v3155, 2147483648
        %v4460 = vxor.u32 %v2135, 2147483648
        %v4461 = vxor.u32 %v2281, 2147483648
        %v4462 = vxor.u32 %v2427, 2147483648
        %v4463 = vxor.u32 %v2573, 2147483648
        %v4464 = vxor.u32 %v2719, 2147483648
        %v4465 = vxor.u32 %v2865, 2147483648
        %v4466 = vxor.u32 %v3011, 2147483648
        %v4467 = vxor.u32 %v3157, 2147483648
        %v4468 = vxor.u32 %v2138, 2147483648
        %v4469 = vxor.u32 %v2284, 2147483648
        %v4470 = vxor.u32 %v2430, 2147483648
        %v4471 = vxor.u32 %v2576, 2147483648
        %v4472 = vxor.u32 %v2722, 2147483648
        %v4473 = vxor.u32 %v2868, 2147483648
        %v4474 = vxor.u32 %v3014, 2147483648
        %v4475 = vxor.u32 %v3160, 2147483648
        %v4476 = vxor.u32 %v2140, 2147483648
        %v4477 = vxor.u32 %v2286, 2147483648
        %v4478 = vxor.u32 %v2432, 2147483648
        %v4479 = vxor.u32 %v2578, 2147483648
        %v4480 = vxor.u32 %v2724, 2147483648
        %v4481 = vxor.u32 %v2870, 2147483648
        %v4482 = vxor.u32 %v3016, 2147483648
        %v4483 = vxor.u32 %v3162, 2147483648
        %v4484 = vxor.u32 %v2143, 2147483648
        %v4485 = vxor.u32 %v2289, 2147483648
        %v4486 = vxor.u32 %v2435, 2147483648
        %v4487 = vxor.u32 %v2581, 2147483648
        %v4488 = vxor.u32 %v2727, 2147483648
        %v4489 = vxor.u32 %v2873, 2147483648
        %v4490 = vxor.u32 %v3019, 2147483648
        %v4491 = vxor.u32 %v3165, 2147483648
        %v4492 = vxor.u32 %v2145, 2147483648
        %v4493 = vxor.u32 %v2291, 2147483648
        %v4494 = vxor.u32 %v2437, 2147483648
        %v4495 = vxor.u32 %v2583, 2147483648
        %v4496 = vxor.u32 %v2729, 2147483648
        %v4497 = vxor.u32 %v2875, 2147483648
        %v4498 = vxor.u32 %v3021, 2147483648
        %v4499 = vxor.u32 %v3167, 2147483648
        %v4500 = vxor.u32 %v2148, 2147483648
        %v4501 = vxor.u32 %v2294, 2147483648
        %v4502 = vxor.u32 %v2440, 2147483648
        %v4503 = vxor.u32 %v2586, 2147483648
        %v4504 = vxor.u32 %v2732, 2147483648
        %v4505 = vxor.u32 %v2878, 2147483648
        %v4506 = vxor.u32 %v3024, 2147483648
        %v4507 = vxor.u32 %v3170, 2147483648
        %v4508 = vxor.u32 %v2150, 2147483648
        %v4509 = vxor.u32 %v2296, 2147483648
        %v4510 = vxor.u32 %v2442, 2147483648
        %v4511 = vxor.u32 %v2588, 2147483648
        %v4512 = vxor.u32 %v2734, 2147483648
        %v4513 = vxor.u32 %v2880, 2147483648
        %v4514 = vxor.u32 %v3026, 2147483648
        %v4515 = vxor.u32 %v3172, 2147483648
        %v4516 = vxor.u32 %v2153, 2147483648
        %v4517 = vxor.u32 %v2299, 2147483648
        %v4518 = vxor.u32 %v2445, 2147483648
        %v4519 = vxor.u32 %v2591, 2147483648
        %v4520 = vxor.u32 %v2737, 2147483648
        %v4521 = vxor.u32 %v2883, 2147483648
        %v4522 = vxor.u32 %v3029, 2147483648
        %v4523 = vxor.u32 %v3175, 2147483648
        %v4524 = vxor.u32 %v2155, 2147483648
        %v4525 = vxor.u32 %v2301, 2147483648
        %v4526 = vxor.u32 %v2447, 2147483648
        %v4527 = vxor.u32 %v2593, 2147483648
        %v4528 = vxor.u32 %v2739, 2147483648
        %v4529 = vxor.u32 %v2885, 2147483648
        %v4530 = vxor.u32 %v3031, 2147483648
        %v4531 = vxor.u32 %v3177, 2147483648
        %v4532 = vxor.u32 %v2158, 2147483648
        %v4533 = vxor.u32 %v2304, 2147483648
        %v4534 = vxor.u32 %v2450, 2147483648
        %v4535 = vxor.u32 %v2596, 2147483648
        %v4536 = vxor.u32 %v2742, 2147483648
        %v4537 = vxor.u32 %v2888, 2147483648
        %v4538 = vxor.u32 %v3034, 2147483648
        %v4539 = vxor.u32 %v3180, 2147483648
        %v4540 = vxor.u32 %v2160, 2147483648
        %v4541 = vxor.u32 %v2306, 2147483648
        %v4542 = vxor.u32 %v2452, 2147483648
        %v4543 = vxor.u32 %v2598, 2147483648
        %v4544 = vxor.u32 %v2744, 2147483648
        %v4545 = vxor.u32 %v2890, 2147483648
        %v4546 = vxor.u32 %v3036, 2147483648
        %v4547 = vxor.u32 %v3182, 2147483648
        %v4548 = vxor.u32 %v2163, 2147483648
        %v4549 = vxor.u32 %v2309, 2147483648
        %v4550 = vxor.u32 %v2455, 2147483648
        %v4551 = vxor.u32 %v2601, 2147483648
        %v4552 = vxor.u32 %v2747, 2147483648
        %v4553 = vxor.u32 %v2893, 2147483648
        %v4554 = vxor.u32 %v3039, 2147483648
        %v4555 = vxor.u32 %v3185, 2147483648
        %v4556 = vmul.f32 %v4356, 1.442695
        %v4557 = vpow.pop %v4556
        %v4558 = vmul.f32 %v4357, 1.442695
        %v4559 = vpow.pop %v4558
        %v4560 = vmul.f32 %v4358, 1.442695
        %v4561 = vpow.pop %v4560
        %v4562 = vmul.f32 %v4359, 1.442695
        %v4563 = vpow.pop %v4562
        %v4564 = vmul.f32 %v4360, 1.442695
        %v4565 = vpow.pop %v4564
        %v4566 = vmul.f32 %v4361, 1.442695
        %v4567 = vpow.pop %v4566
        %v4568 = vmul.f32 %v4362, 1.442695
        %v4569 = vpow.pop %v4568
        %v4570 = vmul.f32 %v4363, 1.442695
        %v4571 = vpow.pop %v4570
        %v4572 = vmul.f32 %v4364, 1.442695
        %v4573 = vpow.pop %v4572
        %v4574 = vmul.f32 %v4365, 1.442695
        %v4575 = vpow.pop %v4574
        %v4576 = vmul.f32 %v4366, 1.442695
        %v4577 = vpow.pop %v4576
        %v4578 = vmul.f32 %v4367, 1.442695
        %v4579 = vpow.pop %v4578
        %v4580 = vmul.f32 %v4368, 1.442695
        %v4581 = vpow.pop %v4580
        %v4582 = vmul.f32 %v4369, 1.442695
        %v4583 = vpow.pop %v4582
        %v4584 = vmul.f32 %v4370, 1.442695
        %v4585 = vpow.pop %v4584
        %v4586 = vmul.f32 %v4371, 1.442695
        %v4587 = vpow.pop %v4586
        %v4588 = vmul.f32 %v4372, 1.442695
        %v4589 = vpow.pop %v4588
        %v4590 = vmul.f32 %v4373, 1.442695
        %v4591 = vpow.pop %v4590
        %v4592 = vmul.f32 %v4374, 1.442695
        %v4593 = vpow.pop %v4592
        %v4594 = vmul.f32 %v4375, 1.442695
        %v4595 = vpow.pop %v4594
        %v4596 = vmul.f32 %v4376, 1.442695
        %v4597 = vpow.pop %v4596
        %v4598 = vmul.f32 %v4377, 1.442695
        %v4599 = vpow.pop %v4598
        %v4600 = vmul.f32 %v4378, 1.442695
        %v4601 = vpow.pop %v4600
        %v4602 = vmul.f32 %v4379, 1.442695
        %v4603 = vpow.pop %v4602
        %v4604 = vmul.f32 %v4380, 1.442695
        %v4605 = vpow.pop %v4604
        %v4606 = vmul.f32 %v4381, 1.442695
        %v4607 = vpow.pop %v4606
        %v4608 = vmul.f32 %v4382, 1.442695
        %v4609 = vpow.pop %v4608
        %v4610 = vmul.f32 %v4383, 1.442695
        %v4611 = vpow.pop %v4610
        %v4612 = vmul.f32 %v4384, 1.442695
        %v4613 = vpow.pop %v4612
        %v4614 = vmul.f32 %v4385, 1.442695
        %v4615 = vpow.pop %v4614
        %v4616 = vmul.f32 %v4386, 1.442695
        %v4617 = vpow.pop %v4616
        %v4618 = vmul.f32 %v4387, 1.442695
        %v4619 = vpow.pop %v4618
        %v4620 = vmul.f32 %v4388, 1.442695
        %v4621 = vpow.pop %v4620
        %v4622 = vmul.f32 %v4389, 1.442695
        %v4623 = vpow.pop %v4622
        %v4624 = vmul.f32 %v4390, 1.442695
        %v4625 = vpow.pop %v4624
        %v4626 = vmul.f32 %v4391, 1.442695
        %v4627 = vpow.pop %v4626
        %v4628 = vmul.f32 %v4392, 1.442695
        %v4629 = vpow.pop %v4628
        %v4630 = vmul.f32 %v4393, 1.442695
        %v4631 = vpow.pop %v4630
        %v4632 = vmul.f32 %v4394, 1.442695
        %v4633 = vpow.pop %v4632
        %v4634 = vmul.f32 %v4395, 1.442695
        %v4635 = vpow.pop %v4634
        %v4636 = vmul.f32 %v4396, 1.442695
        %v4637 = vpow.pop %v4636
        %v4638 = vmul.f32 %v4397, 1.442695
        %v4639 = vpow.pop %v4638
        %v4640 = vmul.f32 %v4398, 1.442695
        %v4641 = vpow.pop %v4640
        %v4642 = vmul.f32 %v4399, 1.442695
        %v4643 = vpow.pop %v4642
        %v4644 = vmul.f32 %v4400, 1.442695
        %v4645 = vpow.pop %v4644
        %v4646 = vmul.f32 %v4401, 1.442695
        %v4647 = vpow.pop %v4646
        %v4648 = vmul.f32 %v4402, 1.442695
        %v4649 = vpow.pop %v4648
        %v4650 = vmul.f32 %v4403, 1.442695
        %v4651 = vpow.pop %v4650
        %v4652 = vmul.f32 %v4404, 1.442695
        %v4653 = vpow.pop %v4652
        %v4654 = vmul.f32 %v4405, 1.442695
        %v4655 = vpow.pop %v4654
        %v4656 = vmul.f32 %v4406, 1.442695
        %v4657 = vpow.pop %v4656
        %v4658 = vmul.f32 %v4407, 1.442695
        %v4659 = vpow.pop %v4658
        %v4660 = vmul.f32 %v4408, 1.442695
        %v4661 = vpow.pop %v4660
        %v4662 = vmul.f32 %v4409, 1.442695
        %v4663 = vpow.pop %v4662
        %v4664 = vmul.f32 %v4410, 1.442695
        %v4665 = vpow.pop %v4664
        %v4666 = vmul.f32 %v4411, 1.442695
        %v4667 = vpow.pop %v4666
        %v4668 = vmul.f32 %v4412, 1.442695
        %v4669 = vpow.pop %v4668
        %v4670 = vmul.f32 %v4413, 1.442695
        %v4671 = vpow.pop %v4670
        %v4672 = vmul.f32 %v4414, 1.442695
        %v4673 = vpow.pop %v4672
        %v4674 = vmul.f32 %v4415, 1.442695
        %v4675 = vpow.pop %v4674
        %v4676 = vmul.f32 %v4416, 1.442695
        %v4677 = vpow.pop %v4676
        %v4678 = vmul.f32 %v4417, 1.442695
        %v4679 = vpow.pop %v4678
        %v4680 = vmul.f32 %v4418, 1.442695
        %v4681 = vpow.pop %v4680
        %v4682 = vmul.f32 %v4419, 1.442695
        %v4683 = vpow.pop %v4682
        %v4684 = vmul.f32 %v4420, 1.442695
        %v4685 = vpow.pop %v4684
        %v4686 = vmul.f32 %v4421, 1.442695
        %v4687 = vpow.pop %v4686
        %v4688 = vmul.f32 %v4422, 1.442695
        %v4689 = vpow.pop %v4688
        %v4690 = vmul.f32 %v4423, 1.442695
        %v4691 = vpow.pop %v4690
        %v4692 = vmul.f32 %v4424, 1.442695
        %v4693 = vpow.pop %v4692
        %v4694 = vmul.f32 %v4425, 1.442695
        %v4695 = vpow.pop %v4694
        %v4696 = vmul.f32 %v4426, 1.442695
        %v4697 = vpow.pop %v4696
        %v4698 = vmul.f32 %v4427, 1.442695
        %v4699 = vpow.pop %v4698
        %v4700 = vmul.f32 %v4428, 1.442695
        %v4701 = vpow.pop %v4700
        %v4702 = vmul.f32 %v4429, 1.442695
        %v4703 = vpow.pop %v4702
        %v4704 = vmul.f32 %v4430, 1.442695
        %v4705 = vpow.pop %v4704
        %v4706 = vmul.f32 %v4431, 1.442695
        %v4707 = vpow.pop %v4706
        %v4708 = vmul.f32 %v4432, 1.442695
        %v4709 = vpow.pop %v4708
        %v4710 = vmul.f32 %v4433, 1.442695
        %v4711 = vpow.pop %v4710
        %v4712 = vmul.f32 %v4434, 1.442695
        %v4713 = vpow.pop %v4712
        %v4714 = vmul.f32 %v4435, 1.442695
        %v4715 = vpow.pop %v4714
        %v4716 = vmul.f32 %v4436, 1.442695
        %v4717 = vpow.pop %v4716
        %v4718 = vmul.f32 %v4437, 1.442695
        %v4719 = vpow.pop %v4718
        %v4720 = vmul.f32 %v4438, 1.442695
        %v4721 = vpow.pop %v4720
        %v4722 = vmul.f32 %v4439, 1.442695
        %v4723 = vpow.pop %v4722
        %v4724 = vmul.f32 %v4440, 1.442695
        %v4725 = vpow.pop %v4724
        %v4726 = vmul.f32 %v4441, 1.442695
        %v4727 = vpow.pop %v4726
        %v4728 = vmul.f32 %v4442, 1.442695
        %v4729 = vpow.pop %v4728
        %v4730 = vmul.f32 %v4443, 1.442695
        %v4731 = vpow.pop %v4730
        %v4732 = vmul.f32 %v4444, 1.442695
        %v4733 = vpow.pop %v4732
        %v4734 = vmul.f32 %v4445, 1.442695
        %v4735 = vpow.pop %v4734
        %v4736 = vmul.f32 %v4446, 1.442695
        %v4737 = vpow.pop %v4736
        %v4738 = vmul.f32 %v4447, 1.442695
        %v4739 = vpow.pop %v4738
        %v4740 = vmul.f32 %v4448, 1.442695
        %v4741 = vpow.pop %v4740
        %v4742 = vmul.f32 %v4449, 1.442695
        %v4743 = vpow.pop %v4742
        %v4744 = vmul.f32 %v4450, 1.442695
        %v4745 = vpow.pop %v4744
        %v4746 = vmul.f32 %v4451, 1.442695
        %v4747 = vpow.pop %v4746
        %v4748 = vmul.f32 %v4452, 1.442695
        %v4749 = vpow.pop %v4748
        %v4750 = vmul.f32 %v4453, 1.442695
        %v4751 = vpow.pop %v4750
        %v4752 = vmul.f32 %v4454, 1.442695
        %v4753 = vpow.pop %v4752
        %v4754 = vmul.f32 %v4455, 1.442695
        %v4755 = vpow.pop %v4754
        %v4756 = vmul.f32 %v4456, 1.442695
        %v4757 = vpow.pop %v4756
        %v4758 = vmul.f32 %v4457, 1.442695
        %v4759 = vpow.pop %v4758
        %v4760 = vmul.f32 %v4458, 1.442695
        %v4761 = vpow.pop %v4760
        %v4762 = vmul.f32 %v4459, 1.442695
        %v4763 = vpow.pop %v4762
        %v4764 = vmul.f32 %v4460, 1.442695
        %v4765 = vpow.pop %v4764
        %v4766 = vmul.f32 %v4461, 1.442695
        %v4767 = vpow.pop %v4766
        %v4768 = vmul.f32 %v4462, 1.442695
        %v4769 = vpow.pop %v4768
        %v4770 = vmul.f32 %v4463, 1.442695
        %v4771 = vpow.pop %v4770
        %v4772 = vmul.f32 %v4464, 1.442695
        %v4773 = vpow.pop %v4772
        %v4774 = vmul.f32 %v4465, 1.442695
        %v4775 = vpow.pop %v4774
        %v4776 = vmul.f32 %v4466, 1.442695
        %v4777 = vpow.pop %v4776
        %v4778 = vmul.f32 %v4467, 1.442695
        %v4779 = vpow.pop %v4778
        %v4780 = vmul.f32 %v4468, 1.442695
        %v4781 = vpow.pop %v4780
        %v4782 = vmul.f32 %v4469, 1.442695
        %v4783 = vpow.pop %v4782
        %v4784 = vmul.f32 %v4470, 1.442695
        %v4785 = vpow.pop %v4784
        %v4786 = vmul.f32 %v4471, 1.442695
        %v4787 = vpow.pop %v4786
        %v4788 = vmul.f32 %v4472, 1.442695
        %v4789 = vpow.pop %v4788
        %v4790 = vmul.f32 %v4473, 1.442695
        %v4791 = vpow.pop %v4790
        %v4792 = vmul.f32 %v4474, 1.442695
        %v4793 = vpow.pop %v4792
        %v4794 = vmul.f32 %v4475, 1.442695
        %v4795 = vpow.pop %v4794
        %v4796 = vmul.f32 %v4476, 1.442695
        %v4797 = vpow.pop %v4796
        %v4798 = vmul.f32 %v4477, 1.442695
        %v4799 = vpow.pop %v4798
        %v4800 = vmul.f32 %v4478, 1.442695
        %v4801 = vpow.pop %v4800
        %v4802 = vmul.f32 %v4479, 1.442695
        %v4803 = vpow.pop %v4802
        %v4804 = vmul.f32 %v4480, 1.442695
        %v4805 = vpow.pop %v4804
        %v4806 = vmul.f32 %v4481, 1.442695
        %v4807 = vpow.pop %v4806
        %v4808 = vmul.f32 %v4482, 1.442695
        %v4809 = vpow.pop %v4808
        %v4810 = vmul.f32 %v4483, 1.442695
        %v4811 = vpow.pop %v4810
        %v4812 = vmul.f32 %v4484, 1.442695
        %v4813 = vpow.pop %v4812
        %v4814 = vmul.f32 %v4485, 1.442695
        %v4815 = vpow.pop %v4814
        %v4816 = vmul.f32 %v4486, 1.442695
        %v4817 = vpow.pop %v4816
        %v4818 = vmul.f32 %v4487, 1.442695
        %v4819 = vpow.pop %v4818
        %v4820 = vmul.f32 %v4488, 1.442695
        %v4821 = vpow.pop %v4820
        %v4822 = vmul.f32 %v4489, 1.442695
        %v4823 = vpow.pop %v4822
        %v4824 = vmul.f32 %v4490, 1.442695
        %v4825 = vpow.pop %v4824
        %v4826 = vmul.f32 %v4491, 1.442695
        %v4827 = vpow.pop %v4826
        %v4828 = vmul.f32 %v4492, 1.442695
        %v4829 = vpow.pop %v4828
        %v4830 = vmul.f32 %v4493, 1.442695
        %v4831 = vpow.pop %v4830
        %v4832 = vmul.f32 %v4494, 1.442695
        %v4833 = vpow.pop %v4832
        %v4834 = vmul.f32 %v4495, 1.442695
        %v4835 = vpow.pop %v4834
        %v4836 = vmul.f32 %v4496, 1.442695
        %v4837 = vpow.pop %v4836
        %v4838 = vmul.f32 %v4497, 1.442695
        %v4839 = vpow.pop %v4838
        %v4840 = vmul.f32 %v4498, 1.442695
        %v4841 = vpow.pop %v4840
        %v4842 = vmul.f32 %v4499, 1.442695
        %v4843 = vpow.pop %v4842
        %v4844 = vmul.f32 %v4500, 1.442695
        %v4845 = vpow.pop %v4844
        %v4846 = vmul.f32 %v4501, 1.442695
        %v4847 = vpow.pop %v4846
        %v4848 = vmul.f32 %v4502, 1.442695
        %v4849 = vpow.pop %v4848
        %v4850 = vmul.f32 %v4503, 1.442695
        %v4851 = vpow.pop %v4850
        %v4852 = vmul.f32 %v4504, 1.442695
        %v4853 = vpow.pop %v4852
        %v4854 = vmul.f32 %v4505, 1.442695
        %v4855 = vpow.pop %v4854
        %v4856 = vmul.f32 %v4506, 1.442695
        %v4857 = vpow.pop %v4856
        %v4858 = vmul.f32 %v4507, 1.442695
        %v4859 = vpow.pop %v4858
        %v4860 = vmul.f32 %v4508, 1.442695
        %v4861 = vpow.pop %v4860
        %v4862 = vmul.f32 %v4509, 1.442695
        %v4863 = vpow.pop %v4862
        %v4864 = vmul.f32 %v4510, 1.442695
        %v4865 = vpow.pop %v4864
        %v4866 = vmul.f32 %v4511, 1.442695
        %v4867 = vpow.pop %v4866
        %v4868 = vmul.f32 %v4512, 1.442695
        %v4869 = vpow.pop %v4868
        %v4870 = vmul.f32 %v4513, 1.442695
        %v4871 = vpow.pop %v4870
        %v4872 = vmul.f32 %v4514, 1.442695
        %v4873 = vpow.pop %v4872
        %v4874 = vmul.f32 %v4515, 1.442695
        %v4875 = vpow.pop %v4874
        %v4876 = vmul.f32 %v4516, 1.442695
        %v4877 = vpow.pop %v4876
        %v4878 = vmul.f32 %v4517, 1.442695
        %v4879 = vpow.pop %v4878
        %v4880 = vmul.f32 %v4518, 1.442695
        %v4881 = vpow.pop %v4880
        %v4882 = vmul.f32 %v4519, 1.442695
        %v4883 = vpow.pop %v4882
        %v4884 = vmul.f32 %v4520, 1.442695
        %v4885 = vpow.pop %v4884
        %v4886 = vmul.f32 %v4521, 1.442695
        %v4887 = vpow.pop %v4886
        %v4888 = vmul.f32 %v4522, 1.442695
        %v4889 = vpow.pop %v4888
        %v4890 = vmul.f32 %v4523, 1.442695
        %v4891 = vpow.pop %v4890
        %v4892 = vmul.f32 %v4524, 1.442695
        %v4893 = vpow.pop %v4892
        %v4894 = vmul.f32 %v4525, 1.442695
        %v4895 = vpow.pop %v4894
        %v4896 = vmul.f32 %v4526, 1.442695
        %v4897 = vpow.pop %v4896
        %v4898 = vmul.f32 %v4527, 1.442695
        %v4899 = vpow.pop %v4898
        %v4900 = vmul.f32 %v4528, 1.442695
        %v4901 = vpow.pop %v4900
        %v4902 = vmul.f32 %v4529, 1.442695
        %v4903 = vpow.pop %v4902
        %v4904 = vmul.f32 %v4530, 1.442695
        %v4905 = vpow.pop %v4904
        %v4906 = vmul.f32 %v4531, 1.442695
        %v4907 = vpow.pop %v4906
        %v4908 = vmul.f32 %v4532, 1.442695
        %v4909 = vpow.pop %v4908
        %v4910 = vmul.f32 %v4533, 1.442695
        %v4911 = vpow.pop %v4910
        %v4912 = vmul.f32 %v4534, 1.442695
        %v4913 = vpow.pop %v4912
        %v4914 = vmul.f32 %v4535, 1.442695
        %v4915 = vpow.pop %v4914
        %v4916 = vmul.f32 %v4536, 1.442695
        %v4917 = vpow.pop %v4916
        %v4918 = vmul.f32 %v4537, 1.442695
        %v4919 = vpow.pop %v4918
        %v4920 = vmul.f32 %v4538, 1.442695
        %v4921 = vpow.pop %v4920
        %v4922 = vmul.f32 %v4539, 1.442695
        %v4923 = vpow.pop %v4922
        %v4924 = vmul.f32 %v4540, 1.442695
        %v4925 = vpow.pop %v4924
        %v4926 = vmul.f32 %v4541, 1.442695
        %v4927 = vpow.pop %v4926
        %v4928 = vmul.f32 %v4542, 1.442695
        %v4929 = vpow.pop %v4928
        %v4930 = vmul.f32 %v4543, 1.442695
        %v4931 = vpow.pop %v4930
        %v4932 = vmul.f32 %v4544, 1.442695
        %v4933 = vpow.pop %v4932
        %v4934 = vmul.f32 %v4545, 1.442695
        %v4935 = vpow.pop %v4934
        %v4936 = vmul.f32 %v4546, 1.442695
        %v4937 = vpow.pop %v4936
        %v4938 = vmul.f32 %v4547, 1.442695
        %v4939 = vpow.pop %v4938
        %v4940 = vmul.f32 %v4548, 1.442695
        %v4941 = vpow.pop %v4940
        %v4942 = vmul.f32 %v4549, 1.442695
        %v4943 = vpow.pop %v4942
        %v4944 = vmul.f32 %v4550, 1.442695
        %v4945 = vpow.pop %v4944
        %v4946 = vmul.f32 %v4551, 1.442695
        %v4947 = vpow.pop %v4946
        %v4948 = vmul.f32 %v4552, 1.442695
        %v4949 = vpow.pop %v4948
        %v4950 = vmul.f32 %v4553, 1.442695
        %v4951 = vpow.pop %v4950
        %v4952 = vmul.f32 %v4554, 1.442695
        %v4953 = vpow.pop %v4952
        %v4954 = vmul.f32 %v4555, 1.442695
        %v4955 = vpow.pop %v4954
        %v4956 = vadd.f32 %v4557, 1.0
        %v4957 = vadd.f32 %v4559, 1.0
        %v4958 = vadd.f32 %v4561, 1.0
        %v4959 = vadd.f32 %v4563, 1.0
        %v4960 = vadd.f32 %v4565, 1.0
        %v4961 = vadd.f32 %v4567, 1.0
        %v4962 = vadd.f32 %v4569, 1.0
        %v4963 = vadd.f32 %v4571, 1.0
        %v4964 = vadd.f32 %v4573, 1.0
        %v4965 = vadd.f32 %v4575, 1.0
        %v4966 = vadd.f32 %v4577, 1.0
        %v4967 = vadd.f32 %v4579, 1.0
        %v4968 = vadd.f32 %v4581, 1.0
        %v4969 = vadd.f32 %v4583, 1.0
        %v4970 = vadd.f32 %v4585, 1.0
        %v4971 = vadd.f32 %v4587, 1.0
        %v4972 = vadd.f32 %v4589, 1.0
        %v4973 = vadd.f32 %v4591, 1.0
        %v4974 = vadd.f32 %v4593, 1.0
        %v4975 = vadd.f32 %v4595, 1.0
        %v4976 = vadd.f32 %v4597, 1.0
        %v4977 = vadd.f32 %v4599, 1.0
        %v4978 = vadd.f32 %v4601, 1.0
        %v4979 = vadd.f32 %v4603, 1.0
        %v4980 = vadd.f32 %v4605, 1.0
        %v4981 = vadd.f32 %v4607, 1.0
        %v4982 = vadd.f32 %v4609, 1.0
        %v4983 = vadd.f32 %v4611, 1.0
        %v4984 = vadd.f32 %v4613, 1.0
        %v4985 = vadd.f32 %v4615, 1.0
        %v4986 = vadd.f32 %v4617, 1.0
        %v4987 = vadd.f32 %v4619, 1.0
        %v4988 = vadd.f32 %v4621, 1.0
        %v4989 = vadd.f32 %v4623, 1.0
        %v4990 = vadd.f32 %v4625, 1.0
        %v4991 = vadd.f32 %v4627, 1.0
        %v4992 = vadd.f32 %v4629, 1.0
        %v4993 = vadd.f32 %v4631, 1.0
        %v4994 = vadd.f32 %v4633, 1.0
        %v4995 = vadd.f32 %v4635, 1.0
        %v4996 = vadd.f32 %v4637, 1.0
        %v4997 = vadd.f32 %v4639, 1.0
        %v4998 = vadd.f32 %v4641, 1.0
        %v4999 = vadd.f32 %v4643, 1.0
        %v5000 = vadd.f32 %v4645, 1.0
        %v5001 = vadd.f32 %v4647, 1.0
        %v5002 = vadd.f32 %v4649, 1.0
        %v5003 = vadd.f32 %v4651, 1.0
        %v5004 = vadd.f32 %v4653, 1.0
        %v5005 = vadd.f32 %v4655, 1.0
        %v5006 = vadd.f32 %v4657, 1.0
        %v5007 = vadd.f32 %v4659, 1.0
        %v5008 = vadd.f32 %v4661, 1.0
        %v5009 = vadd.f32 %v4663, 1.0
        %v5010 = vadd.f32 %v4665, 1.0
        %v5011 = vadd.f32 %v4667, 1.0
        %v5012 = vadd.f32 %v4669, 1.0
        %v5013 = vadd.f32 %v4671, 1.0
        %v5014 = vadd.f32 %v4673, 1.0
        %v5015 = vadd.f32 %v4675, 1.0
        %v5016 = vadd.f32 %v4677, 1.0
        %v5017 = vadd.f32 %v4679, 1.0
        %v5018 = vadd.f32 %v4681, 1.0
        %v5019 = vadd.f32 %v4683, 1.0
        %v5020 = vadd.f32 %v4685, 1.0
        %v5021 = vadd.f32 %v4687, 1.0
        %v5022 = vadd.f32 %v4689, 1.0
        %v5023 = vadd.f32 %v4691, 1.0
        %v5024 = vadd.f32 %v4693, 1.0
        %v5025 = vadd.f32 %v4695, 1.0
        %v5026 = vadd.f32 %v4697, 1.0
        %v5027 = vadd.f32 %v4699, 1.0
        %v5028 = vadd.f32 %v4701, 1.0
        %v5029 = vadd.f32 %v4703, 1.0
        %v5030 = vadd.f32 %v4705, 1.0
        %v5031 = vadd.f32 %v4707, 1.0
        %v5032 = vadd.f32 %v4709, 1.0
        %v5033 = vadd.f32 %v4711, 1.0
        %v5034 = vadd.f32 %v4713, 1.0
        %v5035 = vadd.f32 %v4715, 1.0
        %v5036 = vadd.f32 %v4717, 1.0
        %v5037 = vadd.f32 %v4719, 1.0
        %v5038 = vadd.f32 %v4721, 1.0
        %v5039 = vadd.f32 %v4723, 1.0
        %v5040 = vadd.f32 %v4725, 1.0
        %v5041 = vadd.f32 %v4727, 1.0
        %v5042 = vadd.f32 %v4729, 1.0
        %v5043 = vadd.f32 %v4731, 1.0
        %v5044 = vadd.f32 %v4733, 1.0
        %v5045 = vadd.f32 %v4735, 1.0
        %v5046 = vadd.f32 %v4737, 1.0
        %v5047 = vadd.f32 %v4739, 1.0
        %v5048 = vadd.f32 %v4741, 1.0
        %v5049 = vadd.f32 %v4743, 1.0
        %v5050 = vadd.f32 %v4745, 1.0
        %v5051 = vadd.f32 %v4747, 1.0
        %v5052 = vadd.f32 %v4749, 1.0
        %v5053 = vadd.f32 %v4751, 1.0
        %v5054 = vadd.f32 %v4753, 1.0
        %v5055 = vadd.f32 %v4755, 1.0
        %v5056 = vadd.f32 %v4757, 1.0
        %v5057 = vadd.f32 %v4759, 1.0
        %v5058 = vadd.f32 %v4761, 1.0
        %v5059 = vadd.f32 %v4763, 1.0
        %v5060 = vadd.f32 %v4765, 1.0
        %v5061 = vadd.f32 %v4767, 1.0
        %v5062 = vadd.f32 %v4769, 1.0
        %v5063 = vadd.f32 %v4771, 1.0
        %v5064 = vadd.f32 %v4773, 1.0
        %v5065 = vadd.f32 %v4775, 1.0
        %v5066 = vadd.f32 %v4777, 1.0
        %v5067 = vadd.f32 %v4779, 1.0
        %v5068 = vadd.f32 %v4781, 1.0
        %v5069 = vadd.f32 %v4783, 1.0
        %v5070 = vadd.f32 %v4785, 1.0
        %v5071 = vadd.f32 %v4787, 1.0
        %v5072 = vadd.f32 %v4789, 1.0
        %v5073 = vadd.f32 %v4791, 1.0
        %v5074 = vadd.f32 %v4793, 1.0
        %v5075 = vadd.f32 %v4795, 1.0
        %v5076 = vadd.f32 %v4797, 1.0
        %v5077 = vadd.f32 %v4799, 1.0
        %v5078 = vadd.f32 %v4801, 1.0
        %v5079 = vadd.f32 %v4803, 1.0
        %v5080 = vadd.f32 %v4805, 1.0
        %v5081 = vadd.f32 %v4807, 1.0
        %v5082 = vadd.f32 %v4809, 1.0
        %v5083 = vadd.f32 %v4811, 1.0
        %v5084 = vadd.f32 %v4813, 1.0
        %v5085 = vadd.f32 %v4815, 1.0
        %v5086 = vadd.f32 %v4817, 1.0
        %v5087 = vadd.f32 %v4819, 1.0
        %v5088 = vadd.f32 %v4821, 1.0
        %v5089 = vadd.f32 %v4823, 1.0
        %v5090 = vadd.f32 %v4825, 1.0
        %v5091 = vadd.f32 %v4827, 1.0
        %v5092 = vadd.f32 %v4829, 1.0
        %v5093 = vadd.f32 %v4831, 1.0
        %v5094 = vadd.f32 %v4833, 1.0
        %v5095 = vadd.f32 %v4835, 1.0
        %v5096 = vadd.f32 %v4837, 1.0
        %v5097 = vadd.f32 %v4839, 1.0
        %v5098 = vadd.f32 %v4841, 1.0
        %v5099 = vadd.f32 %v4843, 1.0
        %v5100 = vadd.f32 %v4845, 1.0
        %v5101 = vadd.f32 %v4847, 1.0
        %v5102 = vadd.f32 %v4849, 1.0
        %v5103 = vadd.f32 %v4851, 1.0
        %v5104 = vadd.f32 %v4853, 1.0
        %v5105 = vadd.f32 %v4855, 1.0
        %v5106 = vadd.f32 %v4857, 1.0
        %v5107 = vadd.f32 %v4859, 1.0
        %v5108 = vadd.f32 %v4861, 1.0
        %v5109 = vadd.f32 %v4863, 1.0
        %v5110 = vadd.f32 %v4865, 1.0
        %v5111 = vadd.f32 %v4867, 1.0
        %v5112 = vadd.f32 %v4869, 1.0
        %v5113 = vadd.f32 %v4871, 1.0
        %v5114 = vadd.f32 %v4873, 1.0
        %v5115 = vadd.f32 %v4875, 1.0
        %v5116 = vadd.f32 %v4877, 1.0
        %v5117 = vadd.f32 %v4879, 1.0
        %v5118 = vadd.f32 %v4881, 1.0
        %v5119 = vadd.f32 %v4883, 1.0
        %v5120 = vadd.f32 %v4885, 1.0
        %v5121 = vadd.f32 %v4887, 1.0
        %v5122 = vadd.f32 %v4889, 1.0
        %v5123 = vadd.f32 %v4891, 1.0
        %v5124 = vadd.f32 %v4893, 1.0
        %v5125 = vadd.f32 %v4895, 1.0
        %v5126 = vadd.f32 %v4897, 1.0
        %v5127 = vadd.f32 %v4899, 1.0
        %v5128 = vadd.f32 %v4901, 1.0
        %v5129 = vadd.f32 %v4903, 1.0
        %v5130 = vadd.f32 %v4905, 1.0
        %v5131 = vadd.f32 %v4907, 1.0
        %v5132 = vadd.f32 %v4909, 1.0
        %v5133 = vadd.f32 %v4911, 1.0
        %v5134 = vadd.f32 %v4913, 1.0
        %v5135 = vadd.f32 %v4915, 1.0
        %v5136 = vadd.f32 %v4917, 1.0
        %v5137 = vadd.f32 %v4919, 1.0
        %v5138 = vadd.f32 %v4921, 1.0
        %v5139 = vadd.f32 %v4923, 1.0
        %v5140 = vadd.f32 %v4925, 1.0
        %v5141 = vadd.f32 %v4927, 1.0
        %v5142 = vadd.f32 %v4929, 1.0
        %v5143 = vadd.f32 %v4931, 1.0
        %v5144 = vadd.f32 %v4933, 1.0
        %v5145 = vadd.f32 %v4935, 1.0
        %v5146 = vadd.f32 %v4937, 1.0
        %v5147 = vadd.f32 %v4939, 1.0
        %v5148 = vadd.f32 %v4941, 1.0
        %v5149 = vadd.f32 %v4943, 1.0
        %v5150 = vadd.f32 %v4945, 1.0
        %v5151 = vadd.f32 %v4947, 1.0
        %v5152 = vadd.f32 %v4949, 1.0
        %v5153 = vadd.f32 %v4951, 1.0
        %v5154 = vadd.f32 %v4953, 1.0
        %v5155 = vadd.f32 %v4955, 1.0
        %v5156 = vrcp.pop %v4956
        %v5157 = vmul.f32 %v4956, %v5156
        %v5158 = vsub.f32 1.0, %v5157
        %v5159 = vmul.f32 %v5156, %v5158
        %v5160 = vadd.f32 %v5156, %v5159
        %vm5161 = vweird.f32 %v4956
        %vm5162 = vweird.f32 %v5156
        %vm5163 = vmor %vm5161, %vm5162
        %v5164 = vsel %vm5163, %v5156, %v5160
        %v5165 = vand.u32 2147483647, %v4956
        %vm5166 = vcmp.eq.f32.partialorder %v5165, 8.507059e+37
        %v5167 = vand.u32 %v4956, 2147483648
        %v5168 = vor.u32 1.1754944e-38, %v5167
        %v5169 = vsel %vm5166, %v5168, %v5164
        %v5170 = vmul.f32 1.0, %v5169
        %v5171 = vrcp.pop %v4957
        %v5172 = vmul.f32 %v4957, %v5171
        %v5173 = vsub.f32 1.0, %v5172
        %v5174 = vmul.f32 %v5171, %v5173
        %v5175 = vadd.f32 %v5171, %v5174
        %vm5176 = vweird.f32 %v4957
        %vm5177 = vweird.f32 %v5171
        %vm5178 = vmor %vm5176, %vm5177
        %v5179 = vsel %vm5178, %v5171, %v5175
        %v5180 = vand.u32 2147483647, %v4957
        %vm5181 = vcmp.eq.f32.partialorder %v5180, 8.507059e+37
        %v5182 = vand.u32 %v4957, 2147483648
        %v5183 = vor.u32 1.1754944e-38, %v5182
        %v5184 = vsel %vm5181, %v5183, %v5179
        %v5185 = vmul.f32 1.0, %v5184
        %v5186 = vrcp.pop %v4958
        %v5187 = vmul.f32 %v4958, %v5186
        %v5188 = vsub.f32 1.0, %v5187
        %v5189 = vmul.f32 %v5186, %v5188
        %v5190 = vadd.f32 %v5186, %v5189
        %vm5191 = vweird.f32 %v4958
        %vm5192 = vweird.f32 %v5186
        %vm5193 = vmor %vm5191, %vm5192
        %v5194 = vsel %vm5193, %v5186, %v5190
        %v5195 = vand.u32 2147483647, %v4958
        %vm5196 = vcmp.eq.f32.partialorder %v5195, 8.507059e+37
        %v5197 = vand.u32 %v4958, 2147483648
        %v5198 = vor.u32 1.1754944e-38, %v5197
        %v5199 = vsel %vm5196, %v5198, %v5194
        %v5200 = vmul.f32 1.0, %v5199
        %v5201 = vrcp.pop %v4959
        %v5202 = vmul.f32 %v4959, %v5201
        %v5203 = vsub.f32 1.0, %v5202
        %v5204 = vmul.f32 %v5201, %v5203
        %v5205 = vadd.f32 %v5201, %v5204
        %vm5206 = vweird.f32 %v4959
        %vm5207 = vweird.f32 %v5201
        %vm5208 = vmor %vm5206, %vm5207
        %v5209 = vsel %vm5208, %v5201, %v5205
        %v5210 = vand.u32 2147483647, %v4959
        %vm5211 = vcmp.eq.f32.partialorder %v5210, 8.507059e+37
        %v5212 = vand.u32 %v4959, 2147483648
        %v5213 = vor.u32 1.1754944e-38, %v5212
        %v5214 = vsel %vm5211, %v5213, %v5209
        %v5215 = vmul.f32 1.0, %v5214
        %v5216 = vrcp.pop %v4960
        %v5217 = vmul.f32 %v4960, %v5216
        %v5218 = vsub.f32 1.0, %v5217
        %v5219 = vmul.f32 %v5216, %v5218
        %v5220 = vadd.f32 %v5216, %v5219
        %vm5221 = vweird.f32 %v4960
        %vm5222 = vweird.f32 %v5216
        %vm5223 = vmor %vm5221, %vm5222
        %v5224 = vsel %vm5223, %v5216, %v5220
        %v5225 = vand.u32 2147483647, %v4960
        %vm5226 = vcmp.eq.f32.partialorder %v5225, 8.507059e+37
        %v5227 = vand.u32 %v4960, 2147483648
        %v5228 = vor.u32 1.1754944e-38, %v5227
        %v5229 = vsel %vm5226, %v5228, %v5224
        %v5230 = vmul.f32 1.0, %v5229
        %v5231 = vrcp.pop %v4961
        %v5232 = vmul.f32 %v4961, %v5231
        %v5233 = vsub.f32 1.0, %v5232
        %v5234 = vmul.f32 %v5231, %v5233
        %v5235 = vadd.f32 %v5231, %v5234
        %vm5236 = vweird.f32 %v4961
        %vm5237 = vweird.f32 %v5231
        %vm5238 = vmor %vm5236, %vm5237
        %v5239 = vsel %vm5238, %v5231, %v5235
        %v5240 = vand.u32 2147483647, %v4961
        %vm5241 = vcmp.eq.f32.partialorder %v5240, 8.507059e+37
        %v5242 = vand.u32 %v4961, 2147483648
        %v5243 = vor.u32 1.1754944e-38, %v5242
        %v5244 = vsel %vm5241, %v5243, %v5239
        %v5245 = vmul.f32 1.0, %v5244
        %v5246 = vrcp.pop %v4962
        %v5247 = vmul.f32 %v4962, %v5246
        %v5248 = vsub.f32 1.0, %v5247
        %v5249 = vmul.f32 %v5246, %v5248
        %v5250 = vadd.f32 %v5246, %v5249
        %vm5251 = vweird.f32 %v4962
        %vm5252 = vweird.f32 %v5246
        %vm5253 = vmor %vm5251, %vm5252
        %v5254 = vsel %vm5253, %v5246, %v5250
        %v5255 = vand.u32 2147483647, %v4962
        %vm5256 = vcmp.eq.f32.partialorder %v5255, 8.507059e+37
        %v5257 = vand.u32 %v4962, 2147483648
        %v5258 = vor.u32 1.1754944e-38, %v5257
        %v5259 = vsel %vm5256, %v5258, %v5254
        %v5260 = vmul.f32 1.0, %v5259
        %v5261 = vrcp.pop %v4963
        %v5262 = vmul.f32 %v4963, %v5261
        %v5263 = vsub.f32 1.0, %v5262
        %v5264 = vmul.f32 %v5261, %v5263
        %v5265 = vadd.f32 %v5261, %v5264
        %vm5266 = vweird.f32 %v4963
        %vm5267 = vweird.f32 %v5261
        %vm5268 = vmor %vm5266, %vm5267
        %v5269 = vsel %vm5268, %v5261, %v5265
        %v5270 = vand.u32 2147483647, %v4963
        %vm5271 = vcmp.eq.f32.partialorder %v5270, 8.507059e+37
        %v5272 = vand.u32 %v4963, 2147483648
        %v5273 = vor.u32 1.1754944e-38, %v5272
        %v5274 = vsel %vm5271, %v5273, %v5269
        %v5275 = vmul.f32 1.0, %v5274
        %v5276 = vrcp.pop %v4964
        %v5277 = vmul.f32 %v4964, %v5276
        %v5278 = vsub.f32 1.0, %v5277
        %v5279 = vmul.f32 %v5276, %v5278
        %v5280 = vadd.f32 %v5276, %v5279
        %vm5281 = vweird.f32 %v4964
        %vm5282 = vweird.f32 %v5276
        %vm5283 = vmor %vm5281, %vm5282
        %v5284 = vsel %vm5283, %v5276, %v5280
        %v5285 = vand.u32 2147483647, %v4964
        %vm5286 = vcmp.eq.f32.partialorder %v5285, 8.507059e+37
        %v5287 = vand.u32 %v4964, 2147483648
        %v5288 = vor.u32 1.1754944e-38, %v5287
        %v5289 = vsel %vm5286, %v5288, %v5284
        %v5290 = vmul.f32 1.0, %v5289
        %v5291 = vrcp.pop %v4965
        %v5292 = vmul.f32 %v4965, %v5291
        %v5293 = vsub.f32 1.0, %v5292
        %v5294 = vmul.f32 %v5291, %v5293
        %v5295 = vadd.f32 %v5291, %v5294
        %vm5296 = vweird.f32 %v4965
        %vm5297 = vweird.f32 %v5291
        %vm5298 = vmor %vm5296, %vm5297
        %v5299 = vsel %vm5298, %v5291, %v5295
        %v5300 = vand.u32 2147483647, %v4965
        %vm5301 = vcmp.eq.f32.partialorder %v5300, 8.507059e+37
        %v5302 = vand.u32 %v4965, 2147483648
        %v5303 = vor.u32 1.1754944e-38, %v5302
        %v5304 = vsel %vm5301, %v5303, %v5299
        %v5305 = vmul.f32 1.0, %v5304
        %v5306 = vrcp.pop %v4966
        %v5307 = vmul.f32 %v4966, %v5306
        %v5308 = vsub.f32 1.0, %v5307
        %v5309 = vmul.f32 %v5306, %v5308
        %v5310 = vadd.f32 %v5306, %v5309
        %vm5311 = vweird.f32 %v4966
        %vm5312 = vweird.f32 %v5306
        %vm5313 = vmor %vm5311, %vm5312
        %v5314 = vsel %vm5313, %v5306, %v5310
        %v5315 = vand.u32 2147483647, %v4966
        %vm5316 = vcmp.eq.f32.partialorder %v5315, 8.507059e+37
        %v5317 = vand.u32 %v4966, 2147483648
        %v5318 = vor.u32 1.1754944e-38, %v5317
        %v5319 = vsel %vm5316, %v5318, %v5314
        %v5320 = vmul.f32 1.0, %v5319
        %v5321 = vrcp.pop %v4967
        %v5322 = vmul.f32 %v4967, %v5321
        %v5323 = vsub.f32 1.0, %v5322
        %v5324 = vmul.f32 %v5321, %v5323
        %v5325 = vadd.f32 %v5321, %v5324
        %vm5326 = vweird.f32 %v4967
        %vm5327 = vweird.f32 %v5321
        %vm5328 = vmor %vm5326, %vm5327
        %v5329 = vsel %vm5328, %v5321, %v5325
        %v5330 = vand.u32 2147483647, %v4967
        %vm5331 = vcmp.eq.f32.partialorder %v5330, 8.507059e+37
        %v5332 = vand.u32 %v4967, 2147483648
        %v5333 = vor.u32 1.1754944e-38, %v5332
        %v5334 = vsel %vm5331, %v5333, %v5329
        %v5335 = vmul.f32 1.0, %v5334
        %v5336 = vrcp.pop %v4968
        %v5337 = vmul.f32 %v4968, %v5336
        %v5338 = vsub.f32 1.0, %v5337
        %v5339 = vmul.f32 %v5336, %v5338
        %v5340 = vadd.f32 %v5336, %v5339
        %vm5341 = vweird.f32 %v4968
        %vm5342 = vweird.f32 %v5336
        %vm5343 = vmor %vm5341, %vm5342
        %v5344 = vsel %vm5343, %v5336, %v5340
        %v5345 = vand.u32 2147483647, %v4968
        %vm5346 = vcmp.eq.f32.partialorder %v5345, 8.507059e+37
        %v5347 = vand.u32 %v4968, 2147483648
        %v5348 = vor.u32 1.1754944e-38, %v5347
        %v5349 = vsel %vm5346, %v5348, %v5344
        %v5350 = vmul.f32 1.0, %v5349
        %v5351 = vrcp.pop %v4969
        %v5352 = vmul.f32 %v4969, %v5351
        %v5353 = vsub.f32 1.0, %v5352
        %v5354 = vmul.f32 %v5351, %v5353
        %v5355 = vadd.f32 %v5351, %v5354
        %vm5356 = vweird.f32 %v4969
        %vm5357 = vweird.f32 %v5351
        %vm5358 = vmor %vm5356, %vm5357
        %v5359 = vsel %vm5358, %v5351, %v5355
        %v5360 = vand.u32 2147483647, %v4969
        %vm5361 = vcmp.eq.f32.partialorder %v5360, 8.507059e+37
        %v5362 = vand.u32 %v4969, 2147483648
        %v5363 = vor.u32 1.1754944e-38, %v5362
        %v5364 = vsel %vm5361, %v5363, %v5359
        %v5365 = vmul.f32 1.0, %v5364
        %v5366 = vrcp.pop %v4970
        %v5367 = vmul.f32 %v4970, %v5366
        %v5368 = vsub.f32 1.0, %v5367
        %v5369 = vmul.f32 %v5366, %v5368
        %v5370 = vadd.f32 %v5366, %v5369
        %vm5371 = vweird.f32 %v4970
        %vm5372 = vweird.f32 %v5366
        %vm5373 = vmor %vm5371, %vm5372
        %v5374 = vsel %vm5373, %v5366, %v5370
        %v5375 = vand.u32 2147483647, %v4970
        %vm5376 = vcmp.eq.f32.partialorder %v5375, 8.507059e+37
        %v5377 = vand.u32 %v4970, 2147483648
        %v5378 = vor.u32 1.1754944e-38, %v5377
        %v5379 = vsel %vm5376, %v5378, %v5374
        %v5380 = vmul.f32 1.0, %v5379
        %v5381 = vrcp.pop %v4971
        %v5382 = vmul.f32 %v4971, %v5381
        %v5383 = vsub.f32 1.0, %v5382
        %v5384 = vmul.f32 %v5381, %v5383
        %v5385 = vadd.f32 %v5381, %v5384
        %vm5386 = vweird.f32 %v4971
        %vm5387 = vweird.f32 %v5381
        %vm5388 = vmor %vm5386, %vm5387
        %v5389 = vsel %vm5388, %v5381, %v5385
        %v5390 = vand.u32 2147483647, %v4971
        %vm5391 = vcmp.eq.f32.partialorder %v5390, 8.507059e+37
        %v5392 = vand.u32 %v4971, 2147483648
        %v5393 = vor.u32 1.1754944e-38, %v5392
        %v5394 = vsel %vm5391, %v5393, %v5389
        %v5395 = vmul.f32 1.0, %v5394
        %v5396 = vrcp.pop %v4972
        %v5397 = vmul.f32 %v4972, %v5396
        %v5398 = vsub.f32 1.0, %v5397
        %v5399 = vmul.f32 %v5396, %v5398
        %v5400 = vadd.f32 %v5396, %v5399
        %vm5401 = vweird.f32 %v4972
        %vm5402 = vweird.f32 %v5396
        %vm5403 = vmor %vm5401, %vm5402
        %v5404 = vsel %vm5403, %v5396, %v5400
        %v5405 = vand.u32 2147483647, %v4972
        %vm5406 = vcmp.eq.f32.partialorder %v5405, 8.507059e+37
        %v5407 = vand.u32 %v4972, 2147483648
        %v5408 = vor.u32 1.1754944e-38, %v5407
        %v5409 = vsel %vm5406, %v5408, %v5404
        %v5410 = vmul.f32 1.0, %v5409
        %v5411 = vrcp.pop %v4973
        %v5412 = vmul.f32 %v4973, %v5411
        %v5413 = vsub.f32 1.0, %v5412
        %v5414 = vmul.f32 %v5411, %v5413
        %v5415 = vadd.f32 %v5411, %v5414
        %vm5416 = vweird.f32 %v4973
        %vm5417 = vweird.f32 %v5411
        %vm5418 = vmor %vm5416, %vm5417
        %v5419 = vsel %vm5418, %v5411, %v5415
        %v5420 = vand.u32 2147483647, %v4973
        %vm5421 = vcmp.eq.f32.partialorder %v5420, 8.507059e+37
        %v5422 = vand.u32 %v4973, 2147483648
        %v5423 = vor.u32 1.1754944e-38, %v5422
        %v5424 = vsel %vm5421, %v5423, %v5419
        %v5425 = vmul.f32 1.0, %v5424
        %v5426 = vrcp.pop %v4974
        %v5427 = vmul.f32 %v4974, %v5426
        %v5428 = vsub.f32 1.0, %v5427
        %v5429 = vmul.f32 %v5426, %v5428
        %v5430 = vadd.f32 %v5426, %v5429
        %vm5431 = vweird.f32 %v4974
        %vm5432 = vweird.f32 %v5426
        %vm5433 = vmor %vm5431, %vm5432
        %v5434 = vsel %vm5433, %v5426, %v5430
        %v5435 = vand.u32 2147483647, %v4974
        %vm5436 = vcmp.eq.f32.partialorder %v5435, 8.507059e+37
        %v5437 = vand.u32 %v4974, 2147483648
        %v5438 = vor.u32 1.1754944e-38, %v5437
        %v5439 = vsel %vm5436, %v5438, %v5434
        %v5440 = vmul.f32 1.0, %v5439
        %v5441 = vrcp.pop %v4975
        %v5442 = vmul.f32 %v4975, %v5441
        %v5443 = vsub.f32 1.0, %v5442
        %v5444 = vmul.f32 %v5441, %v5443
        %v5445 = vadd.f32 %v5441, %v5444
        %vm5446 = vweird.f32 %v4975
        %vm5447 = vweird.f32 %v5441
        %vm5448 = vmor %vm5446, %vm5447
        %v5449 = vsel %vm5448, %v5441, %v5445
        %v5450 = vand.u32 2147483647, %v4975
        %vm5451 = vcmp.eq.f32.partialorder %v5450, 8.507059e+37
        %v5452 = vand.u32 %v4975, 2147483648
        %v5453 = vor.u32 1.1754944e-38, %v5452
        %v5454 = vsel %vm5451, %v5453, %v5449
        %v5455 = vmul.f32 1.0, %v5454
        %v5456 = vrcp.pop %v4976
        %v5457 = vmul.f32 %v4976, %v5456
        %v5458 = vsub.f32 1.0, %v5457
        %v5459 = vmul.f32 %v5456, %v5458
        %v5460 = vadd.f32 %v5456, %v5459
        %vm5461 = vweird.f32 %v4976
        %vm5462 = vweird.f32 %v5456
        %vm5463 = vmor %vm5461, %vm5462
        %v5464 = vsel %vm5463, %v5456, %v5460
        %v5465 = vand.u32 2147483647, %v4976
        %vm5466 = vcmp.eq.f32.partialorder %v5465, 8.507059e+37
        %v5467 = vand.u32 %v4976, 2147483648
        %v5468 = vor.u32 1.1754944e-38, %v5467
        %v5469 = vsel %vm5466, %v5468, %v5464
        %v5470 = vmul.f32 1.0, %v5469
        %v5471 = vrcp.pop %v4977
        %v5472 = vmul.f32 %v4977, %v5471
        %v5473 = vsub.f32 1.0, %v5472
        %v5474 = vmul.f32 %v5471, %v5473
        %v5475 = vadd.f32 %v5471, %v5474
        %vm5476 = vweird.f32 %v4977
        %vm5477 = vweird.f32 %v5471
        %vm5478 = vmor %vm5476, %vm5477
        %v5479 = vsel %vm5478, %v5471, %v5475
        %v5480 = vand.u32 2147483647, %v4977
        %vm5481 = vcmp.eq.f32.partialorder %v5480, 8.507059e+37
        %v5482 = vand.u32 %v4977, 2147483648
        %v5483 = vor.u32 1.1754944e-38, %v5482
        %v5484 = vsel %vm5481, %v5483, %v5479
        %v5485 = vmul.f32 1.0, %v5484
        %v5486 = vrcp.pop %v4978
        %v5487 = vmul.f32 %v4978, %v5486
        %v5488 = vsub.f32 1.0, %v5487
        %v5489 = vmul.f32 %v5486, %v5488
        %v5490 = vadd.f32 %v5486, %v5489
        %vm5491 = vweird.f32 %v4978
        %vm5492 = vweird.f32 %v5486
        %vm5493 = vmor %vm5491, %vm5492
        %v5494 = vsel %vm5493, %v5486, %v5490
        %v5495 = vand.u32 2147483647, %v4978
        %vm5496 = vcmp.eq.f32.partialorder %v5495, 8.507059e+37
        %v5497 = vand.u32 %v4978, 2147483648
        %v5498 = vor.u32 1.1754944e-38, %v5497
        %v5499 = vsel %vm5496, %v5498, %v5494
        %v5500 = vmul.f32 1.0, %v5499
        %v5501 = vrcp.pop %v4979
        %v5502 = vmul.f32 %v4979, %v5501
        %v5503 = vsub.f32 1.0, %v5502
        %v5504 = vmul.f32 %v5501, %v5503
        %v5505 = vadd.f32 %v5501, %v5504
        %vm5506 = vweird.f32 %v4979
        %vm5507 = vweird.f32 %v5501
        %vm5508 = vmor %vm5506, %vm5507
        %v5509 = vsel %vm5508, %v5501, %v5505
        %v5510 = vand.u32 2147483647, %v4979
        %vm5511 = vcmp.eq.f32.partialorder %v5510, 8.507059e+37
        %v5512 = vand.u32 %v4979, 2147483648
        %v5513 = vor.u32 1.1754944e-38, %v5512
        %v5514 = vsel %vm5511, %v5513, %v5509
        %v5515 = vmul.f32 1.0, %v5514
        %v5516 = vrcp.pop %v4980
        %v5517 = vmul.f32 %v4980, %v5516
        %v5518 = vsub.f32 1.0, %v5517
        %v5519 = vmul.f32 %v5516, %v5518
        %v5520 = vadd.f32 %v5516, %v5519
        %vm5521 = vweird.f32 %v4980
        %vm5522 = vweird.f32 %v5516
        %vm5523 = vmor %vm5521, %vm5522
        %v5524 = vsel %vm5523, %v5516, %v5520
        %v5525 = vand.u32 2147483647, %v4980
        %vm5526 = vcmp.eq.f32.partialorder %v5525, 8.507059e+37
        %v5527 = vand.u32 %v4980, 2147483648
        %v5528 = vor.u32 1.1754944e-38, %v5527
        %v5529 = vsel %vm5526, %v5528, %v5524
        %v5530 = vmul.f32 1.0, %v5529
        %v5531 = vrcp.pop %v4981
        %v5532 = vmul.f32 %v4981, %v5531
        %v5533 = vsub.f32 1.0, %v5532
        %v5534 = vmul.f32 %v5531, %v5533
        %v5535 = vadd.f32 %v5531, %v5534
        %vm5536 = vweird.f32 %v4981
        %vm5537 = vweird.f32 %v5531
        %vm5538 = vmor %vm5536, %vm5537
        %v5539 = vsel %vm5538, %v5531, %v5535
        %v5540 = vand.u32 2147483647, %v4981
        %vm5541 = vcmp.eq.f32.partialorder %v5540, 8.507059e+37
        %v5542 = vand.u32 %v4981, 2147483648
        %v5543 = vor.u32 1.1754944e-38, %v5542
        %v5544 = vsel %vm5541, %v5543, %v5539
        %v5545 = vmul.f32 1.0, %v5544
        %v5546 = vrcp.pop %v4982
        %v5547 = vmul.f32 %v4982, %v5546
        %v5548 = vsub.f32 1.0, %v5547
        %v5549 = vmul.f32 %v5546, %v5548
        %v5550 = vadd.f32 %v5546, %v5549
        %vm5551 = vweird.f32 %v4982
        %vm5552 = vweird.f32 %v5546
        %vm5553 = vmor %vm5551, %vm5552
        %v5554 = vsel %vm5553, %v5546, %v5550
        %v5555 = vand.u32 2147483647, %v4982
        %vm5556 = vcmp.eq.f32.partialorder %v5555, 8.507059e+37
        %v5557 = vand.u32 %v4982, 2147483648
        %v5558 = vor.u32 1.1754944e-38, %v5557
        %v5559 = vsel %vm5556, %v5558, %v5554
        %v5560 = vmul.f32 1.0, %v5559
        %v5561 = vrcp.pop %v4983
        %v5562 = vmul.f32 %v4983, %v5561
        %v5563 = vsub.f32 1.0, %v5562
        %v5564 = vmul.f32 %v5561, %v5563
        %v5565 = vadd.f32 %v5561, %v5564
        %vm5566 = vweird.f32 %v4983
        %vm5567 = vweird.f32 %v5561
        %vm5568 = vmor %vm5566, %vm5567
        %v5569 = vsel %vm5568, %v5561, %v5565
        %v5570 = vand.u32 2147483647, %v4983
        %vm5571 = vcmp.eq.f32.partialorder %v5570, 8.507059e+37
        %v5572 = vand.u32 %v4983, 2147483648
        %v5573 = vor.u32 1.1754944e-38, %v5572
        %v5574 = vsel %vm5571, %v5573, %v5569
        %v5575 = vmul.f32 1.0, %v5574
        %v5576 = vrcp.pop %v4984
        %v5577 = vmul.f32 %v4984, %v5576
        %v5578 = vsub.f32 1.0, %v5577
        %v5579 = vmul.f32 %v5576, %v5578
        %v5580 = vadd.f32 %v5576, %v5579
        %vm5581 = vweird.f32 %v4984
        %vm5582 = vweird.f32 %v5576
        %vm5583 = vmor %vm5581, %vm5582
        %v5584 = vsel %vm5583, %v5576, %v5580
        %v5585 = vand.u32 2147483647, %v4984
        %vm5586 = vcmp.eq.f32.partialorder %v5585, 8.507059e+37
        %v5587 = vand.u32 %v4984, 2147483648
        %v5588 = vor.u32 1.1754944e-38, %v5587
        %v5589 = vsel %vm5586, %v5588, %v5584
        %v5590 = vmul.f32 1.0, %v5589
        %v5591 = vrcp.pop %v4985
        %v5592 = vmul.f32 %v4985, %v5591
        %v5593 = vsub.f32 1.0, %v5592
        %v5594 = vmul.f32 %v5591, %v5593
        %v5595 = vadd.f32 %v5591, %v5594
        %vm5596 = vweird.f32 %v4985
        %vm5597 = vweird.f32 %v5591
        %vm5598 = vmor %vm5596, %vm5597
        %v5599 = vsel %vm5598, %v5591, %v5595
        %v5600 = vand.u32 2147483647, %v4985
        %vm5601 = vcmp.eq.f32.partialorder %v5600, 8.507059e+37
        %v5602 = vand.u32 %v4985, 2147483648
        %v5603 = vor.u32 1.1754944e-38, %v5602
        %v5604 = vsel %vm5601, %v5603, %v5599
        %v5605 = vmul.f32 1.0, %v5604
        %v5606 = vrcp.pop %v4986
        %v5607 = vmul.f32 %v4986, %v5606
        %v5608 = vsub.f32 1.0, %v5607
        %v5609 = vmul.f32 %v5606, %v5608
        %v5610 = vadd.f32 %v5606, %v5609
        %vm5611 = vweird.f32 %v4986
        %vm5612 = vweird.f32 %v5606
        %vm5613 = vmor %vm5611, %vm5612
        %v5614 = vsel %vm5613, %v5606, %v5610
        %v5615 = vand.u32 2147483647, %v4986
        %vm5616 = vcmp.eq.f32.partialorder %v5615, 8.507059e+37
        %v5617 = vand.u32 %v4986, 2147483648
        %v5618 = vor.u32 1.1754944e-38, %v5617
        %v5619 = vsel %vm5616, %v5618, %v5614
        %v5620 = vmul.f32 1.0, %v5619
        %v5621 = vrcp.pop %v4987
        %v5622 = vmul.f32 %v4987, %v5621
        %v5623 = vsub.f32 1.0, %v5622
        %v5624 = vmul.f32 %v5621, %v5623
        %v5625 = vadd.f32 %v5621, %v5624
        %vm5626 = vweird.f32 %v4987
        %vm5627 = vweird.f32 %v5621
        %vm5628 = vmor %vm5626, %vm5627
        %v5629 = vsel %vm5628, %v5621, %v5625
        %v5630 = vand.u32 2147483647, %v4987
        %vm5631 = vcmp.eq.f32.partialorder %v5630, 8.507059e+37
        %v5632 = vand.u32 %v4987, 2147483648
        %v5633 = vor.u32 1.1754944e-38, %v5632
        %v5634 = vsel %vm5631, %v5633, %v5629
        %v5635 = vmul.f32 1.0, %v5634
        %v5636 = vrcp.pop %v4988
        %v5637 = vmul.f32 %v4988, %v5636
        %v5638 = vsub.f32 1.0, %v5637
        %v5639 = vmul.f32 %v5636, %v5638
        %v5640 = vadd.f32 %v5636, %v5639
        %vm5641 = vweird.f32 %v4988
        %vm5642 = vweird.f32 %v5636
        %vm5643 = vmor %vm5641, %vm5642
        %v5644 = vsel %vm5643, %v5636, %v5640
        %v5645 = vand.u32 2147483647, %v4988
        %vm5646 = vcmp.eq.f32.partialorder %v5645, 8.507059e+37
        %v5647 = vand.u32 %v4988, 2147483648
        %v5648 = vor.u32 1.1754944e-38, %v5647
        %v5649 = vsel %vm5646, %v5648, %v5644
        %v5650 = vmul.f32 1.0, %v5649
        %v5651 = vrcp.pop %v4989
        %v5652 = vmul.f32 %v4989, %v5651
        %v5653 = vsub.f32 1.0, %v5652
        %v5654 = vmul.f32 %v5651, %v5653
        %v5655 = vadd.f32 %v5651, %v5654
        %vm5656 = vweird.f32 %v4989
        %vm5657 = vweird.f32 %v5651
        %vm5658 = vmor %vm5656, %vm5657
        %v5659 = vsel %vm5658, %v5651, %v5655
        %v5660 = vand.u32 2147483647, %v4989
        %vm5661 = vcmp.eq.f32.partialorder %v5660, 8.507059e+37
        %v5662 = vand.u32 %v4989, 2147483648
        %v5663 = vor.u32 1.1754944e-38, %v5662
        %v5664 = vsel %vm5661, %v5663, %v5659
        %v5665 = vmul.f32 1.0, %v5664
        %v5666 = vrcp.pop %v4990
        %v5667 = vmul.f32 %v4990, %v5666
        %v5668 = vsub.f32 1.0, %v5667
        %v5669 = vmul.f32 %v5666, %v5668
        %v5670 = vadd.f32 %v5666, %v5669
        %vm5671 = vweird.f32 %v4990
        %vm5672 = vweird.f32 %v5666
        %vm5673 = vmor %vm5671, %vm5672
        %v5674 = vsel %vm5673, %v5666, %v5670
        %v5675 = vand.u32 2147483647, %v4990
        %vm5676 = vcmp.eq.f32.partialorder %v5675, 8.507059e+37
        %v5677 = vand.u32 %v4990, 2147483648
        %v5678 = vor.u32 1.1754944e-38, %v5677
        %v5679 = vsel %vm5676, %v5678, %v5674
        %v5680 = vmul.f32 1.0, %v5679
        %v5681 = vrcp.pop %v4991
        %v5682 = vmul.f32 %v4991, %v5681
        %v5683 = vsub.f32 1.0, %v5682
        %v5684 = vmul.f32 %v5681, %v5683
        %v5685 = vadd.f32 %v5681, %v5684
        %vm5686 = vweird.f32 %v4991
        %vm5687 = vweird.f32 %v5681
        %vm5688 = vmor %vm5686, %vm5687
        %v5689 = vsel %vm5688, %v5681, %v5685
        %v5690 = vand.u32 2147483647, %v4991
        %vm5691 = vcmp.eq.f32.partialorder %v5690, 8.507059e+37
        %v5692 = vand.u32 %v4991, 2147483648
        %v5693 = vor.u32 1.1754944e-38, %v5692
        %v5694 = vsel %vm5691, %v5693, %v5689
        %v5695 = vmul.f32 1.0, %v5694
        %v5696 = vrcp.pop %v4992
        %v5697 = vmul.f32 %v4992, %v5696
        %v5698 = vsub.f32 1.0, %v5697
        %v5699 = vmul.f32 %v5696, %v5698
        %v5700 = vadd.f32 %v5696, %v5699
        %vm5701 = vweird.f32 %v4992
        %vm5702 = vweird.f32 %v5696
        %vm5703 = vmor %vm5701, %vm5702
        %v5704 = vsel %vm5703, %v5696, %v5700
        %v5705 = vand.u32 2147483647, %v4992
        %vm5706 = vcmp.eq.f32.partialorder %v5705, 8.507059e+37
        %v5707 = vand.u32 %v4992, 2147483648
        %v5708 = vor.u32 1.1754944e-38, %v5707
        %v5709 = vsel %vm5706, %v5708, %v5704
        %v5710 = vmul.f32 1.0, %v5709
        %v5711 = vrcp.pop %v4993
        %v5712 = vmul.f32 %v4993, %v5711
        %v5713 = vsub.f32 1.0, %v5712
        %v5714 = vmul.f32 %v5711, %v5713
        %v5715 = vadd.f32 %v5711, %v5714
        %vm5716 = vweird.f32 %v4993
        %vm5717 = vweird.f32 %v5711
        %vm5718 = vmor %vm5716, %vm5717
        %v5719 = vsel %vm5718, %v5711, %v5715
        %v5720 = vand.u32 2147483647, %v4993
        %vm5721 = vcmp.eq.f32.partialorder %v5720, 8.507059e+37
        %v5722 = vand.u32 %v4993, 2147483648
        %v5723 = vor.u32 1.1754944e-38, %v5722
        %v5724 = vsel %vm5721, %v5723, %v5719
        %v5725 = vmul.f32 1.0, %v5724
        %v5726 = vrcp.pop %v4994
        %v5727 = vmul.f32 %v4994, %v5726
        %v5728 = vsub.f32 1.0, %v5727
        %v5729 = vmul.f32 %v5726, %v5728
        %v5730 = vadd.f32 %v5726, %v5729
        %vm5731 = vweird.f32 %v4994
        %vm5732 = vweird.f32 %v5726
        %vm5733 = vmor %vm5731, %vm5732
        %v5734 = vsel %vm5733, %v5726, %v5730
        %v5735 = vand.u32 2147483647, %v4994
        %vm5736 = vcmp.eq.f32.partialorder %v5735, 8.507059e+37
        %v5737 = vand.u32 %v4994, 2147483648
        %v5738 = vor.u32 1.1754944e-38, %v5737
        %v5739 = vsel %vm5736, %v5738, %v5734
        %v5740 = vmul.f32 1.0, %v5739
        %v5741 = vrcp.pop %v4995
        %v5742 = vmul.f32 %v4995, %v5741
        %v5743 = vsub.f32 1.0, %v5742
        %v5744 = vmul.f32 %v5741, %v5743
        %v5745 = vadd.f32 %v5741, %v5744
        %vm5746 = vweird.f32 %v4995
        %vm5747 = vweird.f32 %v5741
        %vm5748 = vmor %vm5746, %vm5747
        %v5749 = vsel %vm5748, %v5741, %v5745
        %v5750 = vand.u32 2147483647, %v4995
        %vm5751 = vcmp.eq.f32.partialorder %v5750, 8.507059e+37
        %v5752 = vand.u32 %v4995, 2147483648
        %v5753 = vor.u32 1.1754944e-38, %v5752
        %v5754 = vsel %vm5751, %v5753, %v5749
        %v5755 = vmul.f32 1.0, %v5754
        %v5756 = vrcp.pop %v4996
        %v5757 = vmul.f32 %v4996, %v5756
        %v5758 = vsub.f32 1.0, %v5757
        %v5759 = vmul.f32 %v5756, %v5758
        %v5760 = vadd.f32 %v5756, %v5759
        %vm5761 = vweird.f32 %v4996
        %vm5762 = vweird.f32 %v5756
        %vm5763 = vmor %vm5761, %vm5762
        %v5764 = vsel %vm5763, %v5756, %v5760
        %v5765 = vand.u32 2147483647, %v4996
        %vm5766 = vcmp.eq.f32.partialorder %v5765, 8.507059e+37
        %v5767 = vand.u32 %v4996, 2147483648
        %v5768 = vor.u32 1.1754944e-38, %v5767
        %v5769 = vsel %vm5766, %v5768, %v5764
        %v5770 = vmul.f32 1.0, %v5769
        %v5771 = vrcp.pop %v4997
        %v5772 = vmul.f32 %v4997, %v5771
        %v5773 = vsub.f32 1.0, %v5772
        %v5774 = vmul.f32 %v5771, %v5773
        %v5775 = vadd.f32 %v5771, %v5774
        %vm5776 = vweird.f32 %v4997
        %vm5777 = vweird.f32 %v5771
        %vm5778 = vmor %vm5776, %vm5777
        %v5779 = vsel %vm5778, %v5771, %v5775
        %v5780 = vand.u32 2147483647, %v4997
        %vm5781 = vcmp.eq.f32.partialorder %v5780, 8.507059e+37
        %v5782 = vand.u32 %v4997, 2147483648
        %v5783 = vor.u32 1.1754944e-38, %v5782
        %v5784 = vsel %vm5781, %v5783, %v5779
        %v5785 = vmul.f32 1.0, %v5784
        %v5786 = vrcp.pop %v4998
        %v5787 = vmul.f32 %v4998, %v5786
        %v5788 = vsub.f32 1.0, %v5787
        %v5789 = vmul.f32 %v5786, %v5788
        %v5790 = vadd.f32 %v5786, %v5789
        %vm5791 = vweird.f32 %v4998
        %vm5792 = vweird.f32 %v5786
        %vm5793 = vmor %vm5791, %vm5792
        %v5794 = vsel %vm5793, %v5786, %v5790
        %v5795 = vand.u32 2147483647, %v4998
        %vm5796 = vcmp.eq.f32.partialorder %v5795, 8.507059e+37
        %v5797 = vand.u32 %v4998, 2147483648
        %v5798 = vor.u32 1.1754944e-38, %v5797
        %v5799 = vsel %vm5796, %v5798, %v5794
        %v5800 = vmul.f32 1.0, %v5799
        %v5801 = vrcp.pop %v4999
        %v5802 = vmul.f32 %v4999, %v5801
        %v5803 = vsub.f32 1.0, %v5802
        %v5804 = vmul.f32 %v5801, %v5803
        %v5805 = vadd.f32 %v5801, %v5804
        %vm5806 = vweird.f32 %v4999
        %vm5807 = vweird.f32 %v5801
        %vm5808 = vmor %vm5806, %vm5807
        %v5809 = vsel %vm5808, %v5801, %v5805
        %v5810 = vand.u32 2147483647, %v4999
        %vm5811 = vcmp.eq.f32.partialorder %v5810, 8.507059e+37
        %v5812 = vand.u32 %v4999, 2147483648
        %v5813 = vor.u32 1.1754944e-38, %v5812
        %v5814 = vsel %vm5811, %v5813, %v5809
        %v5815 = vmul.f32 1.0, %v5814
        %v5816 = vrcp.pop %v5000
        %v5817 = vmul.f32 %v5000, %v5816
        %v5818 = vsub.f32 1.0, %v5817
        %v5819 = vmul.f32 %v5816, %v5818
        %v5820 = vadd.f32 %v5816, %v5819
        %vm5821 = vweird.f32 %v5000
        %vm5822 = vweird.f32 %v5816
        %vm5823 = vmor %vm5821, %vm5822
        %v5824 = vsel %vm5823, %v5816, %v5820
        %v5825 = vand.u32 2147483647, %v5000
        %vm5826 = vcmp.eq.f32.partialorder %v5825, 8.507059e+37
        %v5827 = vand.u32 %v5000, 2147483648
        %v5828 = vor.u32 1.1754944e-38, %v5827
        %v5829 = vsel %vm5826, %v5828, %v5824
        %v5830 = vmul.f32 1.0, %v5829
        %v5831 = vrcp.pop %v5001
        %v5832 = vmul.f32 %v5001, %v5831
        %v5833 = vsub.f32 1.0, %v5832
        %v5834 = vmul.f32 %v5831, %v5833
        %v5835 = vadd.f32 %v5831, %v5834
        %vm5836 = vweird.f32 %v5001
        %vm5837 = vweird.f32 %v5831
        %vm5838 = vmor %vm5836, %vm5837
        %v5839 = vsel %vm5838, %v5831, %v5835
        %v5840 = vand.u32 2147483647, %v5001
        %vm5841 = vcmp.eq.f32.partialorder %v5840, 8.507059e+37
        %v5842 = vand.u32 %v5001, 2147483648
        %v5843 = vor.u32 1.1754944e-38, %v5842
        %v5844 = vsel %vm5841, %v5843, %v5839
        %v5845 = vmul.f32 1.0, %v5844
        %v5846 = vrcp.pop %v5002
        %v5847 = vmul.f32 %v5002, %v5846
        %v5848 = vsub.f32 1.0, %v5847
        %v5849 = vmul.f32 %v5846, %v5848
        %v5850 = vadd.f32 %v5846, %v5849
        %vm5851 = vweird.f32 %v5002
        %vm5852 = vweird.f32 %v5846
        %vm5853 = vmor %vm5851, %vm5852
        %v5854 = vsel %vm5853, %v5846, %v5850
        %v5855 = vand.u32 2147483647, %v5002
        %vm5856 = vcmp.eq.f32.partialorder %v5855, 8.507059e+37
        %v5857 = vand.u32 %v5002, 2147483648
        %v5858 = vor.u32 1.1754944e-38, %v5857
        %v5859 = vsel %vm5856, %v5858, %v5854
        %v5860 = vmul.f32 1.0, %v5859
        %v5861 = vrcp.pop %v5003
        %v5862 = vmul.f32 %v5003, %v5861
        %v5863 = vsub.f32 1.0, %v5862
        %v5864 = vmul.f32 %v5861, %v5863
        %v5865 = vadd.f32 %v5861, %v5864
        %vm5866 = vweird.f32 %v5003
        %vm5867 = vweird.f32 %v5861
        %vm5868 = vmor %vm5866, %vm5867
        %v5869 = vsel %vm5868, %v5861, %v5865
        %v5870 = vand.u32 2147483647, %v5003
        %vm5871 = vcmp.eq.f32.partialorder %v5870, 8.507059e+37
        %v5872 = vand.u32 %v5003, 2147483648
        %v5873 = vor.u32 1.1754944e-38, %v5872
        %v5874 = vsel %vm5871, %v5873, %v5869
        %v5875 = vmul.f32 1.0, %v5874
        %v5876 = vrcp.pop %v5004
        %v5877 = vmul.f32 %v5004, %v5876
        %v5878 = vsub.f32 1.0, %v5877
        %v5879 = vmul.f32 %v5876, %v5878
        %v5880 = vadd.f32 %v5876, %v5879
        %vm5881 = vweird.f32 %v5004
        %vm5882 = vweird.f32 %v5876
        %vm5883 = vmor %vm5881, %vm5882
        %v5884 = vsel %vm5883, %v5876, %v5880
        %v5885 = vand.u32 2147483647, %v5004
        %vm5886 = vcmp.eq.f32.partialorder %v5885, 8.507059e+37
        %v5887 = vand.u32 %v5004, 2147483648
        %v5888 = vor.u32 1.1754944e-38, %v5887
        %v5889 = vsel %vm5886, %v5888, %v5884
        %v5890 = vmul.f32 1.0, %v5889
        %v5891 = vrcp.pop %v5005
        %v5892 = vmul.f32 %v5005, %v5891
        %v5893 = vsub.f32 1.0, %v5892
        %v5894 = vmul.f32 %v5891, %v5893
        %v5895 = vadd.f32 %v5891, %v5894
        %vm5896 = vweird.f32 %v5005
        %vm5897 = vweird.f32 %v5891
        %vm5898 = vmor %vm5896, %vm5897
        %v5899 = vsel %vm5898, %v5891, %v5895
        %v5900 = vand.u32 2147483647, %v5005
        %vm5901 = vcmp.eq.f32.partialorder %v5900, 8.507059e+37
        %v5902 = vand.u32 %v5005, 2147483648
        %v5903 = vor.u32 1.1754944e-38, %v5902
        %v5904 = vsel %vm5901, %v5903, %v5899
        %v5905 = vmul.f32 1.0, %v5904
        %v5906 = vrcp.pop %v5006
        %v5907 = vmul.f32 %v5006, %v5906
        %v5908 = vsub.f32 1.0, %v5907
        %v5909 = vmul.f32 %v5906, %v5908
        %v5910 = vadd.f32 %v5906, %v5909
        %vm5911 = vweird.f32 %v5006
        %vm5912 = vweird.f32 %v5906
        %vm5913 = vmor %vm5911, %vm5912
        %v5914 = vsel %vm5913, %v5906, %v5910
        %v5915 = vand.u32 2147483647, %v5006
        %vm5916 = vcmp.eq.f32.partialorder %v5915, 8.507059e+37
        %v5917 = vand.u32 %v5006, 2147483648
        %v5918 = vor.u32 1.1754944e-38, %v5917
        %v5919 = vsel %vm5916, %v5918, %v5914
        %v5920 = vmul.f32 1.0, %v5919
        %v5921 = vrcp.pop %v5007
        %v5922 = vmul.f32 %v5007, %v5921
        %v5923 = vsub.f32 1.0, %v5922
        %v5924 = vmul.f32 %v5921, %v5923
        %v5925 = vadd.f32 %v5921, %v5924
        %vm5926 = vweird.f32 %v5007
        %vm5927 = vweird.f32 %v5921
        %vm5928 = vmor %vm5926, %vm5927
        %v5929 = vsel %vm5928, %v5921, %v5925
        %v5930 = vand.u32 2147483647, %v5007
        %vm5931 = vcmp.eq.f32.partialorder %v5930, 8.507059e+37
        %v5932 = vand.u32 %v5007, 2147483648
        %v5933 = vor.u32 1.1754944e-38, %v5932
        %v5934 = vsel %vm5931, %v5933, %v5929
        %v5935 = vmul.f32 1.0, %v5934
        %v5936 = vrcp.pop %v5008
        %v5937 = vmul.f32 %v5008, %v5936
        %v5938 = vsub.f32 1.0, %v5937
        %v5939 = vmul.f32 %v5936, %v5938
        %v5940 = vadd.f32 %v5936, %v5939
        %vm5941 = vweird.f32 %v5008
        %vm5942 = vweird.f32 %v5936
        %vm5943 = vmor %vm5941, %vm5942
        %v5944 = vsel %vm5943, %v5936, %v5940
        %v5945 = vand.u32 2147483647, %v5008
        %vm5946 = vcmp.eq.f32.partialorder %v5945, 8.507059e+37
        %v5947 = vand.u32 %v5008, 2147483648
        %v5948 = vor.u32 1.1754944e-38, %v5947
        %v5949 = vsel %vm5946, %v5948, %v5944
        %v5950 = vmul.f32 1.0, %v5949
        %v5951 = vrcp.pop %v5009
        %v5952 = vmul.f32 %v5009, %v5951
        %v5953 = vsub.f32 1.0, %v5952
        %v5954 = vmul.f32 %v5951, %v5953
        %v5955 = vadd.f32 %v5951, %v5954
        %vm5956 = vweird.f32 %v5009
        %vm5957 = vweird.f32 %v5951
        %vm5958 = vmor %vm5956, %vm5957
        %v5959 = vsel %vm5958, %v5951, %v5955
        %v5960 = vand.u32 2147483647, %v5009
        %vm5961 = vcmp.eq.f32.partialorder %v5960, 8.507059e+37
        %v5962 = vand.u32 %v5009, 2147483648
        %v5963 = vor.u32 1.1754944e-38, %v5962
        %v5964 = vsel %vm5961, %v5963, %v5959
        %v5965 = vmul.f32 1.0, %v5964
        %v5966 = vrcp.pop %v5010
        %v5967 = vmul.f32 %v5010, %v5966
        %v5968 = vsub.f32 1.0, %v5967
        %v5969 = vmul.f32 %v5966, %v5968
        %v5970 = vadd.f32 %v5966, %v5969
        %vm5971 = vweird.f32 %v5010
        %vm5972 = vweird.f32 %v5966
        %vm5973 = vmor %vm5971, %vm5972
        %v5974 = vsel %vm5973, %v5966, %v5970
        %v5975 = vand.u32 2147483647, %v5010
        %vm5976 = vcmp.eq.f32.partialorder %v5975, 8.507059e+37
        %v5977 = vand.u32 %v5010, 2147483648
        %v5978 = vor.u32 1.1754944e-38, %v5977
        %v5979 = vsel %vm5976, %v5978, %v5974
        %v5980 = vmul.f32 1.0, %v5979
        %v5981 = vrcp.pop %v5011
        %v5982 = vmul.f32 %v5011, %v5981
        %v5983 = vsub.f32 1.0, %v5982
        %v5984 = vmul.f32 %v5981, %v5983
        %v5985 = vadd.f32 %v5981, %v5984
        %vm5986 = vweird.f32 %v5011
        %vm5987 = vweird.f32 %v5981
        %vm5988 = vmor %vm5986, %vm5987
        %v5989 = vsel %vm5988, %v5981, %v5985
        %v5990 = vand.u32 2147483647, %v5011
        %vm5991 = vcmp.eq.f32.partialorder %v5990, 8.507059e+37
        %v5992 = vand.u32 %v5011, 2147483648
        %v5993 = vor.u32 1.1754944e-38, %v5992
        %v5994 = vsel %vm5991, %v5993, %v5989
        %v5995 = vmul.f32 1.0, %v5994
        %v5996 = vrcp.pop %v5012
        %v5997 = vmul.f32 %v5012, %v5996
        %v5998 = vsub.f32 1.0, %v5997
        %v5999 = vmul.f32 %v5996, %v5998
        %v6000 = vadd.f32 %v5996, %v5999
        %vm6001 = vweird.f32 %v5012
        %vm6002 = vweird.f32 %v5996
        %vm6003 = vmor %vm6001, %vm6002
        %v6004 = vsel %vm6003, %v5996, %v6000
        %v6005 = vand.u32 2147483647, %v5012
        %vm6006 = vcmp.eq.f32.partialorder %v6005, 8.507059e+37
        %v6007 = vand.u32 %v5012, 2147483648
        %v6008 = vor.u32 1.1754944e-38, %v6007
        %v6009 = vsel %vm6006, %v6008, %v6004
        %v6010 = vmul.f32 1.0, %v6009
        %v6011 = vrcp.pop %v5013
        %v6012 = vmul.f32 %v5013, %v6011
        %v6013 = vsub.f32 1.0, %v6012
        %v6014 = vmul.f32 %v6011, %v6013
        %v6015 = vadd.f32 %v6011, %v6014
        %vm6016 = vweird.f32 %v5013
        %vm6017 = vweird.f32 %v6011
        %vm6018 = vmor %vm6016, %vm6017
        %v6019 = vsel %vm6018, %v6011, %v6015
        %v6020 = vand.u32 2147483647, %v5013
        %vm6021 = vcmp.eq.f32.partialorder %v6020, 8.507059e+37
        %v6022 = vand.u32 %v5013, 2147483648
        %v6023 = vor.u32 1.1754944e-38, %v6022
        %v6024 = vsel %vm6021, %v6023, %v6019
        %v6025 = vmul.f32 1.0, %v6024
        %v6026 = vrcp.pop %v5014
        %v6027 = vmul.f32 %v5014, %v6026
        %v6028 = vsub.f32 1.0, %v6027
        %v6029 = vmul.f32 %v6026, %v6028
        %v6030 = vadd.f32 %v6026, %v6029
        %vm6031 = vweird.f32 %v5014
        %vm6032 = vweird.f32 %v6026
        %vm6033 = vmor %vm6031, %vm6032
        %v6034 = vsel %vm6033, %v6026, %v6030
        %v6035 = vand.u32 2147483647, %v5014
        %vm6036 = vcmp.eq.f32.partialorder %v6035, 8.507059e+37
        %v6037 = vand.u32 %v5014, 2147483648
        %v6038 = vor.u32 1.1754944e-38, %v6037
        %v6039 = vsel %vm6036, %v6038, %v6034
        %v6040 = vmul.f32 1.0, %v6039
        %v6041 = vrcp.pop %v5015
        %v6042 = vmul.f32 %v5015, %v6041
        %v6043 = vsub.f32 1.0, %v6042
        %v6044 = vmul.f32 %v6041, %v6043
        %v6045 = vadd.f32 %v6041, %v6044
        %vm6046 = vweird.f32 %v5015
        %vm6047 = vweird.f32 %v6041
        %vm6048 = vmor %vm6046, %vm6047
        %v6049 = vsel %vm6048, %v6041, %v6045
        %v6050 = vand.u32 2147483647, %v5015
        %vm6051 = vcmp.eq.f32.partialorder %v6050, 8.507059e+37
        %v6052 = vand.u32 %v5015, 2147483648
        %v6053 = vor.u32 1.1754944e-38, %v6052
        %v6054 = vsel %vm6051, %v6053, %v6049
        %v6055 = vmul.f32 1.0, %v6054
        %v6056 = vrcp.pop %v5016
        %v6057 = vmul.f32 %v5016, %v6056
        %v6058 = vsub.f32 1.0, %v6057
        %v6059 = vmul.f32 %v6056, %v6058
        %v6060 = vadd.f32 %v6056, %v6059
        %vm6061 = vweird.f32 %v5016
        %vm6062 = vweird.f32 %v6056
        %vm6063 = vmor %vm6061, %vm6062
        %v6064 = vsel %vm6063, %v6056, %v6060
        %v6065 = vand.u32 2147483647, %v5016
        %vm6066 = vcmp.eq.f32.partialorder %v6065, 8.507059e+37
        %v6067 = vand.u32 %v5016, 2147483648
        %v6068 = vor.u32 1.1754944e-38, %v6067
        %v6069 = vsel %vm6066, %v6068, %v6064
        %v6070 = vmul.f32 1.0, %v6069
        %v6071 = vrcp.pop %v5017
        %v6072 = vmul.f32 %v5017, %v6071
        %v6073 = vsub.f32 1.0, %v6072
        %v6074 = vmul.f32 %v6071, %v6073
        %v6075 = vadd.f32 %v6071, %v6074
        %vm6076 = vweird.f32 %v5017
        %vm6077 = vweird.f32 %v6071
        %vm6078 = vmor %vm6076, %vm6077
        %v6079 = vsel %vm6078, %v6071, %v6075
        %v6080 = vand.u32 2147483647, %v5017
        %vm6081 = vcmp.eq.f32.partialorder %v6080, 8.507059e+37
        %v6082 = vand.u32 %v5017, 2147483648
        %v6083 = vor.u32 1.1754944e-38, %v6082
        %v6084 = vsel %vm6081, %v6083, %v6079
        %v6085 = vmul.f32 1.0, %v6084
        %v6086 = vrcp.pop %v5018
        %v6087 = vmul.f32 %v5018, %v6086
        %v6088 = vsub.f32 1.0, %v6087
        %v6089 = vmul.f32 %v6086, %v6088
        %v6090 = vadd.f32 %v6086, %v6089
        %vm6091 = vweird.f32 %v5018
        %vm6092 = vweird.f32 %v6086
        %vm6093 = vmor %vm6091, %vm6092
        %v6094 = vsel %vm6093, %v6086, %v6090
        %v6095 = vand.u32 2147483647, %v5018
        %vm6096 = vcmp.eq.f32.partialorder %v6095, 8.507059e+37
        %v6097 = vand.u32 %v5018, 2147483648
        %v6098 = vor.u32 1.1754944e-38, %v6097
        %v6099 = vsel %vm6096, %v6098, %v6094
        %v6100 = vmul.f32 1.0, %v6099
        %v6101 = vrcp.pop %v5019
        %v6102 = vmul.f32 %v5019, %v6101
        %v6103 = vsub.f32 1.0, %v6102
        %v6104 = vmul.f32 %v6101, %v6103
        %v6105 = vadd.f32 %v6101, %v6104
        %vm6106 = vweird.f32 %v5019
        %vm6107 = vweird.f32 %v6101
        %vm6108 = vmor %vm6106, %vm6107
        %v6109 = vsel %vm6108, %v6101, %v6105
        %v6110 = vand.u32 2147483647, %v5019
        %vm6111 = vcmp.eq.f32.partialorder %v6110, 8.507059e+37
        %v6112 = vand.u32 %v5019, 2147483648
        %v6113 = vor.u32 1.1754944e-38, %v6112
        %v6114 = vsel %vm6111, %v6113, %v6109
        %v6115 = vmul.f32 1.0, %v6114
        %v6116 = vrcp.pop %v5020
        %v6117 = vmul.f32 %v5020, %v6116
        %v6118 = vsub.f32 1.0, %v6117
        %v6119 = vmul.f32 %v6116, %v6118
        %v6120 = vadd.f32 %v6116, %v6119
        %vm6121 = vweird.f32 %v5020
        %vm6122 = vweird.f32 %v6116
        %vm6123 = vmor %vm6121, %vm6122
        %v6124 = vsel %vm6123, %v6116, %v6120
        %v6125 = vand.u32 2147483647, %v5020
        %vm6126 = vcmp.eq.f32.partialorder %v6125, 8.507059e+37
        %v6127 = vand.u32 %v5020, 2147483648
        %v6128 = vor.u32 1.1754944e-38, %v6127
        %v6129 = vsel %vm6126, %v6128, %v6124
        %v6130 = vmul.f32 1.0, %v6129
        %v6131 = vrcp.pop %v5021
        %v6132 = vmul.f32 %v5021, %v6131
        %v6133 = vsub.f32 1.0, %v6132
        %v6134 = vmul.f32 %v6131, %v6133
        %v6135 = vadd.f32 %v6131, %v6134
        %vm6136 = vweird.f32 %v5021
        %vm6137 = vweird.f32 %v6131
        %vm6138 = vmor %vm6136, %vm6137
        %v6139 = vsel %vm6138, %v6131, %v6135
        %v6140 = vand.u32 2147483647, %v5021
        %vm6141 = vcmp.eq.f32.partialorder %v6140, 8.507059e+37
        %v6142 = vand.u32 %v5021, 2147483648
        %v6143 = vor.u32 1.1754944e-38, %v6142
        %v6144 = vsel %vm6141, %v6143, %v6139
        %v6145 = vmul.f32 1.0, %v6144
        %v6146 = vrcp.pop %v5022
        %v6147 = vmul.f32 %v5022, %v6146
        %v6148 = vsub.f32 1.0, %v6147
        %v6149 = vmul.f32 %v6146, %v6148
        %v6150 = vadd.f32 %v6146, %v6149
        %vm6151 = vweird.f32 %v5022
        %vm6152 = vweird.f32 %v6146
        %vm6153 = vmor %vm6151, %vm6152
        %v6154 = vsel %vm6153, %v6146, %v6150
        %v6155 = vand.u32 2147483647, %v5022
        %vm6156 = vcmp.eq.f32.partialorder %v6155, 8.507059e+37
        %v6157 = vand.u32 %v5022, 2147483648
        %v6158 = vor.u32 1.1754944e-38, %v6157
        %v6159 = vsel %vm6156, %v6158, %v6154
        %v6160 = vmul.f32 1.0, %v6159
        %v6161 = vrcp.pop %v5023
        %v6162 = vmul.f32 %v5023, %v6161
        %v6163 = vsub.f32 1.0, %v6162
        %v6164 = vmul.f32 %v6161, %v6163
        %v6165 = vadd.f32 %v6161, %v6164
        %vm6166 = vweird.f32 %v5023
        %vm6167 = vweird.f32 %v6161
        %vm6168 = vmor %vm6166, %vm6167
        %v6169 = vsel %vm6168, %v6161, %v6165
        %v6170 = vand.u32 2147483647, %v5023
        %vm6171 = vcmp.eq.f32.partialorder %v6170, 8.507059e+37
        %v6172 = vand.u32 %v5023, 2147483648
        %v6173 = vor.u32 1.1754944e-38, %v6172
        %v6174 = vsel %vm6171, %v6173, %v6169
        %v6175 = vmul.f32 1.0, %v6174
        %v6176 = vrcp.pop %v5024
        %v6177 = vmul.f32 %v5024, %v6176
        %v6178 = vsub.f32 1.0, %v6177
        %v6179 = vmul.f32 %v6176, %v6178
        %v6180 = vadd.f32 %v6176, %v6179
        %vm6181 = vweird.f32 %v5024
        %vm6182 = vweird.f32 %v6176
        %vm6183 = vmor %vm6181, %vm6182
        %v6184 = vsel %vm6183, %v6176, %v6180
        %v6185 = vand.u32 2147483647, %v5024
        %vm6186 = vcmp.eq.f32.partialorder %v6185, 8.507059e+37
        %v6187 = vand.u32 %v5024, 2147483648
        %v6188 = vor.u32 1.1754944e-38, %v6187
        %v6189 = vsel %vm6186, %v6188, %v6184
        %v6190 = vmul.f32 1.0, %v6189
        %v6191 = vrcp.pop %v5025
        %v6192 = vmul.f32 %v5025, %v6191
        %v6193 = vsub.f32 1.0, %v6192
        %v6194 = vmul.f32 %v6191, %v6193
        %v6195 = vadd.f32 %v6191, %v6194
        %vm6196 = vweird.f32 %v5025
        %vm6197 = vweird.f32 %v6191
        %vm6198 = vmor %vm6196, %vm6197
        %v6199 = vsel %vm6198, %v6191, %v6195
        %v6200 = vand.u32 2147483647, %v5025
        %vm6201 = vcmp.eq.f32.partialorder %v6200, 8.507059e+37
        %v6202 = vand.u32 %v5025, 2147483648
        %v6203 = vor.u32 1.1754944e-38, %v6202
        %v6204 = vsel %vm6201, %v6203, %v6199
        %v6205 = vmul.f32 1.0, %v6204
        %v6206 = vrcp.pop %v5026
        %v6207 = vmul.f32 %v5026, %v6206
        %v6208 = vsub.f32 1.0, %v6207
        %v6209 = vmul.f32 %v6206, %v6208
        %v6210 = vadd.f32 %v6206, %v6209
        %vm6211 = vweird.f32 %v5026
        %vm6212 = vweird.f32 %v6206
        %vm6213 = vmor %vm6211, %vm6212
        %v6214 = vsel %vm6213, %v6206, %v6210
        %v6215 = vand.u32 2147483647, %v5026
        %vm6216 = vcmp.eq.f32.partialorder %v6215, 8.507059e+37
        %v6217 = vand.u32 %v5026, 2147483648
        %v6218 = vor.u32 1.1754944e-38, %v6217
        %v6219 = vsel %vm6216, %v6218, %v6214
        %v6220 = vmul.f32 1.0, %v6219
        %v6221 = vrcp.pop %v5027
        %v6222 = vmul.f32 %v5027, %v6221
        %v6223 = vsub.f32 1.0, %v6222
        %v6224 = vmul.f32 %v6221, %v6223
        %v6225 = vadd.f32 %v6221, %v6224
        %vm6226 = vweird.f32 %v5027
        %vm6227 = vweird.f32 %v6221
        %vm6228 = vmor %vm6226, %vm6227
        %v6229 = vsel %vm6228, %v6221, %v6225
        %v6230 = vand.u32 2147483647, %v5027
        %vm6231 = vcmp.eq.f32.partialorder %v6230, 8.507059e+37
        %v6232 = vand.u32 %v5027, 2147483648
        %v6233 = vor.u32 1.1754944e-38, %v6232
        %v6234 = vsel %vm6231, %v6233, %v6229
        %v6235 = vmul.f32 1.0, %v6234
        %v6236 = vrcp.pop %v5028
        %v6237 = vmul.f32 %v5028, %v6236
        %v6238 = vsub.f32 1.0, %v6237
        %v6239 = vmul.f32 %v6236, %v6238
        %v6240 = vadd.f32 %v6236, %v6239
        %vm6241 = vweird.f32 %v5028
        %vm6242 = vweird.f32 %v6236
        %vm6243 = vmor %vm6241, %vm6242
        %v6244 = vsel %vm6243, %v6236, %v6240
        %v6245 = vand.u32 2147483647, %v5028
        %vm6246 = vcmp.eq.f32.partialorder %v6245, 8.507059e+37
        %v6247 = vand.u32 %v5028, 2147483648
        %v6248 = vor.u32 1.1754944e-38, %v6247
        %v6249 = vsel %vm6246, %v6248, %v6244
        %v6250 = vmul.f32 1.0, %v6249
        %v6251 = vrcp.pop %v5029
        %v6252 = vmul.f32 %v5029, %v6251
        %v6253 = vsub.f32 1.0, %v6252
        %v6254 = vmul.f32 %v6251, %v6253
        %v6255 = vadd.f32 %v6251, %v6254
        %vm6256 = vweird.f32 %v5029
        %vm6257 = vweird.f32 %v6251
        %vm6258 = vmor %vm6256, %vm6257
        %v6259 = vsel %vm6258, %v6251, %v6255
        %v6260 = vand.u32 2147483647, %v5029
        %vm6261 = vcmp.eq.f32.partialorder %v6260, 8.507059e+37
        %v6262 = vand.u32 %v5029, 2147483648
        %v6263 = vor.u32 1.1754944e-38, %v6262
        %v6264 = vsel %vm6261, %v6263, %v6259
        %v6265 = vmul.f32 1.0, %v6264
        %v6266 = vrcp.pop %v5030
        %v6267 = vmul.f32 %v5030, %v6266
        %v6268 = vsub.f32 1.0, %v6267
        %v6269 = vmul.f32 %v6266, %v6268
        %v6270 = vadd.f32 %v6266, %v6269
        %vm6271 = vweird.f32 %v5030
        %vm6272 = vweird.f32 %v6266
        %vm6273 = vmor %vm6271, %vm6272
        %v6274 = vsel %vm6273, %v6266, %v6270
        %v6275 = vand.u32 2147483647, %v5030
        %vm6276 = vcmp.eq.f32.partialorder %v6275, 8.507059e+37
        %v6277 = vand.u32 %v5030, 2147483648
        %v6278 = vor.u32 1.1754944e-38, %v6277
        %v6279 = vsel %vm6276, %v6278, %v6274
        %v6280 = vmul.f32 1.0, %v6279
        %v6281 = vrcp.pop %v5031
        %v6282 = vmul.f32 %v5031, %v6281
        %v6283 = vsub.f32 1.0, %v6282
        %v6284 = vmul.f32 %v6281, %v6283
        %v6285 = vadd.f32 %v6281, %v6284
        %vm6286 = vweird.f32 %v5031
        %vm6287 = vweird.f32 %v6281
        %vm6288 = vmor %vm6286, %vm6287
        %v6289 = vsel %vm6288, %v6281, %v6285
        %v6290 = vand.u32 2147483647, %v5031
        %vm6291 = vcmp.eq.f32.partialorder %v6290, 8.507059e+37
        %v6292 = vand.u32 %v5031, 2147483648
        %v6293 = vor.u32 1.1754944e-38, %v6292
        %v6294 = vsel %vm6291, %v6293, %v6289
        %v6295 = vmul.f32 1.0, %v6294
        %v6296 = vrcp.pop %v5032
        %v6297 = vmul.f32 %v5032, %v6296
        %v6298 = vsub.f32 1.0, %v6297
        %v6299 = vmul.f32 %v6296, %v6298
        %v6300 = vadd.f32 %v6296, %v6299
        %vm6301 = vweird.f32 %v5032
        %vm6302 = vweird.f32 %v6296
        %vm6303 = vmor %vm6301, %vm6302
        %v6304 = vsel %vm6303, %v6296, %v6300
        %v6305 = vand.u32 2147483647, %v5032
        %vm6306 = vcmp.eq.f32.partialorder %v6305, 8.507059e+37
        %v6307 = vand.u32 %v5032, 2147483648
        %v6308 = vor.u32 1.1754944e-38, %v6307
        %v6309 = vsel %vm6306, %v6308, %v6304
        %v6310 = vmul.f32 1.0, %v6309
        %v6311 = vrcp.pop %v5033
        %v6312 = vmul.f32 %v5033, %v6311
        %v6313 = vsub.f32 1.0, %v6312
        %v6314 = vmul.f32 %v6311, %v6313
        %v6315 = vadd.f32 %v6311, %v6314
        %vm6316 = vweird.f32 %v5033
        %vm6317 = vweird.f32 %v6311
        %vm6318 = vmor %vm6316, %vm6317
        %v6319 = vsel %vm6318, %v6311, %v6315
        %v6320 = vand.u32 2147483647, %v5033
        %vm6321 = vcmp.eq.f32.partialorder %v6320, 8.507059e+37
        %v6322 = vand.u32 %v5033, 2147483648
        %v6323 = vor.u32 1.1754944e-38, %v6322
        %v6324 = vsel %vm6321, %v6323, %v6319
        %v6325 = vmul.f32 1.0, %v6324
        %v6326 = vrcp.pop %v5034
        %v6327 = vmul.f32 %v5034, %v6326
        %v6328 = vsub.f32 1.0, %v6327
        %v6329 = vmul.f32 %v6326, %v6328
        %v6330 = vadd.f32 %v6326, %v6329
        %vm6331 = vweird.f32 %v5034
        %vm6332 = vweird.f32 %v6326
        %vm6333 = vmor %vm6331, %vm6332
        %v6334 = vsel %vm6333, %v6326, %v6330
        %v6335 = vand.u32 2147483647, %v5034
        %vm6336 = vcmp.eq.f32.partialorder %v6335, 8.507059e+37
        %v6337 = vand.u32 %v5034, 2147483648
        %v6338 = vor.u32 1.1754944e-38, %v6337
        %v6339 = vsel %vm6336, %v6338, %v6334
        %v6340 = vmul.f32 1.0, %v6339
        %v6341 = vrcp.pop %v5035
        %v6342 = vmul.f32 %v5035, %v6341
        %v6343 = vsub.f32 1.0, %v6342
        %v6344 = vmul.f32 %v6341, %v6343
        %v6345 = vadd.f32 %v6341, %v6344
        %vm6346 = vweird.f32 %v5035
        %vm6347 = vweird.f32 %v6341
        %vm6348 = vmor %vm6346, %vm6347
        %v6349 = vsel %vm6348, %v6341, %v6345
        %v6350 = vand.u32 2147483647, %v5035
        %vm6351 = vcmp.eq.f32.partialorder %v6350, 8.507059e+37
        %v6352 = vand.u32 %v5035, 2147483648
        %v6353 = vor.u32 1.1754944e-38, %v6352
        %v6354 = vsel %vm6351, %v6353, %v6349
        %v6355 = vmul.f32 1.0, %v6354
        %v6356 = vrcp.pop %v5036
        %v6357 = vmul.f32 %v5036, %v6356
        %v6358 = vsub.f32 1.0, %v6357
        %v6359 = vmul.f32 %v6356, %v6358
        %v6360 = vadd.f32 %v6356, %v6359
        %vm6361 = vweird.f32 %v5036
        %vm6362 = vweird.f32 %v6356
        %vm6363 = vmor %vm6361, %vm6362
        %v6364 = vsel %vm6363, %v6356, %v6360
        %v6365 = vand.u32 2147483647, %v5036
        %vm6366 = vcmp.eq.f32.partialorder %v6365, 8.507059e+37
        %v6367 = vand.u32 %v5036, 2147483648
        %v6368 = vor.u32 1.1754944e-38, %v6367
        %v6369 = vsel %vm6366, %v6368, %v6364
        %v6370 = vmul.f32 1.0, %v6369
        %v6371 = vrcp.pop %v5037
        %v6372 = vmul.f32 %v5037, %v6371
        %v6373 = vsub.f32 1.0, %v6372
        %v6374 = vmul.f32 %v6371, %v6373
        %v6375 = vadd.f32 %v6371, %v6374
        %vm6376 = vweird.f32 %v5037
        %vm6377 = vweird.f32 %v6371
        %vm6378 = vmor %vm6376, %vm6377
        %v6379 = vsel %vm6378, %v6371, %v6375
        %v6380 = vand.u32 2147483647, %v5037
        %vm6381 = vcmp.eq.f32.partialorder %v6380, 8.507059e+37
        %v6382 = vand.u32 %v5037, 2147483648
        %v6383 = vor.u32 1.1754944e-38, %v6382
        %v6384 = vsel %vm6381, %v6383, %v6379
        %v6385 = vmul.f32 1.0, %v6384
        %v6386 = vrcp.pop %v5038
        %v6387 = vmul.f32 %v5038, %v6386
        %v6388 = vsub.f32 1.0, %v6387
        %v6389 = vmul.f32 %v6386, %v6388
        %v6390 = vadd.f32 %v6386, %v6389
        %vm6391 = vweird.f32 %v5038
        %vm6392 = vweird.f32 %v6386
        %vm6393 = vmor %vm6391, %vm6392
        %v6394 = vsel %vm6393, %v6386, %v6390
        %v6395 = vand.u32 2147483647, %v5038
        %vm6396 = vcmp.eq.f32.partialorder %v6395, 8.507059e+37
        %v6397 = vand.u32 %v5038, 2147483648
        %v6398 = vor.u32 1.1754944e-38, %v6397
        %v6399 = vsel %vm6396, %v6398, %v6394
        %v6400 = vmul.f32 1.0, %v6399
        %v6401 = vrcp.pop %v5039
        %v6402 = vmul.f32 %v5039, %v6401
        %v6403 = vsub.f32 1.0, %v6402
        %v6404 = vmul.f32 %v6401, %v6403
        %v6405 = vadd.f32 %v6401, %v6404
        %vm6406 = vweird.f32 %v5039
        %vm6407 = vweird.f32 %v6401
        %vm6408 = vmor %vm6406, %vm6407
        %v6409 = vsel %vm6408, %v6401, %v6405
        %v6410 = vand.u32 2147483647, %v5039
        %vm6411 = vcmp.eq.f32.partialorder %v6410, 8.507059e+37
        %v6412 = vand.u32 %v5039, 2147483648
        %v6413 = vor.u32 1.1754944e-38, %v6412
        %v6414 = vsel %vm6411, %v6413, %v6409
        %v6415 = vmul.f32 1.0, %v6414
        %v6416 = vrcp.pop %v5040
        %v6417 = vmul.f32 %v5040, %v6416
        %v6418 = vsub.f32 1.0, %v6417
        %v6419 = vmul.f32 %v6416, %v6418
        %v6420 = vadd.f32 %v6416, %v6419
        %vm6421 = vweird.f32 %v5040
        %vm6422 = vweird.f32 %v6416
        %vm6423 = vmor %vm6421, %vm6422
        %v6424 = vsel %vm6423, %v6416, %v6420
        %v6425 = vand.u32 2147483647, %v5040
        %vm6426 = vcmp.eq.f32.partialorder %v6425, 8.507059e+37
        %v6427 = vand.u32 %v5040, 2147483648
        %v6428 = vor.u32 1.1754944e-38, %v6427
        %v6429 = vsel %vm6426, %v6428, %v6424
        %v6430 = vmul.f32 1.0, %v6429
        %v6431 = vrcp.pop %v5041
        %v6432 = vmul.f32 %v5041, %v6431
        %v6433 = vsub.f32 1.0, %v6432
        %v6434 = vmul.f32 %v6431, %v6433
        %v6435 = vadd.f32 %v6431, %v6434
        %vm6436 = vweird.f32 %v5041
        %vm6437 = vweird.f32 %v6431
        %vm6438 = vmor %vm6436, %vm6437
        %v6439 = vsel %vm6438, %v6431, %v6435
        %v6440 = vand.u32 2147483647, %v5041
        %vm6441 = vcmp.eq.f32.partialorder %v6440, 8.507059e+37
        %v6442 = vand.u32 %v5041, 2147483648
        %v6443 = vor.u32 1.1754944e-38, %v6442
        %v6444 = vsel %vm6441, %v6443, %v6439
        %v6445 = vmul.f32 1.0, %v6444
        %v6446 = vrcp.pop %v5042
        %v6447 = vmul.f32 %v5042, %v6446
        %v6448 = vsub.f32 1.0, %v6447
        %v6449 = vmul.f32 %v6446, %v6448
        %v6450 = vadd.f32 %v6446, %v6449
        %vm6451 = vweird.f32 %v5042
        %vm6452 = vweird.f32 %v6446
        %vm6453 = vmor %vm6451, %vm6452
        %v6454 = vsel %vm6453, %v6446, %v6450
        %v6455 = vand.u32 2147483647, %v5042
        %vm6456 = vcmp.eq.f32.partialorder %v6455, 8.507059e+37
        %v6457 = vand.u32 %v5042, 2147483648
        %v6458 = vor.u32 1.1754944e-38, %v6457
        %v6459 = vsel %vm6456, %v6458, %v6454
        %v6460 = vmul.f32 1.0, %v6459
        %v6461 = vrcp.pop %v5043
        %v6462 = vmul.f32 %v5043, %v6461
        %v6463 = vsub.f32 1.0, %v6462
        %v6464 = vmul.f32 %v6461, %v6463
        %v6465 = vadd.f32 %v6461, %v6464
        %vm6466 = vweird.f32 %v5043
        %vm6467 = vweird.f32 %v6461
        %vm6468 = vmor %vm6466, %vm6467
        %v6469 = vsel %vm6468, %v6461, %v6465
        %v6470 = vand.u32 2147483647, %v5043
        %vm6471 = vcmp.eq.f32.partialorder %v6470, 8.507059e+37
        %v6472 = vand.u32 %v5043, 2147483648
        %v6473 = vor.u32 1.1754944e-38, %v6472
        %v6474 = vsel %vm6471, %v6473, %v6469
        %v6475 = vmul.f32 1.0, %v6474
        %v6476 = vrcp.pop %v5044
        %v6477 = vmul.f32 %v5044, %v6476
        %v6478 = vsub.f32 1.0, %v6477
        %v6479 = vmul.f32 %v6476, %v6478
        %v6480 = vadd.f32 %v6476, %v6479
        %vm6481 = vweird.f32 %v5044
        %vm6482 = vweird.f32 %v6476
        %vm6483 = vmor %vm6481, %vm6482
        %v6484 = vsel %vm6483, %v6476, %v6480
        %v6485 = vand.u32 2147483647, %v5044
        %vm6486 = vcmp.eq.f32.partialorder %v6485, 8.507059e+37
        %v6487 = vand.u32 %v5044, 2147483648
        %v6488 = vor.u32 1.1754944e-38, %v6487
        %v6489 = vsel %vm6486, %v6488, %v6484
        %v6490 = vmul.f32 1.0, %v6489
        %v6491 = vrcp.pop %v5045
        %v6492 = vmul.f32 %v5045, %v6491
        %v6493 = vsub.f32 1.0, %v6492
        %v6494 = vmul.f32 %v6491, %v6493
        %v6495 = vadd.f32 %v6491, %v6494
        %vm6496 = vweird.f32 %v5045
        %vm6497 = vweird.f32 %v6491
        %vm6498 = vmor %vm6496, %vm6497
        %v6499 = vsel %vm6498, %v6491, %v6495
        %v6500 = vand.u32 2147483647, %v5045
        %vm6501 = vcmp.eq.f32.partialorder %v6500, 8.507059e+37
        %v6502 = vand.u32 %v5045, 2147483648
        %v6503 = vor.u32 1.1754944e-38, %v6502
        %v6504 = vsel %vm6501, %v6503, %v6499
        %v6505 = vmul.f32 1.0, %v6504
        %v6506 = vrcp.pop %v5046
        %v6507 = vmul.f32 %v5046, %v6506
        %v6508 = vsub.f32 1.0, %v6507
        %v6509 = vmul.f32 %v6506, %v6508
        %v6510 = vadd.f32 %v6506, %v6509
        %vm6511 = vweird.f32 %v5046
        %vm6512 = vweird.f32 %v6506
        %vm6513 = vmor %vm6511, %vm6512
        %v6514 = vsel %vm6513, %v6506, %v6510
        %v6515 = vand.u32 2147483647, %v5046
        %vm6516 = vcmp.eq.f32.partialorder %v6515, 8.507059e+37
        %v6517 = vand.u32 %v5046, 2147483648
        %v6518 = vor.u32 1.1754944e-38, %v6517
        %v6519 = vsel %vm6516, %v6518, %v6514
        %v6520 = vmul.f32 1.0, %v6519
        %v6521 = vrcp.pop %v5047
        %v6522 = vmul.f32 %v5047, %v6521
        %v6523 = vsub.f32 1.0, %v6522
        %v6524 = vmul.f32 %v6521, %v6523
        %v6525 = vadd.f32 %v6521, %v6524
        %vm6526 = vweird.f32 %v5047
        %vm6527 = vweird.f32 %v6521
        %vm6528 = vmor %vm6526, %vm6527
        %v6529 = vsel %vm6528, %v6521, %v6525
        %v6530 = vand.u32 2147483647, %v5047
        %vm6531 = vcmp.eq.f32.partialorder %v6530, 8.507059e+37
        %v6532 = vand.u32 %v5047, 2147483648
        %v6533 = vor.u32 1.1754944e-38, %v6532
        %v6534 = vsel %vm6531, %v6533, %v6529
        %v6535 = vmul.f32 1.0, %v6534
        %v6536 = vrcp.pop %v5048
        %v6537 = vmul.f32 %v5048, %v6536
        %v6538 = vsub.f32 1.0, %v6537
        %v6539 = vmul.f32 %v6536, %v6538
        %v6540 = vadd.f32 %v6536, %v6539
        %vm6541 = vweird.f32 %v5048
        %vm6542 = vweird.f32 %v6536
        %vm6543 = vmor %vm6541, %vm6542
        %v6544 = vsel %vm6543, %v6536, %v6540
        %v6545 = vand.u32 2147483647, %v5048
        %vm6546 = vcmp.eq.f32.partialorder %v6545, 8.507059e+37
        %v6547 = vand.u32 %v5048, 2147483648
        %v6548 = vor.u32 1.1754944e-38, %v6547
        %v6549 = vsel %vm6546, %v6548, %v6544
        %v6550 = vmul.f32 1.0, %v6549
        %v6551 = vrcp.pop %v5049
        %v6552 = vmul.f32 %v5049, %v6551
        %v6553 = vsub.f32 1.0, %v6552
        %v6554 = vmul.f32 %v6551, %v6553
        %v6555 = vadd.f32 %v6551, %v6554
        %vm6556 = vweird.f32 %v5049
        %vm6557 = vweird.f32 %v6551
        %vm6558 = vmor %vm6556, %vm6557
        %v6559 = vsel %vm6558, %v6551, %v6555
        %v6560 = vand.u32 2147483647, %v5049
        %vm6561 = vcmp.eq.f32.partialorder %v6560, 8.507059e+37
        %v6562 = vand.u32 %v5049, 2147483648
        %v6563 = vor.u32 1.1754944e-38, %v6562
        %v6564 = vsel %vm6561, %v6563, %v6559
        %v6565 = vmul.f32 1.0, %v6564
        %v6566 = vrcp.pop %v5050
        %v6567 = vmul.f32 %v5050, %v6566
        %v6568 = vsub.f32 1.0, %v6567
        %v6569 = vmul.f32 %v6566, %v6568
        %v6570 = vadd.f32 %v6566, %v6569
        %vm6571 = vweird.f32 %v5050
        %vm6572 = vweird.f32 %v6566
        %vm6573 = vmor %vm6571, %vm6572
        %v6574 = vsel %vm6573, %v6566, %v6570
        %v6575 = vand.u32 2147483647, %v5050
        %vm6576 = vcmp.eq.f32.partialorder %v6575, 8.507059e+37
        %v6577 = vand.u32 %v5050, 2147483648
        %v6578 = vor.u32 1.1754944e-38, %v6577
        %v6579 = vsel %vm6576, %v6578, %v6574
        %v6580 = vmul.f32 1.0, %v6579
        %v6581 = vrcp.pop %v5051
        %v6582 = vmul.f32 %v5051, %v6581
        %v6583 = vsub.f32 1.0, %v6582
        %v6584 = vmul.f32 %v6581, %v6583
        %v6585 = vadd.f32 %v6581, %v6584
        %vm6586 = vweird.f32 %v5051
        %vm6587 = vweird.f32 %v6581
        %vm6588 = vmor %vm6586, %vm6587
        %v6589 = vsel %vm6588, %v6581, %v6585
        %v6590 = vand.u32 2147483647, %v5051
        %vm6591 = vcmp.eq.f32.partialorder %v6590, 8.507059e+37
        %v6592 = vand.u32 %v5051, 2147483648
        %v6593 = vor.u32 1.1754944e-38, %v6592
        %v6594 = vsel %vm6591, %v6593, %v6589
        %v6595 = vmul.f32 1.0, %v6594
        %v6596 = vrcp.pop %v5052
        %v6597 = vmul.f32 %v5052, %v6596
        %v6598 = vsub.f32 1.0, %v6597
        %v6599 = vmul.f32 %v6596, %v6598
        %v6600 = vadd.f32 %v6596, %v6599
        %vm6601 = vweird.f32 %v5052
        %vm6602 = vweird.f32 %v6596
        %vm6603 = vmor %vm6601, %vm6602
        %v6604 = vsel %vm6603, %v6596, %v6600
        %v6605 = vand.u32 2147483647, %v5052
        %vm6606 = vcmp.eq.f32.partialorder %v6605, 8.507059e+37
        %v6607 = vand.u32 %v5052, 2147483648
        %v6608 = vor.u32 1.1754944e-38, %v6607
        %v6609 = vsel %vm6606, %v6608, %v6604
        %v6610 = vmul.f32 1.0, %v6609
        %v6611 = vrcp.pop %v5053
        %v6612 = vmul.f32 %v5053, %v6611
        %v6613 = vsub.f32 1.0, %v6612
        %v6614 = vmul.f32 %v6611, %v6613
        %v6615 = vadd.f32 %v6611, %v6614
        %vm6616 = vweird.f32 %v5053
        %vm6617 = vweird.f32 %v6611
        %vm6618 = vmor %vm6616, %vm6617
        %v6619 = vsel %vm6618, %v6611, %v6615
        %v6620 = vand.u32 2147483647, %v5053
        %vm6621 = vcmp.eq.f32.partialorder %v6620, 8.507059e+37
        %v6622 = vand.u32 %v5053, 2147483648
        %v6623 = vor.u32 1.1754944e-38, %v6622
        %v6624 = vsel %vm6621, %v6623, %v6619
        %v6625 = vmul.f32 1.0, %v6624
        %v6626 = vrcp.pop %v5054
        %v6627 = vmul.f32 %v5054, %v6626
        %v6628 = vsub.f32 1.0, %v6627
        %v6629 = vmul.f32 %v6626, %v6628
        %v6630 = vadd.f32 %v6626, %v6629
        %vm6631 = vweird.f32 %v5054
        %vm6632 = vweird.f32 %v6626
        %vm6633 = vmor %vm6631, %vm6632
        %v6634 = vsel %vm6633, %v6626, %v6630
        %v6635 = vand.u32 2147483647, %v5054
        %vm6636 = vcmp.eq.f32.partialorder %v6635, 8.507059e+37
        %v6637 = vand.u32 %v5054, 2147483648
        %v6638 = vor.u32 1.1754944e-38, %v6637
        %v6639 = vsel %vm6636, %v6638, %v6634
        %v6640 = vmul.f32 1.0, %v6639
        %v6641 = vrcp.pop %v5055
        %v6642 = vmul.f32 %v5055, %v6641
        %v6643 = vsub.f32 1.0, %v6642
        %v6644 = vmul.f32 %v6641, %v6643
        %v6645 = vadd.f32 %v6641, %v6644
        %vm6646 = vweird.f32 %v5055
        %vm6647 = vweird.f32 %v6641
        %vm6648 = vmor %vm6646, %vm6647
        %v6649 = vsel %vm6648, %v6641, %v6645
        %v6650 = vand.u32 2147483647, %v5055
        %vm6651 = vcmp.eq.f32.partialorder %v6650, 8.507059e+37
        %v6652 = vand.u32 %v5055, 2147483648
        %v6653 = vor.u32 1.1754944e-38, %v6652
        %v6654 = vsel %vm6651, %v6653, %v6649
        %v6655 = vmul.f32 1.0, %v6654
        %v6656 = vrcp.pop %v5056
        %v6657 = vmul.f32 %v5056, %v6656
        %v6658 = vsub.f32 1.0, %v6657
        %v6659 = vmul.f32 %v6656, %v6658
        %v6660 = vadd.f32 %v6656, %v6659
        %vm6661 = vweird.f32 %v5056
        %vm6662 = vweird.f32 %v6656
        %vm6663 = vmor %vm6661, %vm6662
        %v6664 = vsel %vm6663, %v6656, %v6660
        %v6665 = vand.u32 2147483647, %v5056
        %vm6666 = vcmp.eq.f32.partialorder %v6665, 8.507059e+37
        %v6667 = vand.u32 %v5056, 2147483648
        %v6668 = vor.u32 1.1754944e-38, %v6667
        %v6669 = vsel %vm6666, %v6668, %v6664
        %v6670 = vmul.f32 1.0, %v6669
        %v6671 = vrcp.pop %v5057
        %v6672 = vmul.f32 %v5057, %v6671
        %v6673 = vsub.f32 1.0, %v6672
        %v6674 = vmul.f32 %v6671, %v6673
        %v6675 = vadd.f32 %v6671, %v6674
        %vm6676 = vweird.f32 %v5057
        %vm6677 = vweird.f32 %v6671
        %vm6678 = vmor %vm6676, %vm6677
        %v6679 = vsel %vm6678, %v6671, %v6675
        %v6680 = vand.u32 2147483647, %v5057
        %vm6681 = vcmp.eq.f32.partialorder %v6680, 8.507059e+37
        %v6682 = vand.u32 %v5057, 2147483648
        %v6683 = vor.u32 1.1754944e-38, %v6682
        %v6684 = vsel %vm6681, %v6683, %v6679
        %v6685 = vmul.f32 1.0, %v6684
        %v6686 = vrcp.pop %v5058
        %v6687 = vmul.f32 %v5058, %v6686
        %v6688 = vsub.f32 1.0, %v6687
        %v6689 = vmul.f32 %v6686, %v6688
        %v6690 = vadd.f32 %v6686, %v6689
        %vm6691 = vweird.f32 %v5058
        %vm6692 = vweird.f32 %v6686
        %vm6693 = vmor %vm6691, %vm6692
        %v6694 = vsel %vm6693, %v6686, %v6690
        %v6695 = vand.u32 2147483647, %v5058
        %vm6696 = vcmp.eq.f32.partialorder %v6695, 8.507059e+37
        %v6697 = vand.u32 %v5058, 2147483648
        %v6698 = vor.u32 1.1754944e-38, %v6697
        %v6699 = vsel %vm6696, %v6698, %v6694
        %v6700 = vmul.f32 1.0, %v6699
        %v6701 = vrcp.pop %v5059
        %v6702 = vmul.f32 %v5059, %v6701
        %v6703 = vsub.f32 1.0, %v6702
        %v6704 = vmul.f32 %v6701, %v6703
        %v6705 = vadd.f32 %v6701, %v6704
        %vm6706 = vweird.f32 %v5059
        %vm6707 = vweird.f32 %v6701
        %vm6708 = vmor %vm6706, %vm6707
        %v6709 = vsel %vm6708, %v6701, %v6705
        %v6710 = vand.u32 2147483647, %v5059
        %vm6711 = vcmp.eq.f32.partialorder %v6710, 8.507059e+37
        %v6712 = vand.u32 %v5059, 2147483648
        %v6713 = vor.u32 1.1754944e-38, %v6712
        %v6714 = vsel %vm6711, %v6713, %v6709
        %v6715 = vmul.f32 1.0, %v6714
        %v6716 = vrcp.pop %v5060
        %v6717 = vmul.f32 %v5060, %v6716
        %v6718 = vsub.f32 1.0, %v6717
        %v6719 = vmul.f32 %v6716, %v6718
        %v6720 = vadd.f32 %v6716, %v6719
        %vm6721 = vweird.f32 %v5060
        %vm6722 = vweird.f32 %v6716
        %vm6723 = vmor %vm6721, %vm6722
        %v6724 = vsel %vm6723, %v6716, %v6720
        %v6725 = vand.u32 2147483647, %v5060
        %vm6726 = vcmp.eq.f32.partialorder %v6725, 8.507059e+37
        %v6727 = vand.u32 %v5060, 2147483648
        %v6728 = vor.u32 1.1754944e-38, %v6727
        %v6729 = vsel %vm6726, %v6728, %v6724
        %v6730 = vmul.f32 1.0, %v6729
        %v6731 = vrcp.pop %v5061
        %v6732 = vmul.f32 %v5061, %v6731
        %v6733 = vsub.f32 1.0, %v6732
        %v6734 = vmul.f32 %v6731, %v6733
        %v6735 = vadd.f32 %v6731, %v6734
        %vm6736 = vweird.f32 %v5061
        %vm6737 = vweird.f32 %v6731
        %vm6738 = vmor %vm6736, %vm6737
        %v6739 = vsel %vm6738, %v6731, %v6735
        %v6740 = vand.u32 2147483647, %v5061
        %vm6741 = vcmp.eq.f32.partialorder %v6740, 8.507059e+37
        %v6742 = vand.u32 %v5061, 2147483648
        %v6743 = vor.u32 1.1754944e-38, %v6742
        %v6744 = vsel %vm6741, %v6743, %v6739
        %v6745 = vmul.f32 1.0, %v6744
        %v6746 = vrcp.pop %v5062
        %v6747 = vmul.f32 %v5062, %v6746
        %v6748 = vsub.f32 1.0, %v6747
        %v6749 = vmul.f32 %v6746, %v6748
        %v6750 = vadd.f32 %v6746, %v6749
        %vm6751 = vweird.f32 %v5062
        %vm6752 = vweird.f32 %v6746
        %vm6753 = vmor %vm6751, %vm6752
        %v6754 = vsel %vm6753, %v6746, %v6750
        %v6755 = vand.u32 2147483647, %v5062
        %vm6756 = vcmp.eq.f32.partialorder %v6755, 8.507059e+37
        %v6757 = vand.u32 %v5062, 2147483648
        %v6758 = vor.u32 1.1754944e-38, %v6757
        %v6759 = vsel %vm6756, %v6758, %v6754
        %v6760 = vmul.f32 1.0, %v6759
        %v6761 = vrcp.pop %v5063
        %v6762 = vmul.f32 %v5063, %v6761
        %v6763 = vsub.f32 1.0, %v6762
        %v6764 = vmul.f32 %v6761, %v6763
        %v6765 = vadd.f32 %v6761, %v6764
        %vm6766 = vweird.f32 %v5063
        %vm6767 = vweird.f32 %v6761
        %vm6768 = vmor %vm6766, %vm6767
        %v6769 = vsel %vm6768, %v6761, %v6765
        %v6770 = vand.u32 2147483647, %v5063
        %vm6771 = vcmp.eq.f32.partialorder %v6770, 8.507059e+37
        %v6772 = vand.u32 %v5063, 2147483648
        %v6773 = vor.u32 1.1754944e-38, %v6772
        %v6774 = vsel %vm6771, %v6773, %v6769
        %v6775 = vmul.f32 1.0, %v6774
        %v6776 = vrcp.pop %v5064
        %v6777 = vmul.f32 %v5064, %v6776
        %v6778 = vsub.f32 1.0, %v6777
        %v6779 = vmul.f32 %v6776, %v6778
        %v6780 = vadd.f32 %v6776, %v6779
        %vm6781 = vweird.f32 %v5064
        %vm6782 = vweird.f32 %v6776
        %vm6783 = vmor %vm6781, %vm6782
        %v6784 = vsel %vm6783, %v6776, %v6780
        %v6785 = vand.u32 2147483647, %v5064
        %vm6786 = vcmp.eq.f32.partialorder %v6785, 8.507059e+37
        %v6787 = vand.u32 %v5064, 2147483648
        %v6788 = vor.u32 1.1754944e-38, %v6787
        %v6789 = vsel %vm6786, %v6788, %v6784
        %v6790 = vmul.f32 1.0, %v6789
        %v6791 = vrcp.pop %v5065
        %v6792 = vmul.f32 %v5065, %v6791
        %v6793 = vsub.f32 1.0, %v6792
        %v6794 = vmul.f32 %v6791, %v6793
        %v6795 = vadd.f32 %v6791, %v6794
        %vm6796 = vweird.f32 %v5065
        %vm6797 = vweird.f32 %v6791
        %vm6798 = vmor %vm6796, %vm6797
        %v6799 = vsel %vm6798, %v6791, %v6795
        %v6800 = vand.u32 2147483647, %v5065
        %vm6801 = vcmp.eq.f32.partialorder %v6800, 8.507059e+37
        %v6802 = vand.u32 %v5065, 2147483648
        %v6803 = vor.u32 1.1754944e-38, %v6802
        %v6804 = vsel %vm6801, %v6803, %v6799
        %v6805 = vmul.f32 1.0, %v6804
        %v6806 = vrcp.pop %v5066
        %v6807 = vmul.f32 %v5066, %v6806
        %v6808 = vsub.f32 1.0, %v6807
        %v6809 = vmul.f32 %v6806, %v6808
        %v6810 = vadd.f32 %v6806, %v6809
        %vm6811 = vweird.f32 %v5066
        %vm6812 = vweird.f32 %v6806
        %vm6813 = vmor %vm6811, %vm6812
        %v6814 = vsel %vm6813, %v6806, %v6810
        %v6815 = vand.u32 2147483647, %v5066
        %vm6816 = vcmp.eq.f32.partialorder %v6815, 8.507059e+37
        %v6817 = vand.u32 %v5066, 2147483648
        %v6818 = vor.u32 1.1754944e-38, %v6817
        %v6819 = vsel %vm6816, %v6818, %v6814
        %v6820 = vmul.f32 1.0, %v6819
        %v6821 = vrcp.pop %v5067
        %v6822 = vmul.f32 %v5067, %v6821
        %v6823 = vsub.f32 1.0, %v6822
        %v6824 = vmul.f32 %v6821, %v6823
        %v6825 = vadd.f32 %v6821, %v6824
        %vm6826 = vweird.f32 %v5067
        %vm6827 = vweird.f32 %v6821
        %vm6828 = vmor %vm6826, %vm6827
        %v6829 = vsel %vm6828, %v6821, %v6825
        %v6830 = vand.u32 2147483647, %v5067
        %vm6831 = vcmp.eq.f32.partialorder %v6830, 8.507059e+37
        %v6832 = vand.u32 %v5067, 2147483648
        %v6833 = vor.u32 1.1754944e-38, %v6832
        %v6834 = vsel %vm6831, %v6833, %v6829
        %v6835 = vmul.f32 1.0, %v6834
        %v6836 = vrcp.pop %v5068
        %v6837 = vmul.f32 %v5068, %v6836
        %v6838 = vsub.f32 1.0, %v6837
        %v6839 = vmul.f32 %v6836, %v6838
        %v6840 = vadd.f32 %v6836, %v6839
        %vm6841 = vweird.f32 %v5068
        %vm6842 = vweird.f32 %v6836
        %vm6843 = vmor %vm6841, %vm6842
        %v6844 = vsel %vm6843, %v6836, %v6840
        %v6845 = vand.u32 2147483647, %v5068
        %vm6846 = vcmp.eq.f32.partialorder %v6845, 8.507059e+37
        %v6847 = vand.u32 %v5068, 2147483648
        %v6848 = vor.u32 1.1754944e-38, %v6847
        %v6849 = vsel %vm6846, %v6848, %v6844
        %v6850 = vmul.f32 1.0, %v6849
        %v6851 = vrcp.pop %v5069
        %v6852 = vmul.f32 %v5069, %v6851
        %v6853 = vsub.f32 1.0, %v6852
        %v6854 = vmul.f32 %v6851, %v6853
        %v6855 = vadd.f32 %v6851, %v6854
        %vm6856 = vweird.f32 %v5069
        %vm6857 = vweird.f32 %v6851
        %vm6858 = vmor %vm6856, %vm6857
        %v6859 = vsel %vm6858, %v6851, %v6855
        %v6860 = vand.u32 2147483647, %v5069
        %vm6861 = vcmp.eq.f32.partialorder %v6860, 8.507059e+37
        %v6862 = vand.u32 %v5069, 2147483648
        %v6863 = vor.u32 1.1754944e-38, %v6862
        %v6864 = vsel %vm6861, %v6863, %v6859
        %v6865 = vmul.f32 1.0, %v6864
        %v6866 = vrcp.pop %v5070
        %v6867 = vmul.f32 %v5070, %v6866
        %v6868 = vsub.f32 1.0, %v6867
        %v6869 = vmul.f32 %v6866, %v6868
        %v6870 = vadd.f32 %v6866, %v6869
        %vm6871 = vweird.f32 %v5070
        %vm6872 = vweird.f32 %v6866
        %vm6873 = vmor %vm6871, %vm6872
        %v6874 = vsel %vm6873, %v6866, %v6870
        %v6875 = vand.u32 2147483647, %v5070
        %vm6876 = vcmp.eq.f32.partialorder %v6875, 8.507059e+37
        %v6877 = vand.u32 %v5070, 2147483648
        %v6878 = vor.u32 1.1754944e-38, %v6877
        %v6879 = vsel %vm6876, %v6878, %v6874
        %v6880 = vmul.f32 1.0, %v6879
        %v6881 = vrcp.pop %v5071
        %v6882 = vmul.f32 %v5071, %v6881
        %v6883 = vsub.f32 1.0, %v6882
        %v6884 = vmul.f32 %v6881, %v6883
        %v6885 = vadd.f32 %v6881, %v6884
        %vm6886 = vweird.f32 %v5071
        %vm6887 = vweird.f32 %v6881
        %vm6888 = vmor %vm6886, %vm6887
        %v6889 = vsel %vm6888, %v6881, %v6885
        %v6890 = vand.u32 2147483647, %v5071
        %vm6891 = vcmp.eq.f32.partialorder %v6890, 8.507059e+37
        %v6892 = vand.u32 %v5071, 2147483648
        %v6893 = vor.u32 1.1754944e-38, %v6892
        %v6894 = vsel %vm6891, %v6893, %v6889
        %v6895 = vmul.f32 1.0, %v6894
        %v6896 = vrcp.pop %v5072
        %v6897 = vmul.f32 %v5072, %v6896
        %v6898 = vsub.f32 1.0, %v6897
        %v6899 = vmul.f32 %v6896, %v6898
        %v6900 = vadd.f32 %v6896, %v6899
        %vm6901 = vweird.f32 %v5072
        %vm6902 = vweird.f32 %v6896
        %vm6903 = vmor %vm6901, %vm6902
        %v6904 = vsel %vm6903, %v6896, %v6900
        %v6905 = vand.u32 2147483647, %v5072
        %vm6906 = vcmp.eq.f32.partialorder %v6905, 8.507059e+37
        %v6907 = vand.u32 %v5072, 2147483648
        %v6908 = vor.u32 1.1754944e-38, %v6907
        %v6909 = vsel %vm6906, %v6908, %v6904
        %v6910 = vmul.f32 1.0, %v6909
        %v6911 = vrcp.pop %v5073
        %v6912 = vmul.f32 %v5073, %v6911
        %v6913 = vsub.f32 1.0, %v6912
        %v6914 = vmul.f32 %v6911, %v6913
        %v6915 = vadd.f32 %v6911, %v6914
        %vm6916 = vweird.f32 %v5073
        %vm6917 = vweird.f32 %v6911
        %vm6918 = vmor %vm6916, %vm6917
        %v6919 = vsel %vm6918, %v6911, %v6915
        %v6920 = vand.u32 2147483647, %v5073
        %vm6921 = vcmp.eq.f32.partialorder %v6920, 8.507059e+37
        %v6922 = vand.u32 %v5073, 2147483648
        %v6923 = vor.u32 1.1754944e-38, %v6922
        %v6924 = vsel %vm6921, %v6923, %v6919
        %v6925 = vmul.f32 1.0, %v6924
        %v6926 = vrcp.pop %v5074
        %v6927 = vmul.f32 %v5074, %v6926
        %v6928 = vsub.f32 1.0, %v6927
        %v6929 = vmul.f32 %v6926, %v6928
        %v6930 = vadd.f32 %v6926, %v6929
        %vm6931 = vweird.f32 %v5074
        %vm6932 = vweird.f32 %v6926
        %vm6933 = vmor %vm6931, %vm6932
        %v6934 = vsel %vm6933, %v6926, %v6930
        %v6935 = vand.u32 2147483647, %v5074
        %vm6936 = vcmp.eq.f32.partialorder %v6935, 8.507059e+37
        %v6937 = vand.u32 %v5074, 2147483648
        %v6938 = vor.u32 1.1754944e-38, %v6937
        %v6939 = vsel %vm6936, %v6938, %v6934
        %v6940 = vmul.f32 1.0, %v6939
        %v6941 = vrcp.pop %v5075
        %v6942 = vmul.f32 %v5075, %v6941
        %v6943 = vsub.f32 1.0, %v6942
        %v6944 = vmul.f32 %v6941, %v6943
        %v6945 = vadd.f32 %v6941, %v6944
        %vm6946 = vweird.f32 %v5075
        %vm6947 = vweird.f32 %v6941
        %vm6948 = vmor %vm6946, %vm6947
        %v6949 = vsel %vm6948, %v6941, %v6945
        %v6950 = vand.u32 2147483647, %v5075
        %vm6951 = vcmp.eq.f32.partialorder %v6950, 8.507059e+37
        %v6952 = vand.u32 %v5075, 2147483648
        %v6953 = vor.u32 1.1754944e-38, %v6952
        %v6954 = vsel %vm6951, %v6953, %v6949
        %v6955 = vmul.f32 1.0, %v6954
        %v6956 = vrcp.pop %v5076
        %v6957 = vmul.f32 %v5076, %v6956
        %v6958 = vsub.f32 1.0, %v6957
        %v6959 = vmul.f32 %v6956, %v6958
        %v6960 = vadd.f32 %v6956, %v6959
        %vm6961 = vweird.f32 %v5076
        %vm6962 = vweird.f32 %v6956
        %vm6963 = vmor %vm6961, %vm6962
        %v6964 = vsel %vm6963, %v6956, %v6960
        %v6965 = vand.u32 2147483647, %v5076
        %vm6966 = vcmp.eq.f32.partialorder %v6965, 8.507059e+37
        %v6967 = vand.u32 %v5076, 2147483648
        %v6968 = vor.u32 1.1754944e-38, %v6967
        %v6969 = vsel %vm6966, %v6968, %v6964
        %v6970 = vmul.f32 1.0, %v6969
        %v6971 = vrcp.pop %v5077
        %v6972 = vmul.f32 %v5077, %v6971
        %v6973 = vsub.f32 1.0, %v6972
        %v6974 = vmul.f32 %v6971, %v6973
        %v6975 = vadd.f32 %v6971, %v6974
        %vm6976 = vweird.f32 %v5077
        %vm6977 = vweird.f32 %v6971
        %vm6978 = vmor %vm6976, %vm6977
        %v6979 = vsel %vm6978, %v6971, %v6975
        %v6980 = vand.u32 2147483647, %v5077
        %vm6981 = vcmp.eq.f32.partialorder %v6980, 8.507059e+37
        %v6982 = vand.u32 %v5077, 2147483648
        %v6983 = vor.u32 1.1754944e-38, %v6982
        %v6984 = vsel %vm6981, %v6983, %v6979
        %v6985 = vmul.f32 1.0, %v6984
        %v6986 = vrcp.pop %v5078
        %v6987 = vmul.f32 %v5078, %v6986
        %v6988 = vsub.f32 1.0, %v6987
        %v6989 = vmul.f32 %v6986, %v6988
        %v6990 = vadd.f32 %v6986, %v6989
        %vm6991 = vweird.f32 %v5078
        %vm6992 = vweird.f32 %v6986
        %vm6993 = vmor %vm6991, %vm6992
        %v6994 = vsel %vm6993, %v6986, %v6990
        %v6995 = vand.u32 2147483647, %v5078
        %vm6996 = vcmp.eq.f32.partialorder %v6995, 8.507059e+37
        %v6997 = vand.u32 %v5078, 2147483648
        %v6998 = vor.u32 1.1754944e-38, %v6997
        %v6999 = vsel %vm6996, %v6998, %v6994
        %v7000 = vmul.f32 1.0, %v6999
        %v7001 = vrcp.pop %v5079
        %v7002 = vmul.f32 %v5079, %v7001
        %v7003 = vsub.f32 1.0, %v7002
        %v7004 = vmul.f32 %v7001, %v7003
        %v7005 = vadd.f32 %v7001, %v7004
        %vm7006 = vweird.f32 %v5079
        %vm7007 = vweird.f32 %v7001
        %vm7008 = vmor %vm7006, %vm7007
        %v7009 = vsel %vm7008, %v7001, %v7005
        %v7010 = vand.u32 2147483647, %v5079
        %vm7011 = vcmp.eq.f32.partialorder %v7010, 8.507059e+37
        %v7012 = vand.u32 %v5079, 2147483648
        %v7013 = vor.u32 1.1754944e-38, %v7012
        %v7014 = vsel %vm7011, %v7013, %v7009
        %v7015 = vmul.f32 1.0, %v7014
        %v7016 = vrcp.pop %v5080
        %v7017 = vmul.f32 %v5080, %v7016
        %v7018 = vsub.f32 1.0, %v7017
        %v7019 = vmul.f32 %v7016, %v7018
        %v7020 = vadd.f32 %v7016, %v7019
        %vm7021 = vweird.f32 %v5080
        %vm7022 = vweird.f32 %v7016
        %vm7023 = vmor %vm7021, %vm7022
        %v7024 = vsel %vm7023, %v7016, %v7020
        %v7025 = vand.u32 2147483647, %v5080
        %vm7026 = vcmp.eq.f32.partialorder %v7025, 8.507059e+37
        %v7027 = vand.u32 %v5080, 2147483648
        %v7028 = vor.u32 1.1754944e-38, %v7027
        %v7029 = vsel %vm7026, %v7028, %v7024
        %v7030 = vmul.f32 1.0, %v7029
        %v7031 = vrcp.pop %v5081
        %v7032 = vmul.f32 %v5081, %v7031
        %v7033 = vsub.f32 1.0, %v7032
        %v7034 = vmul.f32 %v7031, %v7033
        %v7035 = vadd.f32 %v7031, %v7034
        %vm7036 = vweird.f32 %v5081
        %vm7037 = vweird.f32 %v7031
        %vm7038 = vmor %vm7036, %vm7037
        %v7039 = vsel %vm7038, %v7031, %v7035
        %v7040 = vand.u32 2147483647, %v5081
        %vm7041 = vcmp.eq.f32.partialorder %v7040, 8.507059e+37
        %v7042 = vand.u32 %v5081, 2147483648
        %v7043 = vor.u32 1.1754944e-38, %v7042
        %v7044 = vsel %vm7041, %v7043, %v7039
        %v7045 = vmul.f32 1.0, %v7044
        %v7046 = vrcp.pop %v5082
        %v7047 = vmul.f32 %v5082, %v7046
        %v7048 = vsub.f32 1.0, %v7047
        %v7049 = vmul.f32 %v7046, %v7048
        %v7050 = vadd.f32 %v7046, %v7049
        %vm7051 = vweird.f32 %v5082
        %vm7052 = vweird.f32 %v7046
        %vm7053 = vmor %vm7051, %vm7052
        %v7054 = vsel %vm7053, %v7046, %v7050
        %v7055 = vand.u32 2147483647, %v5082
        %vm7056 = vcmp.eq.f32.partialorder %v7055, 8.507059e+37
        %v7057 = vand.u32 %v5082, 2147483648
        %v7058 = vor.u32 1.1754944e-38, %v7057
        %v7059 = vsel %vm7056, %v7058, %v7054
        %v7060 = vmul.f32 1.0, %v7059
        %v7061 = vrcp.pop %v5083
        %v7062 = vmul.f32 %v5083, %v7061
        %v7063 = vsub.f32 1.0, %v7062
        %v7064 = vmul.f32 %v7061, %v7063
        %v7065 = vadd.f32 %v7061, %v7064
        %vm7066 = vweird.f32 %v5083
        %vm7067 = vweird.f32 %v7061
        %vm7068 = vmor %vm7066, %vm7067
        %v7069 = vsel %vm7068, %v7061, %v7065
        %v7070 = vand.u32 2147483647, %v5083
        %vm7071 = vcmp.eq.f32.partialorder %v7070, 8.507059e+37
        %v7072 = vand.u32 %v5083, 2147483648
        %v7073 = vor.u32 1.1754944e-38, %v7072
        %v7074 = vsel %vm7071, %v7073, %v7069
        %v7075 = vmul.f32 1.0, %v7074
        %v7076 = vrcp.pop %v5084
        %v7077 = vmul.f32 %v5084, %v7076
        %v7078 = vsub.f32 1.0, %v7077
        %v7079 = vmul.f32 %v7076, %v7078
        %v7080 = vadd.f32 %v7076, %v7079
        %vm7081 = vweird.f32 %v5084
        %vm7082 = vweird.f32 %v7076
        %vm7083 = vmor %vm7081, %vm7082
        %v7084 = vsel %vm7083, %v7076, %v7080
        %v7085 = vand.u32 2147483647, %v5084
        %vm7086 = vcmp.eq.f32.partialorder %v7085, 8.507059e+37
        %v7087 = vand.u32 %v5084, 2147483648
        %v7088 = vor.u32 1.1754944e-38, %v7087
        %v7089 = vsel %vm7086, %v7088, %v7084
        %v7090 = vmul.f32 1.0, %v7089
        %v7091 = vrcp.pop %v5085
        %v7092 = vmul.f32 %v5085, %v7091
        %v7093 = vsub.f32 1.0, %v7092
        %v7094 = vmul.f32 %v7091, %v7093
        %v7095 = vadd.f32 %v7091, %v7094
        %vm7096 = vweird.f32 %v5085
        %vm7097 = vweird.f32 %v7091
        %vm7098 = vmor %vm7096, %vm7097
        %v7099 = vsel %vm7098, %v7091, %v7095
        %v7100 = vand.u32 2147483647, %v5085
        %vm7101 = vcmp.eq.f32.partialorder %v7100, 8.507059e+37
        %v7102 = vand.u32 %v5085, 2147483648
        %v7103 = vor.u32 1.1754944e-38, %v7102
        %v7104 = vsel %vm7101, %v7103, %v7099
        %v7105 = vmul.f32 1.0, %v7104
        %v7106 = vrcp.pop %v5086
        %v7107 = vmul.f32 %v5086, %v7106
        %v7108 = vsub.f32 1.0, %v7107
        %v7109 = vmul.f32 %v7106, %v7108
        %v7110 = vadd.f32 %v7106, %v7109
        %vm7111 = vweird.f32 %v5086
        %vm7112 = vweird.f32 %v7106
        %vm7113 = vmor %vm7111, %vm7112
        %v7114 = vsel %vm7113, %v7106, %v7110
        %v7115 = vand.u32 2147483647, %v5086
        %vm7116 = vcmp.eq.f32.partialorder %v7115, 8.507059e+37
        %v7117 = vand.u32 %v5086, 2147483648
        %v7118 = vor.u32 1.1754944e-38, %v7117
        %v7119 = vsel %vm7116, %v7118, %v7114
        %v7120 = vmul.f32 1.0, %v7119
        %v7121 = vrcp.pop %v5087
        %v7122 = vmul.f32 %v5087, %v7121
        %v7123 = vsub.f32 1.0, %v7122
        %v7124 = vmul.f32 %v7121, %v7123
        %v7125 = vadd.f32 %v7121, %v7124
        %vm7126 = vweird.f32 %v5087
        %vm7127 = vweird.f32 %v7121
        %vm7128 = vmor %vm7126, %vm7127
        %v7129 = vsel %vm7128, %v7121, %v7125
        %v7130 = vand.u32 2147483647, %v5087
        %vm7131 = vcmp.eq.f32.partialorder %v7130, 8.507059e+37
        %v7132 = vand.u32 %v5087, 2147483648
        %v7133 = vor.u32 1.1754944e-38, %v7132
        %v7134 = vsel %vm7131, %v7133, %v7129
        %v7135 = vmul.f32 1.0, %v7134
        %v7136 = vrcp.pop %v5088
        %v7137 = vmul.f32 %v5088, %v7136
        %v7138 = vsub.f32 1.0, %v7137
        %v7139 = vmul.f32 %v7136, %v7138
        %v7140 = vadd.f32 %v7136, %v7139
        %vm7141 = vweird.f32 %v5088
        %vm7142 = vweird.f32 %v7136
        %vm7143 = vmor %vm7141, %vm7142
        %v7144 = vsel %vm7143, %v7136, %v7140
        %v7145 = vand.u32 2147483647, %v5088
        %vm7146 = vcmp.eq.f32.partialorder %v7145, 8.507059e+37
        %v7147 = vand.u32 %v5088, 2147483648
        %v7148 = vor.u32 1.1754944e-38, %v7147
        %v7149 = vsel %vm7146, %v7148, %v7144
        %v7150 = vmul.f32 1.0, %v7149
        %v7151 = vrcp.pop %v5089
        %v7152 = vmul.f32 %v5089, %v7151
        %v7153 = vsub.f32 1.0, %v7152
        %v7154 = vmul.f32 %v7151, %v7153
        %v7155 = vadd.f32 %v7151, %v7154
        %vm7156 = vweird.f32 %v5089
        %vm7157 = vweird.f32 %v7151
        %vm7158 = vmor %vm7156, %vm7157
        %v7159 = vsel %vm7158, %v7151, %v7155
        %v7160 = vand.u32 2147483647, %v5089
        %vm7161 = vcmp.eq.f32.partialorder %v7160, 8.507059e+37
        %v7162 = vand.u32 %v5089, 2147483648
        %v7163 = vor.u32 1.1754944e-38, %v7162
        %v7164 = vsel %vm7161, %v7163, %v7159
        %v7165 = vmul.f32 1.0, %v7164
        %v7166 = vrcp.pop %v5090
        %v7167 = vmul.f32 %v5090, %v7166
        %v7168 = vsub.f32 1.0, %v7167
        %v7169 = vmul.f32 %v7166, %v7168
        %v7170 = vadd.f32 %v7166, %v7169
        %vm7171 = vweird.f32 %v5090
        %vm7172 = vweird.f32 %v7166
        %vm7173 = vmor %vm7171, %vm7172
        %v7174 = vsel %vm7173, %v7166, %v7170
        %v7175 = vand.u32 2147483647, %v5090
        %vm7176 = vcmp.eq.f32.partialorder %v7175, 8.507059e+37
        %v7177 = vand.u32 %v5090, 2147483648
        %v7178 = vor.u32 1.1754944e-38, %v7177
        %v7179 = vsel %vm7176, %v7178, %v7174
        %v7180 = vmul.f32 1.0, %v7179
        %v7181 = vrcp.pop %v5091
        %v7182 = vmul.f32 %v5091, %v7181
        %v7183 = vsub.f32 1.0, %v7182
        %v7184 = vmul.f32 %v7181, %v7183
        %v7185 = vadd.f32 %v7181, %v7184
        %vm7186 = vweird.f32 %v5091
        %vm7187 = vweird.f32 %v7181
        %vm7188 = vmor %vm7186, %vm7187
        %v7189 = vsel %vm7188, %v7181, %v7185
        %v7190 = vand.u32 2147483647, %v5091
        %vm7191 = vcmp.eq.f32.partialorder %v7190, 8.507059e+37
        %v7192 = vand.u32 %v5091, 2147483648
        %v7193 = vor.u32 1.1754944e-38, %v7192
        %v7194 = vsel %vm7191, %v7193, %v7189
        %v7195 = vmul.f32 1.0, %v7194
        %v7196 = vrcp.pop %v5092
        %v7197 = vmul.f32 %v5092, %v7196
        %v7198 = vsub.f32 1.0, %v7197
        %v7199 = vmul.f32 %v7196, %v7198
        %v7200 = vadd.f32 %v7196, %v7199
        %vm7201 = vweird.f32 %v5092
        %vm7202 = vweird.f32 %v7196
        %vm7203 = vmor %vm7201, %vm7202
        %v7204 = vsel %vm7203, %v7196, %v7200
        %v7205 = vand.u32 2147483647, %v5092
        %vm7206 = vcmp.eq.f32.partialorder %v7205, 8.507059e+37
        %v7207 = vand.u32 %v5092, 2147483648
        %v7208 = vor.u32 1.1754944e-38, %v7207
        %v7209 = vsel %vm7206, %v7208, %v7204
        %v7210 = vmul.f32 1.0, %v7209
        %v7211 = vrcp.pop %v5093
        %v7212 = vmul.f32 %v5093, %v7211
        %v7213 = vsub.f32 1.0, %v7212
        %v7214 = vmul.f32 %v7211, %v7213
        %v7215 = vadd.f32 %v7211, %v7214
        %vm7216 = vweird.f32 %v5093
        %vm7217 = vweird.f32 %v7211
        %vm7218 = vmor %vm7216, %vm7217
        %v7219 = vsel %vm7218, %v7211, %v7215
        %v7220 = vand.u32 2147483647, %v5093
        %vm7221 = vcmp.eq.f32.partialorder %v7220, 8.507059e+37
        %v7222 = vand.u32 %v5093, 2147483648
        %v7223 = vor.u32 1.1754944e-38, %v7222
        %v7224 = vsel %vm7221, %v7223, %v7219
        %v7225 = vmul.f32 1.0, %v7224
        %v7226 = vrcp.pop %v5094
        %v7227 = vmul.f32 %v5094, %v7226
        %v7228 = vsub.f32 1.0, %v7227
        %v7229 = vmul.f32 %v7226, %v7228
        %v7230 = vadd.f32 %v7226, %v7229
        %vm7231 = vweird.f32 %v5094
        %vm7232 = vweird.f32 %v7226
        %vm7233 = vmor %vm7231, %vm7232
        %v7234 = vsel %vm7233, %v7226, %v7230
        %v7235 = vand.u32 2147483647, %v5094
        %vm7236 = vcmp.eq.f32.partialorder %v7235, 8.507059e+37
        %v7237 = vand.u32 %v5094, 2147483648
        %v7238 = vor.u32 1.1754944e-38, %v7237
        %v7239 = vsel %vm7236, %v7238, %v7234
        %v7240 = vmul.f32 1.0, %v7239
        %v7241 = vrcp.pop %v5095
        %v7242 = vmul.f32 %v5095, %v7241
        %v7243 = vsub.f32 1.0, %v7242
        %v7244 = vmul.f32 %v7241, %v7243
        %v7245 = vadd.f32 %v7241, %v7244
        %vm7246 = vweird.f32 %v5095
        %vm7247 = vweird.f32 %v7241
        %vm7248 = vmor %vm7246, %vm7247
        %v7249 = vsel %vm7248, %v7241, %v7245
        %v7250 = vand.u32 2147483647, %v5095
        %vm7251 = vcmp.eq.f32.partialorder %v7250, 8.507059e+37
        %v7252 = vand.u32 %v5095, 2147483648
        %v7253 = vor.u32 1.1754944e-38, %v7252
        %v7254 = vsel %vm7251, %v7253, %v7249
        %v7255 = vmul.f32 1.0, %v7254
        %v7256 = vrcp.pop %v5096
        %v7257 = vmul.f32 %v5096, %v7256
        %v7258 = vsub.f32 1.0, %v7257
        %v7259 = vmul.f32 %v7256, %v7258
        %v7260 = vadd.f32 %v7256, %v7259
        %vm7261 = vweird.f32 %v5096
        %vm7262 = vweird.f32 %v7256
        %vm7263 = vmor %vm7261, %vm7262
        %v7264 = vsel %vm7263, %v7256, %v7260
        %v7265 = vand.u32 2147483647, %v5096
        %vm7266 = vcmp.eq.f32.partialorder %v7265, 8.507059e+37
        %v7267 = vand.u32 %v5096, 2147483648
        %v7268 = vor.u32 1.1754944e-38, %v7267
        %v7269 = vsel %vm7266, %v7268, %v7264
        %v7270 = vmul.f32 1.0, %v7269
        %v7271 = vrcp.pop %v5097
        %v7272 = vmul.f32 %v5097, %v7271
        %v7273 = vsub.f32 1.0, %v7272
        %v7274 = vmul.f32 %v7271, %v7273
        %v7275 = vadd.f32 %v7271, %v7274
        %vm7276 = vweird.f32 %v5097
        %vm7277 = vweird.f32 %v7271
        %vm7278 = vmor %vm7276, %vm7277
        %v7279 = vsel %vm7278, %v7271, %v7275
        %v7280 = vand.u32 2147483647, %v5097
        %vm7281 = vcmp.eq.f32.partialorder %v7280, 8.507059e+37
        %v7282 = vand.u32 %v5097, 2147483648
        %v7283 = vor.u32 1.1754944e-38, %v7282
        %v7284 = vsel %vm7281, %v7283, %v7279
        %v7285 = vmul.f32 1.0, %v7284
        %v7286 = vrcp.pop %v5098
        %v7287 = vmul.f32 %v5098, %v7286
        %v7288 = vsub.f32 1.0, %v7287
        %v7289 = vmul.f32 %v7286, %v7288
        %v7290 = vadd.f32 %v7286, %v7289
        %vm7291 = vweird.f32 %v5098
        %vm7292 = vweird.f32 %v7286
        %vm7293 = vmor %vm7291, %vm7292
        %v7294 = vsel %vm7293, %v7286, %v7290
        %v7295 = vand.u32 2147483647, %v5098
        %vm7296 = vcmp.eq.f32.partialorder %v7295, 8.507059e+37
        %v7297 = vand.u32 %v5098, 2147483648
        %v7298 = vor.u32 1.1754944e-38, %v7297
        %v7299 = vsel %vm7296, %v7298, %v7294
        %v7300 = vmul.f32 1.0, %v7299
        %v7301 = vrcp.pop %v5099
        %v7302 = vmul.f32 %v5099, %v7301
        %v7303 = vsub.f32 1.0, %v7302
        %v7304 = vmul.f32 %v7301, %v7303
        %v7305 = vadd.f32 %v7301, %v7304
        %vm7306 = vweird.f32 %v5099
        %vm7307 = vweird.f32 %v7301
        %vm7308 = vmor %vm7306, %vm7307
        %v7309 = vsel %vm7308, %v7301, %v7305
        %v7310 = vand.u32 2147483647, %v5099
        %vm7311 = vcmp.eq.f32.partialorder %v7310, 8.507059e+37
        %v7312 = vand.u32 %v5099, 2147483648
        %v7313 = vor.u32 1.1754944e-38, %v7312
        %v7314 = vsel %vm7311, %v7313, %v7309
        %v7315 = vmul.f32 1.0, %v7314
        %v7316 = vrcp.pop %v5100
        %v7317 = vmul.f32 %v5100, %v7316
        %v7318 = vsub.f32 1.0, %v7317
        %v7319 = vmul.f32 %v7316, %v7318
        %v7320 = vadd.f32 %v7316, %v7319
        %vm7321 = vweird.f32 %v5100
        %vm7322 = vweird.f32 %v7316
        %vm7323 = vmor %vm7321, %vm7322
        %v7324 = vsel %vm7323, %v7316, %v7320
        %v7325 = vand.u32 2147483647, %v5100
        %vm7326 = vcmp.eq.f32.partialorder %v7325, 8.507059e+37
        %v7327 = vand.u32 %v5100, 2147483648
        %v7328 = vor.u32 1.1754944e-38, %v7327
        %v7329 = vsel %vm7326, %v7328, %v7324
        %v7330 = vmul.f32 1.0, %v7329
        %v7331 = vrcp.pop %v5101
        %v7332 = vmul.f32 %v5101, %v7331
        %v7333 = vsub.f32 1.0, %v7332
        %v7334 = vmul.f32 %v7331, %v7333
        %v7335 = vadd.f32 %v7331, %v7334
        %vm7336 = vweird.f32 %v5101
        %vm7337 = vweird.f32 %v7331
        %vm7338 = vmor %vm7336, %vm7337
        %v7339 = vsel %vm7338, %v7331, %v7335
        %v7340 = vand.u32 2147483647, %v5101
        %vm7341 = vcmp.eq.f32.partialorder %v7340, 8.507059e+37
        %v7342 = vand.u32 %v5101, 2147483648
        %v7343 = vor.u32 1.1754944e-38, %v7342
        %v7344 = vsel %vm7341, %v7343, %v7339
        %v7345 = vmul.f32 1.0, %v7344
        %v7346 = vrcp.pop %v5102
        %v7347 = vmul.f32 %v5102, %v7346
        %v7348 = vsub.f32 1.0, %v7347
        %v7349 = vmul.f32 %v7346, %v7348
        %v7350 = vadd.f32 %v7346, %v7349
        %vm7351 = vweird.f32 %v5102
        %vm7352 = vweird.f32 %v7346
        %vm7353 = vmor %vm7351, %vm7352
        %v7354 = vsel %vm7353, %v7346, %v7350
        %v7355 = vand.u32 2147483647, %v5102
        %vm7356 = vcmp.eq.f32.partialorder %v7355, 8.507059e+37
        %v7357 = vand.u32 %v5102, 2147483648
        %v7358 = vor.u32 1.1754944e-38, %v7357
        %v7359 = vsel %vm7356, %v7358, %v7354
        %v7360 = vmul.f32 1.0, %v7359
        %v7361 = vrcp.pop %v5103
        %v7362 = vmul.f32 %v5103, %v7361
        %v7363 = vsub.f32 1.0, %v7362
        %v7364 = vmul.f32 %v7361, %v7363
        %v7365 = vadd.f32 %v7361, %v7364
        %vm7366 = vweird.f32 %v5103
        %vm7367 = vweird.f32 %v7361
        %vm7368 = vmor %vm7366, %vm7367
        %v7369 = vsel %vm7368, %v7361, %v7365
        %v7370 = vand.u32 2147483647, %v5103
        %vm7371 = vcmp.eq.f32.partialorder %v7370, 8.507059e+37
        %v7372 = vand.u32 %v5103, 2147483648
        %v7373 = vor.u32 1.1754944e-38, %v7372
        %v7374 = vsel %vm7371, %v7373, %v7369
        %v7375 = vmul.f32 1.0, %v7374
        %v7376 = vrcp.pop %v5104
        %v7377 = vmul.f32 %v5104, %v7376
        %v7378 = vsub.f32 1.0, %v7377
        %v7379 = vmul.f32 %v7376, %v7378
        %v7380 = vadd.f32 %v7376, %v7379
        %vm7381 = vweird.f32 %v5104
        %vm7382 = vweird.f32 %v7376
        %vm7383 = vmor %vm7381, %vm7382
        %v7384 = vsel %vm7383, %v7376, %v7380
        %v7385 = vand.u32 2147483647, %v5104
        %vm7386 = vcmp.eq.f32.partialorder %v7385, 8.507059e+37
        %v7387 = vand.u32 %v5104, 2147483648
        %v7388 = vor.u32 1.1754944e-38, %v7387
        %v7389 = vsel %vm7386, %v7388, %v7384
        %v7390 = vmul.f32 1.0, %v7389
        %v7391 = vrcp.pop %v5105
        %v7392 = vmul.f32 %v5105, %v7391
        %v7393 = vsub.f32 1.0, %v7392
        %v7394 = vmul.f32 %v7391, %v7393
        %v7395 = vadd.f32 %v7391, %v7394
        %vm7396 = vweird.f32 %v5105
        %vm7397 = vweird.f32 %v7391
        %vm7398 = vmor %vm7396, %vm7397
        %v7399 = vsel %vm7398, %v7391, %v7395
        %v7400 = vand.u32 2147483647, %v5105
        %vm7401 = vcmp.eq.f32.partialorder %v7400, 8.507059e+37
        %v7402 = vand.u32 %v5105, 2147483648
        %v7403 = vor.u32 1.1754944e-38, %v7402
        %v7404 = vsel %vm7401, %v7403, %v7399
        %v7405 = vmul.f32 1.0, %v7404
        %v7406 = vrcp.pop %v5106
        %v7407 = vmul.f32 %v5106, %v7406
        %v7408 = vsub.f32 1.0, %v7407
        %v7409 = vmul.f32 %v7406, %v7408
        %v7410 = vadd.f32 %v7406, %v7409
        %vm7411 = vweird.f32 %v5106
        %vm7412 = vweird.f32 %v7406
        %vm7413 = vmor %vm7411, %vm7412
        %v7414 = vsel %vm7413, %v7406, %v7410
        %v7415 = vand.u32 2147483647, %v5106
        %vm7416 = vcmp.eq.f32.partialorder %v7415, 8.507059e+37
        %v7417 = vand.u32 %v5106, 2147483648
        %v7418 = vor.u32 1.1754944e-38, %v7417
        %v7419 = vsel %vm7416, %v7418, %v7414
        %v7420 = vmul.f32 1.0, %v7419
        %v7421 = vrcp.pop %v5107
        %v7422 = vmul.f32 %v5107, %v7421
        %v7423 = vsub.f32 1.0, %v7422
        %v7424 = vmul.f32 %v7421, %v7423
        %v7425 = vadd.f32 %v7421, %v7424
        %vm7426 = vweird.f32 %v5107
        %vm7427 = vweird.f32 %v7421
        %vm7428 = vmor %vm7426, %vm7427
        %v7429 = vsel %vm7428, %v7421, %v7425
        %v7430 = vand.u32 2147483647, %v5107
        %vm7431 = vcmp.eq.f32.partialorder %v7430, 8.507059e+37
        %v7432 = vand.u32 %v5107, 2147483648
        %v7433 = vor.u32 1.1754944e-38, %v7432
        %v7434 = vsel %vm7431, %v7433, %v7429
        %v7435 = vmul.f32 1.0, %v7434
        %v7436 = vrcp.pop %v5108
        %v7437 = vmul.f32 %v5108, %v7436
        %v7438 = vsub.f32 1.0, %v7437
        %v7439 = vmul.f32 %v7436, %v7438
        %v7440 = vadd.f32 %v7436, %v7439
        %vm7441 = vweird.f32 %v5108
        %vm7442 = vweird.f32 %v7436
        %vm7443 = vmor %vm7441, %vm7442
        %v7444 = vsel %vm7443, %v7436, %v7440
        %v7445 = vand.u32 2147483647, %v5108
        %vm7446 = vcmp.eq.f32.partialorder %v7445, 8.507059e+37
        %v7447 = vand.u32 %v5108, 2147483648
        %v7448 = vor.u32 1.1754944e-38, %v7447
        %v7449 = vsel %vm7446, %v7448, %v7444
        %v7450 = vmul.f32 1.0, %v7449
        %v7451 = vrcp.pop %v5109
        %v7452 = vmul.f32 %v5109, %v7451
        %v7453 = vsub.f32 1.0, %v7452
        %v7454 = vmul.f32 %v7451, %v7453
        %v7455 = vadd.f32 %v7451, %v7454
        %vm7456 = vweird.f32 %v5109
        %vm7457 = vweird.f32 %v7451
        %vm7458 = vmor %vm7456, %vm7457
        %v7459 = vsel %vm7458, %v7451, %v7455
        %v7460 = vand.u32 2147483647, %v5109
        %vm7461 = vcmp.eq.f32.partialorder %v7460, 8.507059e+37
        %v7462 = vand.u32 %v5109, 2147483648
        %v7463 = vor.u32 1.1754944e-38, %v7462
        %v7464 = vsel %vm7461, %v7463, %v7459
        %v7465 = vmul.f32 1.0, %v7464
        %v7466 = vrcp.pop %v5110
        %v7467 = vmul.f32 %v5110, %v7466
        %v7468 = vsub.f32 1.0, %v7467
        %v7469 = vmul.f32 %v7466, %v7468
        %v7470 = vadd.f32 %v7466, %v7469
        %vm7471 = vweird.f32 %v5110
        %vm7472 = vweird.f32 %v7466
        %vm7473 = vmor %vm7471, %vm7472
        %v7474 = vsel %vm7473, %v7466, %v7470
        %v7475 = vand.u32 2147483647, %v5110
        %vm7476 = vcmp.eq.f32.partialorder %v7475, 8.507059e+37
        %v7477 = vand.u32 %v5110, 2147483648
        %v7478 = vor.u32 1.1754944e-38, %v7477
        %v7479 = vsel %vm7476, %v7478, %v7474
        %v7480 = vmul.f32 1.0, %v7479
        %v7481 = vrcp.pop %v5111
        %v7482 = vmul.f32 %v5111, %v7481
        %v7483 = vsub.f32 1.0, %v7482
        %v7484 = vmul.f32 %v7481, %v7483
        %v7485 = vadd.f32 %v7481, %v7484
        %vm7486 = vweird.f32 %v5111
        %vm7487 = vweird.f32 %v7481
        %vm7488 = vmor %vm7486, %vm7487
        %v7489 = vsel %vm7488, %v7481, %v7485
        %v7490 = vand.u32 2147483647, %v5111
        %vm7491 = vcmp.eq.f32.partialorder %v7490, 8.507059e+37
        %v7492 = vand.u32 %v5111, 2147483648
        %v7493 = vor.u32 1.1754944e-38, %v7492
        %v7494 = vsel %vm7491, %v7493, %v7489
        %v7495 = vmul.f32 1.0, %v7494
        %v7496 = vrcp.pop %v5112
        %v7497 = vmul.f32 %v5112, %v7496
        %v7498 = vsub.f32 1.0, %v7497
        %v7499 = vmul.f32 %v7496, %v7498
        %v7500 = vadd.f32 %v7496, %v7499
        %vm7501 = vweird.f32 %v5112
        %vm7502 = vweird.f32 %v7496
        %vm7503 = vmor %vm7501, %vm7502
        %v7504 = vsel %vm7503, %v7496, %v7500
        %v7505 = vand.u32 2147483647, %v5112
        %vm7506 = vcmp.eq.f32.partialorder %v7505, 8.507059e+37
        %v7507 = vand.u32 %v5112, 2147483648
        %v7508 = vor.u32 1.1754944e-38, %v7507
        %v7509 = vsel %vm7506, %v7508, %v7504
        %v7510 = vmul.f32 1.0, %v7509
        %v7511 = vrcp.pop %v5113
        %v7512 = vmul.f32 %v5113, %v7511
        %v7513 = vsub.f32 1.0, %v7512
        %v7514 = vmul.f32 %v7511, %v7513
        %v7515 = vadd.f32 %v7511, %v7514
        %vm7516 = vweird.f32 %v5113
        %vm7517 = vweird.f32 %v7511
        %vm7518 = vmor %vm7516, %vm7517
        %v7519 = vsel %vm7518, %v7511, %v7515
        %v7520 = vand.u32 2147483647, %v5113
        %vm7521 = vcmp.eq.f32.partialorder %v7520, 8.507059e+37
        %v7522 = vand.u32 %v5113, 2147483648
        %v7523 = vor.u32 1.1754944e-38, %v7522
        %v7524 = vsel %vm7521, %v7523, %v7519
        %v7525 = vmul.f32 1.0, %v7524
        %v7526 = vrcp.pop %v5114
        %v7527 = vmul.f32 %v5114, %v7526
        %v7528 = vsub.f32 1.0, %v7527
        %v7529 = vmul.f32 %v7526, %v7528
        %v7530 = vadd.f32 %v7526, %v7529
        %vm7531 = vweird.f32 %v5114
        %vm7532 = vweird.f32 %v7526
        %vm7533 = vmor %vm7531, %vm7532
        %v7534 = vsel %vm7533, %v7526, %v7530
        %v7535 = vand.u32 2147483647, %v5114
        %vm7536 = vcmp.eq.f32.partialorder %v7535, 8.507059e+37
        %v7537 = vand.u32 %v5114, 2147483648
        %v7538 = vor.u32 1.1754944e-38, %v7537
        %v7539 = vsel %vm7536, %v7538, %v7534
        %v7540 = vmul.f32 1.0, %v7539
        %v7541 = vrcp.pop %v5115
        %v7542 = vmul.f32 %v5115, %v7541
        %v7543 = vsub.f32 1.0, %v7542
        %v7544 = vmul.f32 %v7541, %v7543
        %v7545 = vadd.f32 %v7541, %v7544
        %vm7546 = vweird.f32 %v5115
        %vm7547 = vweird.f32 %v7541
        %vm7548 = vmor %vm7546, %vm7547
        %v7549 = vsel %vm7548, %v7541, %v7545
        %v7550 = vand.u32 2147483647, %v5115
        %vm7551 = vcmp.eq.f32.partialorder %v7550, 8.507059e+37
        %v7552 = vand.u32 %v5115, 2147483648
        %v7553 = vor.u32 1.1754944e-38, %v7552
        %v7554 = vsel %vm7551, %v7553, %v7549
        %v7555 = vmul.f32 1.0, %v7554
        %v7556 = vrcp.pop %v5116
        %v7557 = vmul.f32 %v5116, %v7556
        %v7558 = vsub.f32 1.0, %v7557
        %v7559 = vmul.f32 %v7556, %v7558
        %v7560 = vadd.f32 %v7556, %v7559
        %vm7561 = vweird.f32 %v5116
        %vm7562 = vweird.f32 %v7556
        %vm7563 = vmor %vm7561, %vm7562
        %v7564 = vsel %vm7563, %v7556, %v7560
        %v7565 = vand.u32 2147483647, %v5116
        %vm7566 = vcmp.eq.f32.partialorder %v7565, 8.507059e+37
        %v7567 = vand.u32 %v5116, 2147483648
        %v7568 = vor.u32 1.1754944e-38, %v7567
        %v7569 = vsel %vm7566, %v7568, %v7564
        %v7570 = vmul.f32 1.0, %v7569
        %v7571 = vrcp.pop %v5117
        %v7572 = vmul.f32 %v5117, %v7571
        %v7573 = vsub.f32 1.0, %v7572
        %v7574 = vmul.f32 %v7571, %v7573
        %v7575 = vadd.f32 %v7571, %v7574
        %vm7576 = vweird.f32 %v5117
        %vm7577 = vweird.f32 %v7571
        %vm7578 = vmor %vm7576, %vm7577
        %v7579 = vsel %vm7578, %v7571, %v7575
        %v7580 = vand.u32 2147483647, %v5117
        %vm7581 = vcmp.eq.f32.partialorder %v7580, 8.507059e+37
        %v7582 = vand.u32 %v5117, 2147483648
        %v7583 = vor.u32 1.1754944e-38, %v7582
        %v7584 = vsel %vm7581, %v7583, %v7579
        %v7585 = vmul.f32 1.0, %v7584
        %v7586 = vrcp.pop %v5118
        %v7587 = vmul.f32 %v5118, %v7586
        %v7588 = vsub.f32 1.0, %v7587
        %v7589 = vmul.f32 %v7586, %v7588
        %v7590 = vadd.f32 %v7586, %v7589
        %vm7591 = vweird.f32 %v5118
        %vm7592 = vweird.f32 %v7586
        %vm7593 = vmor %vm7591, %vm7592
        %v7594 = vsel %vm7593, %v7586, %v7590
        %v7595 = vand.u32 2147483647, %v5118
        %vm7596 = vcmp.eq.f32.partialorder %v7595, 8.507059e+37
        %v7597 = vand.u32 %v5118, 2147483648
        %v7598 = vor.u32 1.1754944e-38, %v7597
        %v7599 = vsel %vm7596, %v7598, %v7594
        %v7600 = vmul.f32 1.0, %v7599
        %v7601 = vrcp.pop %v5119
        %v7602 = vmul.f32 %v5119, %v7601
        %v7603 = vsub.f32 1.0, %v7602
        %v7604 = vmul.f32 %v7601, %v7603
        %v7605 = vadd.f32 %v7601, %v7604
        %vm7606 = vweird.f32 %v5119
        %vm7607 = vweird.f32 %v7601
        %vm7608 = vmor %vm7606, %vm7607
        %v7609 = vsel %vm7608, %v7601, %v7605
        %v7610 = vand.u32 2147483647, %v5119
        %vm7611 = vcmp.eq.f32.partialorder %v7610, 8.507059e+37
        %v7612 = vand.u32 %v5119, 2147483648
        %v7613 = vor.u32 1.1754944e-38, %v7612
        %v7614 = vsel %vm7611, %v7613, %v7609
        %v7615 = vmul.f32 1.0, %v7614
        %v7616 = vrcp.pop %v5120
        %v7617 = vmul.f32 %v5120, %v7616
        %v7618 = vsub.f32 1.0, %v7617
        %v7619 = vmul.f32 %v7616, %v7618
        %v7620 = vadd.f32 %v7616, %v7619
        %vm7621 = vweird.f32 %v5120
        %vm7622 = vweird.f32 %v7616
        %vm7623 = vmor %vm7621, %vm7622
        %v7624 = vsel %vm7623, %v7616, %v7620
        %v7625 = vand.u32 2147483647, %v5120
        %vm7626 = vcmp.eq.f32.partialorder %v7625, 8.507059e+37
        %v7627 = vand.u32 %v5120, 2147483648
        %v7628 = vor.u32 1.1754944e-38, %v7627
        %v7629 = vsel %vm7626, %v7628, %v7624
        %v7630 = vmul.f32 1.0, %v7629
        %v7631 = vrcp.pop %v5121
        %v7632 = vmul.f32 %v5121, %v7631
        %v7633 = vsub.f32 1.0, %v7632
        %v7634 = vmul.f32 %v7631, %v7633
        %v7635 = vadd.f32 %v7631, %v7634
        %vm7636 = vweird.f32 %v5121
        %vm7637 = vweird.f32 %v7631
        %vm7638 = vmor %vm7636, %vm7637
        %v7639 = vsel %vm7638, %v7631, %v7635
        %v7640 = vand.u32 2147483647, %v5121
        %vm7641 = vcmp.eq.f32.partialorder %v7640, 8.507059e+37
        %v7642 = vand.u32 %v5121, 2147483648
        %v7643 = vor.u32 1.1754944e-38, %v7642
        %v7644 = vsel %vm7641, %v7643, %v7639
        %v7645 = vmul.f32 1.0, %v7644
        %v7646 = vrcp.pop %v5122
        %v7647 = vmul.f32 %v5122, %v7646
        %v7648 = vsub.f32 1.0, %v7647
        %v7649 = vmul.f32 %v7646, %v7648
        %v7650 = vadd.f32 %v7646, %v7649
        %vm7651 = vweird.f32 %v5122
        %vm7652 = vweird.f32 %v7646
        %vm7653 = vmor %vm7651, %vm7652
        %v7654 = vsel %vm7653, %v7646, %v7650
        %v7655 = vand.u32 2147483647, %v5122
        %vm7656 = vcmp.eq.f32.partialorder %v7655, 8.507059e+37
        %v7657 = vand.u32 %v5122, 2147483648
        %v7658 = vor.u32 1.1754944e-38, %v7657
        %v7659 = vsel %vm7656, %v7658, %v7654
        %v7660 = vmul.f32 1.0, %v7659
        %v7661 = vrcp.pop %v5123
        %v7662 = vmul.f32 %v5123, %v7661
        %v7663 = vsub.f32 1.0, %v7662
        %v7664 = vmul.f32 %v7661, %v7663
        %v7665 = vadd.f32 %v7661, %v7664
        %vm7666 = vweird.f32 %v5123
        %vm7667 = vweird.f32 %v7661
        %vm7668 = vmor %vm7666, %vm7667
        %v7669 = vsel %vm7668, %v7661, %v7665
        %v7670 = vand.u32 2147483647, %v5123
        %vm7671 = vcmp.eq.f32.partialorder %v7670, 8.507059e+37
        %v7672 = vand.u32 %v5123, 2147483648
        %v7673 = vor.u32 1.1754944e-38, %v7672
        %v7674 = vsel %vm7671, %v7673, %v7669
        %v7675 = vmul.f32 1.0, %v7674
        %v7676 = vrcp.pop %v5124
        %v7677 = vmul.f32 %v5124, %v7676
        %v7678 = vsub.f32 1.0, %v7677
        %v7679 = vmul.f32 %v7676, %v7678
        %v7680 = vadd.f32 %v7676, %v7679
        %vm7681 = vweird.f32 %v5124
        %vm7682 = vweird.f32 %v7676
        %vm7683 = vmor %vm7681, %vm7682
        %v7684 = vsel %vm7683, %v7676, %v7680
        %v7685 = vand.u32 2147483647, %v5124
        %vm7686 = vcmp.eq.f32.partialorder %v7685, 8.507059e+37
        %v7687 = vand.u32 %v5124, 2147483648
        %v7688 = vor.u32 1.1754944e-38, %v7687
        %v7689 = vsel %vm7686, %v7688, %v7684
        %v7690 = vmul.f32 1.0, %v7689
        %v7691 = vrcp.pop %v5125
        %v7692 = vmul.f32 %v5125, %v7691
        %v7693 = vsub.f32 1.0, %v7692
        %v7694 = vmul.f32 %v7691, %v7693
        %v7695 = vadd.f32 %v7691, %v7694
        %vm7696 = vweird.f32 %v5125
        %vm7697 = vweird.f32 %v7691
        %vm7698 = vmor %vm7696, %vm7697
        %v7699 = vsel %vm7698, %v7691, %v7695
        %v7700 = vand.u32 2147483647, %v5125
        %vm7701 = vcmp.eq.f32.partialorder %v7700, 8.507059e+37
        %v7702 = vand.u32 %v5125, 2147483648
        %v7703 = vor.u32 1.1754944e-38, %v7702
        %v7704 = vsel %vm7701, %v7703, %v7699
        %v7705 = vmul.f32 1.0, %v7704
        %v7706 = vrcp.pop %v5126
        %v7707 = vmul.f32 %v5126, %v7706
        %v7708 = vsub.f32 1.0, %v7707
        %v7709 = vmul.f32 %v7706, %v7708
        %v7710 = vadd.f32 %v7706, %v7709
        %vm7711 = vweird.f32 %v5126
        %vm7712 = vweird.f32 %v7706
        %vm7713 = vmor %vm7711, %vm7712
        %v7714 = vsel %vm7713, %v7706, %v7710
        %v7715 = vand.u32 2147483647, %v5126
        %vm7716 = vcmp.eq.f32.partialorder %v7715, 8.507059e+37
        %v7717 = vand.u32 %v5126, 2147483648
        %v7718 = vor.u32 1.1754944e-38, %v7717
        %v7719 = vsel %vm7716, %v7718, %v7714
        %v7720 = vmul.f32 1.0, %v7719
        %v7721 = vrcp.pop %v5127
        %v7722 = vmul.f32 %v5127, %v7721
        %v7723 = vsub.f32 1.0, %v7722
        %v7724 = vmul.f32 %v7721, %v7723
        %v7725 = vadd.f32 %v7721, %v7724
        %vm7726 = vweird.f32 %v5127
        %vm7727 = vweird.f32 %v7721
        %vm7728 = vmor %vm7726, %vm7727
        %v7729 = vsel %vm7728, %v7721, %v7725
        %v7730 = vand.u32 2147483647, %v5127
        %vm7731 = vcmp.eq.f32.partialorder %v7730, 8.507059e+37
        %v7732 = vand.u32 %v5127, 2147483648
        %v7733 = vor.u32 1.1754944e-38, %v7732
        %v7734 = vsel %vm7731, %v7733, %v7729
        %v7735 = vmul.f32 1.0, %v7734
        %v7736 = vrcp.pop %v5128
        %v7737 = vmul.f32 %v5128, %v7736
        %v7738 = vsub.f32 1.0, %v7737
        %v7739 = vmul.f32 %v7736, %v7738
        %v7740 = vadd.f32 %v7736, %v7739
        %vm7741 = vweird.f32 %v5128
        %vm7742 = vweird.f32 %v7736
        %vm7743 = vmor %vm7741, %vm7742
        %v7744 = vsel %vm7743, %v7736, %v7740
        %v7745 = vand.u32 2147483647, %v5128
        %vm7746 = vcmp.eq.f32.partialorder %v7745, 8.507059e+37
        %v7747 = vand.u32 %v5128, 2147483648
        %v7748 = vor.u32 1.1754944e-38, %v7747
        %v7749 = vsel %vm7746, %v7748, %v7744
        %v7750 = vmul.f32 1.0, %v7749
        %v7751 = vrcp.pop %v5129
        %v7752 = vmul.f32 %v5129, %v7751
        %v7753 = vsub.f32 1.0, %v7752
        %v7754 = vmul.f32 %v7751, %v7753
        %v7755 = vadd.f32 %v7751, %v7754
        %vm7756 = vweird.f32 %v5129
        %vm7757 = vweird.f32 %v7751
        %vm7758 = vmor %vm7756, %vm7757
        %v7759 = vsel %vm7758, %v7751, %v7755
        %v7760 = vand.u32 2147483647, %v5129
        %vm7761 = vcmp.eq.f32.partialorder %v7760, 8.507059e+37
        %v7762 = vand.u32 %v5129, 2147483648
        %v7763 = vor.u32 1.1754944e-38, %v7762
        %v7764 = vsel %vm7761, %v7763, %v7759
        %v7765 = vmul.f32 1.0, %v7764
        %v7766 = vrcp.pop %v5130
        %v7767 = vmul.f32 %v5130, %v7766
        %v7768 = vsub.f32 1.0, %v7767
        %v7769 = vmul.f32 %v7766, %v7768
        %v7770 = vadd.f32 %v7766, %v7769
        %vm7771 = vweird.f32 %v5130
        %vm7772 = vweird.f32 %v7766
        %vm7773 = vmor %vm7771, %vm7772
        %v7774 = vsel %vm7773, %v7766, %v7770
        %v7775 = vand.u32 2147483647, %v5130
        %vm7776 = vcmp.eq.f32.partialorder %v7775, 8.507059e+37
        %v7777 = vand.u32 %v5130, 2147483648
        %v7778 = vor.u32 1.1754944e-38, %v7777
        %v7779 = vsel %vm7776, %v7778, %v7774
        %v7780 = vmul.f32 1.0, %v7779
        %v7781 = vrcp.pop %v5131
        %v7782 = vmul.f32 %v5131, %v7781
        %v7783 = vsub.f32 1.0, %v7782
        %v7784 = vmul.f32 %v7781, %v7783
        %v7785 = vadd.f32 %v7781, %v7784
        %vm7786 = vweird.f32 %v5131
        %vm7787 = vweird.f32 %v7781
        %vm7788 = vmor %vm7786, %vm7787
        %v7789 = vsel %vm7788, %v7781, %v7785
        %v7790 = vand.u32 2147483647, %v5131
        %vm7791 = vcmp.eq.f32.partialorder %v7790, 8.507059e+37
        %v7792 = vand.u32 %v5131, 2147483648
        %v7793 = vor.u32 1.1754944e-38, %v7792
        %v7794 = vsel %vm7791, %v7793, %v7789
        %v7795 = vmul.f32 1.0, %v7794
        %v7796 = vrcp.pop %v5132
        %v7797 = vmul.f32 %v5132, %v7796
        %v7798 = vsub.f32 1.0, %v7797
        %v7799 = vmul.f32 %v7796, %v7798
        %v7800 = vadd.f32 %v7796, %v7799
        %vm7801 = vweird.f32 %v5132
        %vm7802 = vweird.f32 %v7796
        %vm7803 = vmor %vm7801, %vm7802
        %v7804 = vsel %vm7803, %v7796, %v7800
        %v7805 = vand.u32 2147483647, %v5132
        %vm7806 = vcmp.eq.f32.partialorder %v7805, 8.507059e+37
        %v7807 = vand.u32 %v5132, 2147483648
        %v7808 = vor.u32 1.1754944e-38, %v7807
        %v7809 = vsel %vm7806, %v7808, %v7804
        %v7810 = vmul.f32 1.0, %v7809
        %v7811 = vrcp.pop %v5133
        %v7812 = vmul.f32 %v5133, %v7811
        %v7813 = vsub.f32 1.0, %v7812
        %v7814 = vmul.f32 %v7811, %v7813
        %v7815 = vadd.f32 %v7811, %v7814
        %vm7816 = vweird.f32 %v5133
        %vm7817 = vweird.f32 %v7811
        %vm7818 = vmor %vm7816, %vm7817
        %v7819 = vsel %vm7818, %v7811, %v7815
        %v7820 = vand.u32 2147483647, %v5133
        %vm7821 = vcmp.eq.f32.partialorder %v7820, 8.507059e+37
        %v7822 = vand.u32 %v5133, 2147483648
        %v7823 = vor.u32 1.1754944e-38, %v7822
        %v7824 = vsel %vm7821, %v7823, %v7819
        %v7825 = vmul.f32 1.0, %v7824
        %v7826 = vrcp.pop %v5134
        %v7827 = vmul.f32 %v5134, %v7826
        %v7828 = vsub.f32 1.0, %v7827
        %v7829 = vmul.f32 %v7826, %v7828
        %v7830 = vadd.f32 %v7826, %v7829
        %vm7831 = vweird.f32 %v5134
        %vm7832 = vweird.f32 %v7826
        %vm7833 = vmor %vm7831, %vm7832
        %v7834 = vsel %vm7833, %v7826, %v7830
        %v7835 = vand.u32 2147483647, %v5134
        %vm7836 = vcmp.eq.f32.partialorder %v7835, 8.507059e+37
        %v7837 = vand.u32 %v5134, 2147483648
        %v7838 = vor.u32 1.1754944e-38, %v7837
        %v7839 = vsel %vm7836, %v7838, %v7834
        %v7840 = vmul.f32 1.0, %v7839
        %v7841 = vrcp.pop %v5135
        %v7842 = vmul.f32 %v5135, %v7841
        %v7843 = vsub.f32 1.0, %v7842
        %v7844 = vmul.f32 %v7841, %v7843
        %v7845 = vadd.f32 %v7841, %v7844
        %vm7846 = vweird.f32 %v5135
        %vm7847 = vweird.f32 %v7841
        %vm7848 = vmor %vm7846, %vm7847
        %v7849 = vsel %vm7848, %v7841, %v7845
        %v7850 = vand.u32 2147483647, %v5135
        %vm7851 = vcmp.eq.f32.partialorder %v7850, 8.507059e+37
        %v7852 = vand.u32 %v5135, 2147483648
        %v7853 = vor.u32 1.1754944e-38, %v7852
        %v7854 = vsel %vm7851, %v7853, %v7849
        %v7855 = vmul.f32 1.0, %v7854
        %v7856 = vrcp.pop %v5136
        %v7857 = vmul.f32 %v5136, %v7856
        %v7858 = vsub.f32 1.0, %v7857
        %v7859 = vmul.f32 %v7856, %v7858
        %v7860 = vadd.f32 %v7856, %v7859
        %vm7861 = vweird.f32 %v5136
        %vm7862 = vweird.f32 %v7856
        %vm7863 = vmor %vm7861, %vm7862
        %v7864 = vsel %vm7863, %v7856, %v7860
        %v7865 = vand.u32 2147483647, %v5136
        %vm7866 = vcmp.eq.f32.partialorder %v7865, 8.507059e+37
        %v7867 = vand.u32 %v5136, 2147483648
        %v7868 = vor.u32 1.1754944e-38, %v7867
        %v7869 = vsel %vm7866, %v7868, %v7864
        %v7870 = vmul.f32 1.0, %v7869
        %v7871 = vrcp.pop %v5137
        %v7872 = vmul.f32 %v5137, %v7871
        %v7873 = vsub.f32 1.0, %v7872
        %v7874 = vmul.f32 %v7871, %v7873
        %v7875 = vadd.f32 %v7871, %v7874
        %vm7876 = vweird.f32 %v5137
        %vm7877 = vweird.f32 %v7871
        %vm7878 = vmor %vm7876, %vm7877
        %v7879 = vsel %vm7878, %v7871, %v7875
        %v7880 = vand.u32 2147483647, %v5137
        %vm7881 = vcmp.eq.f32.partialorder %v7880, 8.507059e+37
        %v7882 = vand.u32 %v5137, 2147483648
        %v7883 = vor.u32 1.1754944e-38, %v7882
        %v7884 = vsel %vm7881, %v7883, %v7879
        %v7885 = vmul.f32 1.0, %v7884
        %v7886 = vrcp.pop %v5138
        %v7887 = vmul.f32 %v5138, %v7886
        %v7888 = vsub.f32 1.0, %v7887
        %v7889 = vmul.f32 %v7886, %v7888
        %v7890 = vadd.f32 %v7886, %v7889
        %vm7891 = vweird.f32 %v5138
        %vm7892 = vweird.f32 %v7886
        %vm7893 = vmor %vm7891, %vm7892
        %v7894 = vsel %vm7893, %v7886, %v7890
        %v7895 = vand.u32 2147483647, %v5138
        %vm7896 = vcmp.eq.f32.partialorder %v7895, 8.507059e+37
        %v7897 = vand.u32 %v5138, 2147483648
        %v7898 = vor.u32 1.1754944e-38, %v7897
        %v7899 = vsel %vm7896, %v7898, %v7894
        %v7900 = vmul.f32 1.0, %v7899
        %v7901 = vrcp.pop %v5139
        %v7902 = vmul.f32 %v5139, %v7901
        %v7903 = vsub.f32 1.0, %v7902
        %v7904 = vmul.f32 %v7901, %v7903
        %v7905 = vadd.f32 %v7901, %v7904
        %vm7906 = vweird.f32 %v5139
        %vm7907 = vweird.f32 %v7901
        %vm7908 = vmor %vm7906, %vm7907
        %v7909 = vsel %vm7908, %v7901, %v7905
        %v7910 = vand.u32 2147483647, %v5139
        %vm7911 = vcmp.eq.f32.partialorder %v7910, 8.507059e+37
        %v7912 = vand.u32 %v5139, 2147483648
        %v7913 = vor.u32 1.1754944e-38, %v7912
        %v7914 = vsel %vm7911, %v7913, %v7909
        %v7915 = vmul.f32 1.0, %v7914
        %v7916 = vrcp.pop %v5140
        %v7917 = vmul.f32 %v5140, %v7916
        %v7918 = vsub.f32 1.0, %v7917
        %v7919 = vmul.f32 %v7916, %v7918
        %v7920 = vadd.f32 %v7916, %v7919
        %vm7921 = vweird.f32 %v5140
        %vm7922 = vweird.f32 %v7916
        %vm7923 = vmor %vm7921, %vm7922
        %v7924 = vsel %vm7923, %v7916, %v7920
        %v7925 = vand.u32 2147483647, %v5140
        %vm7926 = vcmp.eq.f32.partialorder %v7925, 8.507059e+37
        %v7927 = vand.u32 %v5140, 2147483648
        %v7928 = vor.u32 1.1754944e-38, %v7927
        %v7929 = vsel %vm7926, %v7928, %v7924
        %v7930 = vmul.f32 1.0, %v7929
        %v7931 = vrcp.pop %v5141
        %v7932 = vmul.f32 %v5141, %v7931
        %v7933 = vsub.f32 1.0, %v7932
        %v7934 = vmul.f32 %v7931, %v7933
        %v7935 = vadd.f32 %v7931, %v7934
        %vm7936 = vweird.f32 %v5141
        %vm7937 = vweird.f32 %v7931
        %vm7938 = vmor %vm7936, %vm7937
        %v7939 = vsel %vm7938, %v7931, %v7935
        %v7940 = vand.u32 2147483647, %v5141
        %vm7941 = vcmp.eq.f32.partialorder %v7940, 8.507059e+37
        %v7942 = vand.u32 %v5141, 2147483648
        %v7943 = vor.u32 1.1754944e-38, %v7942
        %v7944 = vsel %vm7941, %v7943, %v7939
        %v7945 = vmul.f32 1.0, %v7944
        %v7946 = vrcp.pop %v5142
        %v7947 = vmul.f32 %v5142, %v7946
        %v7948 = vsub.f32 1.0, %v7947
        %v7949 = vmul.f32 %v7946, %v7948
        %v7950 = vadd.f32 %v7946, %v7949
        %vm7951 = vweird.f32 %v5142
        %vm7952 = vweird.f32 %v7946
        %vm7953 = vmor %vm7951, %vm7952
        %v7954 = vsel %vm7953, %v7946, %v7950
        %v7955 = vand.u32 2147483647, %v5142
        %vm7956 = vcmp.eq.f32.partialorder %v7955, 8.507059e+37
        %v7957 = vand.u32 %v5142, 2147483648
        %v7958 = vor.u32 1.1754944e-38, %v7957
        %v7959 = vsel %vm7956, %v7958, %v7954
        %v7960 = vmul.f32 1.0, %v7959
        %v7961 = vrcp.pop %v5143
        %v7962 = vmul.f32 %v5143, %v7961
        %v7963 = vsub.f32 1.0, %v7962
        %v7964 = vmul.f32 %v7961, %v7963
        %v7965 = vadd.f32 %v7961, %v7964
        %vm7966 = vweird.f32 %v5143
        %vm7967 = vweird.f32 %v7961
        %vm7968 = vmor %vm7966, %vm7967
        %v7969 = vsel %vm7968, %v7961, %v7965
        %v7970 = vand.u32 2147483647, %v5143
        %vm7971 = vcmp.eq.f32.partialorder %v7970, 8.507059e+37
        %v7972 = vand.u32 %v5143, 2147483648
        %v7973 = vor.u32 1.1754944e-38, %v7972
        %v7974 = vsel %vm7971, %v7973, %v7969
        %v7975 = vmul.f32 1.0, %v7974
        %v7976 = vrcp.pop %v5144
        %v7977 = vmul.f32 %v5144, %v7976
        %v7978 = vsub.f32 1.0, %v7977
        %v7979 = vmul.f32 %v7976, %v7978
        %v7980 = vadd.f32 %v7976, %v7979
        %vm7981 = vweird.f32 %v5144
        %vm7982 = vweird.f32 %v7976
        %vm7983 = vmor %vm7981, %vm7982
        %v7984 = vsel %vm7983, %v7976, %v7980
        %v7985 = vand.u32 2147483647, %v5144
        %vm7986 = vcmp.eq.f32.partialorder %v7985, 8.507059e+37
        %v7987 = vand.u32 %v5144, 2147483648
        %v7988 = vor.u32 1.1754944e-38, %v7987
        %v7989 = vsel %vm7986, %v7988, %v7984
        %v7990 = vmul.f32 1.0, %v7989
        %v7991 = vrcp.pop %v5145
        %v7992 = vmul.f32 %v5145, %v7991
        %v7993 = vsub.f32 1.0, %v7992
        %v7994 = vmul.f32 %v7991, %v7993
        %v7995 = vadd.f32 %v7991, %v7994
        %vm7996 = vweird.f32 %v5145
        %vm7997 = vweird.f32 %v7991
        %vm7998 = vmor %vm7996, %vm7997
        %v7999 = vsel %vm7998, %v7991, %v7995
        %v8000 = vand.u32 2147483647, %v5145
        %vm8001 = vcmp.eq.f32.partialorder %v8000, 8.507059e+37
        %v8002 = vand.u32 %v5145, 2147483648
        %v8003 = vor.u32 1.1754944e-38, %v8002
        %v8004 = vsel %vm8001, %v8003, %v7999
        %v8005 = vmul.f32 1.0, %v8004
        %v8006 = vrcp.pop %v5146
        %v8007 = vmul.f32 %v5146, %v8006
        %v8008 = vsub.f32 1.0, %v8007
        %v8009 = vmul.f32 %v8006, %v8008
        %v8010 = vadd.f32 %v8006, %v8009
        %vm8011 = vweird.f32 %v5146
        %vm8012 = vweird.f32 %v8006
        %vm8013 = vmor %vm8011, %vm8012
        %v8014 = vsel %vm8013, %v8006, %v8010
        %v8015 = vand.u32 2147483647, %v5146
        %vm8016 = vcmp.eq.f32.partialorder %v8015, 8.507059e+37
        %v8017 = vand.u32 %v5146, 2147483648
        %v8018 = vor.u32 1.1754944e-38, %v8017
        %v8019 = vsel %vm8016, %v8018, %v8014
        %v8020 = vmul.f32 1.0, %v8019
        %v8021 = vrcp.pop %v5147
        %v8022 = vmul.f32 %v5147, %v8021
        %v8023 = vsub.f32 1.0, %v8022
        %v8024 = vmul.f32 %v8021, %v8023
        %v8025 = vadd.f32 %v8021, %v8024
        %vm8026 = vweird.f32 %v5147
        %vm8027 = vweird.f32 %v8021
        %vm8028 = vmor %vm8026, %vm8027
        %v8029 = vsel %vm8028, %v8021, %v8025
        %v8030 = vand.u32 2147483647, %v5147
        %vm8031 = vcmp.eq.f32.partialorder %v8030, 8.507059e+37
        %v8032 = vand.u32 %v5147, 2147483648
        %v8033 = vor.u32 1.1754944e-38, %v8032
        %v8034 = vsel %vm8031, %v8033, %v8029
        %v8035 = vmul.f32 1.0, %v8034
        %v8036 = vrcp.pop %v5148
        %v8037 = vmul.f32 %v5148, %v8036
        %v8038 = vsub.f32 1.0, %v8037
        %v8039 = vmul.f32 %v8036, %v8038
        %v8040 = vadd.f32 %v8036, %v8039
        %vm8041 = vweird.f32 %v5148
        %vm8042 = vweird.f32 %v8036
        %vm8043 = vmor %vm8041, %vm8042
        %v8044 = vsel %vm8043, %v8036, %v8040
        %v8045 = vand.u32 2147483647, %v5148
        %vm8046 = vcmp.eq.f32.partialorder %v8045, 8.507059e+37
        %v8047 = vand.u32 %v5148, 2147483648
        %v8048 = vor.u32 1.1754944e-38, %v8047
        %v8049 = vsel %vm8046, %v8048, %v8044
        %v8050 = vmul.f32 1.0, %v8049
        %v8051 = vrcp.pop %v5149
        %v8052 = vmul.f32 %v5149, %v8051
        %v8053 = vsub.f32 1.0, %v8052
        %v8054 = vmul.f32 %v8051, %v8053
        %v8055 = vadd.f32 %v8051, %v8054
        %vm8056 = vweird.f32 %v5149
        %vm8057 = vweird.f32 %v8051
        %vm8058 = vmor %vm8056, %vm8057
        %v8059 = vsel %vm8058, %v8051, %v8055
        %v8060 = vand.u32 2147483647, %v5149
        %vm8061 = vcmp.eq.f32.partialorder %v8060, 8.507059e+37
        %v8062 = vand.u32 %v5149, 2147483648
        %v8063 = vor.u32 1.1754944e-38, %v8062
        %v8064 = vsel %vm8061, %v8063, %v8059
        %v8065 = vmul.f32 1.0, %v8064
        %v8066 = vrcp.pop %v5150
        %v8067 = vmul.f32 %v5150, %v8066
        %v8068 = vsub.f32 1.0, %v8067
        %v8069 = vmul.f32 %v8066, %v8068
        %v8070 = vadd.f32 %v8066, %v8069
        %vm8071 = vweird.f32 %v5150
        %vm8072 = vweird.f32 %v8066
        %vm8073 = vmor %vm8071, %vm8072
        %v8074 = vsel %vm8073, %v8066, %v8070
        %v8075 = vand.u32 2147483647, %v5150
        %vm8076 = vcmp.eq.f32.partialorder %v8075, 8.507059e+37
        %v8077 = vand.u32 %v5150, 2147483648
        %v8078 = vor.u32 1.1754944e-38, %v8077
        %v8079 = vsel %vm8076, %v8078, %v8074
        %v8080 = vmul.f32 1.0, %v8079
        %v8081 = vrcp.pop %v5151
        %v8082 = vmul.f32 %v5151, %v8081
        %v8083 = vsub.f32 1.0, %v8082
        %v8084 = vmul.f32 %v8081, %v8083
        %v8085 = vadd.f32 %v8081, %v8084
        %vm8086 = vweird.f32 %v5151
        %vm8087 = vweird.f32 %v8081
        %vm8088 = vmor %vm8086, %vm8087
        %v8089 = vsel %vm8088, %v8081, %v8085
        %v8090 = vand.u32 2147483647, %v5151
        %vm8091 = vcmp.eq.f32.partialorder %v8090, 8.507059e+37
        %v8092 = vand.u32 %v5151, 2147483648
        %v8093 = vor.u32 1.1754944e-38, %v8092
        %v8094 = vsel %vm8091, %v8093, %v8089
        %v8095 = vmul.f32 1.0, %v8094
        %v8096 = vrcp.pop %v5152
        %v8097 = vmul.f32 %v5152, %v8096
        %v8098 = vsub.f32 1.0, %v8097
        %v8099 = vmul.f32 %v8096, %v8098
        %v8100 = vadd.f32 %v8096, %v8099
        %vm8101 = vweird.f32 %v5152
        %vm8102 = vweird.f32 %v8096
        %vm8103 = vmor %vm8101, %vm8102
        %v8104 = vsel %vm8103, %v8096, %v8100
        %v8105 = vand.u32 2147483647, %v5152
        %vm8106 = vcmp.eq.f32.partialorder %v8105, 8.507059e+37
        %v8107 = vand.u32 %v5152, 2147483648
        %v8108 = vor.u32 1.1754944e-38, %v8107
        %v8109 = vsel %vm8106, %v8108, %v8104
        %v8110 = vmul.f32 1.0, %v8109
        %v8111 = vrcp.pop %v5153
        %v8112 = vmul.f32 %v5153, %v8111
        %v8113 = vsub.f32 1.0, %v8112
        %v8114 = vmul.f32 %v8111, %v8113
        %v8115 = vadd.f32 %v8111, %v8114
        %vm8116 = vweird.f32 %v5153
        %vm8117 = vweird.f32 %v8111
        %vm8118 = vmor %vm8116, %vm8117
        %v8119 = vsel %vm8118, %v8111, %v8115
        %v8120 = vand.u32 2147483647, %v5153
        %vm8121 = vcmp.eq.f32.partialorder %v8120, 8.507059e+37
        %v8122 = vand.u32 %v5153, 2147483648
        %v8123 = vor.u32 1.1754944e-38, %v8122
        %v8124 = vsel %vm8121, %v8123, %v8119
        %v8125 = vmul.f32 1.0, %v8124
        %v8126 = vrcp.pop %v5154
        %v8127 = vmul.f32 %v5154, %v8126
        %v8128 = vsub.f32 1.0, %v8127
        %v8129 = vmul.f32 %v8126, %v8128
        %v8130 = vadd.f32 %v8126, %v8129
        %vm8131 = vweird.f32 %v5154
        %vm8132 = vweird.f32 %v8126
        %vm8133 = vmor %vm8131, %vm8132
        %v8134 = vsel %vm8133, %v8126, %v8130
        %v8135 = vand.u32 2147483647, %v5154
        %vm8136 = vcmp.eq.f32.partialorder %v8135, 8.507059e+37
        %v8137 = vand.u32 %v5154, 2147483648
        %v8138 = vor.u32 1.1754944e-38, %v8137
        %v8139 = vsel %vm8136, %v8138, %v8134
        %v8140 = vmul.f32 1.0, %v8139
        %v8141 = vrcp.pop %v5155
        %v8142 = vmul.f32 %v5155, %v8141
        %v8143 = vsub.f32 1.0, %v8142
        %v8144 = vmul.f32 %v8141, %v8143
        %v8145 = vadd.f32 %v8141, %v8144
        %vm8146 = vweird.f32 %v5155
        %vm8147 = vweird.f32 %v8141
        %vm8148 = vmor %vm8146, %vm8147
        %v8149 = vsel %vm8148, %v8141, %v8145
        %v8150 = vand.u32 2147483647, %v5155
        %vm8151 = vcmp.eq.f32.partialorder %v8150, 8.507059e+37
        %v8152 = vand.u32 %v5155, 2147483648
        %v8153 = vor.u32 1.1754944e-38, %v8152
        %v8154 = vsel %vm8151, %v8153, %v8149
        %v8155 = vmul.f32 1.0, %v8154
        %v8156 = vmul.f32 %v2103, %v5170
        %v8157 = vmul.f32 %v2249, %v5185
        %v8158 = vmul.f32 %v2395, %v5200
        %v8159 = vmul.f32 %v2541, %v5215
        %v8160 = vmul.f32 %v2687, %v5230
        %v8161 = vmul.f32 %v2833, %v5245
        %v8162 = vmul.f32 %v2979, %v5260
        %v8163 = vmul.f32 %v3125, %v5275
        %v8164 = vmul.f32 %v2105, %v5290
        %v8165 = vmul.f32 %v2251, %v5305
        %v8166 = vmul.f32 %v2397, %v5320
        %v8167 = vmul.f32 %v2543, %v5335
        %v8168 = vmul.f32 %v2689, %v5350
        %v8169 = vmul.f32 %v2835, %v5365
        %v8170 = vmul.f32 %v2981, %v5380
        %v8171 = vmul.f32 %v3127, %v5395
        %v8172 = vmul.f32 %v2108, %v5410
        %v8173 = vmul.f32 %v2254, %v5425
        %v8174 = vmul.f32 %v2400, %v5440
        %v8175 = vmul.f32 %v2546, %v5455
        %v8176 = vmul.f32 %v2692, %v5470
        %v8177 = vmul.f32 %v2838, %v5485
        %v8178 = vmul.f32 %v2984, %v5500
        %v8179 = vmul.f32 %v3130, %v5515
        %v8180 = vmul.f32 %v2110, %v5530
        %v8181 = vmul.f32 %v2256, %v5545
        %v8182 = vmul.f32 %v2402, %v5560
        %v8183 = vmul.f32 %v2548, %v5575
        %v8184 = vmul.f32 %v2694, %v5590
        %v8185 = vmul.f32 %v2840, %v5605
        %v8186 = vmul.f32 %v2986, %v5620
        %v8187 = vmul.f32 %v3132, %v5635
        %v8188 = vmul.f32 %v2113, %v5650
        %v8189 = vmul.f32 %v2259, %v5665
        %v8190 = vmul.f32 %v2405, %v5680
        %v8191 = vmul.f32 %v2551, %v5695
        %v8192 = vmul.f32 %v2697, %v5710
        %v8193 = vmul.f32 %v2843, %v5725
        %v8194 = vmul.f32 %v2989, %v5740
        %v8195 = vmul.f32 %v3135, %v5755
        %v8196 = vmul.f32 %v2115, %v5770
        %v8197 = vmul.f32 %v2261, %v5785
        %v8198 = vmul.f32 %v2407, %v5800
        %v8199 = vmul.f32 %v2553, %v5815
        %v8200 = vmul.f32 %v2699, %v5830
        %v8201 = vmul.f32 %v2845, %v5845
        %v8202 = vmul.f32 %v2991, %v5860
        %v8203 = vmul.f32 %v3137, %v5875
        %v8204 = vmul.f32 %v2118, %v5890
        %v8205 = vmul.f32 %v2264, %v5905
        %v8206 = vmul.f32 %v2410, %v5920
        %v8207 = vmul.f32 %v2556, %v5935
        %v8208 = vmul.f32 %v2702, %v5950
        %v8209 = vmul.f32 %v2848, %v5965
        %v8210 = vmul.f32 %v2994, %v5980
        %v8211 = vmul.f32 %v3140, %v5995
        %v8212 = vmul.f32 %v2120, %v6010
        %v8213 = vmul.f32 %v2266, %v6025
        %v8214 = vmul.f32 %v2412, %v6040
        %v8215 = vmul.f32 %v2558, %v6055
        %v8216 = vmul.f32 %v2704, %v6070
        %v8217 = vmul.f32 %v2850, %v6085
        %v8218 = vmul.f32 %v2996, %v6100
        %v8219 = vmul.f32 %v3142, %v6115
        %v8220 = vmul.f32 %v2123, %v6130
        %v8221 = vmul.f32 %v2269, %v6145
        %v8222 = vmul.f32 %v2415, %v6160
        %v8223 = vmul.f32 %v2561, %v6175
        %v8224 = vmul.f32 %v2707, %v6190
        %v8225 = vmul.f32 %v2853, %v6205
        %v8226 = vmul.f32 %v2999, %v6220
        %v8227 = vmul.f32 %v3145, %v6235
        %v8228 = vmul.f32 %v2125, %v6250
        %v8229 = vmul.f32 %v2271, %v6265
        %v8230 = vmul.f32 %v2417, %v6280
        %v8231 = vmul.f32 %v2563, %v6295
        %v8232 = vmul.f32 %v2709, %v6310
        %v8233 = vmul.f32 %v2855, %v6325
        %v8234 = vmul.f32 %v3001, %v6340
        %v8235 = vmul.f32 %v3147, %v6355
        %v8236 = vmul.f32 %v2128, %v6370
        %v8237 = vmul.f32 %v2274, %v6385
        %v8238 = vmul.f32 %v2420, %v6400
        %v8239 = vmul.f32 %v2566, %v6415
        %v8240 = vmul.f32 %v2712, %v6430
        %v8241 = vmul.f32 %v2858, %v6445
        %v8242 = vmul.f32 %v3004, %v6460
        %v8243 = vmul.f32 %v3150, %v6475
        %v8244 = vmul.f32 %v2130, %v6490
        %v8245 = vmul.f32 %v2276, %v6505
        %v8246 = vmul.f32 %v2422, %v6520
        %v8247 = vmul.f32 %v2568, %v6535
        %v8248 = vmul.f32 %v2714, %v6550
        %v8249 = vmul.f32 %v2860, %v6565
        %v8250 = vmul.f32 %v3006, %v6580
        %v8251 = vmul.f32 %v3152, %v6595
        %v8252 = vmul.f32 %v2133, %v6610
        %v8253 = vmul.f32 %v2279, %v6625
        %v8254 = vmul.f32 %v2425, %v6640
        %v8255 = vmul.f32 %v2571, %v6655
        %v8256 = vmul.f32 %v2717, %v6670
        %v8257 = vmul.f32 %v2863, %v6685
        %v8258 = vmul.f32 %v3009, %v6700
        %v8259 = vmul.f32 %v3155, %v6715
        %v8260 = vmul.f32 %v2135, %v6730
        %v8261 = vmul.f32 %v2281, %v6745
        %v8262 = vmul.f32 %v2427, %v6760
        %v8263 = vmul.f32 %v2573, %v6775
        %v8264 = vmul.f32 %v2719, %v6790
        %v8265 = vmul.f32 %v2865, %v6805
        %v8266 = vmul.f32 %v3011, %v6820
        %v8267 = vmul.f32 %v3157, %v6835
        %v8268 = vmul.f32 %v2138, %v6850
        %v8269 = vmul.f32 %v2284, %v6865
        %v8270 = vmul.f32 %v2430, %v6880
        %v8271 = vmul.f32 %v2576, %v6895
        %v8272 = vmul.f32 %v2722, %v6910
        %v8273 = vmul.f32 %v2868, %v6925
        %v8274 = vmul.f32 %v3014, %v6940
        %v8275 = vmul.f32 %v3160, %v6955
        %v8276 = vmul.f32 %v2140, %v6970
        %v8277 = vmul.f32 %v2286, %v6985
        %v8278 = vmul.f32 %v2432, %v7000
        %v8279 = vmul.f32 %v2578, %v7015
        %v8280 = vmul.f32 %v2724, %v7030
        %v8281 = vmul.f32 %v2870, %v7045
        %v8282 = vmul.f32 %v3016, %v7060
        %v8283 = vmul.f32 %v3162, %v7075
        %v8284 = vmul.f32 %v2143, %v7090
        %v8285 = vmul.f32 %v2289, %v7105
        %v8286 = vmul.f32 %v2435, %v7120
        %v8287 = vmul.f32 %v2581, %v7135
        %v8288 = vmul.f32 %v2727, %v7150
        %v8289 = vmul.f32 %v2873, %v7165
        %v8290 = vmul.f32 %v3019, %v7180
        %v8291 = vmul.f32 %v3165, %v7195
        %v8292 = vmul.f32 %v2145, %v7210
        %v8293 = vmul.f32 %v2291, %v7225
        %v8294 = vmul.f32 %v2437, %v7240
        %v8295 = vmul.f32 %v2583, %v7255
        %v8296 = vmul.f32 %v2729, %v7270
        %v8297 = vmul.f32 %v2875, %v7285
        %v8298 = vmul.f32 %v3021, %v7300
        %v8299 = vmul.f32 %v3167, %v7315
        %v8300 = vmul.f32 %v2148, %v7330
        %v8301 = vmul.f32 %v2294, %v7345
        %v8302 = vmul.f32 %v2440, %v7360
        %v8303 = vmul.f32 %v2586, %v7375
        %v8304 = vmul.f32 %v2732, %v7390
        %v8305 = vmul.f32 %v2878, %v7405
        %v8306 = vmul.f32 %v3024, %v7420
        %v8307 = vmul.f32 %v3170, %v7435
        %v8308 = vmul.f32 %v2150, %v7450
        %v8309 = vmul.f32 %v2296, %v7465
        %v8310 = vmul.f32 %v2442, %v7480
        %v8311 = vmul.f32 %v2588, %v7495
        %v8312 = vmul.f32 %v2734, %v7510
        %v8313 = vmul.f32 %v2880, %v7525
        %v8314 = vmul.f32 %v3026, %v7540
        %v8315 = vmul.f32 %v3172, %v7555
        %v8316 = vmul.f32 %v2153, %v7570
        %v8317 = vmul.f32 %v2299, %v7585
        %v8318 = vmul.f32 %v2445, %v7600
        %v8319 = vmul.f32 %v2591, %v7615
        %v8320 = vmul.f32 %v2737, %v7630
        %v8321 = vmul.f32 %v2883, %v7645
        %v8322 = vmul.f32 %v3029, %v7660
        %v8323 = vmul.f32 %v3175, %v7675
        %v8324 = vmul.f32 %v2155, %v7690
        %v8325 = vmul.f32 %v2301, %v7705
        %v8326 = vmul.f32 %v2447, %v7720
        %v8327 = vmul.f32 %v2593, %v7735
        %v8328 = vmul.f32 %v2739, %v7750
        %v8329 = vmul.f32 %v2885, %v7765
        %v8330 = vmul.f32 %v3031, %v7780
        %v8331 = vmul.f32 %v3177, %v7795
        %v8332 = vmul.f32 %v2158, %v7810
        %v8333 = vmul.f32 %v2304, %v7825
        %v8334 = vmul.f32 %v2450, %v7840
        %v8335 = vmul.f32 %v2596, %v7855
        %v8336 = vmul.f32 %v2742, %v7870
        %v8337 = vmul.f32 %v2888, %v7885
        %v8338 = vmul.f32 %v3034, %v7900
        %v8339 = vmul.f32 %v3180, %v7915
        %v8340 = vmul.f32 %v2160, %v7930
        %v8341 = vmul.f32 %v2306, %v7945
        %v8342 = vmul.f32 %v2452, %v7960
        %v8343 = vmul.f32 %v2598, %v7975
        %v8344 = vmul.f32 %v2744, %v7990
        %v8345 = vmul.f32 %v2890, %v8005
        %v8346 = vmul.f32 %v3036, %v8020
        %v8347 = vmul.f32 %v3182, %v8035
        %v8348 = vmul.f32 %v2163, %v8050
        %v8349 = vmul.f32 %v2309, %v8065
        %v8350 = vmul.f32 %v2455, %v8080
        %v8351 = vmul.f32 %v2601, %v8095
        %v8352 = vmul.f32 %v2747, %v8110
        %v8353 = vmul.f32 %v2893, %v8125
        %v8354 = vmul.f32 %v3039, %v8140
        %v8355 = vmul.f32 %v3185, %v8155
        %v8356 = vmul.f32 %v8156, %v3271
        %v8357 = vmul.f32 %v8157, %v3417
        %v8358 = vmul.f32 %v8158, %v3563
        %v8359 = vmul.f32 %v8159, %v3709
        %v8360 = vmul.f32 %v8160, %v3855
        %v8361 = vmul.f32 %v8161, %v4001
        %v8362 = vmul.f32 %v8162, %v4147
        %v8363 = vmul.f32 %v8163, %v4293
        %v8364 = vmul.f32 %v8164, %v3273
        %v8365 = vmul.f32 %v8165, %v3419
        %v8366 = vmul.f32 %v8166, %v3565
        %v8367 = vmul.f32 %v8167, %v3711
        %v8368 = vmul.f32 %v8168, %v3857
        %v8369 = vmul.f32 %v8169, %v4003
        %v8370 = vmul.f32 %v8170, %v4149
        %v8371 = vmul.f32 %v8171, %v4295
        %v8372 = vmul.f32 %v8172, %v3276
        %v8373 = vmul.f32 %v8173, %v3422
        %v8374 = vmul.f32 %v8174, %v3568
        %v8375 = vmul.f32 %v8175, %v3714
        %v8376 = vmul.f32 %v8176, %v3860
        %v8377 = vmul.f32 %v8177, %v4006
        %v8378 = vmul.f32 %v8178, %v4152
        %v8379 = vmul.f32 %v8179, %v4298
        %v8380 = vmul.f32 %v8180, %v3278
        %v8381 = vmul.f32 %v8181, %v3424
        %v8382 = vmul.f32 %v8182, %v3570
        %v8383 = vmul.f32 %v8183, %v3716
        %v8384 = vmul.f32 %v8184, %v3862
        %v8385 = vmul.f32 %v8185, %v4008
        %v8386 = vmul.f32 %v8186, %v4154
        %v8387 = vmul.f32 %v8187, %v4300
        %v8388 = vmul.f32 %v8188, %v3281
        %v8389 = vmul.f32 %v8189, %v3427
        %v8390 = vmul.f32 %v8190, %v3573
        %v8391 = vmul.f32 %v8191, %v3719
        %v8392 = vmul.f32 %v8192, %v3865
        %v8393 = vmul.f32 %v8193, %v4011
        %v8394 = vmul.f32 %v8194, %v4157
        %v8395 = vmul.f32 %v8195, %v4303
        %v8396 = vmul.f32 %v8196, %v3283
        %v8397 = vmul.f32 %v8197, %v3429
        %v8398 = vmul.f32 %v8198, %v3575
        %v8399 = vmul.f32 %v8199, %v3721
        %v8400 = vmul.f32 %v8200, %v3867
        %v8401 = vmul.f32 %v8201, %v4013
        %v8402 = vmul.f32 %v8202, %v4159
        %v8403 = vmul.f32 %v8203, %v4305
        %v8404 = vmul.f32 %v8204, %v3286
        %v8405 = vmul.f32 %v8205, %v3432
        %v8406 = vmul.f32 %v8206, %v3578
        %v8407 = vmul.f32 %v8207, %v3724
        %v8408 = vmul.f32 %v8208, %v3870
        %v8409 = vmul.f32 %v8209, %v4016
        %v8410 = vmul.f32 %v8210, %v4162
        %v8411 = vmul.f32 %v8211, %v4308
        %v8412 = vmul.f32 %v8212, %v3288
        %v8413 = vmul.f32 %v8213, %v3434
        %v8414 = vmul.f32 %v8214, %v3580
        %v8415 = vmul.f32 %v8215, %v3726
        %v8416 = vmul.f32 %v8216, %v3872
        %v8417 = vmul.f32 %v8217, %v4018
        %v8418 = vmul.f32 %v8218, %v4164
        %v8419 = vmul.f32 %v8219, %v4310
        %v8420 = vmul.f32 %v8220, %v3291
        %v8421 = vmul.f32 %v8221, %v3437
        %v8422 = vmul.f32 %v8222, %v3583
        %v8423 = vmul.f32 %v8223, %v3729
        %v8424 = vmul.f32 %v8224, %v3875
        %v8425 = vmul.f32 %v8225, %v4021
        %v8426 = vmul.f32 %v8226, %v4167
        %v8427 = vmul.f32 %v8227, %v4313
        %v8428 = vmul.f32 %v8228, %v3293
        %v8429 = vmul.f32 %v8229, %v3439
        %v8430 = vmul.f32 %v8230, %v3585
        %v8431 = vmul.f32 %v8231, %v3731
        %v8432 = vmul.f32 %v8232, %v3877
        %v8433 = vmul.f32 %v8233, %v4023
        %v8434 = vmul.f32 %v8234, %v4169
        %v8435 = vmul.f32 %v8235, %v4315
        %v8436 = vmul.f32 %v8236, %v3296
        %v8437 = vmul.f32 %v8237, %v3442
        %v8438 = vmul.f32 %v8238, %v3588
        %v8439 = vmul.f32 %v8239, %v3734
        %v8440 = vmul.f32 %v8240, %v3880
        %v8441 = vmul.f32 %v8241, %v4026
        %v8442 = vmul.f32 %v8242, %v4172
        %v8443 = vmul.f32 %v8243, %v4318
        %v8444 = vmul.f32 %v8244, %v3298
        %v8445 = vmul.f32 %v8245, %v3444
        %v8446 = vmul.f32 %v8246, %v3590
        %v8447 = vmul.f32 %v8247, %v3736
        %v8448 = vmul.f32 %v8248, %v3882
        %v8449 = vmul.f32 %v8249, %v4028
        %v8450 = vmul.f32 %v8250, %v4174
        %v8451 = vmul.f32 %v8251, %v4320
        %v8452 = vmul.f32 %v8252, %v3301
        %v8453 = vmul.f32 %v8253, %v3447
        %v8454 = vmul.f32 %v8254, %v3593
        %v8455 = vmul.f32 %v8255, %v3739
        %v8456 = vmul.f32 %v8256, %v3885
        %v8457 = vmul.f32 %v8257, %v4031
        %v8458 = vmul.f32 %v8258, %v4177
        %v8459 = vmul.f32 %v8259, %v4323
        %v8460 = vmul.f32 %v8260, %v3303
        %v8461 = vmul.f32 %v8261, %v3449
        %v8462 = vmul.f32 %v8262, %v3595
        %v8463 = vmul.f32 %v8263, %v3741
        %v8464 = vmul.f32 %v8264, %v3887
        %v8465 = vmul.f32 %v8265, %v4033
        %v8466 = vmul.f32 %v8266, %v4179
        %v8467 = vmul.f32 %v8267, %v4325
        %v8468 = vmul.f32 %v8268, %v3306
        %v8469 = vmul.f32 %v8269, %v3452
        %v8470 = vmul.f32 %v8270, %v3598
        %v8471 = vmul.f32 %v8271, %v3744
        %v8472 = vmul.f32 %v8272, %v3890
        %v8473 = vmul.f32 %v8273, %v4036
        %v8474 = vmul.f32 %v8274, %v4182
        %v8475 = vmul.f32 %v8275, %v4328
        %v8476 = vmul.f32 %v8276, %v3308
        %v8477 = vmul.f32 %v8277, %v3454
        %v8478 = vmul.f32 %v8278, %v3600
        %v8479 = vmul.f32 %v8279, %v3746
        %v8480 = vmul.f32 %v8280, %v3892
        %v8481 = vmul.f32 %v8281, %v4038
        %v8482 = vmul.f32 %v8282, %v4184
        %v8483 = vmul.f32 %v8283, %v4330
        %v8484 = vmul.f32 %v8284, %v3311
        %v8485 = vmul.f32 %v8285, %v3457
        %v8486 = vmul.f32 %v8286, %v3603
        %v8487 = vmul.f32 %v8287, %v3749
        %v8488 = vmul.f32 %v8288, %v3895
        %v8489 = vmul.f32 %v8289, %v4041
        %v8490 = vmul.f32 %v8290, %v4187
        %v8491 = vmul.f32 %v8291, %v4333
        %v8492 = vmul.f32 %v8292, %v3313
        %v8493 = vmul.f32 %v8293, %v3459
        %v8494 = vmul.f32 %v8294, %v3605
        %v8495 = vmul.f32 %v8295, %v3751
        %v8496 = vmul.f32 %v8296, %v3897
        %v8497 = vmul.f32 %v8297, %v4043
        %v8498 = vmul.f32 %v8298, %v4189
        %v8499 = vmul.f32 %v8299, %v4335
        %v8500 = vmul.f32 %v8300, %v3316
        %v8501 = vmul.f32 %v8301, %v3462
        %v8502 = vmul.f32 %v8302, %v3608
        %v8503 = vmul.f32 %v8303, %v3754
        %v8504 = vmul.f32 %v8304, %v3900
        %v8505 = vmul.f32 %v8305, %v4046
        %v8506 = vmul.f32 %v8306, %v4192
        %v8507 = vmul.f32 %v8307, %v4338
        %v8508 = vmul.f32 %v8308, %v3318
        %v8509 = vmul.f32 %v8309, %v3464
        %v8510 = vmul.f32 %v8310, %v3610
        %v8511 = vmul.f32 %v8311, %v3756
        %v8512 = vmul.f32 %v8312, %v3902
        %v8513 = vmul.f32 %v8313, %v4048
        %v8514 = vmul.f32 %v8314, %v4194
        %v8515 = vmul.f32 %v8315, %v4340
        %v8516 = vmul.f32 %v8316, %v3321
        %v8517 = vmul.f32 %v8317, %v3467
        %v8518 = vmul.f32 %v8318, %v3613
        %v8519 = vmul.f32 %v8319, %v3759
        %v8520 = vmul.f32 %v8320, %v3905
        %v8521 = vmul.f32 %v8321, %v4051
        %v8522 = vmul.f32 %v8322, %v4197
        %v8523 = vmul.f32 %v8323, %v4343
        %v8524 = vmul.f32 %v8324, %v3323
        %v8525 = vmul.f32 %v8325, %v3469
        %v8526 = vmul.f32 %v8326, %v3615
        %v8527 = vmul.f32 %v8327, %v3761
        %v8528 = vmul.f32 %v8328, %v3907
        %v8529 = vmul.f32 %v8329, %v4053
        %v8530 = vmul.f32 %v8330, %v4199
        %v8531 = vmul.f32 %v8331, %v4345
        %v8532 = vmul.f32 %v8332, %v3326
        %v8533 = vmul.f32 %v8333, %v3472
        %v8534 = vmul.f32 %v8334, %v3618
        %v8535 = vmul.f32 %v8335, %v3764
        %v8536 = vmul.f32 %v8336, %v3910
        %v8537 = vmul.f32 %v8337, %v4056
        %v8538 = vmul.f32 %v8338, %v4202
        %v8539 = vmul.f32 %v8339, %v4348
        %v8540 = vmul.f32 %v8340, %v3328
        %v8541 = vmul.f32 %v8341, %v3474
        %v8542 = vmul.f32 %v8342, %v3620
        %v8543 = vmul.f32 %v8343, %v3766
        %v8544 = vmul.f32 %v8344, %v3912
        %v8545 = vmul.f32 %v8345, %v4058
        %v8546 = vmul.f32 %v8346, %v4204
        %v8547 = vmul.f32 %v8347, %v4350
        %v8548 = vmul.f32 %v8348, %v3331
        %v8549 = vmul.f32 %v8349, %v3477
        %v8550 = vmul.f32 %v8350, %v3623
        %v8551 = vmul.f32 %v8351, %v3769
        %v8552 = vmul.f32 %v8352, %v3915
        %v8553 = vmul.f32 %v8353, %v4061
        %v8554 = vmul.f32 %v8354, %v4207
        %v8555 = vmul.f32 %v8355, %v4353
        %v8556 = vpack.c.bf16 %v8364, %v8356
        %v8557 = vpack.c.bf16 %v8365, %v8357
        %v8558 = vpack.c.bf16 %v8366, %v8358
        %v8559 = vpack.c.bf16 %v8367, %v8359
        %v8560 = vpack.c.bf16 %v8368, %v8360
        %v8561 = vpack.c.bf16 %v8369, %v8361
        %v8562 = vpack.c.bf16 %v8370, %v8362
        %v8563 = vpack.c.bf16 %v8371, %v8363
        %v8564 = vpack.c.bf16 %v8380, %v8372
        %v8565 = vpack.c.bf16 %v8381, %v8373
        %v8566 = vpack.c.bf16 %v8382, %v8374
        %v8567 = vpack.c.bf16 %v8383, %v8375
        %v8568 = vpack.c.bf16 %v8384, %v8376
        %v8569 = vpack.c.bf16 %v8385, %v8377
        %v8570 = vpack.c.bf16 %v8386, %v8378
        %v8571 = vpack.c.bf16 %v8387, %v8379
        %v8572 = vpack.c.bf16 %v8396, %v8388
        %v8573 = vpack.c.bf16 %v8397, %v8389
        %v8574 = vpack.c.bf16 %v8398, %v8390
        %v8575 = vpack.c.bf16 %v8399, %v8391
        %v8576 = vpack.c.bf16 %v8400, %v8392
        %v8577 = vpack.c.bf16 %v8401, %v8393
        %v8578 = vpack.c.bf16 %v8402, %v8394
        %v8579 = vpack.c.bf16 %v8403, %v8395
        %v8580 = vpack.c.bf16 %v8412, %v8404
        %v8581 = vpack.c.bf16 %v8413, %v8405
        %v8582 = vpack.c.bf16 %v8414, %v8406
        %v8583 = vpack.c.bf16 %v8415, %v8407
        %v8584 = vpack.c.bf16 %v8416, %v8408
        %v8585 = vpack.c.bf16 %v8417, %v8409
        %v8586 = vpack.c.bf16 %v8418, %v8410
        %v8587 = vpack.c.bf16 %v8419, %v8411
        %v8588 = vpack.c.bf16 %v8428, %v8420
        %v8589 = vpack.c.bf16 %v8429, %v8421
        %v8590 = vpack.c.bf16 %v8430, %v8422
        %v8591 = vpack.c.bf16 %v8431, %v8423
        %v8592 = vpack.c.bf16 %v8432, %v8424
        %v8593 = vpack.c.bf16 %v8433, %v8425
        %v8594 = vpack.c.bf16 %v8434, %v8426
        %v8595 = vpack.c.bf16 %v8435, %v8427
        %v8596 = vpack.c.bf16 %v8444, %v8436
        %v8597 = vpack.c.bf16 %v8445, %v8437
        %v8598 = vpack.c.bf16 %v8446, %v8438
        %v8599 = vpack.c.bf16 %v8447, %v8439
        %v8600 = vpack.c.bf16 %v8448, %v8440
        %v8601 = vpack.c.bf16 %v8449, %v8441
        %v8602 = vpack.c.bf16 %v8450, %v8442
        %v8603 = vpack.c.bf16 %v8451, %v8443
        %v8604 = vpack.c.bf16 %v8460, %v8452
        %v8605 = vpack.c.bf16 %v8461, %v8453
        %v8606 = vpack.c.bf16 %v8462, %v8454
        %v8607 = vpack.c.bf16 %v8463, %v8455
        %v8608 = vpack.c.bf16 %v8464, %v8456
        %v8609 = vpack.c.bf16 %v8465, %v8457
        %v8610 = vpack.c.bf16 %v8466, %v8458
        %v8611 = vpack.c.bf16 %v8467, %v8459
        %v8612 = vpack.c.bf16 %v8476, %v8468
        %v8613 = vpack.c.bf16 %v8477, %v8469
        %v8614 = vpack.c.bf16 %v8478, %v8470
        %v8615 = vpack.c.bf16 %v8479, %v8471
        %v8616 = vpack.c.bf16 %v8480, %v8472
        %v8617 = vpack.c.bf16 %v8481, %v8473
        %v8618 = vpack.c.bf16 %v8482, %v8474
        %v8619 = vpack.c.bf16 %v8483, %v8475
        %v8620 = vpack.c.bf16 %v8492, %v8484
        %v8621 = vpack.c.bf16 %v8493, %v8485
        %v8622 = vpack.c.bf16 %v8494, %v8486
        %v8623 = vpack.c.bf16 %v8495, %v8487
        %v8624 = vpack.c.bf16 %v8496, %v8488
        %v8625 = vpack.c.bf16 %v8497, %v8489
        %v8626 = vpack.c.bf16 %v8498, %v8490
        %v8627 = vpack.c.bf16 %v8499, %v8491
        %v8628 = vpack.c.bf16 %v8508, %v8500
        %v8629 = vpack.c.bf16 %v8509, %v8501
        %v8630 = vpack.c.bf16 %v8510, %v8502
        %v8631 = vpack.c.bf16 %v8511, %v8503
        %v8632 = vpack.c.bf16 %v8512, %v8504
        %v8633 = vpack.c.bf16 %v8513, %v8505
        %v8634 = vpack.c.bf16 %v8514, %v8506
        %v8635 = vpack.c.bf16 %v8515, %v8507
        %v8636 = vpack.c.bf16 %v8524, %v8516
        %v8637 = vpack.c.bf16 %v8525, %v8517
        %v8638 = vpack.c.bf16 %v8526, %v8518
        %v8639 = vpack.c.bf16 %v8527, %v8519
        %v8640 = vpack.c.bf16 %v8528, %v8520
        %v8641 = vpack.c.bf16 %v8529, %v8521
        %v8642 = vpack.c.bf16 %v8530, %v8522
        %v8643 = vpack.c.bf16 %v8531, %v8523
        %v8644 = vpack.c.bf16 %v8540, %v8532
        %v8645 = vpack.c.bf16 %v8541, %v8533
        %v8646 = vpack.c.bf16 %v8542, %v8534
        %v8647 = vpack.c.bf16 %v8543, %v8535
        %v8648 = vpack.c.bf16 %v8544, %v8536
        %v8649 = vpack.c.bf16 %v8545, %v8537
        %v8650 = vpack.c.bf16 %v8546, %v8538
        %v8651 = vpack.c.bf16 %v8547, %v8539
        %v8652 = vpack.c.bf16 %v8548, %v8548
        %v8653 = vpack.c.bf16 %v8549, %v8549
        %v8654 = vpack.c.bf16 %v8550, %v8550
        %v8655 = vpack.c.bf16 %v8551, %v8551
        %v8656 = vpack.c.bf16 %v8552, %v8552
        %v8657 = vpack.c.bf16 %v8553, %v8553
        %v8658 = vpack.c.bf16 %v8554, %v8554
        %v8659 = vpack.c.bf16 %v8555, %v8555
        %v8660 = vld [vmem:[#allocation8] sm:$0xff]
        %v8661 = vld [vmem:[#allocation8 + $0x8] sm:$0xff]
        %v8662 = vld [vmem:[#allocation8 + $0x10] sm:$0xff]
        %v8663 = vld [vmem:[#allocation8 + $0x18] sm:$0xff]
        %v8664 = vld [vmem:[#allocation8 + $0x20] sm:$0xff]
        %v8665 = vld [vmem:[#allocation8 + $0x28] sm:$0xff]
        %v8666 = vld [vmem:[#allocation8 + $0x30] sm:$0xff]
        %v8667 = vld [vmem:[#allocation8 + $0x38] sm:$0xff]
        %v8668 = vld [vmem:[#allocation8 + $0x40] sm:$0xff]
        %v8669 = vld [vmem:[#allocation8 + $0x48] sm:$0xff]
        %v8670 = vld [vmem:[#allocation8 + $0x50] sm:$0xff]
        %v8671 = vld [vmem:[#allocation8 + $0x58] sm:$0xff]
        %v8672 = vld [vmem:[#allocation8 + $0x60] sm:$0xff]
        %v8673 = vld [vmem:[#allocation8 + $0x68] sm:$0xff]
        %v8674 = vld [vmem:[#allocation8 + $0x70] sm:$0xff]
        %v8675 = vld [vmem:[#allocation8 + $0x78] sm:$0xff]
        %v8676 = vld [vmem:[#allocation8 + $0x80] sm:$0xff]
        %v8677 = vld [vmem:[#allocation8 + $0x88] sm:$0xff]
        %v8678 = vld [vmem:[#allocation8 + $0x90] sm:$0xff]
        %v8679 = vld [vmem:[#allocation8 + $0x98] sm:$0xff]
        %v8680 = vld [vmem:[#allocation8 + $0xa0] sm:$0xff]
        %v8681 = vld [vmem:[#allocation8 + $0xa8] sm:$0xff]
        %v8682 = vld [vmem:[#allocation8 + $0xb0] sm:$0xff]
        %v8683 = vld [vmem:[#allocation8 + $0xb8] sm:$0xff]
        %v8684 = vld [vmem:[#allocation8 + $0xc0] sm:$0xff]
        %v8685 = vld [vmem:[#allocation8 + $0xc8] sm:$0xff]
        %v8686 = vld [vmem:[#allocation8 + $0xd0] sm:$0xff]
        %v8687 = vld [vmem:[#allocation8 + $0xd8] sm:$0xff]
        %v8688 = vld [vmem:[#allocation8 + $0xe0] sm:$0xff]
        %v8689 = vld [vmem:[#allocation8 + $0xe8] sm:$0xff]
        %v8690 = vld [vmem:[#allocation8 + $0xf0] sm:$0xff]
        %v8691 = vld [vmem:[#allocation8 + $0xf8] sm:$0xff]
        %v8692 = vld [vmem:[#allocation8 + $0x100] sm:$0xff]
        %v8693 = vld [vmem:[#allocation8 + $0x108] sm:$0xff]
        %v8694 = vld [vmem:[#allocation8 + $0x110] sm:$0xff]
        %v8695 = vld [vmem:[#allocation8 + $0x118] sm:$0xff]
        %v8696 = vld [vmem:[#allocation8 + $0x120] sm:$0xff]
        %v8697 = vld [vmem:[#allocation8 + $0x128] sm:$0xff]
        %v8698 = vld [vmem:[#allocation8 + $0x130] sm:$0xff]
        %v8699 = vld [vmem:[#allocation8 + $0x138] sm:$0xff]
        %v8700 = vld [vmem:[#allocation8 + $0x140] sm:$0xff]
        %v8701 = vld [vmem:[#allocation8 + $0x148] sm:$0xff]
        %v8702 = vld [vmem:[#allocation8 + $0x150] sm:$0xff]
        %v8703 = vld [vmem:[#allocation8 + $0x158] sm:$0xff]
        %v8704 = vld [vmem:[#allocation8 + $0x160] sm:$0xff]
        %v8705 = vld [vmem:[#allocation8 + $0x168] sm:$0xff]
        %v8706 = vld [vmem:[#allocation8 + $0x170] sm:$0xff]
        %v8707 = vld [vmem:[#allocation8 + $0x178] sm:$0xff]
        %v8708 = vld [vmem:[#allocation8 + $0x180] sm:$0xff]
        %v8709 = vld [vmem:[#allocation8 + $0x188] sm:$0xff]
        %v8710 = vld [vmem:[#allocation8 + $0x190] sm:$0xff]
        %v8711 = vld [vmem:[#allocation8 + $0x198] sm:$0xff]
        %v8712 = vld [vmem:[#allocation8 + $0x1a0] sm:$0xff]
        %v8713 = vld [vmem:[#allocation8 + $0x1a8] sm:$0xff]
        %v8714 = vld [vmem:[#allocation8 + $0x1b0] sm:$0xff]
        %v8715 = vld [vmem:[#allocation8 + $0x1b8] sm:$0xff]
        %v8716 = vld [vmem:[#allocation8 + $0x1c0] sm:$0xff]
        %v8717 = vld [vmem:[#allocation8 + $0x1c8] sm:$0xff]
        %v8718 = vld [vmem:[#allocation8 + $0x1d0] sm:$0xff]
        %v8719 = vld [vmem:[#allocation8 + $0x1d8] sm:$0xff]
        %v8720 = vld [vmem:[#allocation8 + $0x1e0] sm:$0xff]
        %v8721 = vld [vmem:[#allocation8 + $0x1e8] sm:$0xff]
        %v8722 = vld [vmem:[#allocation8 + $0x1f0] sm:$0xff]
        %v8723 = vld [vmem:[#allocation8 + $0x1f8] sm:$0xff]
        %v8724 = vld [vmem:[#allocation8 + $0x200] sm:$0xff]
        %v8725 = vld [vmem:[#allocation8 + $0x208] sm:$0xff]
        %v8726 = vld [vmem:[#allocation8 + $0x210] sm:$0xff]
        %v8727 = vld [vmem:[#allocation8 + $0x218] sm:$0xff]
        %v8728 = vld [vmem:[#allocation8 + $0x220] sm:$0xff]
        %v8729 = vld [vmem:[#allocation8 + $0x228] sm:$0xff]
        %v8730 = vld [vmem:[#allocation8 + $0x230] sm:$0xff]
        %v8731 = vld [vmem:[#allocation8 + $0x238] sm:$0xff]
        %v8732 = vld [vmem:[#allocation8 + $0x240] sm:$0xff]
        %v8733 = vld [vmem:[#allocation8 + $0x248] sm:$0xff]
        %v8734 = vld [vmem:[#allocation8 + $0x250] sm:$0xff]
        %v8735 = vld [vmem:[#allocation8 + $0x258] sm:$0xff]
        %v8736 = vld [vmem:[#allocation8 + $0x260] sm:$0xff]
        %v8737 = vld [vmem:[#allocation8 + $0x268] sm:$0xff]
        %v8738 = vld [vmem:[#allocation8 + $0x270] sm:$0xff]
        %v8739 = vld [vmem:[#allocation8 + $0x278] sm:$0xff]
        %v8740 = vld [vmem:[#allocation8 + $0x280] sm:$0xff]
        %v8741 = vld [vmem:[#allocation8 + $0x288] sm:$0xff]
        %v8742 = vld [vmem:[#allocation8 + $0x290] sm:$0xff]
        %v8743 = vld [vmem:[#allocation8 + $0x298] sm:$0xff]
        %v8744 = vld [vmem:[#allocation8 + $0x2a0] sm:$0xff]
        %v8745 = vld [vmem:[#allocation8 + $0x2a8] sm:$0xff]
        %v8746 = vld [vmem:[#allocation8 + $0x2b0] sm:$0xff]
        %v8747 = vld [vmem:[#allocation8 + $0x2b8] sm:$0xff]
        %v8748 = vld [vmem:[#allocation8 + $0x2c0] sm:$0xff]
        %v8749 = vld [vmem:[#allocation8 + $0x2c8] sm:$0xff]
        %v8750 = vld [vmem:[#allocation8 + $0x2d0] sm:$0xff]
        %v8751 = vld [vmem:[#allocation8 + $0x2d8] sm:$0xff]
        %v8752 = vld [vmem:[#allocation8 + $0x2e0] sm:$0xff]
        %v8753 = vld [vmem:[#allocation8 + $0x2e8] sm:$0xff]
        %v8754 = vld [vmem:[#allocation8 + $0x2f0] sm:$0xff]
        %v8755 = vld [vmem:[#allocation8 + $0x2f8] sm:$0xff]
        %v8756 = vld [vmem:[#allocation8 + $0x300] sm:$0xff]
        %v8757 = vld [vmem:[#allocation8 + $0x308] sm:$0xff]
        %v8758 = vld [vmem:[#allocation8 + $0x310] sm:$0xff]
        %v8759 = vld [vmem:[#allocation8 + $0x318] sm:$0xff]
        %v8760 = vld [vmem:[#allocation8 + $0x320] sm:$0xff]
        %v8761 = vld [vmem:[#allocation8 + $0x328] sm:$0xff]
        %v8762 = vld [vmem:[#allocation8 + $0x330] sm:$0xff]
        %v8763 = vld [vmem:[#allocation8 + $0x338] sm:$0xff]
        %v8764 = vld [vmem:[#allocation8 + $0x340] sm:$0xff]
        %v8765 = vld [vmem:[#allocation8 + $0x348] sm:$0xff]
        %v8766 = vld [vmem:[#allocation8 + $0x350] sm:$0xff]
        %v8767 = vld [vmem:[#allocation8 + $0x358] sm:$0xff]
        %v8768 = vld [vmem:[#allocation8 + $0x360] sm:$0xff]
        %v8769 = vld [vmem:[#allocation8 + $0x368] sm:$0xff]
        %v8770 = vld [vmem:[#allocation8 + $0x370] sm:$0xff]
        %v8771 = vld [vmem:[#allocation8 + $0x378] sm:$0xff]
        %v8772 = vld [vmem:[#allocation8 + $0x380] sm:$0xff]
        %v8773 = vld [vmem:[#allocation8 + $0x388] sm:$0xff]
        %v8774 = vld [vmem:[#allocation8 + $0x390] sm:$0xff]
        %v8775 = vld [vmem:[#allocation8 + $0x398] sm:$0xff]
        %v8776 = vld [vmem:[#allocation8 + $0x3a0] sm:$0xff]
        %v8777 = vld [vmem:[#allocation8 + $0x3a8] sm:$0xff]
        %v8778 = vld [vmem:[#allocation8 + $0x3b0] sm:$0xff]
        %v8779 = vld [vmem:[#allocation8 + $0x3b8] sm:$0xff]
        %v8780 = vld [vmem:[#allocation8 + $0x3c0] sm:$0xff]
        %v8781 = vld [vmem:[#allocation8 + $0x3c8] sm:$0xff]
        %v8782 = vld [vmem:[#allocation8 + $0x3d0] sm:$0xff]
        %v8783 = vld [vmem:[#allocation8 + $0x3d8] sm:$0xff]
        %v8784 = vld [vmem:[#allocation8 + $0x3e0] sm:$0xff]
        %v8785 = vld [vmem:[#allocation8 + $0x3e8] sm:$0xff]
        %v8786 = vld [vmem:[#allocation8 + $0x3f0] sm:$0xff]
        %v8787 = vld [vmem:[#allocation8 + $0x3f8] sm:$0xff]
        %v8788 = vld [vmem:[%s4] sm:$0x3]
        %v8790 = vperm.slane %v8788, 0
        %v8791 = vperm.slane %v8788, 1
        %v8922 = vunpack.c.l.b16 %v8660
        %v8923 = vunpack.c.h.b16 %v8660
        %v8924 = vunpack.c.l.b16 %v8661
        %v8925 = vunpack.c.h.b16 %v8661
        %v8926 = vunpack.c.l.b16 %v8662
        %v8927 = vunpack.c.h.b16 %v8662
        %v8928 = vunpack.c.l.b16 %v8663
        %v8929 = vunpack.c.h.b16 %v8663
        %v8930 = vunpack.c.l.b16 %v8664
        %v8931 = vunpack.c.h.b16 %v8664
        %v8932 = vunpack.c.l.b16 %v8665
        %v8933 = vunpack.c.h.b16 %v8665
        %v8934 = vunpack.c.l.b16 %v8666
        %v8935 = vunpack.c.h.b16 %v8666
        %v8936 = vunpack.c.l.b16 %v8667
        %v8937 = vunpack.c.h.b16 %v8667
        %v8938 = vunpack.c.l.b16 %v8668
        %v8939 = vunpack.c.h.b16 %v8668
        %v8940 = vunpack.c.l.b16 %v8669
        %v8941 = vunpack.c.h.b16 %v8669
        %v8942 = vunpack.c.l.b16 %v8670
        %v8943 = vunpack.c.h.b16 %v8670
        %v8944 = vunpack.c.l.b16 %v8671
        %v8945 = vunpack.c.h.b16 %v8671
        %v8946 = vunpack.c.l.b16 %v8672
        %v8947 = vunpack.c.h.b16 %v8672
        %v8948 = vunpack.c.l.b16 %v8673
        %v8949 = vunpack.c.h.b16 %v8673
        %v8950 = vunpack.c.l.b16 %v8674
        %v8951 = vunpack.c.h.b16 %v8674
        %v8952 = vunpack.c.l.b16 %v8675
        %v8953 = vunpack.c.h.b16 %v8675
        %v8954 = vunpack.c.l.b16 %v8676
        %v8955 = vunpack.c.h.b16 %v8676
        %v8956 = vunpack.c.l.b16 %v8677
        %v8957 = vunpack.c.h.b16 %v8677
        %v8958 = vunpack.c.l.b16 %v8678
        %v8959 = vunpack.c.h.b16 %v8678
        %v8960 = vunpack.c.l.b16 %v8679
        %v8961 = vunpack.c.h.b16 %v8679
        %v8962 = vunpack.c.l.b16 %v8680
        %v8963 = vunpack.c.h.b16 %v8680
        %v8964 = vunpack.c.l.b16 %v8681
        %v8965 = vunpack.c.h.b16 %v8681
        %v8966 = vunpack.c.l.b16 %v8682
        %v8967 = vunpack.c.h.b16 %v8682
        %v8968 = vunpack.c.l.b16 %v8683
        %v8969 = vunpack.c.h.b16 %v8683
        %v8970 = vunpack.c.l.b16 %v8684
        %v8971 = vunpack.c.h.b16 %v8684
        %v8972 = vunpack.c.l.b16 %v8685
        %v8973 = vunpack.c.h.b16 %v8685
        %v8974 = vunpack.c.l.b16 %v8686
        %v8975 = vunpack.c.h.b16 %v8686
        %v8976 = vunpack.c.l.b16 %v8687
        %v8977 = vunpack.c.h.b16 %v8687
        %v8978 = vunpack.c.l.b16 %v8688
        %v8979 = vunpack.c.h.b16 %v8688
        %v8980 = vunpack.c.l.b16 %v8689
        %v8981 = vunpack.c.h.b16 %v8689
        %v8982 = vunpack.c.l.b16 %v8690
        %v8983 = vunpack.c.h.b16 %v8690
        %v8984 = vunpack.c.l.b16 %v8691
        %v8985 = vunpack.c.h.b16 %v8691
        %v8986 = vunpack.c.l.b16 %v8692
        %v8987 = vunpack.c.h.b16 %v8692
        %v8988 = vunpack.c.l.b16 %v8693
        %v8989 = vunpack.c.h.b16 %v8693
        %v8990 = vunpack.c.l.b16 %v8694
        %v8991 = vunpack.c.h.b16 %v8694
        %v8992 = vunpack.c.l.b16 %v8695
        %v8993 = vunpack.c.h.b16 %v8695
        %v8994 = vunpack.c.l.b16 %v8696
        %v8995 = vunpack.c.h.b16 %v8696
        %v8996 = vunpack.c.l.b16 %v8697
        %v8997 = vunpack.c.h.b16 %v8697
        %v8998 = vunpack.c.l.b16 %v8698
        %v8999 = vunpack.c.h.b16 %v8698
        %v9000 = vunpack.c.l.b16 %v8699
        %v9001 = vunpack.c.h.b16 %v8699
        %v9002 = vunpack.c.l.b16 %v8700
        %v9003 = vunpack.c.h.b16 %v8700
        %v9004 = vunpack.c.l.b16 %v8701
        %v9005 = vunpack.c.h.b16 %v8701
        %v9006 = vunpack.c.l.b16 %v8702
        %v9007 = vunpack.c.h.b16 %v8702
        %v9008 = vunpack.c.l.b16 %v8703
        %v9009 = vunpack.c.h.b16 %v8703
        %v9010 = vunpack.c.l.b16 %v8704
        %v9011 = vunpack.c.h.b16 %v8704
        %v9012 = vunpack.c.l.b16 %v8705
        %v9013 = vunpack.c.h.b16 %v8705
        %v9014 = vunpack.c.l.b16 %v8706
        %v9015 = vunpack.c.h.b16 %v8706
        %v9016 = vunpack.c.l.b16 %v8707
        %v9017 = vunpack.c.h.b16 %v8707
        %v9018 = vunpack.c.l.b16 %v8708
        %v9019 = vunpack.c.h.b16 %v8708
        %v9020 = vunpack.c.l.b16 %v8709
        %v9021 = vunpack.c.h.b16 %v8709
        %v9022 = vunpack.c.l.b16 %v8710
        %v9023 = vunpack.c.h.b16 %v8710
        %v9024 = vunpack.c.l.b16 %v8711
        %v9025 = vunpack.c.h.b16 %v8711
        %v9026 = vunpack.c.l.b16 %v8712
        %v9027 = vunpack.c.h.b16 %v8712
        %v9028 = vunpack.c.l.b16 %v8713
        %v9029 = vunpack.c.h.b16 %v8713
        %v9030 = vunpack.c.l.b16 %v8714
        %v9031 = vunpack.c.h.b16 %v8714
        %v9032 = vunpack.c.l.b16 %v8715
        %v9033 = vunpack.c.h.b16 %v8715
        %v9034 = vunpack.c.l.b16 %v8716
        %v9035 = vunpack.c.h.b16 %v8716
        %v9036 = vunpack.c.l.b16 %v8717
        %v9037 = vunpack.c.h.b16 %v8717
        %v9038 = vunpack.c.l.b16 %v8718
        %v9039 = vunpack.c.h.b16 %v8718
        %v9040 = vunpack.c.l.b16 %v8719
        %v9041 = vunpack.c.h.b16 %v8719
        %v9042 = vunpack.c.l.b16 %v8720
        %v9043 = vunpack.c.h.b16 %v8720
        %v9044 = vunpack.c.l.b16 %v8721
        %v9045 = vunpack.c.h.b16 %v8721
        %v9046 = vunpack.c.l.b16 %v8722
        %v9047 = vunpack.c.h.b16 %v8722
        %v9048 = vunpack.c.l.b16 %v8723
        %v9049 = vunpack.c.h.b16 %v8723
        %v9050 = vunpack.c.l.b16 %v8724
        %v9051 = vunpack.c.h.b16 %v8724
        %v9052 = vunpack.c.l.b16 %v8725
        %v9053 = vunpack.c.h.b16 %v8725
        %v9054 = vunpack.c.l.b16 %v8726
        %v9055 = vunpack.c.h.b16 %v8726
        %v9056 = vunpack.c.l.b16 %v8727
        %v9057 = vunpack.c.h.b16 %v8727
        %v9058 = vunpack.c.l.b16 %v8728
        %v9059 = vunpack.c.h.b16 %v8728
        %v9060 = vunpack.c.l.b16 %v8729
        %v9061 = vunpack.c.h.b16 %v8729
        %v9062 = vunpack.c.l.b16 %v8730
        %v9063 = vunpack.c.h.b16 %v8730
        %v9064 = vunpack.c.l.b16 %v8731
        %v9065 = vunpack.c.h.b16 %v8731
        %v9066 = vunpack.c.l.b16 %v8732
        %v9067 = vunpack.c.h.b16 %v8732
        %v9068 = vunpack.c.l.b16 %v8733
        %v9069 = vunpack.c.h.b16 %v8733
        %v9070 = vunpack.c.l.b16 %v8734
        %v9071 = vunpack.c.h.b16 %v8734
        %v9072 = vunpack.c.l.b16 %v8735
        %v9073 = vunpack.c.h.b16 %v8735
        %v9074 = vunpack.c.l.b16 %v8736
        %v9075 = vunpack.c.h.b16 %v8736
        %v9076 = vunpack.c.l.b16 %v8737
        %v9077 = vunpack.c.h.b16 %v8737
        %v9078 = vunpack.c.l.b16 %v8738
        %v9079 = vunpack.c.h.b16 %v8738
        %v9080 = vunpack.c.l.b16 %v8739
        %v9081 = vunpack.c.h.b16 %v8739
        %v9082 = vunpack.c.l.b16 %v8740
        %v9083 = vunpack.c.h.b16 %v8740
        %v9084 = vunpack.c.l.b16 %v8741
        %v9085 = vunpack.c.h.b16 %v8741
        %v9086 = vunpack.c.l.b16 %v8742
        %v9087 = vunpack.c.h.b16 %v8742
        %v9088 = vunpack.c.l.b16 %v8743
        %v9089 = vunpack.c.h.b16 %v8743
        %v9090 = vunpack.c.l.b16 %v8744
        %v9091 = vunpack.c.h.b16 %v8744
        %v9092 = vunpack.c.l.b16 %v8745
        %v9093 = vunpack.c.h.b16 %v8745
        %v9094 = vunpack.c.l.b16 %v8746
        %v9095 = vunpack.c.h.b16 %v8746
        %v9096 = vunpack.c.l.b16 %v8747
        %v9097 = vunpack.c.h.b16 %v8747
        %v9098 = vunpack.c.l.b16 %v8748
        %v9099 = vunpack.c.h.b16 %v8748
        %v9100 = vunpack.c.l.b16 %v8749
        %v9101 = vunpack.c.h.b16 %v8749
        %v9102 = vunpack.c.l.b16 %v8750
        %v9103 = vunpack.c.h.b16 %v8750
        %v9104 = vunpack.c.l.b16 %v8751
        %v9105 = vunpack.c.h.b16 %v8751
        %v9106 = vunpack.c.l.b16 %v8752
        %v9107 = vunpack.c.h.b16 %v8752
        %v9108 = vunpack.c.l.b16 %v8753
        %v9109 = vunpack.c.h.b16 %v8753
        %v9110 = vunpack.c.l.b16 %v8754
        %v9111 = vunpack.c.h.b16 %v8754
        %v9112 = vunpack.c.l.b16 %v8755
        %v9113 = vunpack.c.h.b16 %v8755
        %v9114 = vunpack.c.l.b16 %v8756
        %v9115 = vunpack.c.h.b16 %v8756
        %v9116 = vunpack.c.l.b16 %v8757
        %v9117 = vunpack.c.h.b16 %v8757
        %v9118 = vunpack.c.l.b16 %v8758
        %v9119 = vunpack.c.h.b16 %v8758
        %v9120 = vunpack.c.l.b16 %v8759
        %v9121 = vunpack.c.h.b16 %v8759
        %v9122 = vunpack.c.l.b16 %v8760
        %v9123 = vunpack.c.h.b16 %v8760
        %v9124 = vunpack.c.l.b16 %v8761
        %v9125 = vunpack.c.h.b16 %v8761
        %v9126 = vunpack.c.l.b16 %v8762
        %v9127 = vunpack.c.h.b16 %v8762
        %v9128 = vunpack.c.l.b16 %v8763
        %v9129 = vunpack.c.h.b16 %v8763
        %v9130 = vunpack.c.l.b16 %v8764
        %v9131 = vunpack.c.h.b16 %v8764
        %v9132 = vunpack.c.l.b16 %v8765
        %v9133 = vunpack.c.h.b16 %v8765
        %v9134 = vunpack.c.l.b16 %v8766
        %v9135 = vunpack.c.h.b16 %v8766
        %v9136 = vunpack.c.l.b16 %v8767
        %v9137 = vunpack.c.h.b16 %v8767
        %v9138 = vunpack.c.l.b16 %v8768
        %v9139 = vunpack.c.h.b16 %v8768
        %v9140 = vunpack.c.l.b16 %v8769
        %v9141 = vunpack.c.h.b16 %v8769
        %v9142 = vunpack.c.l.b16 %v8770
        %v9143 = vunpack.c.h.b16 %v8770
        %v9144 = vunpack.c.l.b16 %v8771
        %v9145 = vunpack.c.h.b16 %v8771
        %v9146 = vunpack.c.l.b16 %v8772
        %v9147 = vunpack.c.h.b16 %v8772
        %v9148 = vunpack.c.l.b16 %v8773
        %v9149 = vunpack.c.h.b16 %v8773
        %v9150 = vunpack.c.l.b16 %v8774
        %v9151 = vunpack.c.h.b16 %v8774
        %v9152 = vunpack.c.l.b16 %v8775
        %v9153 = vunpack.c.h.b16 %v8775
        %v9154 = vunpack.c.l.b16 %v8776
        %v9155 = vunpack.c.h.b16 %v8776
        %v9156 = vunpack.c.l.b16 %v8777
        %v9157 = vunpack.c.h.b16 %v8777
        %v9158 = vunpack.c.l.b16 %v8778
        %v9159 = vunpack.c.h.b16 %v8778
        %v9160 = vunpack.c.l.b16 %v8779
        %v9161 = vunpack.c.h.b16 %v8779
        %v9162 = vunpack.c.l.b16 %v8780
        %v9163 = vunpack.c.h.b16 %v8780
        %v9164 = vunpack.c.l.b16 %v8781
        %v9165 = vunpack.c.h.b16 %v8781
        %v9166 = vunpack.c.l.b16 %v8782
        %v9167 = vunpack.c.h.b16 %v8782
        %v9168 = vunpack.c.l.b16 %v8783
        %v9169 = vunpack.c.h.b16 %v8783
        %v9170 = vunpack.c.l.b16 %v8784
        %v9171 = vunpack.c.h.b16 %v8784
        %v9172 = vunpack.c.l.b16 %v8785
        %v9173 = vunpack.c.h.b16 %v8785
        %v9174 = vunpack.c.l.b16 %v8786
        %v9175 = vunpack.c.h.b16 %v8786
        %v9176 = vunpack.c.l.b16 %v8787
        %v9177 = vunpack.c.h.b16 %v8787
        %v9178 = vpack.c.b16 %v8924, %v8922
        %v9179 = vpack.c.b16 %v8925, %v8923
        %v9180 = vpack.c.b16 %v8928, %v8926
        %v9181 = vpack.c.b16 %v8929, %v8927
        %v9182 = vpack.c.b16 %v8932, %v8930
        %v9183 = vpack.c.b16 %v8933, %v8931
        %v9184 = vpack.c.b16 %v8936, %v8934
        %v9185 = vpack.c.b16 %v8937, %v8935
        %v9186 = vpack.c.b16 %v8940, %v8938
        %v9187 = vpack.c.b16 %v8941, %v8939
        %v9188 = vpack.c.b16 %v8944, %v8942
        %v9189 = vpack.c.b16 %v8945, %v8943
        %v9190 = vpack.c.b16 %v8948, %v8946
        %v9191 = vpack.c.b16 %v8949, %v8947
        %v9192 = vpack.c.b16 %v8952, %v8950
        %v9193 = vpack.c.b16 %v8953, %v8951
        %v9194 = vpack.c.b16 %v8956, %v8954
        %v9195 = vpack.c.b16 %v8957, %v8955
        %v9196 = vpack.c.b16 %v8960, %v8958
        %v9197 = vpack.c.b16 %v8961, %v8959
        %v9198 = vpack.c.b16 %v8964, %v8962
        %v9199 = vpack.c.b16 %v8965, %v8963
        %v9200 = vpack.c.b16 %v8968, %v8966
        %v9201 = vpack.c.b16 %v8969, %v8967
        %v9202 = vpack.c.b16 %v8972, %v8970
        %v9203 = vpack.c.b16 %v8973, %v8971
        %v9204 = vpack.c.b16 %v8976, %v8974
        %v9205 = vpack.c.b16 %v8977, %v8975
        %v9206 = vpack.c.b16 %v8980, %v8978
        %v9207 = vpack.c.b16 %v8981, %v8979
        %v9208 = vpack.c.b16 %v8984, %v8982
        %v9209 = vpack.c.b16 %v8985, %v8983
        %v9210 = vpack.c.b16 %v8988, %v8986
        %v9211 = vpack.c.b16 %v8989, %v8987
        %v9212 = vpack.c.b16 %v8992, %v8990
        %v9213 = vpack.c.b16 %v8993, %v8991
        %v9214 = vpack.c.b16 %v8996, %v8994
        %v9215 = vpack.c.b16 %v8997, %v8995
        %v9216 = vpack.c.b16 %v9000, %v8998
        %v9217 = vpack.c.b16 %v9001, %v8999
        %v9218 = vpack.c.b16 %v9004, %v9002
        %v9219 = vpack.c.b16 %v9005, %v9003
        %v9220 = vpack.c.b16 %v9008, %v9006
        %v9221 = vpack.c.b16 %v9009, %v9007
        %v9222 = vpack.c.b16 %v9012, %v9010
        %v9223 = vpack.c.b16 %v9013, %v9011
        %v9224 = vpack.c.b16 %v9016, %v9014
        %v9225 = vpack.c.b16 %v9017, %v9015
        %v9226 = vpack.c.b16 %v9020, %v9018
        %v9227 = vpack.c.b16 %v9021, %v9019
        %v9228 = vpack.c.b16 %v9024, %v9022
        %v9229 = vpack.c.b16 %v9025, %v9023
        %v9230 = vpack.c.b16 %v9028, %v9026
        %v9231 = vpack.c.b16 %v9029, %v9027
        %v9232 = vpack.c.b16 %v9032, %v9030
        %v9233 = vpack.c.b16 %v9033, %v9031
        %v9234 = vpack.c.b16 %v9036, %v9034
        %v9235 = vpack.c.b16 %v9037, %v9035
        %v9236 = vpack.c.b16 %v9040, %v9038
        %v9237 = vpack.c.b16 %v9041, %v9039
        %v9238 = vpack.c.b16 %v9044, %v9042
        %v9239 = vpack.c.b16 %v9045, %v9043
        %v9240 = vpack.c.b16 %v9048, %v9046
        %v9241 = vpack.c.b16 %v9049, %v9047
        %v9242 = vpack.c.b16 %v9052, %v9050
        %v9243 = vpack.c.b16 %v9053, %v9051
        %v9244 = vpack.c.b16 %v9056, %v9054
        %v9245 = vpack.c.b16 %v9057, %v9055
        %v9246 = vpack.c.b16 %v9060, %v9058
        %v9247 = vpack.c.b16 %v9061, %v9059
        %v9248 = vpack.c.b16 %v9064, %v9062
        %v9249 = vpack.c.b16 %v9065, %v9063
        %v9250 = vpack.c.b16 %v9068, %v9066
        %v9251 = vpack.c.b16 %v9069, %v9067
        %v9252 = vpack.c.b16 %v9072, %v9070
        %v9253 = vpack.c.b16 %v9073, %v9071
        %v9254 = vpack.c.b16 %v9076, %v9074
        %v9255 = vpack.c.b16 %v9077, %v9075
        %v9256 = vpack.c.b16 %v9080, %v9078
        %v9257 = vpack.c.b16 %v9081, %v9079
        %v9258 = vpack.c.b16 %v9084, %v9082
        %v9259 = vpack.c.b16 %v9085, %v9083
        %v9260 = vpack.c.b16 %v9088, %v9086
        %v9261 = vpack.c.b16 %v9089, %v9087
        %v9262 = vpack.c.b16 %v9092, %v9090
        %v9263 = vpack.c.b16 %v9093, %v9091
        %v9264 = vpack.c.b16 %v9096, %v9094
        %v9265 = vpack.c.b16 %v9097, %v9095
        %v9266 = vpack.c.b16 %v9100, %v9098
        %v9267 = vpack.c.b16 %v9101, %v9099
        %v9268 = vpack.c.b16 %v9104, %v9102
        %v9269 = vpack.c.b16 %v9105, %v9103
        %v9270 = vpack.c.b16 %v9108, %v9106
        %v9271 = vpack.c.b16 %v9109, %v9107
        %v9272 = vpack.c.b16 %v9112, %v9110
        %v9273 = vpack.c.b16 %v9113, %v9111
        %v9274 = vpack.c.b16 %v9116, %v9114
        %v9275 = vpack.c.b16 %v9117, %v9115
        %v9276 = vpack.c.b16 %v9120, %v9118
        %v9277 = vpack.c.b16 %v9121, %v9119
        %v9278 = vpack.c.b16 %v9124, %v9122
        %v9279 = vpack.c.b16 %v9125, %v9123
        %v9280 = vpack.c.b16 %v9128, %v9126
        %v9281 = vpack.c.b16 %v9129, %v9127
        %v9282 = vpack.c.b16 %v9132, %v9130
        %v9283 = vpack.c.b16 %v9133, %v9131
        %v9284 = vpack.c.b16 %v9136, %v9134
        %v9285 = vpack.c.b16 %v9137, %v9135
        %v9286 = vpack.c.b16 %v9140, %v9138
        %v9287 = vpack.c.b16 %v9141, %v9139
        %v9288 = vpack.c.b16 %v9144, %v9142
        %v9289 = vpack.c.b16 %v9145, %v9143
        %v9290 = vpack.c.b16 %v9148, %v9146
        %v9291 = vpack.c.b16 %v9149, %v9147
        %v9292 = vpack.c.b16 %v9152, %v9150
        %v9293 = vpack.c.b16 %v9153, %v9151
        %v9294 = vpack.c.b16 %v9156, %v9154
        %v9295 = vpack.c.b16 %v9157, %v9155
        %v9296 = vpack.c.b16 %v9160, %v9158
        %v9297 = vpack.c.b16 %v9161, %v9159
        %v9298 = vpack.c.b16 %v9164, %v9162
        %v9299 = vpack.c.b16 %v9165, %v9163
        %v9300 = vpack.c.b16 %v9168, %v9166
        %v9301 = vpack.c.b16 %v9169, %v9167
        %v9302 = vpack.c.b16 %v9172, %v9170
        %v9303 = vpack.c.b16 %v9173, %v9171
        %v9304 = vpack.c.b16 %v9176, %v9174
        %v9305 = vpack.c.b16 %v9177, %v9175
        %9434 = vmatpush.bf16.msra.mxu0 %v9192
        %9435 = vmatpush.bf16.msra.mxu0 %v9190
        %9436 = vmatpush.bf16.msra.mxu0 %v9188
        %9437 = vmatpush.bf16.msra.mxu0 %v9186
        %9438 = vmatpush.bf16.msra.mxu0 %v9184
        %9439 = vmatpush.bf16.msra.mxu0 %v9182
        %9440 = vmatpush.bf16.msra.mxu0 %v9180
        %9441 = vmatpush.bf16.msra.mxu0 %v9178
        %9442 = vmatmul.bf16.gmra.mxu0 %v8556
        %v9443 = vpop.f32.mrf.mxu0
        %v9444 = vadd.f32 %v8790, %v9443
        %v9445 = vpop.f32.mrf.mxu0
        %v9446 = vadd.f32 %v8790, %v9445
        %9447 = vmatmul.bf16.gmra.mxu0 %v8564
        %v9448 = vpop.f32.mrf.mxu0
        %v9449 = vadd.f32 %v8790, %v9448
        %v9450 = vpop.f32.mrf.mxu0
        %v9451 = vadd.f32 %v8790, %v9450
        %9452 = vmatmul.bf16.gmra.mxu0 %v8572
        %v9453 = vpop.f32.mrf.mxu0
        %v9454 = vadd.f32 %v8790, %v9453
        %v9455 = vpop.f32.mrf.mxu0
        %v9456 = vadd.f32 %v8790, %v9455
        %9457 = vmatmul.bf16.gmra.mxu0 %v8580
        %v9458 = vpop.f32.mrf.mxu0
        %v9459 = vadd.f32 %v8790, %v9458
        %v9460 = vpop.f32.mrf.mxu0
        %v9461 = vadd.f32 %v8790, %v9460
        %9462 = vmatmul.bf16.gmra.mxu0 %v8588
        %v9463 = vpop.f32.mrf.mxu0
        %v9464 = vadd.f32 %v8790, %v9463
        %v9465 = vpop.f32.mrf.mxu0
        %v9466 = vadd.f32 %v8790, %v9465
        %9467 = vmatmul.bf16.gmra.mxu0 %v8596
        %v9468 = vpop.f32.mrf.mxu0
        %v9469 = vadd.f32 %v8790, %v9468
        %v9470 = vpop.f32.mrf.mxu0
        %v9471 = vadd.f32 %v8790, %v9470
        %9472 = vmatmul.bf16.gmra.mxu0 %v8604
        %v9473 = vpop.f32.mrf.mxu0
        %v9474 = vadd.f32 %v8790, %v9473
        %v9475 = vpop.f32.mrf.mxu0
        %v9476 = vadd.f32 %v8790, %v9475
        %9477 = vmatmul.bf16.gmra.mxu0 %v8612
        %v9478 = vpop.f32.mrf.mxu0
        %v9479 = vadd.f32 %v8790, %v9478
        %v9480 = vpop.f32.mrf.mxu0
        %v9481 = vadd.f32 %v8790, %v9480
        %9482 = vmatmul.bf16.gmra.mxu0 %v8620
        %v9483 = vpop.f32.mrf.mxu0
        %v9484 = vadd.f32 %v8790, %v9483
        %v9485 = vpop.f32.mrf.mxu0
        %v9486 = vadd.f32 %v8790, %v9485
        %9487 = vmatmul.bf16.gmra.mxu0 %v8628
        %v9488 = vpop.f32.mrf.mxu0
        %v9489 = vadd.f32 %v8790, %v9488
        %v9490 = vpop.f32.mrf.mxu0
        %v9491 = vadd.f32 %v8790, %v9490
        %9492 = vmatmul.bf16.gmra.mxu0 %v8636
        %v9493 = vpop.f32.mrf.mxu0
        %v9494 = vadd.f32 %v8790, %v9493
        %v9495 = vpop.f32.mrf.mxu0
        %v9496 = vadd.f32 %v8790, %v9495
        %9497 = vmatmul.bf16.gmra.mxu0 %v8644
        %v9498 = vpop.f32.mrf.mxu0
        %v9499 = vadd.f32 %v8790, %v9498
        %v9500 = vpop.f32.mrf.mxu0
        %v9501 = vadd.f32 %v8790, %v9500
        %9502 = vmatmul.bf16.gmra.mxu0 %v8652
        %v9503 = vpop.f32.mrf.mxu0
        %v9504 = vadd.f32 %v8790, %v9503
        %v9505 = vpop.f32.mrf.mxu0
        %9506 = vdwg.mxu0
        %9507 = vmatpush.bf16.msra.mxu0 %v9208
        %9508 = vmatpush.bf16.msra.mxu0 %v9206
        %9509 = vmatpush.bf16.msra.mxu0 %v9204
        %9510 = vmatpush.bf16.msra.mxu0 %v9202
        %9511 = vmatpush.bf16.msra.mxu0 %v9200
        %9512 = vmatpush.bf16.msra.mxu0 %v9198
        %9513 = vmatpush.bf16.msra.mxu0 %v9196
        %9514 = vmatpush.bf16.msra.mxu0 %v9194
        %9515 = vmatmul.bf16.gmra.mxu0 %v8557
        %v9516 = vpop.f32.mrf.mxu0
        %v9517 = vadd.f32 %v9444, %v9516
        %v9518 = vpop.f32.mrf.mxu0
        %v9519 = vadd.f32 %v9446, %v9518
        %9520 = vmatmul.bf16.gmra.mxu0 %v8565
        %v9521 = vpop.f32.mrf.mxu0
        %v9522 = vadd.f32 %v9449, %v9521
        %v9523 = vpop.f32.mrf.mxu0
        %v9524 = vadd.f32 %v9451, %v9523
        %9525 = vmatmul.bf16.gmra.mxu0 %v8573
        %v9526 = vpop.f32.mrf.mxu0
        %v9527 = vadd.f32 %v9454, %v9526
        %v9528 = vpop.f32.mrf.mxu0
        %v9529 = vadd.f32 %v9456, %v9528
        %9530 = vmatmul.bf16.gmra.mxu0 %v8581
        %v9531 = vpop.f32.mrf.mxu0
        %v9532 = vadd.f32 %v9459, %v9531
        %v9533 = vpop.f32.mrf.mxu0
        %v9534 = vadd.f32 %v9461, %v9533
        %9535 = vmatmul.bf16.gmra.mxu0 %v8589
        %v9536 = vpop.f32.mrf.mxu0
        %v9537 = vadd.f32 %v9464, %v9536
        %v9538 = vpop.f32.mrf.mxu0
        %v9539 = vadd.f32 %v9466, %v9538
        %9540 = vmatmul.bf16.gmra.mxu0 %v8597
        %v9541 = vpop.f32.mrf.mxu0
        %v9542 = vadd.f32 %v9469, %v9541
        %v9543 = vpop.f32.mrf.mxu0
        %v9544 = vadd.f32 %v9471, %v9543
        %9545 = vmatmul.bf16.gmra.mxu0 %v8605
        %v9546 = vpop.f32.mrf.mxu0
        %v9547 = vadd.f32 %v9474, %v9546
        %v9548 = vpop.f32.mrf.mxu0
        %v9549 = vadd.f32 %v9476, %v9548
        %9550 = vmatmul.bf16.gmra.mxu0 %v8613
        %v9551 = vpop.f32.mrf.mxu0
        %v9552 = vadd.f32 %v9479, %v9551
        %v9553 = vpop.f32.mrf.mxu0
        %v9554 = vadd.f32 %v9481, %v9553
        %9555 = vmatmul.bf16.gmra.mxu0 %v8621
        %v9556 = vpop.f32.mrf.mxu0
        %v9557 = vadd.f32 %v9484, %v9556
        %v9558 = vpop.f32.mrf.mxu0
        %v9559 = vadd.f32 %v9486, %v9558
        %9560 = vmatmul.bf16.gmra.mxu0 %v8629
        %v9561 = vpop.f32.mrf.mxu0
        %v9562 = vadd.f32 %v9489, %v9561
        %v9563 = vpop.f32.mrf.mxu0
        %v9564 = vadd.f32 %v9491, %v9563
        %9565 = vmatmul.bf16.gmra.mxu0 %v8637
        %v9566 = vpop.f32.mrf.mxu0
        %v9567 = vadd.f32 %v9494, %v9566
        %v9568 = vpop.f32.mrf.mxu0
        %v9569 = vadd.f32 %v9496, %v9568
        %9570 = vmatmul.bf16.gmra.mxu0 %v8645
        %v9571 = vpop.f32.mrf.mxu0
        %v9572 = vadd.f32 %v9499, %v9571
        %v9573 = vpop.f32.mrf.mxu0
        %v9574 = vadd.f32 %v9501, %v9573
        %9575 = vmatmul.bf16.gmra.mxu0 %v8653
        %v9576 = vpop.f32.mrf.mxu0
        %v9577 = vadd.f32 %v9504, %v9576
        %v9578 = vpop.f32.mrf.mxu0
        %9579 = vdwg.mxu0
        %9580 = vmatpush.bf16.msra.mxu0 %v9224
        %9581 = vmatpush.bf16.msra.mxu0 %v9222
        %9582 = vmatpush.bf16.msra.mxu0 %v9220
        %9583 = vmatpush.bf16.msra.mxu0 %v9218
        %9584 = vmatpush.bf16.msra.mxu0 %v9216
        %9585 = vmatpush.bf16.msra.mxu0 %v9214
        %9586 = vmatpush.bf16.msra.mxu0 %v9212
        %9587 = vmatpush.bf16.msra.mxu0 %v9210
        %9588 = vmatmul.bf16.gmra.mxu0 %v8558
        %v9589 = vpop.f32.mrf.mxu0
        %v9590 = vadd.f32 %v9517, %v9589
        %v9591 = vpop.f32.mrf.mxu0
        %v9592 = vadd.f32 %v9519, %v9591
        %9593 = vmatmul.bf16.gmra.mxu0 %v8566
        %v9594 = vpop.f32.mrf.mxu0
        %v9595 = vadd.f32 %v9522, %v9594
        %v9596 = vpop.f32.mrf.mxu0
        %v9597 = vadd.f32 %v9524, %v9596
        %9598 = vmatmul.bf16.gmra.mxu0 %v8574
        %v9599 = vpop.f32.mrf.mxu0
        %v9600 = vadd.f32 %v9527, %v9599
        %v9601 = vpop.f32.mrf.mxu0
        %v9602 = vadd.f32 %v9529, %v9601
        %9603 = vmatmul.bf16.gmra.mxu0 %v8582
        %v9604 = vpop.f32.mrf.mxu0
        %v9605 = vadd.f32 %v9532, %v9604
        %v9606 = vpop.f32.mrf.mxu0
        %v9607 = vadd.f32 %v9534, %v9606
        %9608 = vmatmul.bf16.gmra.mxu0 %v8590
        %v9609 = vpop.f32.mrf.mxu0
        %v9610 = vadd.f32 %v9537, %v9609
        %v9611 = vpop.f32.mrf.mxu0
        %v9612 = vadd.f32 %v9539, %v9611
        %9613 = vmatmul.bf16.gmra.mxu0 %v8598
        %v9614 = vpop.f32.mrf.mxu0
        %v9615 = vadd.f32 %v9542, %v9614
        %v9616 = vpop.f32.mrf.mxu0
        %v9617 = vadd.f32 %v9544, %v9616
        %9618 = vmatmul.bf16.gmra.mxu0 %v8606
        %v9619 = vpop.f32.mrf.mxu0
        %v9620 = vadd.f32 %v9547, %v9619
        %v9621 = vpop.f32.mrf.mxu0
        %v9622 = vadd.f32 %v9549, %v9621
        %9623 = vmatmul.bf16.gmra.mxu0 %v8614
        %v9624 = vpop.f32.mrf.mxu0
        %v9625 = vadd.f32 %v9552, %v9624
        %v9626 = vpop.f32.mrf.mxu0
        %v9627 = vadd.f32 %v9554, %v9626
        %9628 = vmatmul.bf16.gmra.mxu0 %v8622
        %v9629 = vpop.f32.mrf.mxu0
        %v9630 = vadd.f32 %v9557, %v9629
        %v9631 = vpop.f32.mrf.mxu0
        %v9632 = vadd.f32 %v9559, %v9631
        %9633 = vmatmul.bf16.gmra.mxu0 %v8630
        %v9634 = vpop.f32.mrf.mxu0
        %v9635 = vadd.f32 %v9562, %v9634
        %v9636 = vpop.f32.mrf.mxu0
        %v9637 = vadd.f32 %v9564, %v9636
        %9638 = vmatmul.bf16.gmra.mxu0 %v8638
        %v9639 = vpop.f32.mrf.mxu0
        %v9640 = vadd.f32 %v9567, %v9639
        %v9641 = vpop.f32.mrf.mxu0
        %v9642 = vadd.f32 %v9569, %v9641
        %9643 = vmatmul.bf16.gmra.mxu0 %v8646
        %v9644 = vpop.f32.mrf.mxu0
        %v9645 = vadd.f32 %v9572, %v9644
        %v9646 = vpop.f32.mrf.mxu0
        %v9647 = vadd.f32 %v9574, %v9646
        %9648 = vmatmul.bf16.gmra.mxu0 %v8654
        %v9649 = vpop.f32.mrf.mxu0
        %v9650 = vadd.f32 %v9577, %v9649
        %v9651 = vpop.f32.mrf.mxu0
        %9652 = vdwg.mxu0
        %9653 = vmatpush.bf16.msra.mxu0 %v9240
        %9654 = vmatpush.bf16.msra.mxu0 %v9238
        %9655 = vmatpush.bf16.msra.mxu0 %v9236
        %9656 = vmatpush.bf16.msra.mxu0 %v9234
        %9657 = vmatpush.bf16.msra.mxu0 %v9232
        %9658 = vmatpush.bf16.msra.mxu0 %v9230
        %9659 = vmatpush.bf16.msra.mxu0 %v9228
        %9660 = vmatpush.bf16.msra.mxu0 %v9226
        %9661 = vmatmul.bf16.gmra.mxu0 %v8559
        %v9662 = vpop.f32.mrf.mxu0
        %v9663 = vadd.f32 %v9590, %v9662
        %v9664 = vpop.f32.mrf.mxu0
        %v9665 = vadd.f32 %v9592, %v9664
        %9666 = vmatmul.bf16.gmra.mxu0 %v8567
        %v9667 = vpop.f32.mrf.mxu0
        %v9668 = vadd.f32 %v9595, %v9667
        %v9669 = vpop.f32.mrf.mxu0
        %v9670 = vadd.f32 %v9597, %v9669
        %9671 = vmatmul.bf16.gmra.mxu0 %v8575
        %v9672 = vpop.f32.mrf.mxu0
        %v9673 = vadd.f32 %v9600, %v9672
        %v9674 = vpop.f32.mrf.mxu0
        %v9675 = vadd.f32 %v9602, %v9674
        %9676 = vmatmul.bf16.gmra.mxu0 %v8583
        %v9677 = vpop.f32.mrf.mxu0
        %v9678 = vadd.f32 %v9605, %v9677
        %v9679 = vpop.f32.mrf.mxu0
        %v9680 = vadd.f32 %v9607, %v9679
        %9681 = vmatmul.bf16.gmra.mxu0 %v8591
        %v9682 = vpop.f32.mrf.mxu0
        %v9683 = vadd.f32 %v9610, %v9682
        %v9684 = vpop.f32.mrf.mxu0
        %v9685 = vadd.f32 %v9612, %v9684
        %9686 = vmatmul.bf16.gmra.mxu0 %v8599
        %v9687 = vpop.f32.mrf.mxu0
        %v9688 = vadd.f32 %v9615, %v9687
        %v9689 = vpop.f32.mrf.mxu0
        %v9690 = vadd.f32 %v9617, %v9689
        %9691 = vmatmul.bf16.gmra.mxu0 %v8607
        %v9692 = vpop.f32.mrf.mxu0
        %v9693 = vadd.f32 %v9620, %v9692
        %v9694 = vpop.f32.mrf.mxu0
        %v9695 = vadd.f32 %v9622, %v9694
        %9696 = vmatmul.bf16.gmra.mxu0 %v8615
        %v9697 = vpop.f32.mrf.mxu0
        %v9698 = vadd.f32 %v9625, %v9697
        %v9699 = vpop.f32.mrf.mxu0
        %v9700 = vadd.f32 %v9627, %v9699
        %9701 = vmatmul.bf16.gmra.mxu0 %v8623
        %v9702 = vpop.f32.mrf.mxu0
        %v9703 = vadd.f32 %v9630, %v9702
        %v9704 = vpop.f32.mrf.mxu0
        %v9705 = vadd.f32 %v9632, %v9704
        %9706 = vmatmul.bf16.gmra.mxu0 %v8631
        %v9707 = vpop.f32.mrf.mxu0
        %v9708 = vadd.f32 %v9635, %v9707
        %v9709 = vpop.f32.mrf.mxu0
        %v9710 = vadd.f32 %v9637, %v9709
        %9711 = vmatmul.bf16.gmra.mxu0 %v8639
        %v9712 = vpop.f32.mrf.mxu0
        %v9713 = vadd.f32 %v9640, %v9712
        %v9714 = vpop.f32.mrf.mxu0
        %v9715 = vadd.f32 %v9642, %v9714
        %9716 = vmatmul.bf16.gmra.mxu0 %v8647
        %v9717 = vpop.f32.mrf.mxu0
        %v9718 = vadd.f32 %v9645, %v9717
        %v9719 = vpop.f32.mrf.mxu0
        %v9720 = vadd.f32 %v9647, %v9719
        %9721 = vmatmul.bf16.gmra.mxu0 %v8655
        %v9722 = vpop.f32.mrf.mxu0
        %v9723 = vadd.f32 %v9650, %v9722
        %v9724 = vpop.f32.mrf.mxu0
        %9725 = vdwg.mxu0
        %9726 = vmatpush.bf16.msra.mxu0 %v9256
        %9727 = vmatpush.bf16.msra.mxu0 %v9254
        %9728 = vmatpush.bf16.msra.mxu0 %v9252
        %9729 = vmatpush.bf16.msra.mxu0 %v9250
        %9730 = vmatpush.bf16.msra.mxu0 %v9248
        %9731 = vmatpush.bf16.msra.mxu0 %v9246
        %9732 = vmatpush.bf16.msra.mxu0 %v9244
        %9733 = vmatpush.bf16.msra.mxu0 %v9242
        %9734 = vmatmul.bf16.gmra.mxu0 %v8560
        %v9735 = vpop.f32.mrf.mxu0
        %v9736 = vadd.f32 %v9663, %v9735
        %v9737 = vpop.f32.mrf.mxu0
        %v9738 = vadd.f32 %v9665, %v9737
        %9739 = vmatmul.bf16.gmra.mxu0 %v8568
        %v9740 = vpop.f32.mrf.mxu0
        %v9741 = vadd.f32 %v9668, %v9740
        %v9742 = vpop.f32.mrf.mxu0
        %v9743 = vadd.f32 %v9670, %v9742
        %9744 = vmatmul.bf16.gmra.mxu0 %v8576
        %v9745 = vpop.f32.mrf.mxu0
        %v9746 = vadd.f32 %v9673, %v9745
        %v9747 = vpop.f32.mrf.mxu0
        %v9748 = vadd.f32 %v9675, %v9747
        %9749 = vmatmul.bf16.gmra.mxu0 %v8584
        %v9750 = vpop.f32.mrf.mxu0
        %v9751 = vadd.f32 %v9678, %v9750
        %v9752 = vpop.f32.mrf.mxu0
        %v9753 = vadd.f32 %v9680, %v9752
        %9754 = vmatmul.bf16.gmra.mxu0 %v8592
        %v9755 = vpop.f32.mrf.mxu0
        %v9756 = vadd.f32 %v9683, %v9755
        %v9757 = vpop.f32.mrf.mxu0
        %v9758 = vadd.f32 %v9685, %v9757
        %9759 = vmatmul.bf16.gmra.mxu0 %v8600
        %v9760 = vpop.f32.mrf.mxu0
        %v9761 = vadd.f32 %v9688, %v9760
        %v9762 = vpop.f32.mrf.mxu0
        %v9763 = vadd.f32 %v9690, %v9762
        %9764 = vmatmul.bf16.gmra.mxu0 %v8608
        %v9765 = vpop.f32.mrf.mxu0
        %v9766 = vadd.f32 %v9693, %v9765
        %v9767 = vpop.f32.mrf.mxu0
        %v9768 = vadd.f32 %v9695, %v9767
        %9769 = vmatmul.bf16.gmra.mxu0 %v8616
        %v9770 = vpop.f32.mrf.mxu0
        %v9771 = vadd.f32 %v9698, %v9770
        %v9772 = vpop.f32.mrf.mxu0
        %v9773 = vadd.f32 %v9700, %v9772
        %9774 = vmatmul.bf16.gmra.mxu0 %v8624
        %v9775 = vpop.f32.mrf.mxu0
        %v9776 = vadd.f32 %v9703, %v9775
        %v9777 = vpop.f32.mrf.mxu0
        %v9778 = vadd.f32 %v9705, %v9777
        %9779 = vmatmul.bf16.gmra.mxu0 %v8632
        %v9780 = vpop.f32.mrf.mxu0
        %v9781 = vadd.f32 %v9708, %v9780
        %v9782 = vpop.f32.mrf.mxu0
        %v9783 = vadd.f32 %v9710, %v9782
        %9784 = vmatmul.bf16.gmra.mxu0 %v8640
        %v9785 = vpop.f32.mrf.mxu0
        %v9786 = vadd.f32 %v9713, %v9785
        %v9787 = vpop.f32.mrf.mxu0
        %v9788 = vadd.f32 %v9715, %v9787
        %9789 = vmatmul.bf16.gmra.mxu0 %v8648
        %v9790 = vpop.f32.mrf.mxu0
        %v9791 = vadd.f32 %v9718, %v9790
        %v9792 = vpop.f32.mrf.mxu0
        %v9793 = vadd.f32 %v9720, %v9792
        %9794 = vmatmul.bf16.gmra.mxu0 %v8656
        %v9795 = vpop.f32.mrf.mxu0
        %v9796 = vadd.f32 %v9723, %v9795
        %v9797 = vpop.f32.mrf.mxu0
        %9798 = vdwg.mxu0
        %9799 = vmatpush.bf16.msra.mxu0 %v9272
        %9800 = vmatpush.bf16.msra.mxu0 %v9270
        %9801 = vmatpush.bf16.msra.mxu0 %v9268
        %9802 = vmatpush.bf16.msra.mxu0 %v9266
        %9803 = vmatpush.bf16.msra.mxu0 %v9264
        %9804 = vmatpush.bf16.msra.mxu0 %v9262
        %9805 = vmatpush.bf16.msra.mxu0 %v9260
        %9806 = vmatpush.bf16.msra.mxu0 %v9258
        %9807 = vmatmul.bf16.gmra.mxu0 %v8561
        %v9808 = vpop.f32.mrf.mxu0
        %v9809 = vadd.f32 %v9736, %v9808
        %v9810 = vpop.f32.mrf.mxu0
        %v9811 = vadd.f32 %v9738, %v9810
        %9812 = vmatmul.bf16.gmra.mxu0 %v8569
        %v9813 = vpop.f32.mrf.mxu0
        %v9814 = vadd.f32 %v9741, %v9813
        %v9815 = vpop.f32.mrf.mxu0
        %v9816 = vadd.f32 %v9743, %v9815
        %9817 = vmatmul.bf16.gmra.mxu0 %v8577
        %v9818 = vpop.f32.mrf.mxu0
        %v9819 = vadd.f32 %v9746, %v9818
        %v9820 = vpop.f32.mrf.mxu0
        %v9821 = vadd.f32 %v9748, %v9820
        %9822 = vmatmul.bf16.gmra.mxu0 %v8585
        %v9823 = vpop.f32.mrf.mxu0
        %v9824 = vadd.f32 %v9751, %v9823
        %v9825 = vpop.f32.mrf.mxu0
        %v9826 = vadd.f32 %v9753, %v9825
        %9827 = vmatmul.bf16.gmra.mxu0 %v8593
        %v9828 = vpop.f32.mrf.mxu0
        %v9829 = vadd.f32 %v9756, %v9828
        %v9830 = vpop.f32.mrf.mxu0
        %v9831 = vadd.f32 %v9758, %v9830
        %9832 = vmatmul.bf16.gmra.mxu0 %v8601
        %v9833 = vpop.f32.mrf.mxu0
        %v9834 = vadd.f32 %v9761, %v9833
        %v9835 = vpop.f32.mrf.mxu0
        %v9836 = vadd.f32 %v9763, %v9835
        %9837 = vmatmul.bf16.gmra.mxu0 %v8609
        %v9838 = vpop.f32.mrf.mxu0
        %v9839 = vadd.f32 %v9766, %v9838
        %v9840 = vpop.f32.mrf.mxu0
        %v9841 = vadd.f32 %v9768, %v9840
        %9842 = vmatmul.bf16.gmra.mxu0 %v8617
        %v9843 = vpop.f32.mrf.mxu0
        %v9844 = vadd.f32 %v9771, %v9843
        %v9845 = vpop.f32.mrf.mxu0
        %v9846 = vadd.f32 %v9773, %v9845
        %9847 = vmatmul.bf16.gmra.mxu0 %v8625
        %v9848 = vpop.f32.mrf.mxu0
        %v9849 = vadd.f32 %v9776, %v9848
        %v9850 = vpop.f32.mrf.mxu0
        %v9851 = vadd.f32 %v9778, %v9850
        %9852 = vmatmul.bf16.gmra.mxu0 %v8633
        %v9853 = vpop.f32.mrf.mxu0
        %v9854 = vadd.f32 %v9781, %v9853
        %v9855 = vpop.f32.mrf.mxu0
        %v9856 = vadd.f32 %v9783, %v9855
        %9857 = vmatmul.bf16.gmra.mxu0 %v8641
        %v9858 = vpop.f32.mrf.mxu0
        %v9859 = vadd.f32 %v9786, %v9858
        %v9860 = vpop.f32.mrf.mxu0
        %v9861 = vadd.f32 %v9788, %v9860
        %9862 = vmatmul.bf16.gmra.mxu0 %v8649
        %v9863 = vpop.f32.mrf.mxu0
        %v9864 = vadd.f32 %v9791, %v9863
        %v9865 = vpop.f32.mrf.mxu0
        %v9866 = vadd.f32 %v9793, %v9865
        %9867 = vmatmul.bf16.gmra.mxu0 %v8657
        %v9868 = vpop.f32.mrf.mxu0
        %v9869 = vadd.f32 %v9796, %v9868
        %v9870 = vpop.f32.mrf.mxu0
        %9871 = vdwg.mxu0
        %9872 = vmatpush.bf16.msra.mxu0 %v9288
        %9873 = vmatpush.bf16.msra.mxu0 %v9286
        %9874 = vmatpush.bf16.msra.mxu0 %v9284
        %9875 = vmatpush.bf16.msra.mxu0 %v9282
        %9876 = vmatpush.bf16.msra.mxu0 %v9280
        %9877 = vmatpush.bf16.msra.mxu0 %v9278
        %9878 = vmatpush.bf16.msra.mxu0 %v9276
        %9879 = vmatpush.bf16.msra.mxu0 %v9274
        %9880 = vmatmul.bf16.gmra.mxu0 %v8562
        %v9881 = vpop.f32.mrf.mxu0
        %v9882 = vadd.f32 %v9809, %v9881
        %v9883 = vpop.f32.mrf.mxu0
        %v9884 = vadd.f32 %v9811, %v9883
        %9885 = vmatmul.bf16.gmra.mxu0 %v8570
        %v9886 = vpop.f32.mrf.mxu0
        %v9887 = vadd.f32 %v9814, %v9886
        %v9888 = vpop.f32.mrf.mxu0
        %v9889 = vadd.f32 %v9816, %v9888
        %9890 = vmatmul.bf16.gmra.mxu0 %v8578
        %v9891 = vpop.f32.mrf.mxu0
        %v9892 = vadd.f32 %v9819, %v9891
        %v9893 = vpop.f32.mrf.mxu0
        %v9894 = vadd.f32 %v9821, %v9893
        %9895 = vmatmul.bf16.gmra.mxu0 %v8586
        %v9896 = vpop.f32.mrf.mxu0
        %v9897 = vadd.f32 %v9824, %v9896
        %v9898 = vpop.f32.mrf.mxu0
        %v9899 = vadd.f32 %v9826, %v9898
        %9900 = vmatmul.bf16.gmra.mxu0 %v8594
        %v9901 = vpop.f32.mrf.mxu0
        %v9902 = vadd.f32 %v9829, %v9901
        %v9903 = vpop.f32.mrf.mxu0
        %v9904 = vadd.f32 %v9831, %v9903
        %9905 = vmatmul.bf16.gmra.mxu0 %v8602
        %v9906 = vpop.f32.mrf.mxu0
        %v9907 = vadd.f32 %v9834, %v9906
        %v9908 = vpop.f32.mrf.mxu0
        %v9909 = vadd.f32 %v9836, %v9908
        %9910 = vmatmul.bf16.gmra.mxu0 %v8610
        %v9911 = vpop.f32.mrf.mxu0
        %v9912 = vadd.f32 %v9839, %v9911
        %v9913 = vpop.f32.mrf.mxu0
        %v9914 = vadd.f32 %v9841, %v9913
        %9915 = vmatmul.bf16.gmra.mxu0 %v8618
        %v9916 = vpop.f32.mrf.mxu0
        %v9917 = vadd.f32 %v9844, %v9916
        %v9918 = vpop.f32.mrf.mxu0
        %v9919 = vadd.f32 %v9846, %v9918
        %9920 = vmatmul.bf16.gmra.mxu0 %v8626
        %v9921 = vpop.f32.mrf.mxu0
        %v9922 = vadd.f32 %v9849, %v9921
        %v9923 = vpop.f32.mrf.mxu0
        %v9924 = vadd.f32 %v9851, %v9923
        %9925 = vmatmul.bf16.gmra.mxu0 %v8634
        %v9926 = vpop.f32.mrf.mxu0
        %v9927 = vadd.f32 %v9854, %v9926
        %v9928 = vpop.f32.mrf.mxu0
        %v9929 = vadd.f32 %v9856, %v9928
        %9930 = vmatmul.bf16.gmra.mxu0 %v8642
        %v9931 = vpop.f32.mrf.mxu0
        %v9932 = vadd.f32 %v9859, %v9931
        %v9933 = vpop.f32.mrf.mxu0
        %v9934 = vadd.f32 %v9861, %v9933
        %9935 = vmatmul.bf16.gmra.mxu0 %v8650
        %v9936 = vpop.f32.mrf.mxu0
        %v9937 = vadd.f32 %v9864, %v9936
        %v9938 = vpop.f32.mrf.mxu0
        %v9939 = vadd.f32 %v9866, %v9938
        %9940 = vmatmul.bf16.gmra.mxu0 %v8658
        %v9941 = vpop.f32.mrf.mxu0
        %v9942 = vadd.f32 %v9869, %v9941
        %v9943 = vpop.f32.mrf.mxu0
        %9944 = vdwg.mxu0
        %9945 = vmatpush.bf16.msra.mxu0 %v9304
        %9946 = vmatpush.bf16.msra.mxu0 %v9302
        %9947 = vmatpush.bf16.msra.mxu0 %v9300
        %9948 = vmatpush.bf16.msra.mxu0 %v9298
        %9949 = vmatpush.bf16.msra.mxu0 %v9296
        %9950 = vmatpush.bf16.msra.mxu0 %v9294
        %9951 = vmatpush.bf16.msra.mxu0 %v9292
        %9952 = vmatpush.bf16.msra.mxu0 %v9290
        %9953 = vmatmul.bf16.gmra.mxu0 %v8563
        %v9954 = vpop.f32.mrf.mxu0
        %v9955 = vadd.f32 %v9882, %v9954
        %v9956 = vpop.f32.mrf.mxu0
        %v9957 = vadd.f32 %v9884, %v9956
        %9958 = vmatmul.bf16.gmra.mxu0 %v8571
        %v9959 = vpop.f32.mrf.mxu0
        %v9960 = vadd.f32 %v9887, %v9959
        %v9961 = vpop.f32.mrf.mxu0
        %v9962 = vadd.f32 %v9889, %v9961
        %9963 = vmatmul.bf16.gmra.mxu0 %v8579
        %v9964 = vpop.f32.mrf.mxu0
        %v9965 = vadd.f32 %v9892, %v9964
        %v9966 = vpop.f32.mrf.mxu0
        %v9967 = vadd.f32 %v9894, %v9966
        %9968 = vmatmul.bf16.gmra.mxu0 %v8587
        %v9969 = vpop.f32.mrf.mxu0
        %v9970 = vadd.f32 %v9897, %v9969
        %v9971 = vpop.f32.mrf.mxu0
        %v9972 = vadd.f32 %v9899, %v9971
        %9973 = vmatmul.bf16.gmra.mxu0 %v8595
        %v9974 = vpop.f32.mrf.mxu0
        %v9975 = vadd.f32 %v9902, %v9974
        %v9976 = vpop.f32.mrf.mxu0
        %v9977 = vadd.f32 %v9904, %v9976
        %9978 = vmatmul.bf16.gmra.mxu0 %v8603
        %v9979 = vpop.f32.mrf.mxu0
        %v9980 = vadd.f32 %v9907, %v9979
        %v9981 = vpop.f32.mrf.mxu0
        %v9982 = vadd.f32 %v9909, %v9981
        %9983 = vmatmul.bf16.gmra.mxu0 %v8611
        %v9984 = vpop.f32.mrf.mxu0
        %v9985 = vadd.f32 %v9912, %v9984
        %v9986 = vpop.f32.mrf.mxu0
        %v9987 = vadd.f32 %v9914, %v9986
        %9988 = vmatmul.bf16.gmra.mxu0 %v8619
        %v9989 = vpop.f32.mrf.mxu0
        %v9990 = vadd.f32 %v9917, %v9989
        %v9991 = vpop.f32.mrf.mxu0
        %v9992 = vadd.f32 %v9919, %v9991
        %9993 = vmatmul.bf16.gmra.mxu0 %v8627
        %v9994 = vpop.f32.mrf.mxu0
        %v9995 = vadd.f32 %v9922, %v9994
        %v9996 = vpop.f32.mrf.mxu0
        %v9997 = vadd.f32 %v9924, %v9996
        %9998 = vmatmul.bf16.gmra.mxu0 %v8635
        %v9999 = vpop.f32.mrf.mxu0
        %v10000 = vadd.f32 %v9927, %v9999
        %v10001 = vpop.f32.mrf.mxu0
        %v10002 = vadd.f32 %v9929, %v10001
        %10003 = vmatmul.bf16.gmra.mxu0 %v8643
        %v10004 = vpop.f32.mrf.mxu0
        %v10005 = vadd.f32 %v9932, %v10004
        %v10006 = vpop.f32.mrf.mxu0
        %v10007 = vadd.f32 %v9934, %v10006
        %10008 = vmatmul.bf16.gmra.mxu0 %v8651
        %v10009 = vpop.f32.mrf.mxu0
        %v10010 = vadd.f32 %v9937, %v10009
        %v10011 = vpop.f32.mrf.mxu0
        %v10012 = vadd.f32 %v9939, %v10011
        %10013 = vmatmul.bf16.gmra.mxu0 %v8659
        %v10014 = vpop.f32.mrf.mxu0
        %v10015 = vadd.f32 %v9942, %v10014
        %v10016 = vpop.f32.mrf.mxu0
        %10017 = vdwg.mxu0
        %10018 = vmatpush.bf16.msra.mxu0 %v9193
        %10019 = vmatpush.bf16.msra.mxu0 %v9191
        %10020 = vmatpush.bf16.msra.mxu0 %v9189
        %10021 = vmatpush.bf16.msra.mxu0 %v9187
        %10022 = vmatpush.bf16.msra.mxu0 %v9185
        %10023 = vmatpush.bf16.msra.mxu0 %v9183
        %10024 = vmatpush.bf16.msra.mxu0 %v9181
        %10025 = vmatpush.bf16.msra.mxu0 %v9179
        %10026 = vmatmul.bf16.gmra.mxu0 %v8556
        %v10027 = vpop.f32.mrf.mxu0
        %v10028 = vadd.f32 %v8791, %v10027
        %v10029 = vpop.f32.mrf.mxu0
        %v10030 = vadd.f32 %v8791, %v10029
        %10031 = vmatmul.bf16.gmra.mxu0 %v8564
        %v10032 = vpop.f32.mrf.mxu0
        %v10033 = vadd.f32 %v8791, %v10032
        %v10034 = vpop.f32.mrf.mxu0
        %v10035 = vadd.f32 %v8791, %v10034
        %10036 = vmatmul.bf16.gmra.mxu0 %v8572
        %v10037 = vpop.f32.mrf.mxu0
        %v10038 = vadd.f32 %v8791, %v10037
        %v10039 = vpop.f32.mrf.mxu0
        %v10040 = vadd.f32 %v8791, %v10039
        %10041 = vmatmul.bf16.gmra.mxu0 %v8580
        %v10042 = vpop.f32.mrf.mxu0
        %v10043 = vadd.f32 %v8791, %v10042
        %v10044 = vpop.f32.mrf.mxu0
        %v10045 = vadd.f32 %v8791, %v10044
        %10046 = vmatmul.bf16.gmra.mxu0 %v8588
        %v10047 = vpop.f32.mrf.mxu0
        %v10048 = vadd.f32 %v8791, %v10047
        %v10049 = vpop.f32.mrf.mxu0
        %v10050 = vadd.f32 %v8791, %v10049
        %10051 = vmatmul.bf16.gmra.mxu0 %v8596
        %v10052 = vpop.f32.mrf.mxu0
        %v10053 = vadd.f32 %v8791, %v10052
        %v10054 = vpop.f32.mrf.mxu0
        %v10055 = vadd.f32 %v8791, %v10054
        %10056 = vmatmul.bf16.gmra.mxu0 %v8604
        %v10057 = vpop.f32.mrf.mxu0
        %v10058 = vadd.f32 %v8791, %v10057
        %v10059 = vpop.f32.mrf.mxu0
        %v10060 = vadd.f32 %v8791, %v10059
        %10061 = vmatmul.bf16.gmra.mxu0 %v8612
        %v10062 = vpop.f32.mrf.mxu0
        %v10063 = vadd.f32 %v8791, %v10062
        %v10064 = vpop.f32.mrf.mxu0
        %v10065 = vadd.f32 %v8791, %v10064
        %10066 = vmatmul.bf16.gmra.mxu0 %v8620
        %v10067 = vpop.f32.mrf.mxu0
        %v10068 = vadd.f32 %v8791, %v10067
        %v10069 = vpop.f32.mrf.mxu0
        %v10070 = vadd.f32 %v8791, %v10069
        %10071 = vmatmul.bf16.gmra.mxu0 %v8628
        %v10072 = vpop.f32.mrf.mxu0
        %v10073 = vadd.f32 %v8791, %v10072
        %v10074 = vpop.f32.mrf.mxu0
        %v10075 = vadd.f32 %v8791, %v10074
        %10076 = vmatmul.bf16.gmra.mxu0 %v8636
        %v10077 = vpop.f32.mrf.mxu0
        %v10078 = vadd.f32 %v8791, %v10077
        %v10079 = vpop.f32.mrf.mxu0
        %v10080 = vadd.f32 %v8791, %v10079
        %10081 = vmatmul.bf16.gmra.mxu0 %v8644
        %v10082 = vpop.f32.mrf.mxu0
        %v10083 = vadd.f32 %v8791, %v10082
        %v10084 = vpop.f32.mrf.mxu0
        %v10085 = vadd.f32 %v8791, %v10084
        %10086 = vmatmul.bf16.gmra.mxu0 %v8652
        %v10087 = vpop.f32.mrf.mxu0
        %v10088 = vadd.f32 %v8791, %v10087
        %v10089 = vpop.f32.mrf.mxu0
        %10090 = vdwg.mxu0
        %10091 = vmatpush.bf16.msra.mxu0 %v9209
        %10092 = vmatpush.bf16.msra.mxu0 %v9207
        %10093 = vmatpush.bf16.msra.mxu0 %v9205
        %10094 = vmatpush.bf16.msra.mxu0 %v9203
        %10095 = vmatpush.bf16.msra.mxu0 %v9201
        %10096 = vmatpush.bf16.msra.mxu0 %v9199
        %10097 = vmatpush.bf16.msra.mxu0 %v9197
        %10098 = vmatpush.bf16.msra.mxu0 %v9195
        %10099 = vmatmul.bf16.gmra.mxu0 %v8557
        %v10100 = vpop.f32.mrf.mxu0
        %v10101 = vadd.f32 %v10028, %v10100
        %v10102 = vpop.f32.mrf.mxu0
        %v10103 = vadd.f32 %v10030, %v10102
        %10104 = vmatmul.bf16.gmra.mxu0 %v8565
        %v10105 = vpop.f32.mrf.mxu0
        %v10106 = vadd.f32 %v10033, %v10105
        %v10107 = vpop.f32.mrf.mxu0
        %v10108 = vadd.f32 %v10035, %v10107
        %10109 = vmatmul.bf16.gmra.mxu0 %v8573
        %v10110 = vpop.f32.mrf.mxu0
        %v10111 = vadd.f32 %v10038, %v10110
        %v10112 = vpop.f32.mrf.mxu0
        %v10113 = vadd.f32 %v10040, %v10112
        %10114 = vmatmul.bf16.gmra.mxu0 %v8581
        %v10115 = vpop.f32.mrf.mxu0
        %v10116 = vadd.f32 %v10043, %v10115
        %v10117 = vpop.f32.mrf.mxu0
        %v10118 = vadd.f32 %v10045, %v10117
        %10119 = vmatmul.bf16.gmra.mxu0 %v8589
        %v10120 = vpop.f32.mrf.mxu0
        %v10121 = vadd.f32 %v10048, %v10120
        %v10122 = vpop.f32.mrf.mxu0
        %v10123 = vadd.f32 %v10050, %v10122
        %10124 = vmatmul.bf16.gmra.mxu0 %v8597
        %v10125 = vpop.f32.mrf.mxu0
        %v10126 = vadd.f32 %v10053, %v10125
        %v10127 = vpop.f32.mrf.mxu0
        %v10128 = vadd.f32 %v10055, %v10127
        %10129 = vmatmul.bf16.gmra.mxu0 %v8605
        %v10130 = vpop.f32.mrf.mxu0
        %v10131 = vadd.f32 %v10058, %v10130
        %v10132 = vpop.f32.mrf.mxu0
        %v10133 = vadd.f32 %v10060, %v10132
        %10134 = vmatmul.bf16.gmra.mxu0 %v8613
        %v10135 = vpop.f32.mrf.mxu0
        %v10136 = vadd.f32 %v10063, %v10135
        %v10137 = vpop.f32.mrf.mxu0
        %v10138 = vadd.f32 %v10065, %v10137
        %10139 = vmatmul.bf16.gmra.mxu0 %v8621
        %v10140 = vpop.f32.mrf.mxu0
        %v10141 = vadd.f32 %v10068, %v10140
        %v10142 = vpop.f32.mrf.mxu0
        %v10143 = vadd.f32 %v10070, %v10142
        %10144 = vmatmul.bf16.gmra.mxu0 %v8629
        %v10145 = vpop.f32.mrf.mxu0
        %v10146 = vadd.f32 %v10073, %v10145
        %v10147 = vpop.f32.mrf.mxu0
        %v10148 = vadd.f32 %v10075, %v10147
        %10149 = vmatmul.bf16.gmra.mxu0 %v8637
        %v10150 = vpop.f32.mrf.mxu0
        %v10151 = vadd.f32 %v10078, %v10150
        %v10152 = vpop.f32.mrf.mxu0
        %v10153 = vadd.f32 %v10080, %v10152
        %10154 = vmatmul.bf16.gmra.mxu0 %v8645
        %v10155 = vpop.f32.mrf.mxu0
        %v10156 = vadd.f32 %v10083, %v10155
        %v10157 = vpop.f32.mrf.mxu0
        %v10158 = vadd.f32 %v10085, %v10157
        %10159 = vmatmul.bf16.gmra.mxu0 %v8653
        %v10160 = vpop.f32.mrf.mxu0
        %v10161 = vadd.f32 %v10088, %v10160
        %v10162 = vpop.f32.mrf.mxu0
        %10163 = vdwg.mxu0
        %10164 = vmatpush.bf16.msra.mxu0 %v9225
        %10165 = vmatpush.bf16.msra.mxu0 %v9223
        %10166 = vmatpush.bf16.msra.mxu0 %v9221
        %10167 = vmatpush.bf16.msra.mxu0 %v9219
        %10168 = vmatpush.bf16.msra.mxu0 %v9217
        %10169 = vmatpush.bf16.msra.mxu0 %v9215
        %10170 = vmatpush.bf16.msra.mxu0 %v9213
        %10171 = vmatpush.bf16.msra.mxu0 %v9211
        %10172 = vmatmul.bf16.gmra.mxu0 %v8558
        %v10173 = vpop.f32.mrf.mxu0
        %v10174 = vadd.f32 %v10101, %v10173
        %v10175 = vpop.f32.mrf.mxu0
        %v10176 = vadd.f32 %v10103, %v10175
        %10177 = vmatmul.bf16.gmra.mxu0 %v8566
        %v10178 = vpop.f32.mrf.mxu0
        %v10179 = vadd.f32 %v10106, %v10178
        %v10180 = vpop.f32.mrf.mxu0
        %v10181 = vadd.f32 %v10108, %v10180
        %10182 = vmatmul.bf16.gmra.mxu0 %v8574
        %v10183 = vpop.f32.mrf.mxu0
        %v10184 = vadd.f32 %v10111, %v10183
        %v10185 = vpop.f32.mrf.mxu0
        %v10186 = vadd.f32 %v10113, %v10185
        %10187 = vmatmul.bf16.gmra.mxu0 %v8582
        %v10188 = vpop.f32.mrf.mxu0
        %v10189 = vadd.f32 %v10116, %v10188
        %v10190 = vpop.f32.mrf.mxu0
        %v10191 = vadd.f32 %v10118, %v10190
        %10192 = vmatmul.bf16.gmra.mxu0 %v8590
        %v10193 = vpop.f32.mrf.mxu0
        %v10194 = vadd.f32 %v10121, %v10193
        %v10195 = vpop.f32.mrf.mxu0
        %v10196 = vadd.f32 %v10123, %v10195
        %10197 = vmatmul.bf16.gmra.mxu0 %v8598
        %v10198 = vpop.f32.mrf.mxu0
        %v10199 = vadd.f32 %v10126, %v10198
        %v10200 = vpop.f32.mrf.mxu0
        %v10201 = vadd.f32 %v10128, %v10200
        %10202 = vmatmul.bf16.gmra.mxu0 %v8606
        %v10203 = vpop.f32.mrf.mxu0
        %v10204 = vadd.f32 %v10131, %v10203
        %v10205 = vpop.f32.mrf.mxu0
        %v10206 = vadd.f32 %v10133, %v10205
        %10207 = vmatmul.bf16.gmra.mxu0 %v8614
        %v10208 = vpop.f32.mrf.mxu0
        %v10209 = vadd.f32 %v10136, %v10208
        %v10210 = vpop.f32.mrf.mxu0
        %v10211 = vadd.f32 %v10138, %v10210
        %10212 = vmatmul.bf16.gmra.mxu0 %v8622
        %v10213 = vpop.f32.mrf.mxu0
        %v10214 = vadd.f32 %v10141, %v10213
        %v10215 = vpop.f32.mrf.mxu0
        %v10216 = vadd.f32 %v10143, %v10215
        %10217 = vmatmul.bf16.gmra.mxu0 %v8630
        %v10218 = vpop.f32.mrf.mxu0
        %v10219 = vadd.f32 %v10146, %v10218
        %v10220 = vpop.f32.mrf.mxu0
        %v10221 = vadd.f32 %v10148, %v10220
        %10222 = vmatmul.bf16.gmra.mxu0 %v8638
        %v10223 = vpop.f32.mrf.mxu0
        %v10224 = vadd.f32 %v10151, %v10223
        %v10225 = vpop.f32.mrf.mxu0
        %v10226 = vadd.f32 %v10153, %v10225
        %10227 = vmatmul.bf16.gmra.mxu0 %v8646
        %v10228 = vpop.f32.mrf.mxu0
        %v10229 = vadd.f32 %v10156, %v10228
        %v10230 = vpop.f32.mrf.mxu0
        %v10231 = vadd.f32 %v10158, %v10230
        %10232 = vmatmul.bf16.gmra.mxu0 %v8654
        %v10233 = vpop.f32.mrf.mxu0
        %v10234 = vadd.f32 %v10161, %v10233
        %v10235 = vpop.f32.mrf.mxu0
        %10236 = vdwg.mxu0
        %10237 = vmatpush.bf16.msra.mxu0 %v9241
        %10238 = vmatpush.bf16.msra.mxu0 %v9239
        %10239 = vmatpush.bf16.msra.mxu0 %v9237
        %10240 = vmatpush.bf16.msra.mxu0 %v9235
        %10241 = vmatpush.bf16.msra.mxu0 %v9233
        %10242 = vmatpush.bf16.msra.mxu0 %v9231
        %10243 = vmatpush.bf16.msra.mxu0 %v9229
        %10244 = vmatpush.bf16.msra.mxu0 %v9227
        %10245 = vmatmul.bf16.gmra.mxu0 %v8559
        %v10246 = vpop.f32.mrf.mxu0
        %v10247 = vadd.f32 %v10174, %v10246
        %v10248 = vpop.f32.mrf.mxu0
        %v10249 = vadd.f32 %v10176, %v10248
        %10250 = vmatmul.bf16.gmra.mxu0 %v8567
        %v10251 = vpop.f32.mrf.mxu0
        %v10252 = vadd.f32 %v10179, %v10251
        %v10253 = vpop.f32.mrf.mxu0
        %v10254 = vadd.f32 %v10181, %v10253
        %10255 = vmatmul.bf16.gmra.mxu0 %v8575
        %v10256 = vpop.f32.mrf.mxu0
        %v10257 = vadd.f32 %v10184, %v10256
        %v10258 = vpop.f32.mrf.mxu0
        %v10259 = vadd.f32 %v10186, %v10258
        %10260 = vmatmul.bf16.gmra.mxu0 %v8583
        %v10261 = vpop.f32.mrf.mxu0
        %v10262 = vadd.f32 %v10189, %v10261
        %v10263 = vpop.f32.mrf.mxu0
        %v10264 = vadd.f32 %v10191, %v10263
        %10265 = vmatmul.bf16.gmra.mxu0 %v8591
        %v10266 = vpop.f32.mrf.mxu0
        %v10267 = vadd.f32 %v10194, %v10266
        %v10268 = vpop.f32.mrf.mxu0
        %v10269 = vadd.f32 %v10196, %v10268
        %10270 = vmatmul.bf16.gmra.mxu0 %v8599
        %v10271 = vpop.f32.mrf.mxu0
        %v10272 = vadd.f32 %v10199, %v10271
        %v10273 = vpop.f32.mrf.mxu0
        %v10274 = vadd.f32 %v10201, %v10273
        %10275 = vmatmul.bf16.gmra.mxu0 %v8607
        %v10276 = vpop.f32.mrf.mxu0
        %v10277 = vadd.f32 %v10204, %v10276
        %v10278 = vpop.f32.mrf.mxu0
        %v10279 = vadd.f32 %v10206, %v10278
        %10280 = vmatmul.bf16.gmra.mxu0 %v8615
        %v10281 = vpop.f32.mrf.mxu0
        %v10282 = vadd.f32 %v10209, %v10281
        %v10283 = vpop.f32.mrf.mxu0
        %v10284 = vadd.f32 %v10211, %v10283
        %10285 = vmatmul.bf16.gmra.mxu0 %v8623
        %v10286 = vpop.f32.mrf.mxu0
        %v10287 = vadd.f32 %v10214, %v10286
        %v10288 = vpop.f32.mrf.mxu0
        %v10289 = vadd.f32 %v10216, %v10288
        %10290 = vmatmul.bf16.gmra.mxu0 %v8631
        %v10291 = vpop.f32.mrf.mxu0
        %v10292 = vadd.f32 %v10219, %v10291
        %v10293 = vpop.f32.mrf.mxu0
        %v10294 = vadd.f32 %v10221, %v10293
        %10295 = vmatmul.bf16.gmra.mxu0 %v8639
        %v10296 = vpop.f32.mrf.mxu0
        %v10297 = vadd.f32 %v10224, %v10296
        %v10298 = vpop.f32.mrf.mxu0
        %v10299 = vadd.f32 %v10226, %v10298
        %10300 = vmatmul.bf16.gmra.mxu0 %v8647
        %v10301 = vpop.f32.mrf.mxu0
        %v10302 = vadd.f32 %v10229, %v10301
        %v10303 = vpop.f32.mrf.mxu0
        %v10304 = vadd.f32 %v10231, %v10303
        %10305 = vmatmul.bf16.gmra.mxu0 %v8655
        %v10306 = vpop.f32.mrf.mxu0
        %v10307 = vadd.f32 %v10234, %v10306
        %v10308 = vpop.f32.mrf.mxu0
        %10309 = vdwg.mxu0
        %10310 = vmatpush.bf16.msra.mxu0 %v9257
        %10311 = vmatpush.bf16.msra.mxu0 %v9255
        %10312 = vmatpush.bf16.msra.mxu0 %v9253
        %10313 = vmatpush.bf16.msra.mxu0 %v9251
        %10314 = vmatpush.bf16.msra.mxu0 %v9249
        %10315 = vmatpush.bf16.msra.mxu0 %v9247
        %10316 = vmatpush.bf16.msra.mxu0 %v9245
        %10317 = vmatpush.bf16.msra.mxu0 %v9243
        %10318 = vmatmul.bf16.gmra.mxu0 %v8560
        %v10319 = vpop.f32.mrf.mxu0
        %v10320 = vadd.f32 %v10247, %v10319
        %v10321 = vpop.f32.mrf.mxu0
        %v10322 = vadd.f32 %v10249, %v10321
        %10323 = vmatmul.bf16.gmra.mxu0 %v8568
        %v10324 = vpop.f32.mrf.mxu0
        %v10325 = vadd.f32 %v10252, %v10324
        %v10326 = vpop.f32.mrf.mxu0
        %v10327 = vadd.f32 %v10254, %v10326
        %10328 = vmatmul.bf16.gmra.mxu0 %v8576
        %v10329 = vpop.f32.mrf.mxu0
        %v10330 = vadd.f32 %v10257, %v10329
        %v10331 = vpop.f32.mrf.mxu0
        %v10332 = vadd.f32 %v10259, %v10331
        %10333 = vmatmul.bf16.gmra.mxu0 %v8584
        %v10334 = vpop.f32.mrf.mxu0
        %v10335 = vadd.f32 %v10262, %v10334
        %v10336 = vpop.f32.mrf.mxu0
        %v10337 = vadd.f32 %v10264, %v10336
        %10338 = vmatmul.bf16.gmra.mxu0 %v8592
        %v10339 = vpop.f32.mrf.mxu0
        %v10340 = vadd.f32 %v10267, %v10339
        %v10341 = vpop.f32.mrf.mxu0
        %v10342 = vadd.f32 %v10269, %v10341
        %10343 = vmatmul.bf16.gmra.mxu0 %v8600
        %v10344 = vpop.f32.mrf.mxu0
        %v10345 = vadd.f32 %v10272, %v10344
        %v10346 = vpop.f32.mrf.mxu0
        %v10347 = vadd.f32 %v10274, %v10346
        %10348 = vmatmul.bf16.gmra.mxu0 %v8608
        %v10349 = vpop.f32.mrf.mxu0
        %v10350 = vadd.f32 %v10277, %v10349
        %v10351 = vpop.f32.mrf.mxu0
        %v10352 = vadd.f32 %v10279, %v10351
        %10353 = vmatmul.bf16.gmra.mxu0 %v8616
        %v10354 = vpop.f32.mrf.mxu0
        %v10355 = vadd.f32 %v10282, %v10354
        %v10356 = vpop.f32.mrf.mxu0
        %v10357 = vadd.f32 %v10284, %v10356
        %10358 = vmatmul.bf16.gmra.mxu0 %v8624
        %v10359 = vpop.f32.mrf.mxu0
        %v10360 = vadd.f32 %v10287, %v10359
        %v10361 = vpop.f32.mrf.mxu0
        %v10362 = vadd.f32 %v10289, %v10361
        %10363 = vmatmul.bf16.gmra.mxu0 %v8632
        %v10364 = vpop.f32.mrf.mxu0
        %v10365 = vadd.f32 %v10292, %v10364
        %v10366 = vpop.f32.mrf.mxu0
        %v10367 = vadd.f32 %v10294, %v10366
        %10368 = vmatmul.bf16.gmra.mxu0 %v8640
        %v10369 = vpop.f32.mrf.mxu0
        %v10370 = vadd.f32 %v10297, %v10369
        %v10371 = vpop.f32.mrf.mxu0
        %v10372 = vadd.f32 %v10299, %v10371
        %10373 = vmatmul.bf16.gmra.mxu0 %v8648
        %v10374 = vpop.f32.mrf.mxu0
        %v10375 = vadd.f32 %v10302, %v10374
        %v10376 = vpop.f32.mrf.mxu0
        %v10377 = vadd.f32 %v10304, %v10376
        %10378 = vmatmul.bf16.gmra.mxu0 %v8656
        %v10379 = vpop.f32.mrf.mxu0
        %v10380 = vadd.f32 %v10307, %v10379
        %v10381 = vpop.f32.mrf.mxu0
        %10382 = vdwg.mxu0
        %10383 = vmatpush.bf16.msra.mxu0 %v9273
        %10384 = vmatpush.bf16.msra.mxu0 %v9271
        %10385 = vmatpush.bf16.msra.mxu0 %v9269
        %10386 = vmatpush.bf16.msra.mxu0 %v9267
        %10387 = vmatpush.bf16.msra.mxu0 %v9265
        %10388 = vmatpush.bf16.msra.mxu0 %v9263
        %10389 = vmatpush.bf16.msra.mxu0 %v9261
        %10390 = vmatpush.bf16.msra.mxu0 %v9259
        %10391 = vmatmul.bf16.gmra.mxu0 %v8561
        %v10392 = vpop.f32.mrf.mxu0
        %v10393 = vadd.f32 %v10320, %v10392
        %v10394 = vpop.f32.mrf.mxu0
        %v10395 = vadd.f32 %v10322, %v10394
        %10396 = vmatmul.bf16.gmra.mxu0 %v8569
        %v10397 = vpop.f32.mrf.mxu0
        %v10398 = vadd.f32 %v10325, %v10397
        %v10399 = vpop.f32.mrf.mxu0
        %v10400 = vadd.f32 %v10327, %v10399
        %10401 = vmatmul.bf16.gmra.mxu0 %v8577
        %v10402 = vpop.f32.mrf.mxu0
        %v10403 = vadd.f32 %v10330, %v10402
        %v10404 = vpop.f32.mrf.mxu0
        %v10405 = vadd.f32 %v10332, %v10404
        %10406 = vmatmul.bf16.gmra.mxu0 %v8585
        %v10407 = vpop.f32.mrf.mxu0
        %v10408 = vadd.f32 %v10335, %v10407
        %v10409 = vpop.f32.mrf.mxu0
        %v10410 = vadd.f32 %v10337, %v10409
        %10411 = vmatmul.bf16.gmra.mxu0 %v8593
        %v10412 = vpop.f32.mrf.mxu0
        %v10413 = vadd.f32 %v10340, %v10412
        %v10414 = vpop.f32.mrf.mxu0
        %v10415 = vadd.f32 %v10342, %v10414
        %10416 = vmatmul.bf16.gmra.mxu0 %v8601
        %v10417 = vpop.f32.mrf.mxu0
        %v10418 = vadd.f32 %v10345, %v10417
        %v10419 = vpop.f32.mrf.mxu0
        %v10420 = vadd.f32 %v10347, %v10419
        %10421 = vmatmul.bf16.gmra.mxu0 %v8609
        %v10422 = vpop.f32.mrf.mxu0
        %v10423 = vadd.f32 %v10350, %v10422
        %v10424 = vpop.f32.mrf.mxu0
        %v10425 = vadd.f32 %v10352, %v10424
        %10426 = vmatmul.bf16.gmra.mxu0 %v8617
        %v10427 = vpop.f32.mrf.mxu0
        %v10428 = vadd.f32 %v10355, %v10427
        %v10429 = vpop.f32.mrf.mxu0
        %v10430 = vadd.f32 %v10357, %v10429
        %10431 = vmatmul.bf16.gmra.mxu0 %v8625
        %v10432 = vpop.f32.mrf.mxu0
        %v10433 = vadd.f32 %v10360, %v10432
        %v10434 = vpop.f32.mrf.mxu0
        %v10435 = vadd.f32 %v10362, %v10434
        %10436 = vmatmul.bf16.gmra.mxu0 %v8633
        %v10437 = vpop.f32.mrf.mxu0
        %v10438 = vadd.f32 %v10365, %v10437
        %v10439 = vpop.f32.mrf.mxu0
        %v10440 = vadd.f32 %v10367, %v10439
        %10441 = vmatmul.bf16.gmra.mxu0 %v8641
        %v10442 = vpop.f32.mrf.mxu0
        %v10443 = vadd.f32 %v10370, %v10442
        %v10444 = vpop.f32.mrf.mxu0
        %v10445 = vadd.f32 %v10372, %v10444
        %10446 = vmatmul.bf16.gmra.mxu0 %v8649
        %v10447 = vpop.f32.mrf.mxu0
        %v10448 = vadd.f32 %v10375, %v10447
        %v10449 = vpop.f32.mrf.mxu0
        %v10450 = vadd.f32 %v10377, %v10449
        %10451 = vmatmul.bf16.gmra.mxu0 %v8657
        %v10452 = vpop.f32.mrf.mxu0
        %v10453 = vadd.f32 %v10380, %v10452
        %v10454 = vpop.f32.mrf.mxu0
        %10455 = vdwg.mxu0
        %10456 = vmatpush.bf16.msra.mxu0 %v9289
        %10457 = vmatpush.bf16.msra.mxu0 %v9287
        %10458 = vmatpush.bf16.msra.mxu0 %v9285
        %10459 = vmatpush.bf16.msra.mxu0 %v9283
        %10460 = vmatpush.bf16.msra.mxu0 %v9281
        %10461 = vmatpush.bf16.msra.mxu0 %v9279
        %10462 = vmatpush.bf16.msra.mxu0 %v9277
        %10463 = vmatpush.bf16.msra.mxu0 %v9275
        %10464 = vmatmul.bf16.gmra.mxu0 %v8562
        %v10465 = vpop.f32.mrf.mxu0
        %v10466 = vadd.f32 %v10393, %v10465
        %v10467 = vpop.f32.mrf.mxu0
        %v10468 = vadd.f32 %v10395, %v10467
        %10469 = vmatmul.bf16.gmra.mxu0 %v8570
        %v10470 = vpop.f32.mrf.mxu0
        %v10471 = vadd.f32 %v10398, %v10470
        %v10472 = vpop.f32.mrf.mxu0
        %v10473 = vadd.f32 %v10400, %v10472
        %10474 = vmatmul.bf16.gmra.mxu0 %v8578
        %v10475 = vpop.f32.mrf.mxu0
        %v10476 = vadd.f32 %v10403, %v10475
        %v10477 = vpop.f32.mrf.mxu0
        %v10478 = vadd.f32 %v10405, %v10477
        %10479 = vmatmul.bf16.gmra.mxu0 %v8586
        %v10480 = vpop.f32.mrf.mxu0
        %v10481 = vadd.f32 %v10408, %v10480
        %v10482 = vpop.f32.mrf.mxu0
        %v10483 = vadd.f32 %v10410, %v10482
        %10484 = vmatmul.bf16.gmra.mxu0 %v8594
        %v10485 = vpop.f32.mrf.mxu0
        %v10486 = vadd.f32 %v10413, %v10485
        %v10487 = vpop.f32.mrf.mxu0
        %v10488 = vadd.f32 %v10415, %v10487
        %10489 = vmatmul.bf16.gmra.mxu0 %v8602
        %v10490 = vpop.f32.mrf.mxu0
        %v10491 = vadd.f32 %v10418, %v10490
        %v10492 = vpop.f32.mrf.mxu0
        %v10493 = vadd.f32 %v10420, %v10492
        %10494 = vmatmul.bf16.gmra.mxu0 %v8610
        %v10495 = vpop.f32.mrf.mxu0
        %v10496 = vadd.f32 %v10423, %v10495
        %v10497 = vpop.f32.mrf.mxu0
        %v10498 = vadd.f32 %v10425, %v10497
        %10499 = vmatmul.bf16.gmra.mxu0 %v8618
        %v10500 = vpop.f32.mrf.mxu0
        %v10501 = vadd.f32 %v10428, %v10500
        %v10502 = vpop.f32.mrf.mxu0
        %v10503 = vadd.f32 %v10430, %v10502
        %10504 = vmatmul.bf16.gmra.mxu0 %v8626
        %v10505 = vpop.f32.mrf.mxu0
        %v10506 = vadd.f32 %v10433, %v10505
        %v10507 = vpop.f32.mrf.mxu0
        %v10508 = vadd.f32 %v10435, %v10507
        %10509 = vmatmul.bf16.gmra.mxu0 %v8634
        %v10510 = vpop.f32.mrf.mxu0
        %v10511 = vadd.f32 %v10438, %v10510
        %v10512 = vpop.f32.mrf.mxu0
        %v10513 = vadd.f32 %v10440, %v10512
        %10514 = vmatmul.bf16.gmra.mxu0 %v8642
        %v10515 = vpop.f32.mrf.mxu0
        %v10516 = vadd.f32 %v10443, %v10515
        %v10517 = vpop.f32.mrf.mxu0
        %v10518 = vadd.f32 %v10445, %v10517
        %10519 = vmatmul.bf16.gmra.mxu0 %v8650
        %v10520 = vpop.f32.mrf.mxu0
        %v10521 = vadd.f32 %v10448, %v10520
        %v10522 = vpop.f32.mrf.mxu0
        %v10523 = vadd.f32 %v10450, %v10522
        %10524 = vmatmul.bf16.gmra.mxu0 %v8658
        %v10525 = vpop.f32.mrf.mxu0
        %v10526 = vadd.f32 %v10453, %v10525
        %v10527 = vpop.f32.mrf.mxu0
        %10528 = vdwg.mxu0
        %10529 = vmatpush.bf16.msra.mxu0 %v9305
        %10530 = vmatpush.bf16.msra.mxu0 %v9303
        %10531 = vmatpush.bf16.msra.mxu0 %v9301
        %10532 = vmatpush.bf16.msra.mxu0 %v9299
        %10533 = vmatpush.bf16.msra.mxu0 %v9297
        %10534 = vmatpush.bf16.msra.mxu0 %v9295
        %10535 = vmatpush.bf16.msra.mxu0 %v9293
        %10536 = vmatpush.bf16.msra.mxu0 %v9291
        %10537 = vmatmul.bf16.gmra.mxu0 %v8563
        %v10538 = vpop.f32.mrf.mxu0
        %v10539 = vadd.f32 %v10466, %v10538
        %v10540 = vpop.f32.mrf.mxu0
        %v10541 = vadd.f32 %v10468, %v10540
        %10542 = vmatmul.bf16.gmra.mxu0 %v8571
        %v10543 = vpop.f32.mrf.mxu0
        %v10544 = vadd.f32 %v10471, %v10543
        %v10545 = vpop.f32.mrf.mxu0
        %v10546 = vadd.f32 %v10473, %v10545
        %10547 = vmatmul.bf16.gmra.mxu0 %v8579
        %v10548 = vpop.f32.mrf.mxu0
        %v10549 = vadd.f32 %v10476, %v10548
        %v10550 = vpop.f32.mrf.mxu0
        %v10551 = vadd.f32 %v10478, %v10550
        %10552 = vmatmul.bf16.gmra.mxu0 %v8587
        %v10553 = vpop.f32.mrf.mxu0
        %v10554 = vadd.f32 %v10481, %v10553
        %v10555 = vpop.f32.mrf.mxu0
        %v10556 = vadd.f32 %v10483, %v10555
        %10557 = vmatmul.bf16.gmra.mxu0 %v8595
        %v10558 = vpop.f32.mrf.mxu0
        %v10559 = vadd.f32 %v10486, %v10558
        %v10560 = vpop.f32.mrf.mxu0
        %v10561 = vadd.f32 %v10488, %v10560
        %10562 = vmatmul.bf16.gmra.mxu0 %v8603
        %v10563 = vpop.f32.mrf.mxu0
        %v10564 = vadd.f32 %v10491, %v10563
        %v10565 = vpop.f32.mrf.mxu0
        %v10566 = vadd.f32 %v10493, %v10565
        %10567 = vmatmul.bf16.gmra.mxu0 %v8611
        %v10568 = vpop.f32.mrf.mxu0
        %v10569 = vadd.f32 %v10496, %v10568
        %v10570 = vpop.f32.mrf.mxu0
        %v10571 = vadd.f32 %v10498, %v10570
        %10572 = vmatmul.bf16.gmra.mxu0 %v8619
        %v10573 = vpop.f32.mrf.mxu0
        %v10574 = vadd.f32 %v10501, %v10573
        %v10575 = vpop.f32.mrf.mxu0
        %v10576 = vadd.f32 %v10503, %v10575
        %10577 = vmatmul.bf16.gmra.mxu0 %v8627
        %v10578 = vpop.f32.mrf.mxu0
        %v10579 = vadd.f32 %v10506, %v10578
        %v10580 = vpop.f32.mrf.mxu0
        %v10581 = vadd.f32 %v10508, %v10580
        %10582 = vmatmul.bf16.gmra.mxu0 %v8635
        %v10583 = vpop.f32.mrf.mxu0
        %v10584 = vadd.f32 %v10511, %v10583
        %v10585 = vpop.f32.mrf.mxu0
        %v10586 = vadd.f32 %v10513, %v10585
        %10587 = vmatmul.bf16.gmra.mxu0 %v8643
        %v10588 = vpop.f32.mrf.mxu0
        %v10589 = vadd.f32 %v10516, %v10588
        %v10590 = vpop.f32.mrf.mxu0
        %v10591 = vadd.f32 %v10518, %v10590
        %10592 = vmatmul.bf16.gmra.mxu0 %v8651
        %v10593 = vpop.f32.mrf.mxu0
        %v10594 = vadd.f32 %v10521, %v10593
        %v10595 = vpop.f32.mrf.mxu0
        %v10596 = vadd.f32 %v10523, %v10595
        %10597 = vmatmul.bf16.gmra.mxu0 %v8659
        %v10598 = vpop.f32.mrf.mxu0
        %v10599 = vadd.f32 %v10526, %v10598
        %v10600 = vpop.f32.mrf.mxu0
        %10601 = vdwg.mxu0
        %10602 = vst [vmem:[%s293] sm:$0xff] %v9955
        %10603 = vst [vmem:[%s293 + $0x8] sm:$0xff] %v10539
        %10604 = vst [vmem:[%s293 + $0x10] sm:$0xff] %v9957
        %10605 = vst [vmem:[%s293 + $0x18] sm:$0xff] %v10541
        %10606 = vst [vmem:[%s293 + $0x20] sm:$0xff] %v9960
        %10607 = vst [vmem:[%s293 + $0x28] sm:$0xff] %v10544
        %10608 = vst [vmem:[%s293 + $0x30] sm:$0xff] %v9962
        %10609 = vst [vmem:[%s293 + $0x38] sm:$0xff] %v10546
        %10610 = vst [vmem:[%s293 + $0x40] sm:$0xff] %v9965
        %10611 = vst [vmem:[%s293 + $0x48] sm:$0xff] %v10549
        %10612 = vst [vmem:[%s293 + $0x50] sm:$0xff] %v9967
        %10613 = vst [vmem:[%s293 + $0x58] sm:$0xff] %v10551
        %10614 = vst [vmem:[%s293 + $0x60] sm:$0xff] %v9970
        %10615 = vst [vmem:[%s293 + $0x68] sm:$0xff] %v10554
        %10616 = vst [vmem:[%s293 + $0x70] sm:$0xff] %v9972
        %10617 = vst [vmem:[%s293 + $0x78] sm:$0xff] %v10556
        %10618 = vst [vmem:[%s293 + $0x80] sm:$0xff] %v9975
        %10619 = vst [vmem:[%s293 + $0x88] sm:$0xff] %v10559
        %10620 = vst [vmem:[%s293 + $0x90] sm:$0xff] %v9977
        %10621 = vst [vmem:[%s293 + $0x98] sm:$0xff] %v10561
        %10622 = vst [vmem:[%s293 + $0xa0] sm:$0xff] %v9980
        %10623 = vst [vmem:[%s293 + $0xa8] sm:$0xff] %v10564
        %10624 = vst [vmem:[%s293 + $0xb0] sm:$0xff] %v9982
        %10625 = vst [vmem:[%s293 + $0xb8] sm:$0xff] %v10566
        %10626 = vst [vmem:[%s293 + $0xc0] sm:$0xff] %v9985
        %10627 = vst [vmem:[%s293 + $0xc8] sm:$0xff] %v10569
        %10628 = vst [vmem:[%s293 + $0xd0] sm:$0xff] %v9987
        %10629 = vst [vmem:[%s293 + $0xd8] sm:$0xff] %v10571
        %10630 = vst [vmem:[%s293 + $0xe0] sm:$0xff] %v9990
        %10631 = vst [vmem:[%s293 + $0xe8] sm:$0xff] %v10574
        %10632 = vst [vmem:[%s293 + $0xf0] sm:$0xff] %v9992
        %10633 = vst [vmem:[%s293 + $0xf8] sm:$0xff] %v10576
        %10634 = vst [vmem:[%s293 + $0x100] sm:$0xff] %v9995
        %10635 = vst [vmem:[%s293 + $0x108] sm:$0xff] %v10579
        %10636 = vst [vmem:[%s293 + $0x110] sm:$0xff] %v9997
        %10637 = vst [vmem:[%s293 + $0x118] sm:$0xff] %v10581
        %10638 = vst [vmem:[%s293 + $0x120] sm:$0xff] %v10000
        %10639 = vst [vmem:[%s293 + $0x128] sm:$0xff] %v10584
        %10640 = vst [vmem:[%s293 + $0x130] sm:$0xff] %v10002
        %10641 = vst [vmem:[%s293 + $0x138] sm:$0xff] %v10586
        %10642 = vst [vmem:[%s293 + $0x140] sm:$0xff] %v10005
        %10643 = vst [vmem:[%s293 + $0x148] sm:$0xff] %v10589
        %10644 = vst [vmem:[%s293 + $0x150] sm:$0xff] %v10007
        %10645 = vst [vmem:[%s293 + $0x158] sm:$0xff] %v10591
        %10646 = vst [vmem:[%s293 + $0x160] sm:$0xff] %v10010
        %10647 = vst [vmem:[%s293 + $0x168] sm:$0xff] %v10594
        %10648 = vst [vmem:[%s293 + $0x170] sm:$0xff] %v10012
        %10649 = vst [vmem:[%s293 + $0x178] sm:$0xff] %v10596
        %10650 = vst [vmem:[%s293 + $0x180] sm:$0xff] %v10015
        %10651 = vst [vmem:[%s293 + $0x188] sm:$0xff] %v10599
        %s10652 = sand.u32 %s142, 1
        %s10653 = scalar_lea.sflag [#allocation4], %s10652
        %s10654 = sand.u32 %s142, 1
        %s10655 = smul.addr %s10654, 400
        %s10656 = scalar_lea.vmem [#allocation10], %s10655
        // Predicated region
        $region57: #{tpu_custom_call.1} parent=39 // pred_check
          %p10657 = pneg %p152
        $region58: #{tpu_custom_call.1} parent=39 // pred_check_branch
          %10659 = sbr.rel (%p10657) target = $region60
        $region59: #{tpu_custom_call.1} parent=39 // pred_region
          %s10660 = smul.u32 25, %s24
          %10662 = vsyncadd %s10653, 0
          %s10663 = smul.addr %s10660, 2
          %s10664 = smul.addr %s10663, 8
          %s10665 = scalar_lea.hbm %s5, %s10664
          %s10666 = sshll.u32 %s10656, 4
          %s10667 = int_to_ptr.vmem [resolvable:$true] %s10666
          %s10668 = sshll.u32 %s10665, 4
          %s10669 = int_to_ptr.hbm [resolvable:$true] %s10668
          %10674 = dma.vmem_to_hbm [thread:$0]  %s10667, 6400, %s10669, %s10653, 256, 256, 16
        $region60: #{tpu_custom_call.1} parent=39 // pred_fallthru
          _
      $region40: #{tpu_custom_call.1} parent=5 // pred_fallthru
        _
      %p10675 = scmp.le.s32.totalorder 2, %s19
      // Predicated region
      $region61: #{tpu_custom_call.1} parent=5 // pred_check
        %p10676 = pneg %p10675
      $region62: #{tpu_custom_call.1} parent=5 // pred_check_branch
        %10678 = sbr.rel (%p10676) target = $region64
      $region63: #{tpu_custom_call.1} parent=5 // pred_region
        %s10679 = ssub.s32 %s19, 2
        // Predicated region
        $region65: #{tpu_custom_call.1} parent=63 // pred_check
          %p10680 = pneg %p158
        $region66: #{tpu_custom_call.1} parent=63 // pred_check_branch
          %10682 = sbr.rel (%p10680) target = $region68
        $region67: #{tpu_custom_call.1} parent=63 // pred_region
          %s10683 = sand.u32 %s143, 1
          %s10684 = scalar_lea.sflag [#allocation4], %s10683
          %s10685 = sand.u32 %s143, 1
          %s10686 = smul.addr %s10685, 400
          %s10687 = scalar_lea.vmem [#allocation10], %s10686
          %10689 = dma.done %s10684, 6400
        $region68: #{tpu_custom_call.1} parent=63 // pred_fallthru
          _
      $region64: #{tpu_custom_call.1} parent=5 // pred_fallthru
        _
    $region6: #{tpu_custom_call.1} parent=1 // loop_footer
      %s23 = sadd.s32 1, %s19
    $region7: #{tpu_custom_call.1} parent=1 // loop_footer_branch
      %18 = sbr.rel target = $region3
    $region8: #{tpu_custom_call.1} parent=1 // loop_exit
      _
    %10690 = vsyncpa [#allocation3], 1
    %s10691 = scalar_lea.sflag [#allocation3], 1
    %10692 = vsyncpa %s10691, 1
    %10693 = vsyncpa [#allocation6], 1
    %10694 = vsyncpa [#allocation9], 1
    %10695 = vsyncpa [#allocation4], 1
    %s10696 = scalar_lea.sflag [#allocation4], 1
    %10697 = vsyncpa %s10696, 1

</llo_original>
